<compile_context>
chip_gen: v5e
topology: v5e:2x2
jax: 0.10.0
libtpu: 0.0.40
codegen_flags: <defaults>
</compile_context>

<pallas_src>
import functools

import jax
import jax.numpy as jnp
from jax.experimental import pallas as pl
from jax.experimental.pallas import tpu as pltpu

_BN_EPS = 1e-5
_PADL = 8        # left zero-pad of the W (sublane) axis -> tile-aligned VMEM stores


# --------------------------------------------------------------------------
# Fused decoder kernel: one batch element per grid step.
# --------------------------------------------------------------------------
def _fused_decoder_kernel(x_ref, w_ref, s_ref, b_ref, *rest,
                          H, W, Cin, C, n_blocks, emit_side):
    if emit_side:
        out_ref, side_ref, pad_ref = rest
    else:
        out_ref, pad_ref = rest
        side_ref = None

    # Zero-padded activation buffer: the activation lives at
    # [1:H+1, _PADL:_PADL+W, :]; everything else stays zero ("same" padding).
    pad_ref[...] = jnp.zeros_like(pad_ref)
    # Stage the input tile (only the first Cin of C channels; the unused
    # channels stay zero, matching the zero-padded rows of the first weight).
    pad_ref[1:H + 1, _PADL:_PADL + W, 0:Cin] = x_ref[...].astype(pad_ref.dtype)

    def conv3x3_bn_relu(layer, residual=None):
        xpad = pad_ref[...]                                     # (H+2, W+2*PADL, C)
        # im2col: 9 shifted taps concatenated along channels -> ONE matmul.
        cols = jnp.concatenate(
            [xpad[dy:dy + H, _PADL - 1 + dx:_PADL - 1 + dx + W, :]
             for dy in range(3) for dx in range(3)], axis=-1)   # (H, W, 9*C)
        cols = cols.reshape(H * W, 9 * C)                       # W % 8 == 0 -> free
        y = jnp.dot(cols, w_ref[layer],
                    preferred_element_type=jnp.float32)         # (H*W, C), f32 acc
        # folded BatchNorm (eval) + optional residual + ReLU, epilogue in f32
        y = y * s_ref[layer].astype(jnp.float32) + b_ref[layer].astype(jnp.float32)
        if residual is not None:
            y = y + residual
        return jnp.maximum(y, 0.0)

    def stage(act):   # write an activation back into the padded buffer interior
        pad_ref[1:H + 1, _PADL:_PADL + W, :] = \
            act.reshape(H, W, C).astype(pad_ref.dtype)

    # initial ConvNormAct: conv3x3 (bias=False) + BN + ReLU
    act = conv3x3_bn_relu(0)
    layer = 1
    # ResNet BasicBlocks: conv3x3+BN+ReLU -> conv3x3+BN -> (+identity) -> ReLU
    for _ in range(n_blocks):
        identity = act                    # residual kept in registers/VMEM
        stage(act)
        h = conv3x3_bn_relu(layer)
        layer += 1
        stage(h)
        act = conv3x3_bn_relu(layer, residual=identity)
        layer += 1

    act3 = act.reshape(H, W, C)
    if emit_side:
        side_ref[...] = act3.astype(side_ref.dtype)

    # nearest-neighbour x2 upsample, emitted in interleave-friendly layout:
    #   out[i, a, j, b*C + c] = act3[i, j, c]   for a, b in {0, 1}
    # so the wrapper reshape to (2H, 2W, C) is a free contiguous reshape.
    yw = jnp.concatenate([act3, act3], axis=-1).astype(out_ref.dtype)   # (H, W, 2C)
    out_ref[:, 0, :, :] = yw
    out_ref[:, 1, :, :] = yw


# --------------------------------------------------------------------------
# Parameter packing (weights / folded-BN stacked for the fused kernel)
# --------------------------------------------------------------------------
def _pack_params(params, n_channels):
    C = n_channels
    w0 = params["conv_w"]                                   # (3, 3, Cin, C)
    cin = w0.shape[2]
    # zero-pad the initial conv's input channels to C so all convs are C->C
    w0p = jnp.zeros((3, 3, C, C), w0.dtype).at[:, :, :cin, :].set(w0)
    ws = [w0p]
    ss = [params["conv_scale"]]
    bs = [params["conv_bias"]]
    for blk in params["blocks"]:
        ws += [blk["w1"], blk["w2"]]
        ss += [blk["s1"], blk["s2"]]
        bs += [blk["b1"], blk["b2"]]
    # weight rows ordered (dy, dx, ci) to match the in-kernel im2col concat
    w_all = jnp.stack([w.reshape(9 * C, C) for w in ws])     # (n_conv, 9C, C)
    s_all = jnp.stack(ss)[:, None, :]                         # (n_conv, 1, C)
    b_all = jnp.stack(bs)[:, None, :]                         # (n_conv, 1, C)
    return w_all, s_all, b_all


def dense_decoder_forward(x_nhwc, params, training=False):
    N, H, W, Cin = x_nhwc.shape
    C = params["conv_w"].shape[-1]
    n_blocks = len(params["blocks"])
    n_conv = 1 + 2 * n_blocks
    w_all, s_all, b_all = _pack_params(params, C)

    kernel = functools.partial(_fused_decoder_kernel, H=H, W=W, Cin=Cin, C=C,
                               n_blocks=n_blocks, emit_side=training)

    out_shape = [jax.ShapeDtypeStruct((N, H, 2, W, 2 * C), x_nhwc.dtype)]
    out_specs = [pl.BlockSpec((pl.Squeezed(), H, 2, W, 2 * C),
                              lambda n: (n, 0, 0, 0, 0))]
    if training:
        out_shape.append(jax.ShapeDtypeStruct((N, H, W, C), x_nhwc.dtype))
        out_specs.append(pl.BlockSpec((pl.Squeezed(), H, W, C),
                                      lambda n: (n, 0, 0, 0)))

    outs = pl.pallas_call(
        kernel,
        out_shape=tuple(out_shape),
        grid=(N,),
        in_specs=[
            pl.BlockSpec((pl.Squeezed(), H, W, Cin), lambda n: (n, 0, 0, 0)),
            # weights / folded BN: constant block index -> DMA'd once, resident
            pl.BlockSpec((n_conv, 9 * C, C), lambda n: (0, 0, 0)),
            pl.BlockSpec((n_conv, 1, C), lambda n: (0, 0, 0)),
            pl.BlockSpec((n_conv, 1, C), lambda n: (0, 0, 0)),
        ],
        out_specs=tuple(out_specs),
        scratch_shapes=[pltpu.VMEM((H + 2, W + 2 * _PADL, C), x_nhwc.dtype)],
        compiler_params=pltpu.CompilerParams(dimension_semantics=("parallel",)),
    )(x_nhwc, w_all, s_all, b_all)

    out5 = outs[0]
    out_side = outs[1] if training else None     # eval mode -> None
    out_up = out5.reshape(N, 2 * H, 2 * W, C)    # free contiguous reshape
    return out_up, out_side


# --------------------------------------------------------------------------
# Deterministic synthetic parameters + pure-JAX reference (for self-check)
# --------------------------------------------------------------------------
def _bn_fold(key, c):
    k1, k2, k3, k4 = jax.random.split(key, 4)
    gamma = 1.0 + 0.1 * jax.random.normal(k1, (c,), jnp.float32)
    beta = 0.1 * jax.random.normal(k2, (c,), jnp.float32)
    running_mean = 0.1 * jax.random.normal(k3, (c,), jnp.float32)
    running_var = 1.0 + 0.1 * jax.random.uniform(k4, (c,), jnp.float32)
    scale = gamma / jnp.sqrt(running_var + _BN_EPS)
    bias = beta - running_mean * scale
    return scale, bias


def init_params(key, n_channels_in, n_channels, n_blocks):
    keys = jax.random.split(key, 2 + 4 * n_blocks)
    params = {
        "conv_w": 0.1 * jax.random.normal(
            keys[0], (3, 3, n_channels_in, n_channels), jnp.float32),
    }
    params["conv_scale"], params["conv_bias"] = _bn_fold(keys[1], n_channels)
    blocks = []
    for i in range(n_blocks):
        kw1, kb1, kw2, kb2 = keys[2 + 4 * i: 2 + 4 * (i + 1)]
        s1, b1 = _bn_fold(kb1, n_channels)
        s2, b2 = _bn_fold(kb2, n_channels)
        blocks.append(dict(
            w1=0.1 * jax.random.normal(kw1, (3, 3, n_channels, n_channels),
                                       jnp.float32),
            s1=s1, b1=b1,
            w2=0.1 * jax.random.normal(kw2, (3, 3, n_channels, n_channels),
                                       jnp.float32),
            s2=s2, b2=b2,
        ))
    params["blocks"] = blocks
    return params


def _reference_forward(x, params):
    """Pure-JAX (XLA) reference of the same eval-mode forward pass."""
    def conv_bn_relu(x, w, s, b, residual=None):
        y = jax.lax.conv_general_dilated(
            x, w, window_strides=(1, 1), padding="SAME",
            dimension_numbers=("NHWC", "HWIO", "NHWC"),
            precision=jax.lax.Precision.HIGHEST)
        y = y * s + b
        if residual is not None:
            y = y + residual
        return jnp.maximum(y, 0.0)

    out = conv_bn_relu(x, params["conv_w"],
                       params["conv_scale"], params["conv_bias"])
    for blk in params["blocks"]:
        identity = out
        h = conv_bn_relu(out, blk["w1"], blk["s1"], blk["b1"])
        out = conv_bn_relu(h, blk["w2"], blk["s2"], blk["b2"],
                           residual=identity)
    return jnp.repeat(jnp.repeat(out, 2, axis=1), 2, axis=2)   # nearest x2


if __name__ == "__main__":
    key = jax.random.PRNGKey(0)
    k_x, k_p = jax.random.split(key)

    N, Cin, H, W = 2, 4, 16, 16          # NCHW, matches PyTorch input convention
    C, n_blocks = 8, 2

    x_nchw = jax.random.normal(k_x, (N, Cin, H, W), jnp.float32)
    x_nhwc = jnp.transpose(x_nchw, (0, 2, 3, 1))   # layout: NHWC inside kernels

    params = init_params(k_p, Cin, C, n_blocks)

    out, out_side = dense_decoder_forward(x_nhwc, params, training=False)
    out = jax.block_until_ready(out)

    assert out.shape == (N, 2 * H, 2 * W, C), out.shape
    assert out_side is None
    assert bool(jnp.all(jnp.isfinite(out)))

    # numerical self-check against the pure-JAX reference of the same module
    ref = _reference_forward(x_nhwc, params)
    max_err = float(jnp.max(jnp.abs(out - ref)))
    assert max_err < 5e-2, max_err

    print("KERNEL_OK")
</pallas_src>

<mosaic_0001>
module attributes {stable_mosaic.version = 11 : i64} {
  func.func @_fused_decoder_kernel(%arg0: i32, %arg1: memref<1x16x16x4xf32, #tpu.memory_space<vmem>>, %arg2: memref<5x72x8xf32, #tpu.memory_space<vmem>>, %arg3: memref<5x1x8xf32, #tpu.memory_space<vmem>>, %arg4: memref<5x1x8xf32, #tpu.memory_space<vmem>>, %arg5: memref<1x16x2x16x16xf32, #tpu.memory_space<vmem>>, %arg6: memref<18x32x8xf32, #tpu.memory_space<vmem>>) attributes {dimension_semantics = [#tpu.dimension_semantics<parallel>], iteration_bounds = array<i64: 2>, scalar_prefetch = 0 : i64, scratch_operands = 1 : i64, tpu.core_type = #tpu.core_type<tc>, window_params = [{transform_indices = @transform_0, window_bounds = array<i64: 1, 16, 16, 4>}, {pipeline_mode = #tpu.pipeline_mode<synchronous>, transform_indices = @transform_1, window_bounds = array<i64: 5, 72, 8>}, {pipeline_mode = #tpu.pipeline_mode<synchronous>, transform_indices = @transform_2, window_bounds = array<i64: 5, 1, 8>}, {pipeline_mode = #tpu.pipeline_mode<synchronous>, transform_indices = @transform_3, window_bounds = array<i64: 5, 1, 8>}, {transform_indices = @transform_4, window_bounds = array<i64: 1, 16, 2, 16, 16>}]} {
    %cst = arith.constant 0.000000e+00 : f32
    %0 = vector.broadcast %cst : f32 to vector<18x32x8xf32>
    %c0 = arith.constant 0 : index
    %c0_0 = arith.constant 0 : index
    %c0_1 = arith.constant 0 : index
    %1 = vector.load %arg6[%c0, %c0_0, %c0_1] : memref<18x32x8xf32, #tpu.memory_space<vmem>>, vector<18x32x8xf32>
    tpu.vector_store %arg6[%c0, %c0_0, %c0_1], %0 {strides = array<i32>} : memref<18x32x8xf32, #tpu.memory_space<vmem>>, vector<18x32x8xf32>,
    %c0_2 = arith.constant 0 : index
    %c0_3 = arith.constant 0 : index
    %c0_4 = arith.constant 0 : index
    %c0_5 = arith.constant 0 : index
    %2 = vector.load %arg1[%c0_2, %c0_3, %c0_4, %c0_5] : memref<1x16x16x4xf32, #tpu.memory_space<vmem>>, vector<1x16x16x4xf32>
    %3 = vector.shape_cast %2 : vector<1x16x16x4xf32> to vector<16x16x4xf32>
    %c1 = arith.constant 1 : index
    %c8 = arith.constant 8 : index
    %c0_6 = arith.constant 0 : index
    %4 = vector.load %arg6[%c1, %c8, %c0_6] : memref<18x32x8xf32, #tpu.memory_space<vmem>>, vector<16x16x4xf32>
    tpu.vector_store %arg6[%c1, %c8, %c0_6], %3 {strides = array<i32>} : memref<18x32x8xf32, #tpu.memory_space<vmem>>, vector<16x16x4xf32>,
    %c0_7 = arith.constant 0 : index
    %c0_8 = arith.constant 0 : index
    %c0_9 = arith.constant 0 : index
    %5 = vector.load %arg6[%c0_7, %c0_8, %c0_9] : memref<18x32x8xf32, #tpu.memory_space<vmem>>, vector<18x32x8xf32>
    %6 = vector.extract_strided_slice %5 {offsets = [0, 7, 0], sizes = [16, 16, 8], strides = [1, 1, 1]} : vector<18x32x8xf32> to vector<16x16x8xf32>
    %7 = vector.extract_strided_slice %5 {offsets = [0, 8, 0], sizes = [16, 16, 8], strides = [1, 1, 1]} : vector<18x32x8xf32> to vector<16x16x8xf32>
    %8 = vector.extract_strided_slice %5 {offsets = [0, 9, 0], sizes = [16, 16, 8], strides = [1, 1, 1]} : vector<18x32x8xf32> to vector<16x16x8xf32>
    %9 = vector.extract_strided_slice %5 {offsets = [1, 7, 0], sizes = [16, 16, 8], strides = [1, 1, 1]} : vector<18x32x8xf32> to vector<16x16x8xf32>
    %10 = vector.extract_strided_slice %5 {offsets = [1, 8, 0], sizes = [16, 16, 8], strides = [1, 1, 1]} : vector<18x32x8xf32> to vector<16x16x8xf32>
    %11 = vector.extract_strided_slice %5 {offsets = [1, 9, 0], sizes = [16, 16, 8], strides = [1, 1, 1]} : vector<18x32x8xf32> to vector<16x16x8xf32>
    %12 = vector.extract_strided_slice %5 {offsets = [2, 7, 0], sizes = [16, 16, 8], strides = [1, 1, 1]} : vector<18x32x8xf32> to vector<16x16x8xf32>
    %13 = vector.extract_strided_slice %5 {offsets = [2, 8, 0], sizes = [16, 16, 8], strides = [1, 1, 1]} : vector<18x32x8xf32> to vector<16x16x8xf32>
    %14 = vector.extract_strided_slice %5 {offsets = [2, 9, 0], sizes = [16, 16, 8], strides = [1, 1, 1]} : vector<18x32x8xf32> to vector<16x16x8xf32>
    %15 = tpu.concatenate %6, %7, %8, %9, %10, %11, %12, %13, %14 in 2 : vector<16x16x8xf32>, vector<16x16x8xf32>, vector<16x16x8xf32>, vector<16x16x8xf32>, vector<16x16x8xf32>, vector<16x16x8xf32>, vector<16x16x8xf32>, vector<16x16x8xf32>, vector<16x16x8xf32> -> vector<16x16x72xf32>
    %16 = vector.shape_cast %15 : vector<16x16x72xf32> to vector<256x72xf32>
    %c0_10 = arith.constant 0 : index
    %c0_11 = arith.constant 0 : index
    %c0_12 = arith.constant 0 : index
    %17 = vector.load %arg2[%c0_10, %c0_11, %c0_12] : memref<5x72x8xf32, #tpu.memory_space<vmem>>, vector<1x72x8xf32>
    %18 = vector.shape_cast %17 : vector<1x72x8xf32> to vector<72x8xf32>
    %cst_13 = arith.constant dense<0.000000e+00> : vector<256x8xf32>
    %19 = tpu.matmul %16, %18, %cst_13 {dimension_numbers = #tpu.dot_dimension_numbers<[1], [0], [0], [1], [0, 0, 1, 1], [], []>} : vector<256x72xf32>, vector<72x8xf32>, vector<256x8xf32> -> vector<256x8xf32>
    %c0_14 = arith.constant 0 : index
    %c0_15 = arith.constant 0 : index
    %c0_16 = arith.constant 0 : index
    %20 = vector.load %arg3[%c0_14, %c0_15, %c0_16] : memref<5x1x8xf32, #tpu.memory_space<vmem>>, vector<1x1x8xf32>
    %21 = vector.shape_cast %20 : vector<1x1x8xf32> to vector<1x8xf32>
    %22 = vector.broadcast %21 : vector<1x8xf32> to vector<256x8xf32>
    %23 = arith.mulf %19, %22 : vector<256x8xf32>
    %c0_17 = arith.constant 0 : index
    %c0_18 = arith.constant 0 : index
    %c0_19 = arith.constant 0 : index
    %24 = vector.load %arg4[%c0_17, %c0_18, %c0_19] : memref<5x1x8xf32, #tpu.memory_space<vmem>>, vector<1x1x8xf32>
    %25 = vector.shape_cast %24 : vector<1x1x8xf32> to vector<1x8xf32>
    %26 = vector.broadcast %25 : vector<1x8xf32> to vector<256x8xf32>
    %27 = arith.addf %23, %26 : vector<256x8xf32>
    %cst_20 = arith.constant 0.000000e+00 : f32
    %28 = vector.broadcast %cst_20 : f32 to vector<256x8xf32>
    %29 = arith.maximumf %27, %28 : vector<256x8xf32>
    %30 = vector.shape_cast %29 : vector<256x8xf32> to vector<16x16x8xf32>
    %c1_21 = arith.constant 1 : index
    %c8_22 = arith.constant 8 : index
    %c0_23 = arith.constant 0 : index
    %31 = vector.load %arg6[%c1_21, %c8_22, %c0_23] : memref<18x32x8xf32, #tpu.memory_space<vmem>>, vector<16x16x8xf32>
    tpu.vector_store %arg6[%c1_21, %c8_22, %c0_23], %30 {strides = array<i32>} : memref<18x32x8xf32, #tpu.memory_space<vmem>>, vector<16x16x8xf32>,
    %c0_24 = arith.constant 0 : index
    %c0_25 = arith.constant 0 : index
    %c0_26 = arith.constant 0 : index
    %32 = vector.load %arg6[%c0_24, %c0_25, %c0_26] : memref<18x32x8xf32, #tpu.memory_space<vmem>>, vector<18x32x8xf32>
    %33 = vector.extract_strided_slice %32 {offsets = [0, 7, 0], sizes = [16, 16, 8], strides = [1, 1, 1]} : vector<18x32x8xf32> to vector<16x16x8xf32>
    %34 = vector.extract_strided_slice %32 {offsets = [0, 8, 0], sizes = [16, 16, 8], strides = [1, 1, 1]} : vector<18x32x8xf32> to vector<16x16x8xf32>
    %35 = vector.extract_strided_slice %32 {offsets = [0, 9, 0], sizes = [16, 16, 8], strides = [1, 1, 1]} : vector<18x32x8xf32> to vector<16x16x8xf32>
    %36 = vector.extract_strided_slice %32 {offsets = [1, 7, 0], sizes = [16, 16, 8], strides = [1, 1, 1]} : vector<18x32x8xf32> to vector<16x16x8xf32>
    %37 = vector.extract_strided_slice %32 {offsets = [1, 8, 0], sizes = [16, 16, 8], strides = [1, 1, 1]} : vector<18x32x8xf32> to vector<16x16x8xf32>
    %38 = vector.extract_strided_slice %32 {offsets = [1, 9, 0], sizes = [16, 16, 8], strides = [1, 1, 1]} : vector<18x32x8xf32> to vector<16x16x8xf32>
    %39 = vector.extract_strided_slice %32 {offsets = [2, 7, 0], sizes = [16, 16, 8], strides = [1, 1, 1]} : vector<18x32x8xf32> to vector<16x16x8xf32>
    %40 = vector.extract_strided_slice %32 {offsets = [2, 8, 0], sizes = [16, 16, 8], strides = [1, 1, 1]} : vector<18x32x8xf32> to vector<16x16x8xf32>
    %41 = vector.extract_strided_slice %32 {offsets = [2, 9, 0], sizes = [16, 16, 8], strides = [1, 1, 1]} : vector<18x32x8xf32> to vector<16x16x8xf32>
    %42 = tpu.concatenate %33, %34, %35, %36, %37, %38, %39, %40, %41 in 2 : vector<16x16x8xf32>, vector<16x16x8xf32>, vector<16x16x8xf32>, vector<16x16x8xf32>, vector<16x16x8xf32>, vector<16x16x8xf32>, vector<16x16x8xf32>, vector<16x16x8xf32>, vector<16x16x8xf32> -> vector<16x16x72xf32>
    %43 = vector.shape_cast %42 : vector<16x16x72xf32> to vector<256x72xf32>
    %c1_27 = arith.constant 1 : index
    %c0_28 = arith.constant 0 : index
    %c0_29 = arith.constant 0 : index
    %44 = vector.load %arg2[%c1_27, %c0_28, %c0_29] : memref<5x72x8xf32, #tpu.memory_space<vmem>>, vector<1x72x8xf32>
    %45 = vector.shape_cast %44 : vector<1x72x8xf32> to vector<72x8xf32>
    %cst_30 = arith.constant dense<0.000000e+00> : vector<256x8xf32>
    %46 = tpu.matmul %43, %45, %cst_30 {dimension_numbers = #tpu.dot_dimension_numbers<[1], [0], [0], [1], [0, 0, 1, 1], [], []>} : vector<256x72xf32>, vector<72x8xf32>, vector<256x8xf32> -> vector<256x8xf32>
    %c1_31 = arith.constant 1 : index
    %c0_32 = arith.constant 0 : index
    %c0_33 = arith.constant 0 : index
    %47 = vector.load %arg3[%c1_31, %c0_32, %c0_33] : memref<5x1x8xf32, #tpu.memory_space<vmem>>, vector<1x1x8xf32>
    %48 = vector.shape_cast %47 : vector<1x1x8xf32> to vector<1x8xf32>
    %49 = vector.broadcast %48 : vector<1x8xf32> to vector<256x8xf32>
    %50 = arith.mulf %46, %49 : vector<256x8xf32>
    %c1_34 = arith.constant 1 : index
    %c0_35 = arith.constant 0 : index
    %c0_36 = arith.constant 0 : index
    %51 = vector.load %arg4[%c1_34, %c0_35, %c0_36] : memref<5x1x8xf32, #tpu.memory_space<vmem>>, vector<1x1x8xf32>
    %52 = vector.shape_cast %51 : vector<1x1x8xf32> to vector<1x8xf32>
    %53 = vector.broadcast %52 : vector<1x8xf32> to vector<256x8xf32>
    %54 = arith.addf %50, %53 : vector<256x8xf32>
    %cst_37 = arith.constant 0.000000e+00 : f32
    %55 = vector.broadcast %cst_37 : f32 to vector<256x8xf32>
    %56 = arith.maximumf %54, %55 : vector<256x8xf32>
    %57 = vector.shape_cast %56 : vector<256x8xf32> to vector<16x16x8xf32>
    %c1_38 = arith.constant 1 : index
    %c8_39 = arith.constant 8 : index
    %c0_40 = arith.constant 0 : index
    %58 = vector.load %arg6[%c1_38, %c8_39, %c0_40] : memref<18x32x8xf32, #tpu.memory_space<vmem>>, vector<16x16x8xf32>
    tpu.vector_store %arg6[%c1_38, %c8_39, %c0_40], %57 {strides = array<i32>} : memref<18x32x8xf32, #tpu.memory_space<vmem>>, vector<16x16x8xf32>,
    %c0_41 = arith.constant 0 : index
    %c0_42 = arith.constant 0 : index
    %c0_43 = arith.constant 0 : index
    %59 = vector.load %arg6[%c0_41, %c0_42, %c0_43] : memref<18x32x8xf32, #tpu.memory_space<vmem>>, vector<18x32x8xf32>
    %60 = vector.extract_strided_slice %59 {offsets = [0, 7, 0], sizes = [16, 16, 8], strides = [1, 1, 1]} : vector<18x32x8xf32> to vector<16x16x8xf32>
    %61 = vector.extract_strided_slice %59 {offsets = [0, 8, 0], sizes = [16, 16, 8], strides = [1, 1, 1]} : vector<18x32x8xf32> to vector<16x16x8xf32>
    %62 = vector.extract_strided_slice %59 {offsets = [0, 9, 0], sizes = [16, 16, 8], strides = [1, 1, 1]} : vector<18x32x8xf32> to vector<16x16x8xf32>
    %63 = vector.extract_strided_slice %59 {offsets = [1, 7, 0], sizes = [16, 16, 8], strides = [1, 1, 1]} : vector<18x32x8xf32> to vector<16x16x8xf32>
    %64 = vector.extract_strided_slice %59 {offsets = [1, 8, 0], sizes = [16, 16, 8], strides = [1, 1, 1]} : vector<18x32x8xf32> to vector<16x16x8xf32>
    %65 = vector.extract_strided_slice %59 {offsets = [1, 9, 0], sizes = [16, 16, 8], strides = [1, 1, 1]} : vector<18x32x8xf32> to vector<16x16x8xf32>
    %66 = vector.extract_strided_slice %59 {offsets = [2, 7, 0], sizes = [16, 16, 8], strides = [1, 1, 1]} : vector<18x32x8xf32> to vector<16x16x8xf32>
    %67 = vector.extract_strided_slice %59 {offsets = [2, 8, 0], sizes = [16, 16, 8], strides = [1, 1, 1]} : vector<18x32x8xf32> to vector<16x16x8xf32>
    %68 = vector.extract_strided_slice %59 {offsets = [2, 9, 0], sizes = [16, 16, 8], strides = [1, 1, 1]} : vector<18x32x8xf32> to vector<16x16x8xf32>
    %69 = tpu.concatenate %60, %61, %62, %63, %64, %65, %66, %67, %68 in 2 : vector<16x16x8xf32>, vector<16x16x8xf32>, vector<16x16x8xf32>, vector<16x16x8xf32>, vector<16x16x8xf32>, vector<16x16x8xf32>, vector<16x16x8xf32>, vector<16x16x8xf32>, vector<16x16x8xf32> -> vector<16x16x72xf32>
    %70 = vector.shape_cast %69 : vector<16x16x72xf32> to vector<256x72xf32>
    %c2 = arith.constant 2 : index
    %c0_44 = arith.constant 0 : index
    %c0_45 = arith.constant 0 : index
    %71 = vector.load %arg2[%c2, %c0_44, %c0_45] : memref<5x72x8xf32, #tpu.memory_space<vmem>>, vector<1x72x8xf32>
    %72 = vector.shape_cast %71 : vector<1x72x8xf32> to vector<72x8xf32>
    %cst_46 = arith.constant dense<0.000000e+00> : vector<256x8xf32>
    %73 = tpu.matmul %70, %72, %cst_46 {dimension_numbers = #tpu.dot_dimension_numbers<[1], [0], [0], [1], [0, 0, 1, 1], [], []>} : vector<256x72xf32>, vector<72x8xf32>, vector<256x8xf32> -> vector<256x8xf32>
    %c2_47 = arith.constant 2 : index
    %c0_48 = arith.constant 0 : index
    %c0_49 = arith.constant 0 : index
    %74 = vector.load %arg3[%c2_47, %c0_48, %c0_49] : memref<5x1x8xf32, #tpu.memory_space<vmem>>, vector<1x1x8xf32>
    %75 = vector.shape_cast %74 : vector<1x1x8xf32> to vector<1x8xf32>
    %76 = vector.broadcast %75 : vector<1x8xf32> to vector<256x8xf32>
    %77 = arith.mulf %73, %76 : vector<256x8xf32>
    %c2_50 = arith.constant 2 : index
    %c0_51 = arith.constant 0 : index
    %c0_52 = arith.constant 0 : index
    %78 = vector.load %arg4[%c2_50, %c0_51, %c0_52] : memref<5x1x8xf32, #tpu.memory_space<vmem>>, vector<1x1x8xf32>
    %79 = vector.shape_cast %78 : vector<1x1x8xf32> to vector<1x8xf32>
    %80 = vector.broadcast %79 : vector<1x8xf32> to vector<256x8xf32>
    %81 = arith.addf %77, %80 : vector<256x8xf32>
    %82 = arith.addf %81, %29 : vector<256x8xf32>
    %cst_53 = arith.constant 0.000000e+00 : f32
    %83 = vector.broadcast %cst_53 : f32 to vector<256x8xf32>
    %84 = arith.maximumf %82, %83 : vector<256x8xf32>
    %85 = vector.shape_cast %84 : vector<256x8xf32> to vector<16x16x8xf32>
    %c1_54 = arith.constant 1 : index
    %c8_55 = arith.constant 8 : index
    %c0_56 = arith.constant 0 : index
    %86 = vector.load %arg6[%c1_54, %c8_55, %c0_56] : memref<18x32x8xf32, #tpu.memory_space<vmem>>, vector<16x16x8xf32>
    tpu.vector_store %arg6[%c1_54, %c8_55, %c0_56], %85 {strides = array<i32>} : memref<18x32x8xf32, #tpu.memory_space<vmem>>, vector<16x16x8xf32>,
    %c0_57 = arith.constant 0 : index
    %c0_58 = arith.constant 0 : index
    %c0_59 = arith.constant 0 : index
    %87 = vector.load %arg6[%c0_57, %c0_58, %c0_59] : memref<18x32x8xf32, #tpu.memory_space<vmem>>, vector<18x32x8xf32>
    %88 = vector.extract_strided_slice %87 {offsets = [0, 7, 0], sizes = [16, 16, 8], strides = [1, 1, 1]} : vector<18x32x8xf32> to vector<16x16x8xf32>
    %89 = vector.extract_strided_slice %87 {offsets = [0, 8, 0], sizes = [16, 16, 8], strides = [1, 1, 1]} : vector<18x32x8xf32> to vector<16x16x8xf32>
    %90 = vector.extract_strided_slice %87 {offsets = [0, 9, 0], sizes = [16, 16, 8], strides = [1, 1, 1]} : vector<18x32x8xf32> to vector<16x16x8xf32>
    %91 = vector.extract_strided_slice %87 {offsets = [1, 7, 0], sizes = [16, 16, 8], strides = [1, 1, 1]} : vector<18x32x8xf32> to vector<16x16x8xf32>
    %92 = vector.extract_strided_slice %87 {offsets = [1, 8, 0], sizes = [16, 16, 8], strides = [1, 1, 1]} : vector<18x32x8xf32> to vector<16x16x8xf32>
    %93 = vector.extract_strided_slice %87 {offsets = [1, 9, 0], sizes = [16, 16, 8], strides = [1, 1, 1]} : vector<18x32x8xf32> to vector<16x16x8xf32>
    %94 = vector.extract_strided_slice %87 {offsets = [2, 7, 0], sizes = [16, 16, 8], strides = [1, 1, 1]} : vector<18x32x8xf32> to vector<16x16x8xf32>
    %95 = vector.extract_strided_slice %87 {offsets = [2, 8, 0], sizes = [16, 16, 8], strides = [1, 1, 1]} : vector<18x32x8xf32> to vector<16x16x8xf32>
    %96 = vector.extract_strided_slice %87 {offsets = [2, 9, 0], sizes = [16, 16, 8], strides = [1, 1, 1]} : vector<18x32x8xf32> to vector<16x16x8xf32>
    %97 = tpu.concatenate %88, %89, %90, %91, %92, %93, %94, %95, %96 in 2 : vector<16x16x8xf32>, vector<16x16x8xf32>, vector<16x16x8xf32>, vector<16x16x8xf32>, vector<16x16x8xf32>, vector<16x16x8xf32>, vector<16x16x8xf32>, vector<16x16x8xf32>, vector<16x16x8xf32> -> vector<16x16x72xf32>
    %98 = vector.shape_cast %97 : vector<16x16x72xf32> to vector<256x72xf32>
    %c3 = arith.constant 3 : index
    %c0_60 = arith.constant 0 : index
    %c0_61 = arith.constant 0 : index
    %99 = vector.load %arg2[%c3, %c0_60, %c0_61] : memref<5x72x8xf32, #tpu.memory_space<vmem>>, vector<1x72x8xf32>
    %100 = vector.shape_cast %99 : vector<1x72x8xf32> to vector<72x8xf32>
    %cst_62 = arith.constant dense<0.000000e+00> : vector<256x8xf32>
    %101 = tpu.matmul %98, %100, %cst_62 {dimension_numbers = #tpu.dot_dimension_numbers<[1], [0], [0], [1], [0, 0, 1, 1], [], []>} : vector<256x72xf32>, vector<72x8xf32>, vector<256x8xf32> -> vector<256x8xf32>
    %c3_63 = arith.constant 3 : index
    %c0_64 = arith.constant 0 : index
    %c0_65 = arith.constant 0 : index
    %102 = vector.load %arg3[%c3_63, %c0_64, %c0_65] : memref<5x1x8xf32, #tpu.memory_space<vmem>>, vector<1x1x8xf32>
    %103 = vector.shape_cast %102 : vector<1x1x8xf32> to vector<1x8xf32>
    %104 = vector.broadcast %103 : vector<1x8xf32> to vector<256x8xf32>
    %105 = arith.mulf %101, %104 : vector<256x8xf32>
    %c3_66 = arith.constant 3 : index
    %c0_67 = arith.constant 0 : index
    %c0_68 = arith.constant 0 : index
    %106 = vector.load %arg4[%c3_66, %c0_67, %c0_68] : memref<5x1x8xf32, #tpu.memory_space<vmem>>, vector<1x1x8xf32>
    %107 = vector.shape_cast %106 : vector<1x1x8xf32> to vector<1x8xf32>
    %108 = vector.broadcast %107 : vector<1x8xf32> to vector<256x8xf32>
    %109 = arith.addf %105, %108 : vector<256x8xf32>
    %cst_69 = arith.constant 0.000000e+00 : f32
    %110 = vector.broadcast %cst_69 : f32 to vector<256x8xf32>
    %111 = arith.maximumf %109, %110 : vector<256x8xf32>
    %112 = vector.shape_cast %111 : vector<256x8xf32> to vector<16x16x8xf32>
    %c1_70 = arith.constant 1 : index
    %c8_71 = arith.constant 8 : index
    %c0_72 = arith.constant 0 : index
    %113 = vector.load %arg6[%c1_70, %c8_71, %c0_72] : memref<18x32x8xf32, #tpu.memory_space<vmem>>, vector<16x16x8xf32>
    tpu.vector_store %arg6[%c1_70, %c8_71, %c0_72], %112 {strides = array<i32>} : memref<18x32x8xf32, #tpu.memory_space<vmem>>, vector<16x16x8xf32>,
    %c0_73 = arith.constant 0 : index
    %c0_74 = arith.constant 0 : index
    %c0_75 = arith.constant 0 : index
    %114 = vector.load %arg6[%c0_73, %c0_74, %c0_75] : memref<18x32x8xf32, #tpu.memory_space<vmem>>, vector<18x32x8xf32>
    %115 = vector.extract_strided_slice %114 {offsets = [0, 7, 0], sizes = [16, 16, 8], strides = [1, 1, 1]} : vector<18x32x8xf32> to vector<16x16x8xf32>
    %116 = vector.extract_strided_slice %114 {offsets = [0, 8, 0], sizes = [16, 16, 8], strides = [1, 1, 1]} : vector<18x32x8xf32> to vector<16x16x8xf32>
    %117 = vector.extract_strided_slice %114 {offsets = [0, 9, 0], sizes = [16, 16, 8], strides = [1, 1, 1]} : vector<18x32x8xf32> to vector<16x16x8xf32>
    %118 = vector.extract_strided_slice %114 {offsets = [1, 7, 0], sizes = [16, 16, 8], strides = [1, 1, 1]} : vector<18x32x8xf32> to vector<16x16x8xf32>
    %119 = vector.extract_strided_slice %114 {offsets = [1, 8, 0], sizes = [16, 16, 8], strides = [1, 1, 1]} : vector<18x32x8xf32> to vector<16x16x8xf32>
    %120 = vector.extract_strided_slice %114 {offsets = [1, 9, 0], sizes = [16, 16, 8], strides = [1, 1, 1]} : vector<18x32x8xf32> to vector<16x16x8xf32>
    %121 = vector.extract_strided_slice %114 {offsets = [2, 7, 0], sizes = [16, 16, 8], strides = [1, 1, 1]} : vector<18x32x8xf32> to vector<16x16x8xf32>
    %122 = vector.extract_strided_slice %114 {offsets = [2, 8, 0], sizes = [16, 16, 8], strides = [1, 1, 1]} : vector<18x32x8xf32> to vector<16x16x8xf32>
    %123 = vector.extract_strided_slice %114 {offsets = [2, 9, 0], sizes = [16, 16, 8], strides = [1, 1, 1]} : vector<18x32x8xf32> to vector<16x16x8xf32>
    %124 = tpu.concatenate %115, %116, %117, %118, %119, %120, %121, %122, %123 in 2 : vector<16x16x8xf32>, vector<16x16x8xf32>, vector<16x16x8xf32>, vector<16x16x8xf32>, vector<16x16x8xf32>, vector<16x16x8xf32>, vector<16x16x8xf32>, vector<16x16x8xf32>, vector<16x16x8xf32> -> vector<16x16x72xf32>
    %125 = vector.shape_cast %124 : vector<16x16x72xf32> to vector<256x72xf32>
    %c4 = arith.constant 4 : index
    %c0_76 = arith.constant 0 : index
    %c0_77 = arith.constant 0 : index
    %126 = vector.load %arg2[%c4, %c0_76, %c0_77] : memref<5x72x8xf32, #tpu.memory_space<vmem>>, vector<1x72x8xf32>
    %127 = vector.shape_cast %126 : vector<1x72x8xf32> to vector<72x8xf32>
    %cst_78 = arith.constant dense<0.000000e+00> : vector<256x8xf32>
    %128 = tpu.matmul %125, %127, %cst_78 {dimension_numbers = #tpu.dot_dimension_numbers<[1], [0], [0], [1], [0, 0, 1, 1], [], []>} : vector<256x72xf32>, vector<72x8xf32>, vector<256x8xf32> -> vector<256x8xf32>
    %c4_79 = arith.constant 4 : index
    %c0_80 = arith.constant 0 : index
    %c0_81 = arith.constant 0 : index
    %129 = vector.load %arg3[%c4_79, %c0_80, %c0_81] : memref<5x1x8xf32, #tpu.memory_space<vmem>>, vector<1x1x8xf32>
    %130 = vector.shape_cast %129 : vector<1x1x8xf32> to vector<1x8xf32>
    %131 = vector.broadcast %130 : vector<1x8xf32> to vector<256x8xf32>
    %132 = arith.mulf %128, %131 : vector<256x8xf32>
    %c4_82 = arith.constant 4 : index
    %c0_83 = arith.constant 0 : index
    %c0_84 = arith.constant 0 : index
    %133 = vector.load %arg4[%c4_82, %c0_83, %c0_84] : memref<5x1x8xf32, #tpu.memory_space<vmem>>, vector<1x1x8xf32>
    %134 = vector.shape_cast %133 : vector<1x1x8xf32> to vector<1x8xf32>
    %135 = vector.broadcast %134 : vector<1x8xf32> to vector<256x8xf32>
    %136 = arith.addf %132, %135 : vector<256x8xf32>
    %137 = arith.addf %136, %84 : vector<256x8xf32>
    %cst_85 = arith.constant 0.000000e+00 : f32
    %138 = vector.broadcast %cst_85 : f32 to vector<256x8xf32>
    %139 = arith.maximumf %137, %138 : vector<256x8xf32>
    %140 = vector.shape_cast %139 : vector<256x8xf32> to vector<16x16x8xf32>
    %141 = tpu.concatenate %140, %140 in 2 : vector<16x16x8xf32>, vector<16x16x8xf32> -> vector<16x16x16xf32>
    %c0_86 = arith.constant 0 : index
    %c0_87 = arith.constant 0 : index
    %c0_88 = arith.constant 0 : index
    %c0_89 = arith.constant 0 : index
    %c0_90 = arith.constant 0 : index
    %142 = vector.load %arg5[%c0_86, %c0_87, %c0_88, %c0_89, %c0_90] : memref<1x16x2x16x16xf32, #tpu.memory_space<vmem>>, vector<1x16x1x16x16xf32>
    %143 = vector.shape_cast %142 : vector<1x16x1x16x16xf32> to vector<16x16x16xf32>
    %144 = vector.shape_cast %141 : vector<16x16x16xf32> to vector<1x16x1x16x16xf32>
    tpu.vector_store %arg5[%c0_86, %c0_87, %c0_88, %c0_89, %c0_90], %144 {strides = array<i32>} : memref<1x16x2x16x16xf32, #tpu.memory_space<vmem>>, vector<1x16x1x16x16xf32>,
    %c0_91 = arith.constant 0 : index
    %c0_92 = arith.constant 0 : index
    %c1_93 = arith.constant 1 : index
    %c0_94 = arith.constant 0 : index
    %c0_95 = arith.constant 0 : index
    %145 = vector.load %arg5[%c0_91, %c0_92, %c1_93, %c0_94, %c0_95] : memref<1x16x2x16x16xf32, #tpu.memory_space<vmem>>, vector<1x16x1x16x16xf32>
    %146 = vector.shape_cast %145 : vector<1x16x1x16x16xf32> to vector<16x16x16xf32>
    %147 = vector.shape_cast %141 : vector<16x16x16xf32> to vector<1x16x1x16x16xf32>
    tpu.vector_store %arg5[%c0_91, %c0_92, %c1_93, %c0_94, %c0_95], %147 {strides = array<i32>} : memref<1x16x2x16x16xf32, #tpu.memory_space<vmem>>, vector<1x16x1x16x16xf32>,
    return
  }
  func.func @transform_0(%arg0: i32) -> (i32, i32, i32, i32) {
    %c0_i32 = arith.constant 0 : i32
    %c0_i32_0 = arith.constant 0 : i32
    %c0_i32_1 = arith.constant 0 : i32
    %c0_i32_2 = arith.constant 0 : i32
    return %arg0, %c0_i32, %c0_i32_0, %c0_i32_1 : i32, i32, i32, i32
  }
  func.func @transform_1(%arg0: i32) -> (i32, i32, i32) {
    %c0_i32 = arith.constant 0 : i32
    %c0_i32_0 = arith.constant 0 : i32
    %c0_i32_1 = arith.constant 0 : i32
    %c0_i32_2 = arith.constant 0 : i32
    return %c0_i32, %c0_i32_0, %c0_i32_1 : i32, i32, i32
  }
  func.func @transform_2(%arg0: i32) -> (i32, i32, i32) {
    %c0_i32 = arith.constant 0 : i32
    %c0_i32_0 = arith.constant 0 : i32
    %c0_i32_1 = arith.constant 0 : i32
    %c0_i32_2 = arith.constant 0 : i32
    return %c0_i32, %c0_i32_0, %c0_i32_1 : i32, i32, i32
  }
  func.func @transform_3(%arg0: i32) -> (i32, i32, i32) {
    %c0_i32 = arith.constant 0 : i32
    %c0_i32_0 = arith.constant 0 : i32
    %c0_i32_1 = arith.constant 0 : i32
    %c0_i32_2 = arith.constant 0 : i32
    return %c0_i32, %c0_i32_0, %c0_i32_1 : i32, i32, i32
  }
  func.func @transform_4(%arg0: i32) -> (i32, i32, i32, i32, i32) {
    %c0_i32 = arith.constant 0 : i32
    %c0_i32_0 = arith.constant 0 : i32
    %c0_i32_1 = arith.constant 0 : i32
    %c0_i32_2 = arith.constant 0 : i32
    %c0_i32_3 = arith.constant 0 : i32
    return %arg0, %c0_i32, %c0_i32_0, %c0_i32_1, %c0_i32_2 : i32, i32, i32, i32, i32
  }
}

</mosaic_0001>

<llo_original>
// kernel: tpu_custom_call.1
$region0: #{tpu_custom_call.1}
  #allocation0 [shape = 'u32[]', space=smem, size = 0x4, offset = 0x4, fixed_abs, tag = 'smem constant byte address 0x4 - core index']
  #allocation1 [shape = 'u32[72,128]{1,0:T(1,128)}', space=vmem, size = 0x9000, scoped, tag = 'internal scratch']
  #allocation2 [shape = 'f32[18,32,8]{2,1,0:T(8,128)}', space=vmem, size = 0x48000, scoped, tag = 'scratch operand']
  %s0 = inlined_call_operand.vmem [shape: f32[2,16,16,4], index: 0, kind: input, shape index: {}]
  %s1 = inlined_call_operand.vmem [shape: f32[5,72,8], index: 1, kind: input, shape index: {}]
  %s2 = inlined_call_operand.vmem [shape: f32[5,1,8], index: 2, kind: input, shape index: {}]
  %s3 = inlined_call_operand.vmem [shape: f32[5,1,8], index: 3, kind: input, shape index: {}]
  %s4 = inlined_call_operand.hbm [shape: f32[2,16,2,16,16], index: 4, kind: output, shape index: {}]
  %s5 = sld [smem:[#allocation0]]
  $region49: #{tpu_custom_call.1} parent=0
    _
  %s7 = ssub.s32 1, %s5
  %s8 = scalar_select 0, %s7, %s5
  $region1: #{tpu_custom_call.1} parent=0
    #allocation3 [shape = 'u8[524288]{0}', space=vmem, size = 0x80000, scoped, tag = 'output window, operand 0']
    #allocation4 [shape = 's32[2]{0}', space=sflag, size = 0x8, scoped, tag = 'scoped memory for tpu_custom_call.1']
    %9 = vsyncpa [#allocation4], 0
    %s10 = scalar_lea.sflag [#allocation4], 1
    %11 = vsyncpa %s10, 0
    loop: start=0, step=1, limit=4
    $region2: #{tpu_custom_call.1} parent=1 // loop_pre_header
      _
    $region3: #{tpu_custom_call.1} parent=1 // loop_header
      %s13 = sphi 0, %s17
      %p14 = scmp.ge.s32.totalorder %s13, 4
      %s23 = sphi 0, %s25
      %s26 = sphi 0, %s23
      %s27 = sphi 0, %s26
      %s43 = sphi 0, %s27
      %s47 = sphi 0, %s47
      %s49 = sphi 0, %s47
      %s50 = sphi 0, %s49
      %s64 = sphi 0, %s50
      %s68 = sphi 0, %s68
      %s70 = sphi 0, %s68
      %s71 = sphi 0, %s70
      %s85 = sphi 0, %s71
      %s89 = sphi 0, %s89
      %s91 = sphi 0, %s89
      %s92 = sphi 0, %s91
      %s106 = sphi 0, %s92
      %s112 = sphi 0, %s114
      %s115 = sphi 0, %s112
      %s116 = sphi 0, %s115
      %s132 = sphi 0, %s116
    $region4: #{tpu_custom_call.1} parent=1 // loop_header_branch
      %16 = sbr.rel (%p14) target = $region8
    $region5: #{tpu_custom_call.1} parent=1 // loop_body
      %s18 = ssub.s32 %s13, 1
      %s19 = ssub.s32 %s13, 2
      %s20 = sadd.s32 %s13, 1
      %s21 = ssub.s32 %s13, %s20
      %p22 = scmp.eq.s32.totalorder %s21, 0
      %s24 = sadd.s32 %s23, 1
      %s25 = scalar_select %p22, %s23, %s24
      %p28 = pneg %p22
      %p29 = scmp.eq.s32.totalorder %s13, 1
      %p30 = por %p28, %p29
      %p31 = scmp.ne.s32.totalorder %s23, %s26
      %p32 = scmp.eq.s32.totalorder %s13, 0
      %p33 = por %p31, %p32
      %p34 = scmp.ne.s32.totalorder %s23, %s26
      %p35 = scmp.eq.s32.totalorder %s18, 1
      %p36 = por %p34, %p35
      %p37 = scmp.ne.s32.totalorder %s26, %s27
      %p38 = scmp.eq.s32.totalorder %s18, 0
      %p39 = por %p37, %p38
      %p40 = scmp.ne.s32.totalorder %s26, %s27
      %p41 = scmp.eq.s32.totalorder %s19, 1
      %p42 = por %p40, %p41
      %p44 = scmp.ne.s32.totalorder %s27, %s43
      %p45 = scmp.eq.s32.totalorder %s19, 0
      %p46 = por %p44, %p45
      %s48 = sadd.s32 %s47, 1
      %p51 = scmp.eq.s32.totalorder %s13, 1
      %p52 = scmp.ne.s32.totalorder %s47, %s49
      %p53 = scmp.eq.s32.totalorder %s13, 0
      %p54 = por %p52, %p53
      %p55 = scmp.ne.s32.totalorder %s47, %s49
      %p56 = scmp.eq.s32.totalorder %s18, 1
      %p57 = por %p55, %p56
      %p58 = scmp.ne.s32.totalorder %s49, %s50
      %p59 = scmp.eq.s32.totalorder %s18, 0
      %p60 = por %p58, %p59
      %p61 = scmp.ne.s32.totalorder %s49, %s50
      %p62 = scmp.eq.s32.totalorder %s19, 1
      %p63 = por %p61, %p62
      %p65 = scmp.ne.s32.totalorder %s50, %s64
      %p66 = scmp.eq.s32.totalorder %s19, 0
      %p67 = por %p65, %p66
      %s69 = sadd.s32 %s68, 1
      %p72 = scmp.eq.s32.totalorder %s13, 1
      %p73 = scmp.ne.s32.totalorder %s68, %s70
      %p74 = scmp.eq.s32.totalorder %s13, 0
      %p75 = por %p73, %p74
      %p76 = scmp.ne.s32.totalorder %s68, %s70
      %p77 = scmp.eq.s32.totalorder %s18, 1
      %p78 = por %p76, %p77
      %p79 = scmp.ne.s32.totalorder %s70, %s71
      %p80 = scmp.eq.s32.totalorder %s18, 0
      %p81 = por %p79, %p80
      %p82 = scmp.ne.s32.totalorder %s70, %s71
      %p83 = scmp.eq.s32.totalorder %s19, 1
      %p84 = por %p82, %p83
      %p86 = scmp.ne.s32.totalorder %s71, %s85
      %p87 = scmp.eq.s32.totalorder %s19, 0
      %p88 = por %p86, %p87
      %s90 = sadd.s32 %s89, 1
      %p93 = scmp.eq.s32.totalorder %s13, 1
      %p94 = scmp.ne.s32.totalorder %s89, %s91
      %p95 = scmp.eq.s32.totalorder %s13, 0
      %p96 = por %p94, %p95
      %p97 = scmp.ne.s32.totalorder %s89, %s91
      %p98 = scmp.eq.s32.totalorder %s18, 1
      %p99 = por %p97, %p98
      %p100 = scmp.ne.s32.totalorder %s91, %s92
      %p101 = scmp.eq.s32.totalorder %s18, 0
      %p102 = por %p100, %p101
      %p103 = scmp.ne.s32.totalorder %s91, %s92
      %p104 = scmp.eq.s32.totalorder %s19, 1
      %p105 = por %p103, %p104
      %p107 = scmp.ne.s32.totalorder %s92, %s106
      %p108 = scmp.eq.s32.totalorder %s19, 0
      %p109 = por %p107, %p108
      %s110 = ssub.s32 %s13, %s20
      %p111 = scmp.eq.s32.totalorder %s110, 0
      %s113 = sadd.s32 %s112, 1
      %s114 = scalar_select %p111, %s112, %s113
      %p117 = pneg %p111
      %p118 = scmp.eq.s32.totalorder %s13, 1
      %p119 = por %p117, %p118
      %p120 = scmp.ne.s32.totalorder %s112, %s115
      %p121 = scmp.eq.s32.totalorder %s13, 0
      %p122 = por %p120, %p121
      %p123 = scmp.ne.s32.totalorder %s112, %s115
      %p124 = scmp.eq.s32.totalorder %s18, 1
      %p125 = por %p123, %p124
      %p126 = scmp.ne.s32.totalorder %s115, %s116
      %p127 = scmp.eq.s32.totalorder %s18, 0
      %p128 = por %p126, %p127
      %p129 = scmp.ne.s32.totalorder %s115, %s116
      %p130 = scmp.eq.s32.totalorder %s19, 1
      %p131 = por %p129, %p130
      %p133 = scmp.ne.s32.totalorder %s116, %s132
      %p134 = scmp.eq.s32.totalorder %s19, 0
      %p135 = por %p133, %p134
      %p136 = scmp.le.s32.totalorder 1, %s13
      %p137 = scmp.lt.s32.totalorder %s13, 3
      %p138 = pnand %p136, %p137
      %p139 = pneg %p138
      // Predicated region
      $region9: #{tpu_custom_call.1} parent=5 // pred_check
        _
      $region10: #{tpu_custom_call.1} parent=5 // pred_check_branch
        %141 = sbr.rel (%p138) target = $region12
      $region11: #{tpu_custom_call.1} parent=5 // pred_region
        %s142 = ssub.s32 %s13, 1
        // Predicated region
        $region13: #{tpu_custom_call.1} parent=11 // pred_check
          %p143 = pneg %p60
        $region14: #{tpu_custom_call.1} parent=11 // pred_check_branch
          %145 = sbr.rel (%p143) target = $region16
        $region15: #{tpu_custom_call.1} parent=11 // pred_region
          _
        $region16: #{tpu_custom_call.1} parent=11 // pred_fallthru
          _
        // Predicated region
        $region17: #{tpu_custom_call.1} parent=11 // pred_check
          %p146 = pneg %p81
        $region18: #{tpu_custom_call.1} parent=11 // pred_check_branch
          %148 = sbr.rel (%p146) target = $region20
        $region19: #{tpu_custom_call.1} parent=11 // pred_region
          _
        $region20: #{tpu_custom_call.1} parent=11 // pred_fallthru
          _
        // Predicated region
        $region21: #{tpu_custom_call.1} parent=11 // pred_check
          %p149 = pneg %p102
        $region22: #{tpu_custom_call.1} parent=11 // pred_check_branch
          %151 = sbr.rel (%p149) target = $region24
        $region23: #{tpu_custom_call.1} parent=11 // pred_region
          _
        $region24: #{tpu_custom_call.1} parent=11 // pred_fallthru
          _
      $region12: #{tpu_custom_call.1} parent=5 // pred_fallthru
        _
      %p152 = scmp.lt.s32.totalorder %s13, 2
      // Predicated region
      $region25: #{tpu_custom_call.1} parent=5 // pred_check
        %p153 = pneg %p152
      $region26: #{tpu_custom_call.1} parent=5 // pred_check_branch
        %155 = sbr.rel (%p153) target = $region28
      $region27: #{tpu_custom_call.1} parent=5 // pred_region
        // Predicated region
        $region29: #{tpu_custom_call.1} parent=27 // pred_check
          %p156 = pneg %p33
        $region30: #{tpu_custom_call.1} parent=27 // pred_check_branch
          %158 = sbr.rel (%p156) target = $region32
        $region31: #{tpu_custom_call.1} parent=27 // pred_region
          %p159 = scmp.lt.s32.totalorder %s13, 1
          %s160 = scalar_select %p159, %s13, 1
          %s161 = smul.addr %s160, 32
          %s162 = smul.addr %s161, 8
          %s163 = scalar_lea.vmem %s0, %s162
        $region32: #{tpu_custom_call.1} parent=27 // pred_fallthru
          _
      $region28: #{tpu_custom_call.1} parent=5 // pred_fallthru
        _
      %p164 = scmp.le.s32.totalorder 1, %s13
      %p165 = scmp.lt.s32.totalorder %s13, 3
      %p166 = pnand %p164, %p165
      %p167 = pneg %p166
      // Predicated region
      $region33: #{tpu_custom_call.1} parent=5 // pred_check
        _
      $region34: #{tpu_custom_call.1} parent=5 // pred_check_branch
        %169 = sbr.rel (%p166) target = $region36
      $region35: #{tpu_custom_call.1} parent=5 // pred_region
        %s170 = ssub.s32 %s13, 1
        %p171 = scmp.lt.s32.totalorder %s18, 1
        %s172 = scalar_select %p171, %s18, 1
        %s173 = smul.addr %s172, 32
        %s174 = smul.addr %s173, 8
        %s175 = scalar_lea.vmem %s0, %s174
        %p176 = pneg %p39
        %p177 = pneg %p36
        %p178 = pneg %p60
        %p179 = pneg %p57
        %p180 = pneg %p81
        %p181 = pneg %p78
        %p182 = pneg %p102
        %p183 = pneg %p99
        %p184 = pneg %p128
        %p185 = pneg %p125
        %s186 = sand.u32 %s115, 1
        %s187 = scalar_lea.sflag [#allocation4], %s186
        %s188 = sand.u32 %s115, 1
        %s189 = smul.addr %s188, 512
        %s190 = scalar_lea.vmem [#allocation3], %s189
        %p191 = scmp.lt.s32.totalorder %s18, 1
        %s192 = scalar_select %p191, %s18, 1
        %s193 = smul.addr %s192, 32
        %s194 = smul.addr %s193, 8
        %s195 = scalar_lea.vmem %s0, %s194
        %vm196 = vcmask 64512
        %197 = vst.msk [vmem:[#allocation2] sm:$0xff] %vm196, 0.0
        %198 = vst.msk [vmem:[#allocation2 + $0x8] sm:$0xff] %vm196, 0.0
        %199 = vst.msk [vmem:[#allocation2 + $0x10] sm:$0xff] %vm196, 0.0
        %200 = vst.msk [vmem:[#allocation2 + $0x18] sm:$0xff] %vm196, 0.0
        %201 = vst.msk [vmem:[#allocation2 + $0x20] sm:$0xff] %vm196, 0.0
        %202 = vst.msk [vmem:[#allocation2 + $0x28] sm:$0xff] %vm196, 0.0
        %203 = vst.msk [vmem:[#allocation2 + $0x30] sm:$0xff] %vm196, 0.0
        %204 = vst.msk [vmem:[#allocation2 + $0x38] sm:$0xff] %vm196, 0.0
        %205 = vst.msk [vmem:[#allocation2 + $0x40] sm:$0xff] %vm196, 0.0
        %206 = vst.msk [vmem:[#allocation2 + $0x48] sm:$0xff] %vm196, 0.0
        %207 = vst.msk [vmem:[#allocation2 + $0x50] sm:$0xff] %vm196, 0.0
        %208 = vst.msk [vmem:[#allocation2 + $0x58] sm:$0xff] %vm196, 0.0
        %209 = vst.msk [vmem:[#allocation2 + $0x60] sm:$0xff] %vm196, 0.0
        %210 = vst.msk [vmem:[#allocation2 + $0x68] sm:$0xff] %vm196, 0.0
        %211 = vst.msk [vmem:[#allocation2 + $0x70] sm:$0xff] %vm196, 0.0
        %212 = vst.msk [vmem:[#allocation2 + $0x78] sm:$0xff] %vm196, 0.0
        %213 = vst.msk [vmem:[#allocation2 + $0x80] sm:$0xff] %vm196, 0.0
        %214 = vst.msk [vmem:[#allocation2 + $0x88] sm:$0xff] %vm196, 0.0
        %215 = vst.msk [vmem:[#allocation2 + $0x90] sm:$0xff] %vm196, 0.0
        %216 = vst.msk [vmem:[#allocation2 + $0x98] sm:$0xff] %vm196, 0.0
        %217 = vst.msk [vmem:[#allocation2 + $0xa0] sm:$0xff] %vm196, 0.0
        %218 = vst.msk [vmem:[#allocation2 + $0xa8] sm:$0xff] %vm196, 0.0
        %219 = vst.msk [vmem:[#allocation2 + $0xb0] sm:$0xff] %vm196, 0.0
        %220 = vst.msk [vmem:[#allocation2 + $0xb8] sm:$0xff] %vm196, 0.0
        %221 = vst.msk [vmem:[#allocation2 + $0xc0] sm:$0xff] %vm196, 0.0
        %222 = vst.msk [vmem:[#allocation2 + $0xc8] sm:$0xff] %vm196, 0.0
        %223 = vst.msk [vmem:[#allocation2 + $0xd0] sm:$0xff] %vm196, 0.0
        %224 = vst.msk [vmem:[#allocation2 + $0xd8] sm:$0xff] %vm196, 0.0
        %225 = vst.msk [vmem:[#allocation2 + $0xe0] sm:$0xff] %vm196, 0.0
        %226 = vst.msk [vmem:[#allocation2 + $0xe8] sm:$0xff] %vm196, 0.0
        %227 = vst.msk [vmem:[#allocation2 + $0xf0] sm:$0xff] %vm196, 0.0
        %228 = vst.msk [vmem:[#allocation2 + $0xf8] sm:$0xff] %vm196, 0.0
        %229 = vst.msk [vmem:[#allocation2 + $0x100] sm:$0xff] %vm196, 0.0
        %230 = vst.msk [vmem:[#allocation2 + $0x108] sm:$0xff] %vm196, 0.0
        %231 = vst.msk [vmem:[#allocation2 + $0x110] sm:$0xff] %vm196, 0.0
        %232 = vst.msk [vmem:[#allocation2 + $0x118] sm:$0xff] %vm196, 0.0
        %233 = vst.msk [vmem:[#allocation2 + $0x120] sm:$0xff] %vm196, 0.0
        %234 = vst.msk [vmem:[#allocation2 + $0x128] sm:$0xff] %vm196, 0.0
        %235 = vst.msk [vmem:[#allocation2 + $0x130] sm:$0xff] %vm196, 0.0
        %236 = vst.msk [vmem:[#allocation2 + $0x138] sm:$0xff] %vm196, 0.0
        %237 = vst.msk [vmem:[#allocation2 + $0x140] sm:$0xff] %vm196, 0.0
        %238 = vst.msk [vmem:[#allocation2 + $0x148] sm:$0xff] %vm196, 0.0
        %239 = vst.msk [vmem:[#allocation2 + $0x150] sm:$0xff] %vm196, 0.0
        %240 = vst.msk [vmem:[#allocation2 + $0x158] sm:$0xff] %vm196, 0.0
        %241 = vst.msk [vmem:[#allocation2 + $0x160] sm:$0xff] %vm196, 0.0
        %242 = vst.msk [vmem:[#allocation2 + $0x168] sm:$0xff] %vm196, 0.0
        %243 = vst.msk [vmem:[#allocation2 + $0x170] sm:$0xff] %vm196, 0.0
        %244 = vst.msk [vmem:[#allocation2 + $0x178] sm:$0xff] %vm196, 0.0
        %245 = vst.msk [vmem:[#allocation2 + $0x180] sm:$0xff] %vm196, 0.0
        %246 = vst.msk [vmem:[#allocation2 + $0x188] sm:$0xff] %vm196, 0.0
        %247 = vst.msk [vmem:[#allocation2 + $0x190] sm:$0xff] %vm196, 0.0
        %248 = vst.msk [vmem:[#allocation2 + $0x198] sm:$0xff] %vm196, 0.0
        %249 = vst.msk [vmem:[#allocation2 + $0x1a0] sm:$0xff] %vm196, 0.0
        %250 = vst.msk [vmem:[#allocation2 + $0x1a8] sm:$0xff] %vm196, 0.0
        %251 = vst.msk [vmem:[#allocation2 + $0x1b0] sm:$0xff] %vm196, 0.0
        %252 = vst.msk [vmem:[#allocation2 + $0x1b8] sm:$0xff] %vm196, 0.0
        %253 = vst.msk [vmem:[#allocation2 + $0x1c0] sm:$0xff] %vm196, 0.0
        %254 = vst.msk [vmem:[#allocation2 + $0x1c8] sm:$0xff] %vm196, 0.0
        %255 = vst.msk [vmem:[#allocation2 + $0x1d0] sm:$0xff] %vm196, 0.0
        %256 = vst.msk [vmem:[#allocation2 + $0x1d8] sm:$0xff] %vm196, 0.0
        %257 = vst.msk [vmem:[#allocation2 + $0x1e0] sm:$0xff] %vm196, 0.0
        %258 = vst.msk [vmem:[#allocation2 + $0x1e8] sm:$0xff] %vm196, 0.0
        %259 = vst.msk [vmem:[#allocation2 + $0x1f0] sm:$0xff] %vm196, 0.0
        %260 = vst.msk [vmem:[#allocation2 + $0x1f8] sm:$0xff] %vm196, 0.0
        %261 = vst.msk [vmem:[#allocation2 + $0x200] sm:$0xff] %vm196, 0.0
        %262 = vst.msk [vmem:[#allocation2 + $0x208] sm:$0xff] %vm196, 0.0
        %263 = vst.msk [vmem:[#allocation2 + $0x210] sm:$0xff] %vm196, 0.0
        %264 = vst.msk [vmem:[#allocation2 + $0x218] sm:$0xff] %vm196, 0.0
        %265 = vst.msk [vmem:[#allocation2 + $0x220] sm:$0xff] %vm196, 0.0
        %266 = vst.msk [vmem:[#allocation2 + $0x228] sm:$0xff] %vm196, 0.0
        %267 = vst.msk [vmem:[#allocation2 + $0x230] sm:$0xff] %vm196, 0.0
        %268 = vst.msk [vmem:[#allocation2 + $0x238] sm:$0xff] %vm196, 0.0
        %v269 = vld [vmem:[%s195] sm:$0xff]
        %v270 = vld [vmem:[%s195 + $0x8] sm:$0xff]
        %v271 = vld [vmem:[%s195 + $0x10] sm:$0xff]
        %v272 = vld [vmem:[%s195 + $0x18] sm:$0xff]
        %v273 = vld [vmem:[%s195 + $0x20] sm:$0xff]
        %v274 = vld [vmem:[%s195 + $0x28] sm:$0xff]
        %v275 = vld [vmem:[%s195 + $0x30] sm:$0xff]
        %v276 = vld [vmem:[%s195 + $0x38] sm:$0xff]
        %v277 = vld [vmem:[%s195 + $0x40] sm:$0xff]
        %v278 = vld [vmem:[%s195 + $0x48] sm:$0xff]
        %v279 = vld [vmem:[%s195 + $0x50] sm:$0xff]
        %v280 = vld [vmem:[%s195 + $0x58] sm:$0xff]
        %v281 = vld [vmem:[%s195 + $0x60] sm:$0xff]
        %v282 = vld [vmem:[%s195 + $0x68] sm:$0xff]
        %v283 = vld [vmem:[%s195 + $0x70] sm:$0xff]
        %v284 = vld [vmem:[%s195 + $0x78] sm:$0xff]
        %v285 = vld [vmem:[%s195 + $0x80] sm:$0xff]
        %v286 = vld [vmem:[%s195 + $0x88] sm:$0xff]
        %v287 = vld [vmem:[%s195 + $0x90] sm:$0xff]
        %v288 = vld [vmem:[%s195 + $0x98] sm:$0xff]
        %v289 = vld [vmem:[%s195 + $0xa0] sm:$0xff]
        %v290 = vld [vmem:[%s195 + $0xa8] sm:$0xff]
        %v291 = vld [vmem:[%s195 + $0xb0] sm:$0xff]
        %v292 = vld [vmem:[%s195 + $0xb8] sm:$0xff]
        %v293 = vld [vmem:[%s195 + $0xc0] sm:$0xff]
        %v294 = vld [vmem:[%s195 + $0xc8] sm:$0xff]
        %v295 = vld [vmem:[%s195 + $0xd0] sm:$0xff]
        %v296 = vld [vmem:[%s195 + $0xd8] sm:$0xff]
        %v297 = vld [vmem:[%s195 + $0xe0] sm:$0xff]
        %v298 = vld [vmem:[%s195 + $0xe8] sm:$0xff]
        %v299 = vld [vmem:[%s195 + $0xf0] sm:$0xff]
        %v300 = vld [vmem:[%s195 + $0xf8] sm:$0xff]
        %s301 = scalar_lea.vmem [#allocation2], 32
        %vm302 = vcmask 31744
        %303 = vst.msk [vmem:[%s301 + $0x8] sm:$0xff] %vm302, %v269
        %304 = vst.msk [vmem:[%s301 + $0x10] sm:$0xff] %vm302, %v270
        %305 = vst.msk [vmem:[%s301 + $0x28] sm:$0xff] %vm302, %v271
        %306 = vst.msk [vmem:[%s301 + $0x30] sm:$0xff] %vm302, %v272
        %307 = vst.msk [vmem:[%s301 + $0x48] sm:$0xff] %vm302, %v273
        %308 = vst.msk [vmem:[%s301 + $0x50] sm:$0xff] %vm302, %v274
        %309 = vst.msk [vmem:[%s301 + $0x68] sm:$0xff] %vm302, %v275
        %310 = vst.msk [vmem:[%s301 + $0x70] sm:$0xff] %vm302, %v276
        %311 = vst.msk [vmem:[%s301 + $0x88] sm:$0xff] %vm302, %v277
        %312 = vst.msk [vmem:[%s301 + $0x90] sm:$0xff] %vm302, %v278
        %313 = vst.msk [vmem:[%s301 + $0xa8] sm:$0xff] %vm302, %v279
        %314 = vst.msk [vmem:[%s301 + $0xb0] sm:$0xff] %vm302, %v280
        %315 = vst.msk [vmem:[%s301 + $0xc8] sm:$0xff] %vm302, %v281
        %316 = vst.msk [vmem:[%s301 + $0xd0] sm:$0xff] %vm302, %v282
        %317 = vst.msk [vmem:[%s301 + $0xe8] sm:$0xff] %vm302, %v283
        %318 = vst.msk [vmem:[%s301 + $0xf0] sm:$0xff] %vm302, %v284
        %319 = vst.msk [vmem:[%s301 + $0x108] sm:$0xff] %vm302, %v285
        %320 = vst.msk [vmem:[%s301 + $0x110] sm:$0xff] %vm302, %v286
        %321 = vst.msk [vmem:[%s301 + $0x128] sm:$0xff] %vm302, %v287
        %322 = vst.msk [vmem:[%s301 + $0x130] sm:$0xff] %vm302, %v288
        %323 = vst.msk [vmem:[%s301 + $0x148] sm:$0xff] %vm302, %v289
        %324 = vst.msk [vmem:[%s301 + $0x150] sm:$0xff] %vm302, %v290
        %325 = vst.msk [vmem:[%s301 + $0x168] sm:$0xff] %vm302, %v291
        %326 = vst.msk [vmem:[%s301 + $0x170] sm:$0xff] %vm302, %v292
        %327 = vst.msk [vmem:[%s301 + $0x188] sm:$0xff] %vm302, %v293
        %328 = vst.msk [vmem:[%s301 + $0x190] sm:$0xff] %vm302, %v294
        %329 = vst.msk [vmem:[%s301 + $0x1a8] sm:$0xff] %vm302, %v295
        %330 = vst.msk [vmem:[%s301 + $0x1b0] sm:$0xff] %vm302, %v296
        %331 = vst.msk [vmem:[%s301 + $0x1c8] sm:$0xff] %vm302, %v297
        %332 = vst.msk [vmem:[%s301 + $0x1d0] sm:$0xff] %vm302, %v298
        %333 = vst.msk [vmem:[%s301 + $0x1e8] sm:$0xff] %vm302, %v299
        %334 = vst.msk [vmem:[%s301 + $0x1f0] sm:$0xff] %vm302, %v300
        %v335 = vld [vmem:[#allocation2] sm:$0xff]
        %v336 = vld [vmem:[#allocation2 + $0x8] sm:$0xff]
        %v337 = vld [vmem:[#allocation2 + $0x10] sm:$0xff]
        %v338 = vld [vmem:[#allocation2 + $0x18] sm:$0xff]
        %v339 = vld [vmem:[#allocation2 + $0x20] sm:$0xff]
        %v340 = vld [vmem:[#allocation2 + $0x28] sm:$0xff]
        %v341 = vld [vmem:[#allocation2 + $0x30] sm:$0xff]
        %v342 = vld [vmem:[#allocation2 + $0x38] sm:$0xff]
        %v343 = vld [vmem:[#allocation2 + $0x40] sm:$0xff]
        %v344 = vld [vmem:[#allocation2 + $0x48] sm:$0xff]
        %v345 = vld [vmem:[#allocation2 + $0x50] sm:$0xff]
        %v346 = vld [vmem:[#allocation2 + $0x58] sm:$0xff]
        %v347 = vld [vmem:[#allocation2 + $0x60] sm:$0xff]
        %v348 = vld [vmem:[#allocation2 + $0x68] sm:$0xff]
        %v349 = vld [vmem:[#allocation2 + $0x70] sm:$0xff]
        %v350 = vld [vmem:[#allocation2 + $0x78] sm:$0xff]
        %v351 = vld [vmem:[#allocation2 + $0x80] sm:$0xff]
        %v352 = vld [vmem:[#allocation2 + $0x88] sm:$0xff]
        %v353 = vld [vmem:[#allocation2 + $0x90] sm:$0xff]
        %v354 = vld [vmem:[#allocation2 + $0x98] sm:$0xff]
        %v355 = vld [vmem:[#allocation2 + $0xa0] sm:$0xff]
        %v356 = vld [vmem:[#allocation2 + $0xa8] sm:$0xff]
        %v357 = vld [vmem:[#allocation2 + $0xb0] sm:$0xff]
        %v358 = vld [vmem:[#allocation2 + $0xb8] sm:$0xff]
        %v359 = vld [vmem:[#allocation2 + $0xc0] sm:$0xff]
        %v360 = vld [vmem:[#allocation2 + $0xc8] sm:$0xff]
        %v361 = vld [vmem:[#allocation2 + $0xd0] sm:$0xff]
        %v362 = vld [vmem:[#allocation2 + $0xd8] sm:$0xff]
        %v363 = vld [vmem:[#allocation2 + $0xe0] sm:$0xff]
        %v364 = vld [vmem:[#allocation2 + $0xe8] sm:$0xff]
        %v365 = vld [vmem:[#allocation2 + $0xf0] sm:$0xff]
        %v366 = vld [vmem:[#allocation2 + $0xf8] sm:$0xff]
        %v367 = vld [vmem:[#allocation2 + $0x100] sm:$0xff]
        %v368 = vld [vmem:[#allocation2 + $0x108] sm:$0xff]
        %v369 = vld [vmem:[#allocation2 + $0x110] sm:$0xff]
        %v370 = vld [vmem:[#allocation2 + $0x118] sm:$0xff]
        %v371 = vld [vmem:[#allocation2 + $0x120] sm:$0xff]
        %v372 = vld [vmem:[#allocation2 + $0x128] sm:$0xff]
        %v373 = vld [vmem:[#allocation2 + $0x130] sm:$0xff]
        %v374 = vld [vmem:[#allocation2 + $0x138] sm:$0xff]
        %v375 = vld [vmem:[#allocation2 + $0x140] sm:$0xff]
        %v376 = vld [vmem:[#allocation2 + $0x148] sm:$0xff]
        %v377 = vld [vmem:[#allocation2 + $0x150] sm:$0xff]
        %v378 = vld [vmem:[#allocation2 + $0x158] sm:$0xff]
        %v379 = vld [vmem:[#allocation2 + $0x160] sm:$0xff]
        %v380 = vld [vmem:[#allocation2 + $0x168] sm:$0xff]
        %v381 = vld [vmem:[#allocation2 + $0x170] sm:$0xff]
        %v382 = vld [vmem:[#allocation2 + $0x178] sm:$0xff]
        %v383 = vld [vmem:[#allocation2 + $0x180] sm:$0xff]
        %v384 = vld [vmem:[#allocation2 + $0x188] sm:$0xff]
        %v385 = vld [vmem:[#allocation2 + $0x190] sm:$0xff]
        %v386 = vld [vmem:[#allocation2 + $0x198] sm:$0xff]
        %v387 = vld [vmem:[#allocation2 + $0x1a0] sm:$0xff]
        %v388 = vld [vmem:[#allocation2 + $0x1a8] sm:$0xff]
        %v389 = vld [vmem:[#allocation2 + $0x1b0] sm:$0xff]
        %v390 = vld [vmem:[#allocation2 + $0x1b8] sm:$0xff]
        %v391 = vld [vmem:[#allocation2 + $0x1c0] sm:$0xff]
        %v392 = vld [vmem:[#allocation2 + $0x1c8] sm:$0xff]
        %v393 = vld [vmem:[#allocation2 + $0x1d0] sm:$0xff]
        %v394 = vld [vmem:[#allocation2 + $0x1d8] sm:$0xff]
        %v395 = vld [vmem:[#allocation2 + $0x1e0] sm:$0xff]
        %v396 = vld [vmem:[#allocation2 + $0x1e8] sm:$0xff]
        %v397 = vld [vmem:[#allocation2 + $0x1f0] sm:$0xff]
        %v398 = vld [vmem:[#allocation2 + $0x1f8] sm:$0xff]
        %v399 = vld [vmem:[#allocation2 + $0x200] sm:$0xff]
        %v400 = vld [vmem:[#allocation2 + $0x208] sm:$0xff]
        %v401 = vld [vmem:[#allocation2 + $0x210] sm:$0xff]
        %v402 = vld [vmem:[#allocation2 + $0x218] sm:$0xff]
        %v403 = vld [vmem:[#allocation2 + $0x220] sm:$0xff]
        %v404 = vld [vmem:[#allocation2 + $0x228] sm:$0xff]
        %v405 = vld [vmem:[#allocation2 + $0x230] sm:$0xff]
        %v406 = vld [vmem:[#allocation2 + $0x238] sm:$0xff]
        %vm439 = vcmask 1046528
        %v440 = vrot.slane %v336, 1
        %v441 = vrot.slane %v337, 1
        %v442 = vsel %vm439, %v440, %v441
        %v443 = vrot.slane %v340, 1
        %v444 = vrot.slane %v341, 1
        %v445 = vsel %vm439, %v443, %v444
        %v446 = vrot.slane %v344, 1
        %v447 = vrot.slane %v345, 1
        %v448 = vsel %vm439, %v446, %v447
        %v449 = vrot.slane %v348, 1
        %v450 = vrot.slane %v349, 1
        %v451 = vsel %vm439, %v449, %v450
        %v452 = vrot.slane %v352, 1
        %v453 = vrot.slane %v353, 1
        %v454 = vsel %vm439, %v452, %v453
        %v455 = vrot.slane %v356, 1
        %v456 = vrot.slane %v357, 1
        %v457 = vsel %vm439, %v455, %v456
        %v458 = vrot.slane %v360, 1
        %v459 = vrot.slane %v361, 1
        %v460 = vsel %vm439, %v458, %v459
        %v461 = vrot.slane %v364, 1
        %v462 = vrot.slane %v365, 1
        %v463 = vsel %vm439, %v461, %v462
        %v464 = vrot.slane %v368, 1
        %v465 = vrot.slane %v369, 1
        %v466 = vsel %vm439, %v464, %v465
        %v467 = vrot.slane %v372, 1
        %v468 = vrot.slane %v373, 1
        %v469 = vsel %vm439, %v467, %v468
        %v470 = vrot.slane %v376, 1
        %v471 = vrot.slane %v377, 1
        %v472 = vsel %vm439, %v470, %v471
        %v473 = vrot.slane %v380, 1
        %v474 = vrot.slane %v381, 1
        %v475 = vsel %vm439, %v473, %v474
        %v476 = vrot.slane %v384, 1
        %v477 = vrot.slane %v385, 1
        %v478 = vsel %vm439, %v476, %v477
        %v479 = vrot.slane %v388, 1
        %v480 = vrot.slane %v389, 1
        %v481 = vsel %vm439, %v479, %v480
        %v482 = vrot.slane %v392, 1
        %v483 = vrot.slane %v393, 1
        %v484 = vsel %vm439, %v482, %v483
        %v485 = vrot.slane %v396, 1
        %v486 = vrot.slane %v397, 1
        %v487 = vsel %vm439, %v485, %v486
        %488 = vrot.lane.b32.xlu0 %v440, 8
        %v489 = vpop.permute.xlu0 %488
        %490 = vrot.lane.b32.xlu0 %v442, 8
        %v491 = vpop.permute.xlu0 %490
        %492 = vrot.lane.b32.xlu0 %v441, 8
        %v493 = vpop.permute.xlu0 %492
        %494 = vrot.lane.b32.xlu0 %v443, 8
        %v495 = vpop.permute.xlu0 %494
        %496 = vrot.lane.b32.xlu0 %v445, 8
        %v497 = vpop.permute.xlu0 %496
        %498 = vrot.lane.b32.xlu0 %v444, 8
        %v499 = vpop.permute.xlu0 %498
        %500 = vrot.lane.b32.xlu0 %v446, 8
        %v501 = vpop.permute.xlu0 %500
        %502 = vrot.lane.b32.xlu0 %v448, 8
        %v503 = vpop.permute.xlu0 %502
        %504 = vrot.lane.b32.xlu0 %v447, 8
        %v505 = vpop.permute.xlu0 %504
        %506 = vrot.lane.b32.xlu0 %v449, 8
        %v507 = vpop.permute.xlu0 %506
        %508 = vrot.lane.b32.xlu0 %v451, 8
        %v509 = vpop.permute.xlu0 %508
        %510 = vrot.lane.b32.xlu0 %v450, 8
        %v511 = vpop.permute.xlu0 %510
        %512 = vrot.lane.b32.xlu0 %v452, 8
        %v513 = vpop.permute.xlu0 %512
        %514 = vrot.lane.b32.xlu0 %v454, 8
        %v515 = vpop.permute.xlu0 %514
        %516 = vrot.lane.b32.xlu0 %v453, 8
        %v517 = vpop.permute.xlu0 %516
        %518 = vrot.lane.b32.xlu0 %v455, 8
        %v519 = vpop.permute.xlu0 %518
        %520 = vrot.lane.b32.xlu0 %v457, 8
        %v521 = vpop.permute.xlu0 %520
        %522 = vrot.lane.b32.xlu0 %v456, 8
        %v523 = vpop.permute.xlu0 %522
        %524 = vrot.lane.b32.xlu0 %v458, 8
        %v525 = vpop.permute.xlu0 %524
        %526 = vrot.lane.b32.xlu0 %v460, 8
        %v527 = vpop.permute.xlu0 %526
        %528 = vrot.lane.b32.xlu0 %v459, 8
        %v529 = vpop.permute.xlu0 %528
        %530 = vrot.lane.b32.xlu0 %v461, 8
        %v531 = vpop.permute.xlu0 %530
        %532 = vrot.lane.b32.xlu0 %v463, 8
        %v533 = vpop.permute.xlu0 %532
        %534 = vrot.lane.b32.xlu0 %v462, 8
        %v535 = vpop.permute.xlu0 %534
        %536 = vrot.lane.b32.xlu0 %v464, 8
        %v537 = vpop.permute.xlu0 %536
        %538 = vrot.lane.b32.xlu0 %v466, 8
        %v539 = vpop.permute.xlu0 %538
        %540 = vrot.lane.b32.xlu0 %v465, 8
        %v541 = vpop.permute.xlu0 %540
        %542 = vrot.lane.b32.xlu0 %v467, 8
        %v543 = vpop.permute.xlu0 %542
        %544 = vrot.lane.b32.xlu0 %v469, 8
        %v545 = vpop.permute.xlu0 %544
        %546 = vrot.lane.b32.xlu0 %v468, 8
        %v547 = vpop.permute.xlu0 %546
        %548 = vrot.lane.b32.xlu0 %v470, 8
        %v549 = vpop.permute.xlu0 %548
        %550 = vrot.lane.b32.xlu0 %v472, 8
        %v551 = vpop.permute.xlu0 %550
        %552 = vrot.lane.b32.xlu0 %v471, 8
        %v553 = vpop.permute.xlu0 %552
        %554 = vrot.lane.b32.xlu0 %v473, 8
        %v555 = vpop.permute.xlu0 %554
        %556 = vrot.lane.b32.xlu0 %v475, 8
        %v557 = vpop.permute.xlu0 %556
        %558 = vrot.lane.b32.xlu0 %v474, 8
        %v559 = vpop.permute.xlu0 %558
        %560 = vrot.lane.b32.xlu0 %v476, 8
        %v561 = vpop.permute.xlu0 %560
        %562 = vrot.lane.b32.xlu0 %v478, 8
        %v563 = vpop.permute.xlu0 %562
        %564 = vrot.lane.b32.xlu0 %v477, 8
        %v565 = vpop.permute.xlu0 %564
        %566 = vrot.lane.b32.xlu0 %v479, 8
        %v567 = vpop.permute.xlu0 %566
        %568 = vrot.lane.b32.xlu0 %v481, 8
        %v569 = vpop.permute.xlu0 %568
        %570 = vrot.lane.b32.xlu0 %v480, 8
        %v571 = vpop.permute.xlu0 %570
        %572 = vrot.lane.b32.xlu0 %v482, 8
        %v573 = vpop.permute.xlu0 %572
        %574 = vrot.lane.b32.xlu0 %v484, 8
        %v575 = vpop.permute.xlu0 %574
        %576 = vrot.lane.b32.xlu0 %v483, 8
        %v577 = vpop.permute.xlu0 %576
        %578 = vrot.lane.b32.xlu0 %v485, 8
        %v579 = vpop.permute.xlu0 %578
        %580 = vrot.lane.b32.xlu0 %v487, 8
        %v581 = vpop.permute.xlu0 %580
        %582 = vrot.lane.b32.xlu0 %v486, 8
        %v583 = vpop.permute.xlu0 %582
        %vm648 = vcmask 1045504
        %v649 = vrot.slane %v336, 2
        %v650 = vrot.slane %v337, 2
        %v651 = vsel %vm648, %v649, %v650
        %v652 = vrot.slane %v338, 2
        %v653 = vsel %vm648, %v650, %v652
        %v654 = vrot.slane %v340, 2
        %v655 = vrot.slane %v341, 2
        %v656 = vsel %vm648, %v654, %v655
        %v657 = vrot.slane %v342, 2
        %v658 = vsel %vm648, %v655, %v657
        %v659 = vrot.slane %v344, 2
        %v660 = vrot.slane %v345, 2
        %v661 = vsel %vm648, %v659, %v660
        %v662 = vrot.slane %v346, 2
        %v663 = vsel %vm648, %v660, %v662
        %v664 = vrot.slane %v348, 2
        %v665 = vrot.slane %v349, 2
        %v666 = vsel %vm648, %v664, %v665
        %v667 = vrot.slane %v350, 2
        %v668 = vsel %vm648, %v665, %v667
        %v669 = vrot.slane %v352, 2
        %v670 = vrot.slane %v353, 2
        %v671 = vsel %vm648, %v669, %v670
        %v672 = vrot.slane %v354, 2
        %v673 = vsel %vm648, %v670, %v672
        %v674 = vrot.slane %v356, 2
        %v675 = vrot.slane %v357, 2
        %v676 = vsel %vm648, %v674, %v675
        %v677 = vrot.slane %v358, 2
        %v678 = vsel %vm648, %v675, %v677
        %v679 = vrot.slane %v360, 2
        %v680 = vrot.slane %v361, 2
        %v681 = vsel %vm648, %v679, %v680
        %v682 = vrot.slane %v362, 2
        %v683 = vsel %vm648, %v680, %v682
        %v684 = vrot.slane %v364, 2
        %v685 = vrot.slane %v365, 2
        %v686 = vsel %vm648, %v684, %v685
        %v687 = vrot.slane %v366, 2
        %v688 = vsel %vm648, %v685, %v687
        %v689 = vrot.slane %v368, 2
        %v690 = vrot.slane %v369, 2
        %v691 = vsel %vm648, %v689, %v690
        %v692 = vrot.slane %v370, 2
        %v693 = vsel %vm648, %v690, %v692
        %v694 = vrot.slane %v372, 2
        %v695 = vrot.slane %v373, 2
        %v696 = vsel %vm648, %v694, %v695
        %v697 = vrot.slane %v374, 2
        %v698 = vsel %vm648, %v695, %v697
        %v699 = vrot.slane %v376, 2
        %v700 = vrot.slane %v377, 2
        %v701 = vsel %vm648, %v699, %v700
        %v702 = vrot.slane %v378, 2
        %v703 = vsel %vm648, %v700, %v702
        %v704 = vrot.slane %v380, 2
        %v705 = vrot.slane %v381, 2
        %v706 = vsel %vm648, %v704, %v705
        %v707 = vrot.slane %v382, 2
        %v708 = vsel %vm648, %v705, %v707
        %v709 = vrot.slane %v384, 2
        %v710 = vrot.slane %v385, 2
        %v711 = vsel %vm648, %v709, %v710
        %v712 = vrot.slane %v386, 2
        %v713 = vsel %vm648, %v710, %v712
        %v714 = vrot.slane %v388, 2
        %v715 = vrot.slane %v389, 2
        %v716 = vsel %vm648, %v714, %v715
        %v717 = vrot.slane %v390, 2
        %v718 = vsel %vm648, %v715, %v717
        %v719 = vrot.slane %v392, 2
        %v720 = vrot.slane %v393, 2
        %v721 = vsel %vm648, %v719, %v720
        %v722 = vrot.slane %v394, 2
        %v723 = vsel %vm648, %v720, %v722
        %v724 = vrot.slane %v396, 2
        %v725 = vrot.slane %v397, 2
        %v726 = vsel %vm648, %v724, %v725
        %v727 = vrot.slane %v398, 2
        %v728 = vsel %vm648, %v725, %v727
        %729 = vrot.lane.b32.xlu0 %v649, 16
        %v730 = vpop.permute.xlu0 %729
        %731 = vrot.lane.b32.xlu0 %v651, 16
        %v732 = vpop.permute.xlu0 %731
        %733 = vrot.lane.b32.xlu0 %v653, 16
        %v734 = vpop.permute.xlu0 %733
        %735 = vrot.lane.b32.xlu0 %v654, 16
        %v736 = vpop.permute.xlu0 %735
        %737 = vrot.lane.b32.xlu0 %v656, 16
        %v738 = vpop.permute.xlu0 %737
        %739 = vrot.lane.b32.xlu0 %v658, 16
        %v740 = vpop.permute.xlu0 %739
        %741 = vrot.lane.b32.xlu0 %v659, 16
        %v742 = vpop.permute.xlu0 %741
        %743 = vrot.lane.b32.xlu0 %v661, 16
        %v744 = vpop.permute.xlu0 %743
        %745 = vrot.lane.b32.xlu0 %v663, 16
        %v746 = vpop.permute.xlu0 %745
        %747 = vrot.lane.b32.xlu0 %v664, 16
        %v748 = vpop.permute.xlu0 %747
        %749 = vrot.lane.b32.xlu0 %v666, 16
        %v750 = vpop.permute.xlu0 %749
        %751 = vrot.lane.b32.xlu0 %v668, 16
        %v752 = vpop.permute.xlu0 %751
        %753 = vrot.lane.b32.xlu0 %v669, 16
        %v754 = vpop.permute.xlu0 %753
        %755 = vrot.lane.b32.xlu0 %v671, 16
        %v756 = vpop.permute.xlu0 %755
        %757 = vrot.lane.b32.xlu0 %v673, 16
        %v758 = vpop.permute.xlu0 %757
        %759 = vrot.lane.b32.xlu0 %v674, 16
        %v760 = vpop.permute.xlu0 %759
        %761 = vrot.lane.b32.xlu0 %v676, 16
        %v762 = vpop.permute.xlu0 %761
        %763 = vrot.lane.b32.xlu0 %v678, 16
        %v764 = vpop.permute.xlu0 %763
        %765 = vrot.lane.b32.xlu0 %v679, 16
        %v766 = vpop.permute.xlu0 %765
        %767 = vrot.lane.b32.xlu0 %v681, 16
        %v768 = vpop.permute.xlu0 %767
        %769 = vrot.lane.b32.xlu0 %v683, 16
        %v770 = vpop.permute.xlu0 %769
        %771 = vrot.lane.b32.xlu0 %v684, 16
        %v772 = vpop.permute.xlu0 %771
        %773 = vrot.lane.b32.xlu0 %v686, 16
        %v774 = vpop.permute.xlu0 %773
        %775 = vrot.lane.b32.xlu0 %v688, 16
        %v776 = vpop.permute.xlu0 %775
        %777 = vrot.lane.b32.xlu0 %v689, 16
        %v778 = vpop.permute.xlu0 %777
        %779 = vrot.lane.b32.xlu0 %v691, 16
        %v780 = vpop.permute.xlu0 %779
        %781 = vrot.lane.b32.xlu0 %v693, 16
        %v782 = vpop.permute.xlu0 %781
        %783 = vrot.lane.b32.xlu0 %v694, 16
        %v784 = vpop.permute.xlu0 %783
        %785 = vrot.lane.b32.xlu0 %v696, 16
        %v786 = vpop.permute.xlu0 %785
        %787 = vrot.lane.b32.xlu0 %v698, 16
        %v788 = vpop.permute.xlu0 %787
        %789 = vrot.lane.b32.xlu0 %v699, 16
        %v790 = vpop.permute.xlu0 %789
        %791 = vrot.lane.b32.xlu0 %v701, 16
        %v792 = vpop.permute.xlu0 %791
        %793 = vrot.lane.b32.xlu0 %v703, 16
        %v794 = vpop.permute.xlu0 %793
        %795 = vrot.lane.b32.xlu0 %v704, 16
        %v796 = vpop.permute.xlu0 %795
        %797 = vrot.lane.b32.xlu0 %v706, 16
        %v798 = vpop.permute.xlu0 %797
        %799 = vrot.lane.b32.xlu0 %v708, 16
        %v800 = vpop.permute.xlu0 %799
        %801 = vrot.lane.b32.xlu0 %v709, 16
        %v802 = vpop.permute.xlu0 %801
        %803 = vrot.lane.b32.xlu0 %v711, 16
        %v804 = vpop.permute.xlu0 %803
        %805 = vrot.lane.b32.xlu0 %v713, 16
        %v806 = vpop.permute.xlu0 %805
        %807 = vrot.lane.b32.xlu0 %v714, 16
        %v808 = vpop.permute.xlu0 %807
        %809 = vrot.lane.b32.xlu0 %v716, 16
        %v810 = vpop.permute.xlu0 %809
        %811 = vrot.lane.b32.xlu0 %v718, 16
        %v812 = vpop.permute.xlu0 %811
        %813 = vrot.lane.b32.xlu0 %v719, 16
        %v814 = vpop.permute.xlu0 %813
        %815 = vrot.lane.b32.xlu0 %v721, 16
        %v816 = vpop.permute.xlu0 %815
        %817 = vrot.lane.b32.xlu0 %v723, 16
        %v818 = vpop.permute.xlu0 %817
        %819 = vrot.lane.b32.xlu0 %v724, 16
        %v820 = vpop.permute.xlu0 %819
        %821 = vrot.lane.b32.xlu0 %v726, 16
        %v822 = vpop.permute.xlu0 %821
        %823 = vrot.lane.b32.xlu0 %v728, 16
        %v824 = vpop.permute.xlu0 %823
        %891 = vrot.lane.b32.xlu0 %v339, 24
        %v892 = vpop.permute.xlu0 %891
        %893 = vrot.lane.b32.xlu0 %v340, 24
        %v894 = vpop.permute.xlu0 %893
        %895 = vrot.lane.b32.xlu0 %v341, 24
        %v896 = vpop.permute.xlu0 %895
        %897 = vrot.lane.b32.xlu0 %v343, 24
        %v898 = vpop.permute.xlu0 %897
        %899 = vrot.lane.b32.xlu0 %v344, 24
        %v900 = vpop.permute.xlu0 %899
        %901 = vrot.lane.b32.xlu0 %v345, 24
        %v902 = vpop.permute.xlu0 %901
        %903 = vrot.lane.b32.xlu0 %v347, 24
        %v904 = vpop.permute.xlu0 %903
        %905 = vrot.lane.b32.xlu0 %v348, 24
        %v906 = vpop.permute.xlu0 %905
        %907 = vrot.lane.b32.xlu0 %v349, 24
        %v908 = vpop.permute.xlu0 %907
        %909 = vrot.lane.b32.xlu0 %v351, 24
        %v910 = vpop.permute.xlu0 %909
        %911 = vrot.lane.b32.xlu0 %v352, 24
        %v912 = vpop.permute.xlu0 %911
        %913 = vrot.lane.b32.xlu0 %v353, 24
        %v914 = vpop.permute.xlu0 %913
        %915 = vrot.lane.b32.xlu0 %v355, 24
        %v916 = vpop.permute.xlu0 %915
        %917 = vrot.lane.b32.xlu0 %v356, 24
        %v918 = vpop.permute.xlu0 %917
        %919 = vrot.lane.b32.xlu0 %v357, 24
        %v920 = vpop.permute.xlu0 %919
        %921 = vrot.lane.b32.xlu0 %v359, 24
        %v922 = vpop.permute.xlu0 %921
        %923 = vrot.lane.b32.xlu0 %v360, 24
        %v924 = vpop.permute.xlu0 %923
        %925 = vrot.lane.b32.xlu0 %v361, 24
        %v926 = vpop.permute.xlu0 %925
        %927 = vrot.lane.b32.xlu0 %v363, 24
        %v928 = vpop.permute.xlu0 %927
        %929 = vrot.lane.b32.xlu0 %v364, 24
        %v930 = vpop.permute.xlu0 %929
        %931 = vrot.lane.b32.xlu0 %v365, 24
        %v932 = vpop.permute.xlu0 %931
        %933 = vrot.lane.b32.xlu0 %v367, 24
        %v934 = vpop.permute.xlu0 %933
        %935 = vrot.lane.b32.xlu0 %v368, 24
        %v936 = vpop.permute.xlu0 %935
        %937 = vrot.lane.b32.xlu0 %v369, 24
        %v938 = vpop.permute.xlu0 %937
        %939 = vrot.lane.b32.xlu0 %v371, 24
        %v940 = vpop.permute.xlu0 %939
        %941 = vrot.lane.b32.xlu0 %v372, 24
        %v942 = vpop.permute.xlu0 %941
        %943 = vrot.lane.b32.xlu0 %v373, 24
        %v944 = vpop.permute.xlu0 %943
        %945 = vrot.lane.b32.xlu0 %v375, 24
        %v946 = vpop.permute.xlu0 %945
        %947 = vrot.lane.b32.xlu0 %v376, 24
        %v948 = vpop.permute.xlu0 %947
        %949 = vrot.lane.b32.xlu0 %v377, 24
        %v950 = vpop.permute.xlu0 %949
        %951 = vrot.lane.b32.xlu0 %v379, 24
        %v952 = vpop.permute.xlu0 %951
        %953 = vrot.lane.b32.xlu0 %v380, 24
        %v954 = vpop.permute.xlu0 %953
        %955 = vrot.lane.b32.xlu0 %v381, 24
        %v956 = vpop.permute.xlu0 %955
        %957 = vrot.lane.b32.xlu0 %v383, 24
        %v958 = vpop.permute.xlu0 %957
        %959 = vrot.lane.b32.xlu0 %v384, 24
        %v960 = vpop.permute.xlu0 %959
        %961 = vrot.lane.b32.xlu0 %v385, 24
        %v962 = vpop.permute.xlu0 %961
        %963 = vrot.lane.b32.xlu0 %v387, 24
        %v964 = vpop.permute.xlu0 %963
        %965 = vrot.lane.b32.xlu0 %v388, 24
        %v966 = vpop.permute.xlu0 %965
        %967 = vrot.lane.b32.xlu0 %v389, 24
        %v968 = vpop.permute.xlu0 %967
        %969 = vrot.lane.b32.xlu0 %v391, 24
        %v970 = vpop.permute.xlu0 %969
        %971 = vrot.lane.b32.xlu0 %v392, 24
        %v972 = vpop.permute.xlu0 %971
        %973 = vrot.lane.b32.xlu0 %v393, 24
        %v974 = vpop.permute.xlu0 %973
        %975 = vrot.lane.b32.xlu0 %v395, 24
        %v976 = vpop.permute.xlu0 %975
        %977 = vrot.lane.b32.xlu0 %v396, 24
        %v978 = vpop.permute.xlu0 %977
        %979 = vrot.lane.b32.xlu0 %v397, 24
        %v980 = vpop.permute.xlu0 %979
        %981 = vrot.lane.b32.xlu0 %v399, 24
        %v982 = vpop.permute.xlu0 %981
        %983 = vrot.lane.b32.xlu0 %v400, 24
        %v984 = vpop.permute.xlu0 %983
        %985 = vrot.lane.b32.xlu0 %v401, 24
        %v986 = vpop.permute.xlu0 %985
        %v1035 = vrot.slane %v400, 1
        %v1036 = vrot.slane %v401, 1
        %v1037 = vsel %vm439, %v1035, %v1036
        %1038 = vrot.lane.b32.xlu0 %v443, 32
        %v1039 = vpop.permute.xlu0 %1038
        %1040 = vrot.lane.b32.xlu0 %v445, 32
        %v1041 = vpop.permute.xlu0 %1040
        %1042 = vrot.lane.b32.xlu0 %v444, 32
        %v1043 = vpop.permute.xlu0 %1042
        %1044 = vrot.lane.b32.xlu0 %v446, 32
        %v1045 = vpop.permute.xlu0 %1044
        %1046 = vrot.lane.b32.xlu0 %v448, 32
        %v1047 = vpop.permute.xlu0 %1046
        %1048 = vrot.lane.b32.xlu0 %v447, 32
        %v1049 = vpop.permute.xlu0 %1048
        %1050 = vrot.lane.b32.xlu0 %v449, 32
        %v1051 = vpop.permute.xlu0 %1050
        %1052 = vrot.lane.b32.xlu0 %v451, 32
        %v1053 = vpop.permute.xlu0 %1052
        %1054 = vrot.lane.b32.xlu0 %v450, 32
        %v1055 = vpop.permute.xlu0 %1054
        %1056 = vrot.lane.b32.xlu0 %v452, 32
        %v1057 = vpop.permute.xlu0 %1056
        %1058 = vrot.lane.b32.xlu0 %v454, 32
        %v1059 = vpop.permute.xlu0 %1058
        %1060 = vrot.lane.b32.xlu0 %v453, 32
        %v1061 = vpop.permute.xlu0 %1060
        %1062 = vrot.lane.b32.xlu0 %v455, 32
        %v1063 = vpop.permute.xlu0 %1062
        %1064 = vrot.lane.b32.xlu0 %v457, 32
        %v1065 = vpop.permute.xlu0 %1064
        %1066 = vrot.lane.b32.xlu0 %v456, 32
        %v1067 = vpop.permute.xlu0 %1066
        %1068 = vrot.lane.b32.xlu0 %v458, 32
        %v1069 = vpop.permute.xlu0 %1068
        %1070 = vrot.lane.b32.xlu0 %v460, 32
        %v1071 = vpop.permute.xlu0 %1070
        %1072 = vrot.lane.b32.xlu0 %v459, 32
        %v1073 = vpop.permute.xlu0 %1072
        %1074 = vrot.lane.b32.xlu0 %v461, 32
        %v1075 = vpop.permute.xlu0 %1074
        %1076 = vrot.lane.b32.xlu0 %v463, 32
        %v1077 = vpop.permute.xlu0 %1076
        %1078 = vrot.lane.b32.xlu0 %v462, 32
        %v1079 = vpop.permute.xlu0 %1078
        %1080 = vrot.lane.b32.xlu0 %v464, 32
        %v1081 = vpop.permute.xlu0 %1080
        %1082 = vrot.lane.b32.xlu0 %v466, 32
        %v1083 = vpop.permute.xlu0 %1082
        %1084 = vrot.lane.b32.xlu0 %v465, 32
        %v1085 = vpop.permute.xlu0 %1084
        %1086 = vrot.lane.b32.xlu0 %v467, 32
        %v1087 = vpop.permute.xlu0 %1086
        %1088 = vrot.lane.b32.xlu0 %v469, 32
        %v1089 = vpop.permute.xlu0 %1088
        %1090 = vrot.lane.b32.xlu0 %v468, 32
        %v1091 = vpop.permute.xlu0 %1090
        %1092 = vrot.lane.b32.xlu0 %v470, 32
        %v1093 = vpop.permute.xlu0 %1092
        %1094 = vrot.lane.b32.xlu0 %v472, 32
        %v1095 = vpop.permute.xlu0 %1094
        %1096 = vrot.lane.b32.xlu0 %v471, 32
        %v1097 = vpop.permute.xlu0 %1096
        %1098 = vrot.lane.b32.xlu0 %v473, 32
        %v1099 = vpop.permute.xlu0 %1098
        %1100 = vrot.lane.b32.xlu0 %v475, 32
        %v1101 = vpop.permute.xlu0 %1100
        %1102 = vrot.lane.b32.xlu0 %v474, 32
        %v1103 = vpop.permute.xlu0 %1102
        %1104 = vrot.lane.b32.xlu0 %v476, 32
        %v1105 = vpop.permute.xlu0 %1104
        %1106 = vrot.lane.b32.xlu0 %v478, 32
        %v1107 = vpop.permute.xlu0 %1106
        %1108 = vrot.lane.b32.xlu0 %v477, 32
        %v1109 = vpop.permute.xlu0 %1108
        %1110 = vrot.lane.b32.xlu0 %v479, 32
        %v1111 = vpop.permute.xlu0 %1110
        %1112 = vrot.lane.b32.xlu0 %v481, 32
        %v1113 = vpop.permute.xlu0 %1112
        %1114 = vrot.lane.b32.xlu0 %v480, 32
        %v1115 = vpop.permute.xlu0 %1114
        %1116 = vrot.lane.b32.xlu0 %v482, 32
        %v1117 = vpop.permute.xlu0 %1116
        %1118 = vrot.lane.b32.xlu0 %v484, 32
        %v1119 = vpop.permute.xlu0 %1118
        %1120 = vrot.lane.b32.xlu0 %v483, 32
        %v1121 = vpop.permute.xlu0 %1120
        %1122 = vrot.lane.b32.xlu0 %v485, 32
        %v1123 = vpop.permute.xlu0 %1122
        %1124 = vrot.lane.b32.xlu0 %v487, 32
        %v1125 = vpop.permute.xlu0 %1124
        %1126 = vrot.lane.b32.xlu0 %v486, 32
        %v1127 = vpop.permute.xlu0 %1126
        %1128 = vrot.lane.b32.xlu0 %v1035, 32
        %v1129 = vpop.permute.xlu0 %1128
        %1130 = vrot.lane.b32.xlu0 %v1037, 32
        %v1131 = vpop.permute.xlu0 %1130
        %1132 = vrot.lane.b32.xlu0 %v1036, 32
        %v1133 = vpop.permute.xlu0 %1132
        %v1183 = vrot.slane %v400, 2
        %v1184 = vrot.slane %v401, 2
        %v1185 = vsel %vm648, %v1183, %v1184
        %v1186 = vrot.slane %v402, 2
        %v1187 = vsel %vm648, %v1184, %v1186
        %1188 = vrot.lane.b32.xlu0 %v654, 40
        %v1189 = vpop.permute.xlu0 %1188
        %1190 = vrot.lane.b32.xlu0 %v656, 40
        %v1191 = vpop.permute.xlu0 %1190
        %1192 = vrot.lane.b32.xlu0 %v658, 40
        %v1193 = vpop.permute.xlu0 %1192
        %1194 = vrot.lane.b32.xlu0 %v659, 40
        %v1195 = vpop.permute.xlu0 %1194
        %1196 = vrot.lane.b32.xlu0 %v661, 40
        %v1197 = vpop.permute.xlu0 %1196
        %1198 = vrot.lane.b32.xlu0 %v663, 40
        %v1199 = vpop.permute.xlu0 %1198
        %1200 = vrot.lane.b32.xlu0 %v664, 40
        %v1201 = vpop.permute.xlu0 %1200
        %1202 = vrot.lane.b32.xlu0 %v666, 40
        %v1203 = vpop.permute.xlu0 %1202
        %1204 = vrot.lane.b32.xlu0 %v668, 40
        %v1205 = vpop.permute.xlu0 %1204
        %1206 = vrot.lane.b32.xlu0 %v669, 40
        %v1207 = vpop.permute.xlu0 %1206
        %1208 = vrot.lane.b32.xlu0 %v671, 40
        %v1209 = vpop.permute.xlu0 %1208
        %1210 = vrot.lane.b32.xlu0 %v673, 40
        %v1211 = vpop.permute.xlu0 %1210
        %1212 = vrot.lane.b32.xlu0 %v674, 40
        %v1213 = vpop.permute.xlu0 %1212
        %1214 = vrot.lane.b32.xlu0 %v676, 40
        %v1215 = vpop.permute.xlu0 %1214
        %1216 = vrot.lane.b32.xlu0 %v678, 40
        %v1217 = vpop.permute.xlu0 %1216
        %1218 = vrot.lane.b32.xlu0 %v679, 40
        %v1219 = vpop.permute.xlu0 %1218
        %1220 = vrot.lane.b32.xlu0 %v681, 40
        %v1221 = vpop.permute.xlu0 %1220
        %1222 = vrot.lane.b32.xlu0 %v683, 40
        %v1223 = vpop.permute.xlu0 %1222
        %1224 = vrot.lane.b32.xlu0 %v684, 40
        %v1225 = vpop.permute.xlu0 %1224
        %1226 = vrot.lane.b32.xlu0 %v686, 40
        %v1227 = vpop.permute.xlu0 %1226
        %1228 = vrot.lane.b32.xlu0 %v688, 40
        %v1229 = vpop.permute.xlu0 %1228
        %1230 = vrot.lane.b32.xlu0 %v689, 40
        %v1231 = vpop.permute.xlu0 %1230
        %1232 = vrot.lane.b32.xlu0 %v691, 40
        %v1233 = vpop.permute.xlu0 %1232
        %1234 = vrot.lane.b32.xlu0 %v693, 40
        %v1235 = vpop.permute.xlu0 %1234
        %1236 = vrot.lane.b32.xlu0 %v694, 40
        %v1237 = vpop.permute.xlu0 %1236
        %1238 = vrot.lane.b32.xlu0 %v696, 40
        %v1239 = vpop.permute.xlu0 %1238
        %1240 = vrot.lane.b32.xlu0 %v698, 40
        %v1241 = vpop.permute.xlu0 %1240
        %1242 = vrot.lane.b32.xlu0 %v699, 40
        %v1243 = vpop.permute.xlu0 %1242
        %1244 = vrot.lane.b32.xlu0 %v701, 40
        %v1245 = vpop.permute.xlu0 %1244
        %1246 = vrot.lane.b32.xlu0 %v703, 40
        %v1247 = vpop.permute.xlu0 %1246
        %1248 = vrot.lane.b32.xlu0 %v704, 40
        %v1249 = vpop.permute.xlu0 %1248
        %1250 = vrot.lane.b32.xlu0 %v706, 40
        %v1251 = vpop.permute.xlu0 %1250
        %1252 = vrot.lane.b32.xlu0 %v708, 40
        %v1253 = vpop.permute.xlu0 %1252
        %1254 = vrot.lane.b32.xlu0 %v709, 40
        %v1255 = vpop.permute.xlu0 %1254
        %1256 = vrot.lane.b32.xlu0 %v711, 40
        %v1257 = vpop.permute.xlu0 %1256
        %1258 = vrot.lane.b32.xlu0 %v713, 40
        %v1259 = vpop.permute.xlu0 %1258
        %1260 = vrot.lane.b32.xlu0 %v714, 40
        %v1261 = vpop.permute.xlu0 %1260
        %1262 = vrot.lane.b32.xlu0 %v716, 40
        %v1263 = vpop.permute.xlu0 %1262
        %1264 = vrot.lane.b32.xlu0 %v718, 40
        %v1265 = vpop.permute.xlu0 %1264
        %1266 = vrot.lane.b32.xlu0 %v719, 40
        %v1267 = vpop.permute.xlu0 %1266
        %1268 = vrot.lane.b32.xlu0 %v721, 40
        %v1269 = vpop.permute.xlu0 %1268
        %1270 = vrot.lane.b32.xlu0 %v723, 40
        %v1271 = vpop.permute.xlu0 %1270
        %1272 = vrot.lane.b32.xlu0 %v724, 40
        %v1273 = vpop.permute.xlu0 %1272
        %1274 = vrot.lane.b32.xlu0 %v726, 40
        %v1275 = vpop.permute.xlu0 %1274
        %1276 = vrot.lane.b32.xlu0 %v728, 40
        %v1277 = vpop.permute.xlu0 %1276
        %1278 = vrot.lane.b32.xlu0 %v1183, 40
        %v1279 = vpop.permute.xlu0 %1278
        %1280 = vrot.lane.b32.xlu0 %v1185, 40
        %v1281 = vpop.permute.xlu0 %1280
        %1282 = vrot.lane.b32.xlu0 %v1187, 40
        %v1283 = vpop.permute.xlu0 %1282
        %1335 = vrot.lane.b32.xlu0 %v343, 48
        %v1336 = vpop.permute.xlu0 %1335
        %1337 = vrot.lane.b32.xlu0 %v344, 48
        %v1338 = vpop.permute.xlu0 %1337
        %1339 = vrot.lane.b32.xlu0 %v345, 48
        %v1340 = vpop.permute.xlu0 %1339
        %1341 = vrot.lane.b32.xlu0 %v347, 48
        %v1342 = vpop.permute.xlu0 %1341
        %1343 = vrot.lane.b32.xlu0 %v348, 48
        %v1344 = vpop.permute.xlu0 %1343
        %1345 = vrot.lane.b32.xlu0 %v349, 48
        %v1346 = vpop.permute.xlu0 %1345
        %1347 = vrot.lane.b32.xlu0 %v351, 48
        %v1348 = vpop.permute.xlu0 %1347
        %1349 = vrot.lane.b32.xlu0 %v352, 48
        %v1350 = vpop.permute.xlu0 %1349
        %1351 = vrot.lane.b32.xlu0 %v353, 48
        %v1352 = vpop.permute.xlu0 %1351
        %1353 = vrot.lane.b32.xlu0 %v355, 48
        %v1354 = vpop.permute.xlu0 %1353
        %1355 = vrot.lane.b32.xlu0 %v356, 48
        %v1356 = vpop.permute.xlu0 %1355
        %1357 = vrot.lane.b32.xlu0 %v357, 48
        %v1358 = vpop.permute.xlu0 %1357
        %1359 = vrot.lane.b32.xlu0 %v359, 48
        %v1360 = vpop.permute.xlu0 %1359
        %1361 = vrot.lane.b32.xlu0 %v360, 48
        %v1362 = vpop.permute.xlu0 %1361
        %1363 = vrot.lane.b32.xlu0 %v361, 48
        %v1364 = vpop.permute.xlu0 %1363
        %1365 = vrot.lane.b32.xlu0 %v363, 48
        %v1366 = vpop.permute.xlu0 %1365
        %1367 = vrot.lane.b32.xlu0 %v364, 48
        %v1368 = vpop.permute.xlu0 %1367
        %1369 = vrot.lane.b32.xlu0 %v365, 48
        %v1370 = vpop.permute.xlu0 %1369
        %1371 = vrot.lane.b32.xlu0 %v367, 48
        %v1372 = vpop.permute.xlu0 %1371
        %1373 = vrot.lane.b32.xlu0 %v368, 48
        %v1374 = vpop.permute.xlu0 %1373
        %1375 = vrot.lane.b32.xlu0 %v369, 48
        %v1376 = vpop.permute.xlu0 %1375
        %1377 = vrot.lane.b32.xlu0 %v371, 48
        %v1378 = vpop.permute.xlu0 %1377
        %1379 = vrot.lane.b32.xlu0 %v372, 48
        %v1380 = vpop.permute.xlu0 %1379
        %1381 = vrot.lane.b32.xlu0 %v373, 48
        %v1382 = vpop.permute.xlu0 %1381
        %1383 = vrot.lane.b32.xlu0 %v375, 48
        %v1384 = vpop.permute.xlu0 %1383
        %1385 = vrot.lane.b32.xlu0 %v376, 48
        %v1386 = vpop.permute.xlu0 %1385
        %1387 = vrot.lane.b32.xlu0 %v377, 48
        %v1388 = vpop.permute.xlu0 %1387
        %1389 = vrot.lane.b32.xlu0 %v379, 48
        %v1390 = vpop.permute.xlu0 %1389
        %1391 = vrot.lane.b32.xlu0 %v380, 48
        %v1392 = vpop.permute.xlu0 %1391
        %1393 = vrot.lane.b32.xlu0 %v381, 48
        %v1394 = vpop.permute.xlu0 %1393
        %1395 = vrot.lane.b32.xlu0 %v383, 48
        %v1396 = vpop.permute.xlu0 %1395
        %1397 = vrot.lane.b32.xlu0 %v384, 48
        %v1398 = vpop.permute.xlu0 %1397
        %1399 = vrot.lane.b32.xlu0 %v385, 48
        %v1400 = vpop.permute.xlu0 %1399
        %1401 = vrot.lane.b32.xlu0 %v387, 48
        %v1402 = vpop.permute.xlu0 %1401
        %1403 = vrot.lane.b32.xlu0 %v388, 48
        %v1404 = vpop.permute.xlu0 %1403
        %1405 = vrot.lane.b32.xlu0 %v389, 48
        %v1406 = vpop.permute.xlu0 %1405
        %1407 = vrot.lane.b32.xlu0 %v391, 48
        %v1408 = vpop.permute.xlu0 %1407
        %1409 = vrot.lane.b32.xlu0 %v392, 48
        %v1410 = vpop.permute.xlu0 %1409
        %1411 = vrot.lane.b32.xlu0 %v393, 48
        %v1412 = vpop.permute.xlu0 %1411
        %1413 = vrot.lane.b32.xlu0 %v395, 48
        %v1414 = vpop.permute.xlu0 %1413
        %1415 = vrot.lane.b32.xlu0 %v396, 48
        %v1416 = vpop.permute.xlu0 %1415
        %1417 = vrot.lane.b32.xlu0 %v397, 48
        %v1418 = vpop.permute.xlu0 %1417
        %1419 = vrot.lane.b32.xlu0 %v399, 48
        %v1420 = vpop.permute.xlu0 %1419
        %1421 = vrot.lane.b32.xlu0 %v400, 48
        %v1422 = vpop.permute.xlu0 %1421
        %1423 = vrot.lane.b32.xlu0 %v401, 48
        %v1424 = vpop.permute.xlu0 %1423
        %1425 = vrot.lane.b32.xlu0 %v403, 48
        %v1426 = vpop.permute.xlu0 %1425
        %1427 = vrot.lane.b32.xlu0 %v404, 48
        %v1428 = vpop.permute.xlu0 %1427
        %1429 = vrot.lane.b32.xlu0 %v405, 48
        %v1430 = vpop.permute.xlu0 %1429
        %v1479 = vrot.slane %v404, 1
        %v1480 = vrot.slane %v405, 1
        %v1481 = vsel %vm439, %v1479, %v1480
        %1482 = vrot.lane.b32.xlu0 %v446, 56
        %v1483 = vpop.permute.xlu0 %1482
        %1484 = vrot.lane.b32.xlu0 %v448, 56
        %v1485 = vpop.permute.xlu0 %1484
        %1486 = vrot.lane.b32.xlu0 %v447, 56
        %v1487 = vpop.permute.xlu0 %1486
        %1488 = vrot.lane.b32.xlu0 %v449, 56
        %v1489 = vpop.permute.xlu0 %1488
        %1490 = vrot.lane.b32.xlu0 %v451, 56
        %v1491 = vpop.permute.xlu0 %1490
        %1492 = vrot.lane.b32.xlu0 %v450, 56
        %v1493 = vpop.permute.xlu0 %1492
        %1494 = vrot.lane.b32.xlu0 %v452, 56
        %v1495 = vpop.permute.xlu0 %1494
        %1496 = vrot.lane.b32.xlu0 %v454, 56
        %v1497 = vpop.permute.xlu0 %1496
        %1498 = vrot.lane.b32.xlu0 %v453, 56
        %v1499 = vpop.permute.xlu0 %1498
        %1500 = vrot.lane.b32.xlu0 %v455, 56
        %v1501 = vpop.permute.xlu0 %1500
        %1502 = vrot.lane.b32.xlu0 %v457, 56
        %v1503 = vpop.permute.xlu0 %1502
        %1504 = vrot.lane.b32.xlu0 %v456, 56
        %v1505 = vpop.permute.xlu0 %1504
        %1506 = vrot.lane.b32.xlu0 %v458, 56
        %v1507 = vpop.permute.xlu0 %1506
        %1508 = vrot.lane.b32.xlu0 %v460, 56
        %v1509 = vpop.permute.xlu0 %1508
        %1510 = vrot.lane.b32.xlu0 %v459, 56
        %v1511 = vpop.permute.xlu0 %1510
        %1512 = vrot.lane.b32.xlu0 %v461, 56
        %v1513 = vpop.permute.xlu0 %1512
        %1514 = vrot.lane.b32.xlu0 %v463, 56
        %v1515 = vpop.permute.xlu0 %1514
        %1516 = vrot.lane.b32.xlu0 %v462, 56
        %v1517 = vpop.permute.xlu0 %1516
        %1518 = vrot.lane.b32.xlu0 %v464, 56
        %v1519 = vpop.permute.xlu0 %1518
        %1520 = vrot.lane.b32.xlu0 %v466, 56
        %v1521 = vpop.permute.xlu0 %1520
        %1522 = vrot.lane.b32.xlu0 %v465, 56
        %v1523 = vpop.permute.xlu0 %1522
        %1524 = vrot.lane.b32.xlu0 %v467, 56
        %v1525 = vpop.permute.xlu0 %1524
        %1526 = vrot.lane.b32.xlu0 %v469, 56
        %v1527 = vpop.permute.xlu0 %1526
        %1528 = vrot.lane.b32.xlu0 %v468, 56
        %v1529 = vpop.permute.xlu0 %1528
        %1530 = vrot.lane.b32.xlu0 %v470, 56
        %v1531 = vpop.permute.xlu0 %1530
        %1532 = vrot.lane.b32.xlu0 %v472, 56
        %v1533 = vpop.permute.xlu0 %1532
        %1534 = vrot.lane.b32.xlu0 %v471, 56
        %v1535 = vpop.permute.xlu0 %1534
        %1536 = vrot.lane.b32.xlu0 %v473, 56
        %v1537 = vpop.permute.xlu0 %1536
        %1538 = vrot.lane.b32.xlu0 %v475, 56
        %v1539 = vpop.permute.xlu0 %1538
        %1540 = vrot.lane.b32.xlu0 %v474, 56
        %v1541 = vpop.permute.xlu0 %1540
        %1542 = vrot.lane.b32.xlu0 %v476, 56
        %v1543 = vpop.permute.xlu0 %1542
        %1544 = vrot.lane.b32.xlu0 %v478, 56
        %v1545 = vpop.permute.xlu0 %1544
        %1546 = vrot.lane.b32.xlu0 %v477, 56
        %v1547 = vpop.permute.xlu0 %1546
        %1548 = vrot.lane.b32.xlu0 %v479, 56
        %v1549 = vpop.permute.xlu0 %1548
        %1550 = vrot.lane.b32.xlu0 %v481, 56
        %v1551 = vpop.permute.xlu0 %1550
        %1552 = vrot.lane.b32.xlu0 %v480, 56
        %v1553 = vpop.permute.xlu0 %1552
        %1554 = vrot.lane.b32.xlu0 %v482, 56
        %v1555 = vpop.permute.xlu0 %1554
        %1556 = vrot.lane.b32.xlu0 %v484, 56
        %v1557 = vpop.permute.xlu0 %1556
        %1558 = vrot.lane.b32.xlu0 %v483, 56
        %v1559 = vpop.permute.xlu0 %1558
        %1560 = vrot.lane.b32.xlu0 %v485, 56
        %v1561 = vpop.permute.xlu0 %1560
        %1562 = vrot.lane.b32.xlu0 %v487, 56
        %v1563 = vpop.permute.xlu0 %1562
        %1564 = vrot.lane.b32.xlu0 %v486, 56
        %v1565 = vpop.permute.xlu0 %1564
        %1566 = vrot.lane.b32.xlu0 %v1035, 56
        %v1567 = vpop.permute.xlu0 %1566
        %1568 = vrot.lane.b32.xlu0 %v1037, 56
        %v1569 = vpop.permute.xlu0 %1568
        %1570 = vrot.lane.b32.xlu0 %v1036, 56
        %v1571 = vpop.permute.xlu0 %1570
        %1572 = vrot.lane.b32.xlu0 %v1479, 56
        %v1573 = vpop.permute.xlu0 %1572
        %1574 = vrot.lane.b32.xlu0 %v1481, 56
        %v1575 = vpop.permute.xlu0 %1574
        %1576 = vrot.lane.b32.xlu0 %v1480, 56
        %v1577 = vpop.permute.xlu0 %1576
        %v1627 = vrot.slane %v404, 2
        %v1628 = vrot.slane %v405, 2
        %v1629 = vsel %vm648, %v1627, %v1628
        %v1630 = vrot.slane %v406, 2
        %v1631 = vsel %vm648, %v1628, %v1630
        %1632 = vrot.lane.b32.xlu0 %v659, 64
        %v1633 = vpop.permute.xlu0 %1632
        %1634 = vrot.lane.b32.xlu0 %v661, 64
        %v1635 = vpop.permute.xlu0 %1634
        %1636 = vrot.lane.b32.xlu0 %v663, 64
        %v1637 = vpop.permute.xlu0 %1636
        %1638 = vrot.lane.b32.xlu0 %v664, 64
        %v1639 = vpop.permute.xlu0 %1638
        %1640 = vrot.lane.b32.xlu0 %v666, 64
        %v1641 = vpop.permute.xlu0 %1640
        %1642 = vrot.lane.b32.xlu0 %v668, 64
        %v1643 = vpop.permute.xlu0 %1642
        %1644 = vrot.lane.b32.xlu0 %v669, 64
        %v1645 = vpop.permute.xlu0 %1644
        %1646 = vrot.lane.b32.xlu0 %v671, 64
        %v1647 = vpop.permute.xlu0 %1646
        %1648 = vrot.lane.b32.xlu0 %v673, 64
        %v1649 = vpop.permute.xlu0 %1648
        %1650 = vrot.lane.b32.xlu0 %v674, 64
        %v1651 = vpop.permute.xlu0 %1650
        %1652 = vrot.lane.b32.xlu0 %v676, 64
        %v1653 = vpop.permute.xlu0 %1652
        %1654 = vrot.lane.b32.xlu0 %v678, 64
        %v1655 = vpop.permute.xlu0 %1654
        %1656 = vrot.lane.b32.xlu0 %v679, 64
        %v1657 = vpop.permute.xlu0 %1656
        %1658 = vrot.lane.b32.xlu0 %v681, 64
        %v1659 = vpop.permute.xlu0 %1658
        %1660 = vrot.lane.b32.xlu0 %v683, 64
        %v1661 = vpop.permute.xlu0 %1660
        %1662 = vrot.lane.b32.xlu0 %v684, 64
        %v1663 = vpop.permute.xlu0 %1662
        %1664 = vrot.lane.b32.xlu0 %v686, 64
        %v1665 = vpop.permute.xlu0 %1664
        %1666 = vrot.lane.b32.xlu0 %v688, 64
        %v1667 = vpop.permute.xlu0 %1666
        %1668 = vrot.lane.b32.xlu0 %v689, 64
        %v1669 = vpop.permute.xlu0 %1668
        %1670 = vrot.lane.b32.xlu0 %v691, 64
        %v1671 = vpop.permute.xlu0 %1670
        %1672 = vrot.lane.b32.xlu0 %v693, 64
        %v1673 = vpop.permute.xlu0 %1672
        %1674 = vrot.lane.b32.xlu0 %v694, 64
        %v1675 = vpop.permute.xlu0 %1674
        %1676 = vrot.lane.b32.xlu0 %v696, 64
        %v1677 = vpop.permute.xlu0 %1676
        %1678 = vrot.lane.b32.xlu0 %v698, 64
        %v1679 = vpop.permute.xlu0 %1678
        %1680 = vrot.lane.b32.xlu0 %v699, 64
        %v1681 = vpop.permute.xlu0 %1680
        %1682 = vrot.lane.b32.xlu0 %v701, 64
        %v1683 = vpop.permute.xlu0 %1682
        %1684 = vrot.lane.b32.xlu0 %v703, 64
        %v1685 = vpop.permute.xlu0 %1684
        %1686 = vrot.lane.b32.xlu0 %v704, 64
        %v1687 = vpop.permute.xlu0 %1686
        %1688 = vrot.lane.b32.xlu0 %v706, 64
        %v1689 = vpop.permute.xlu0 %1688
        %1690 = vrot.lane.b32.xlu0 %v708, 64
        %v1691 = vpop.permute.xlu0 %1690
        %1692 = vrot.lane.b32.xlu0 %v709, 64
        %v1693 = vpop.permute.xlu0 %1692
        %1694 = vrot.lane.b32.xlu0 %v711, 64
        %v1695 = vpop.permute.xlu0 %1694
        %1696 = vrot.lane.b32.xlu0 %v713, 64
        %v1697 = vpop.permute.xlu0 %1696
        %1698 = vrot.lane.b32.xlu0 %v714, 64
        %v1699 = vpop.permute.xlu0 %1698
        %1700 = vrot.lane.b32.xlu0 %v716, 64
        %v1701 = vpop.permute.xlu0 %1700
        %1702 = vrot.lane.b32.xlu0 %v718, 64
        %v1703 = vpop.permute.xlu0 %1702
        %1704 = vrot.lane.b32.xlu0 %v719, 64
        %v1705 = vpop.permute.xlu0 %1704
        %1706 = vrot.lane.b32.xlu0 %v721, 64
        %v1707 = vpop.permute.xlu0 %1706
        %1708 = vrot.lane.b32.xlu0 %v723, 64
        %v1709 = vpop.permute.xlu0 %1708
        %1710 = vrot.lane.b32.xlu0 %v724, 64
        %v1711 = vpop.permute.xlu0 %1710
        %1712 = vrot.lane.b32.xlu0 %v726, 64
        %v1713 = vpop.permute.xlu0 %1712
        %1714 = vrot.lane.b32.xlu0 %v728, 64
        %v1715 = vpop.permute.xlu0 %1714
        %1716 = vrot.lane.b32.xlu0 %v1183, 64
        %v1717 = vpop.permute.xlu0 %1716
        %1718 = vrot.lane.b32.xlu0 %v1185, 64
        %v1719 = vpop.permute.xlu0 %1718
        %1720 = vrot.lane.b32.xlu0 %v1187, 64
        %v1721 = vpop.permute.xlu0 %1720
        %1722 = vrot.lane.b32.xlu0 %v1627, 64
        %v1723 = vpop.permute.xlu0 %1722
        %1724 = vrot.lane.b32.xlu0 %v1629, 64
        %v1725 = vpop.permute.xlu0 %1724
        %1726 = vrot.lane.b32.xlu0 %v1631, 64
        %v1727 = vpop.permute.xlu0 %1726
        %v1776 = vsel %vm196, %v335, %v489
        %v1777 = vsel %vm196, %v336, %v491
        %v1778 = vsel %vm196, %v337, %v493
        %v1779 = vsel %vm196, %v339, %v495
        %v1780 = vsel %vm196, %v340, %v497
        %v1781 = vsel %vm196, %v341, %v499
        %v1782 = vsel %vm196, %v343, %v501
        %v1783 = vsel %vm196, %v344, %v503
        %v1784 = vsel %vm196, %v345, %v505
        %v1785 = vsel %vm196, %v347, %v507
        %v1786 = vsel %vm196, %v348, %v509
        %v1787 = vsel %vm196, %v349, %v511
        %v1788 = vsel %vm196, %v351, %v513
        %v1789 = vsel %vm196, %v352, %v515
        %v1790 = vsel %vm196, %v353, %v517
        %v1791 = vsel %vm196, %v355, %v519
        %v1792 = vsel %vm196, %v356, %v521
        %v1793 = vsel %vm196, %v357, %v523
        %v1794 = vsel %vm196, %v359, %v525
        %v1795 = vsel %vm196, %v360, %v527
        %v1796 = vsel %vm196, %v361, %v529
        %v1797 = vsel %vm196, %v363, %v531
        %v1798 = vsel %vm196, %v364, %v533
        %v1799 = vsel %vm196, %v365, %v535
        %v1800 = vsel %vm196, %v367, %v537
        %v1801 = vsel %vm196, %v368, %v539
        %v1802 = vsel %vm196, %v369, %v541
        %v1803 = vsel %vm196, %v371, %v543
        %v1804 = vsel %vm196, %v372, %v545
        %v1805 = vsel %vm196, %v373, %v547
        %v1806 = vsel %vm196, %v375, %v549
        %v1807 = vsel %vm196, %v376, %v551
        %v1808 = vsel %vm196, %v377, %v553
        %v1809 = vsel %vm196, %v379, %v555
        %v1810 = vsel %vm196, %v380, %v557
        %v1811 = vsel %vm196, %v381, %v559
        %v1812 = vsel %vm196, %v383, %v561
        %v1813 = vsel %vm196, %v384, %v563
        %v1814 = vsel %vm196, %v385, %v565
        %v1815 = vsel %vm196, %v387, %v567
        %v1816 = vsel %vm196, %v388, %v569
        %v1817 = vsel %vm196, %v389, %v571
        %v1818 = vsel %vm196, %v391, %v573
        %v1819 = vsel %vm196, %v392, %v575
        %v1820 = vsel %vm196, %v393, %v577
        %v1821 = vsel %vm196, %v395, %v579
        %v1822 = vsel %vm196, %v396, %v581
        %v1823 = vsel %vm196, %v397, %v583
        %vm1824 = vcmask 130048
        %v1825 = vsel %vm1824, %v1776, %v730
        %v1826 = vsel %vm1824, %v1777, %v732
        %v1827 = vsel %vm1824, %v1778, %v734
        %v1828 = vsel %vm1824, %v1779, %v736
        %v1829 = vsel %vm1824, %v1780, %v738
        %v1830 = vsel %vm1824, %v1781, %v740
        %v1831 = vsel %vm1824, %v1782, %v742
        %v1832 = vsel %vm1824, %v1783, %v744
        %v1833 = vsel %vm1824, %v1784, %v746
        %v1834 = vsel %vm1824, %v1785, %v748
        %v1835 = vsel %vm1824, %v1786, %v750
        %v1836 = vsel %vm1824, %v1787, %v752
        %v1837 = vsel %vm1824, %v1788, %v754
        %v1838 = vsel %vm1824, %v1789, %v756
        %v1839 = vsel %vm1824, %v1790, %v758
        %v1840 = vsel %vm1824, %v1791, %v760
        %v1841 = vsel %vm1824, %v1792, %v762
        %v1842 = vsel %vm1824, %v1793, %v764
        %v1843 = vsel %vm1824, %v1794, %v766
        %v1844 = vsel %vm1824, %v1795, %v768
        %v1845 = vsel %vm1824, %v1796, %v770
        %v1846 = vsel %vm1824, %v1797, %v772
        %v1847 = vsel %vm1824, %v1798, %v774
        %v1848 = vsel %vm1824, %v1799, %v776
        %v1849 = vsel %vm1824, %v1800, %v778
        %v1850 = vsel %vm1824, %v1801, %v780
        %v1851 = vsel %vm1824, %v1802, %v782
        %v1852 = vsel %vm1824, %v1803, %v784
        %v1853 = vsel %vm1824, %v1804, %v786
        %v1854 = vsel %vm1824, %v1805, %v788
        %v1855 = vsel %vm1824, %v1806, %v790
        %v1856 = vsel %vm1824, %v1807, %v792
        %v1857 = vsel %vm1824, %v1808, %v794
        %v1858 = vsel %vm1824, %v1809, %v796
        %v1859 = vsel %vm1824, %v1810, %v798
        %v1860 = vsel %vm1824, %v1811, %v800
        %v1861 = vsel %vm1824, %v1812, %v802
        %v1862 = vsel %vm1824, %v1813, %v804
        %v1863 = vsel %vm1824, %v1814, %v806
        %v1864 = vsel %vm1824, %v1815, %v808
        %v1865 = vsel %vm1824, %v1816, %v810
        %v1866 = vsel %vm1824, %v1817, %v812
        %v1867 = vsel %vm1824, %v1818, %v814
        %v1868 = vsel %vm1824, %v1819, %v816
        %v1869 = vsel %vm1824, %v1820, %v818
        %v1870 = vsel %vm1824, %v1821, %v820
        %v1871 = vsel %vm1824, %v1822, %v822
        %v1872 = vsel %vm1824, %v1823, %v824
        %vm1873 = vcmask 195584
        %v1874 = vsel %vm1873, %v1825, %v892
        %v1875 = vsel %vm1873, %v1826, %v894
        %v1876 = vsel %vm1873, %v1827, %v896
        %v1877 = vsel %vm1873, %v1828, %v898
        %v1878 = vsel %vm1873, %v1829, %v900
        %v1879 = vsel %vm1873, %v1830, %v902
        %v1880 = vsel %vm1873, %v1831, %v904
        %v1881 = vsel %vm1873, %v1832, %v906
        %v1882 = vsel %vm1873, %v1833, %v908
        %v1883 = vsel %vm1873, %v1834, %v910
        %v1884 = vsel %vm1873, %v1835, %v912
        %v1885 = vsel %vm1873, %v1836, %v914
        %v1886 = vsel %vm1873, %v1837, %v916
        %v1887 = vsel %vm1873, %v1838, %v918
        %v1888 = vsel %vm1873, %v1839, %v920
        %v1889 = vsel %vm1873, %v1840, %v922
        %v1890 = vsel %vm1873, %v1841, %v924
        %v1891 = vsel %vm1873, %v1842, %v926
        %v1892 = vsel %vm1873, %v1843, %v928
        %v1893 = vsel %vm1873, %v1844, %v930
        %v1894 = vsel %vm1873, %v1845, %v932
        %v1895 = vsel %vm1873, %v1846, %v934
        %v1896 = vsel %vm1873, %v1847, %v936
        %v1897 = vsel %vm1873, %v1848, %v938
        %v1898 = vsel %vm1873, %v1849, %v940
        %v1899 = vsel %vm1873, %v1850, %v942
        %v1900 = vsel %vm1873, %v1851, %v944
        %v1901 = vsel %vm1873, %v1852, %v946
        %v1902 = vsel %vm1873, %v1853, %v948
        %v1903 = vsel %vm1873, %v1854, %v950
        %v1904 = vsel %vm1873, %v1855, %v952
        %v1905 = vsel %vm1873, %v1856, %v954
        %v1906 = vsel %vm1873, %v1857, %v956
        %v1907 = vsel %vm1873, %v1858, %v958
        %v1908 = vsel %vm1873, %v1859, %v960
        %v1909 = vsel %vm1873, %v1860, %v962
        %v1910 = vsel %vm1873, %v1861, %v964
        %v1911 = vsel %vm1873, %v1862, %v966
        %v1912 = vsel %vm1873, %v1863, %v968
        %v1913 = vsel %vm1873, %v1864, %v970
        %v1914 = vsel %vm1873, %v1865, %v972
        %v1915 = vsel %vm1873, %v1866, %v974
        %v1916 = vsel %vm1873, %v1867, %v976
        %v1917 = vsel %vm1873, %v1868, %v978
        %v1918 = vsel %vm1873, %v1869, %v980
        %v1919 = vsel %vm1873, %v1870, %v982
        %v1920 = vsel %vm1873, %v1871, %v984
        %v1921 = vsel %vm1873, %v1872, %v986
        %vm1922 = vcmask 261120
        %v1923 = vsel %vm1922, %v1874, %v1039
        %v1924 = vsel %vm1922, %v1875, %v1041
        %v1925 = vsel %vm1922, %v1876, %v1043
        %v1926 = vsel %vm1922, %v1877, %v1045
        %v1927 = vsel %vm1922, %v1878, %v1047
        %v1928 = vsel %vm1922, %v1879, %v1049
        %v1929 = vsel %vm1922, %v1880, %v1051
        %v1930 = vsel %vm1922, %v1881, %v1053
        %v1931 = vsel %vm1922, %v1882, %v1055
        %v1932 = vsel %vm1922, %v1883, %v1057
        %v1933 = vsel %vm1922, %v1884, %v1059
        %v1934 = vsel %vm1922, %v1885, %v1061
        %v1935 = vsel %vm1922, %v1886, %v1063
        %v1936 = vsel %vm1922, %v1887, %v1065
        %v1937 = vsel %vm1922, %v1888, %v1067
        %v1938 = vsel %vm1922, %v1889, %v1069
        %v1939 = vsel %vm1922, %v1890, %v1071
        %v1940 = vsel %vm1922, %v1891, %v1073
        %v1941 = vsel %vm1922, %v1892, %v1075
        %v1942 = vsel %vm1922, %v1893, %v1077
        %v1943 = vsel %vm1922, %v1894, %v1079
        %v1944 = vsel %vm1922, %v1895, %v1081
        %v1945 = vsel %vm1922, %v1896, %v1083
        %v1946 = vsel %vm1922, %v1897, %v1085
        %v1947 = vsel %vm1922, %v1898, %v1087
        %v1948 = vsel %vm1922, %v1899, %v1089
        %v1949 = vsel %vm1922, %v1900, %v1091
        %v1950 = vsel %vm1922, %v1901, %v1093
        %v1951 = vsel %vm1922, %v1902, %v1095
        %v1952 = vsel %vm1922, %v1903, %v1097
        %v1953 = vsel %vm1922, %v1904, %v1099
        %v1954 = vsel %vm1922, %v1905, %v1101
        %v1955 = vsel %vm1922, %v1906, %v1103
        %v1956 = vsel %vm1922, %v1907, %v1105
        %v1957 = vsel %vm1922, %v1908, %v1107
        %v1958 = vsel %vm1922, %v1909, %v1109
        %v1959 = vsel %vm1922, %v1910, %v1111
        %v1960 = vsel %vm1922, %v1911, %v1113
        %v1961 = vsel %vm1922, %v1912, %v1115
        %v1962 = vsel %vm1922, %v1913, %v1117
        %v1963 = vsel %vm1922, %v1914, %v1119
        %v1964 = vsel %vm1922, %v1915, %v1121
        %v1965 = vsel %vm1922, %v1916, %v1123
        %v1966 = vsel %vm1922, %v1917, %v1125
        %v1967 = vsel %vm1922, %v1918, %v1127
        %v1968 = vsel %vm1922, %v1919, %v1129
        %v1969 = vsel %vm1922, %v1920, %v1131
        %v1970 = vsel %vm1922, %v1921, %v1133
        %vm1971 = vcmask 326656
        %v1972 = vsel %vm1971, %v1923, %v1189
        %v1973 = vsel %vm1971, %v1924, %v1191
        %v1974 = vsel %vm1971, %v1925, %v1193
        %v1975 = vsel %vm1971, %v1926, %v1195
        %v1976 = vsel %vm1971, %v1927, %v1197
        %v1977 = vsel %vm1971, %v1928, %v1199
        %v1978 = vsel %vm1971, %v1929, %v1201
        %v1979 = vsel %vm1971, %v1930, %v1203
        %v1980 = vsel %vm1971, %v1931, %v1205
        %v1981 = vsel %vm1971, %v1932, %v1207
        %v1982 = vsel %vm1971, %v1933, %v1209
        %v1983 = vsel %vm1971, %v1934, %v1211
        %v1984 = vsel %vm1971, %v1935, %v1213
        %v1985 = vsel %vm1971, %v1936, %v1215
        %v1986 = vsel %vm1971, %v1937, %v1217
        %v1987 = vsel %vm1971, %v1938, %v1219
        %v1988 = vsel %vm1971, %v1939, %v1221
        %v1989 = vsel %vm1971, %v1940, %v1223
        %v1990 = vsel %vm1971, %v1941, %v1225
        %v1991 = vsel %vm1971, %v1942, %v1227
        %v1992 = vsel %vm1971, %v1943, %v1229
        %v1993 = vsel %vm1971, %v1944, %v1231
        %v1994 = vsel %vm1971, %v1945, %v1233
        %v1995 = vsel %vm1971, %v1946, %v1235
        %v1996 = vsel %vm1971, %v1947, %v1237
        %v1997 = vsel %vm1971, %v1948, %v1239
        %v1998 = vsel %vm1971, %v1949, %v1241
        %v1999 = vsel %vm1971, %v1950, %v1243
        %v2000 = vsel %vm1971, %v1951, %v1245
        %v2001 = vsel %vm1971, %v1952, %v1247
        %v2002 = vsel %vm1971, %v1953, %v1249
        %v2003 = vsel %vm1971, %v1954, %v1251
        %v2004 = vsel %vm1971, %v1955, %v1253
        %v2005 = vsel %vm1971, %v1956, %v1255
        %v2006 = vsel %vm1971, %v1957, %v1257
        %v2007 = vsel %vm1971, %v1958, %v1259
        %v2008 = vsel %vm1971, %v1959, %v1261
        %v2009 = vsel %vm1971, %v1960, %v1263
        %v2010 = vsel %vm1971, %v1961, %v1265
        %v2011 = vsel %vm1971, %v1962, %v1267
        %v2012 = vsel %vm1971, %v1963, %v1269
        %v2013 = vsel %vm1971, %v1964, %v1271
        %v2014 = vsel %vm1971, %v1965, %v1273
        %v2015 = vsel %vm1971, %v1966, %v1275
        %v2016 = vsel %vm1971, %v1967, %v1277
        %v2017 = vsel %vm1971, %v1968, %v1279
        %v2018 = vsel %vm1971, %v1969, %v1281
        %v2019 = vsel %vm1971, %v1970, %v1283
        %vm2020 = vcmask 392192
        %v2021 = vsel %vm2020, %v1972, %v1336
        %v2022 = vsel %vm2020, %v1973, %v1338
        %v2023 = vsel %vm2020, %v1974, %v1340
        %v2024 = vsel %vm2020, %v1975, %v1342
        %v2025 = vsel %vm2020, %v1976, %v1344
        %v2026 = vsel %vm2020, %v1977, %v1346
        %v2027 = vsel %vm2020, %v1978, %v1348
        %v2028 = vsel %vm2020, %v1979, %v1350
        %v2029 = vsel %vm2020, %v1980, %v1352
        %v2030 = vsel %vm2020, %v1981, %v1354
        %v2031 = vsel %vm2020, %v1982, %v1356
        %v2032 = vsel %vm2020, %v1983, %v1358
        %v2033 = vsel %vm2020, %v1984, %v1360
        %v2034 = vsel %vm2020, %v1985, %v1362
        %v2035 = vsel %vm2020, %v1986, %v1364
        %v2036 = vsel %vm2020, %v1987, %v1366
        %v2037 = vsel %vm2020, %v1988, %v1368
        %v2038 = vsel %vm2020, %v1989, %v1370
        %v2039 = vsel %vm2020, %v1990, %v1372
        %v2040 = vsel %vm2020, %v1991, %v1374
        %v2041 = vsel %vm2020, %v1992, %v1376
        %v2042 = vsel %vm2020, %v1993, %v1378
        %v2043 = vsel %vm2020, %v1994, %v1380
        %v2044 = vsel %vm2020, %v1995, %v1382
        %v2045 = vsel %vm2020, %v1996, %v1384
        %v2046 = vsel %vm2020, %v1997, %v1386
        %v2047 = vsel %vm2020, %v1998, %v1388
        %v2048 = vsel %vm2020, %v1999, %v1390
        %v2049 = vsel %vm2020, %v2000, %v1392
        %v2050 = vsel %vm2020, %v2001, %v1394
        %v2051 = vsel %vm2020, %v2002, %v1396
        %v2052 = vsel %vm2020, %v2003, %v1398
        %v2053 = vsel %vm2020, %v2004, %v1400
        %v2054 = vsel %vm2020, %v2005, %v1402
        %v2055 = vsel %vm2020, %v2006, %v1404
        %v2056 = vsel %vm2020, %v2007, %v1406
        %v2057 = vsel %vm2020, %v2008, %v1408
        %v2058 = vsel %vm2020, %v2009, %v1410
        %v2059 = vsel %vm2020, %v2010, %v1412
        %v2060 = vsel %vm2020, %v2011, %v1414
        %v2061 = vsel %vm2020, %v2012, %v1416
        %v2062 = vsel %vm2020, %v2013, %v1418
        %v2063 = vsel %vm2020, %v2014, %v1420
        %v2064 = vsel %vm2020, %v2015, %v1422
        %v2065 = vsel %vm2020, %v2016, %v1424
        %v2066 = vsel %vm2020, %v2017, %v1426
        %v2067 = vsel %vm2020, %v2018, %v1428
        %v2068 = vsel %vm2020, %v2019, %v1430
        %vm2069 = vcmask 457728
        %v2070 = vsel %vm2069, %v2021, %v1483
        %v2071 = vsel %vm2069, %v2022, %v1485
        %v2072 = vsel %vm2069, %v2023, %v1487
        %v2073 = vsel %vm2069, %v2024, %v1489
        %v2074 = vsel %vm2069, %v2025, %v1491
        %v2075 = vsel %vm2069, %v2026, %v1493
        %v2076 = vsel %vm2069, %v2027, %v1495
        %v2077 = vsel %vm2069, %v2028, %v1497
        %v2078 = vsel %vm2069, %v2029, %v1499
        %v2079 = vsel %vm2069, %v2030, %v1501
        %v2080 = vsel %vm2069, %v2031, %v1503
        %v2081 = vsel %vm2069, %v2032, %v1505
        %v2082 = vsel %vm2069, %v2033, %v1507
        %v2083 = vsel %vm2069, %v2034, %v1509
        %v2084 = vsel %vm2069, %v2035, %v1511
        %v2085 = vsel %vm2069, %v2036, %v1513
        %v2086 = vsel %vm2069, %v2037, %v1515
        %v2087 = vsel %vm2069, %v2038, %v1517
        %v2088 = vsel %vm2069, %v2039, %v1519
        %v2089 = vsel %vm2069, %v2040, %v1521
        %v2090 = vsel %vm2069, %v2041, %v1523
        %v2091 = vsel %vm2069, %v2042, %v1525
        %v2092 = vsel %vm2069, %v2043, %v1527
        %v2093 = vsel %vm2069, %v2044, %v1529
        %v2094 = vsel %vm2069, %v2045, %v1531
        %v2095 = vsel %vm2069, %v2046, %v1533
        %v2096 = vsel %vm2069, %v2047, %v1535
        %v2097 = vsel %vm2069, %v2048, %v1537
        %v2098 = vsel %vm2069, %v2049, %v1539
        %v2099 = vsel %vm2069, %v2050, %v1541
        %v2100 = vsel %vm2069, %v2051, %v1543
        %v2101 = vsel %vm2069, %v2052, %v1545
        %v2102 = vsel %vm2069, %v2053, %v1547
        %v2103 = vsel %vm2069, %v2054, %v1549
        %v2104 = vsel %vm2069, %v2055, %v1551
        %v2105 = vsel %vm2069, %v2056, %v1553
        %v2106 = vsel %vm2069, %v2057, %v1555
        %v2107 = vsel %vm2069, %v2058, %v1557
        %v2108 = vsel %vm2069, %v2059, %v1559
        %v2109 = vsel %vm2069, %v2060, %v1561
        %v2110 = vsel %vm2069, %v2061, %v1563
        %v2111 = vsel %vm2069, %v2062, %v1565
        %v2112 = vsel %vm2069, %v2063, %v1567
        %v2113 = vsel %vm2069, %v2064, %v1569
        %v2114 = vsel %vm2069, %v2065, %v1571
        %v2115 = vsel %vm2069, %v2066, %v1573
        %v2116 = vsel %vm2069, %v2067, %v1575
        %v2117 = vsel %vm2069, %v2068, %v1577
        %vm2118 = vcmask 523264
        %v2119 = vsel %vm2118, %v2070, %v1633
        %v2120 = vsel %vm2118, %v2071, %v1635
        %v2121 = vsel %vm2118, %v2072, %v1637
        %v2122 = vsel %vm2118, %v2073, %v1639
        %v2123 = vsel %vm2118, %v2074, %v1641
        %v2124 = vsel %vm2118, %v2075, %v1643
        %v2125 = vsel %vm2118, %v2076, %v1645
        %v2126 = vsel %vm2118, %v2077, %v1647
        %v2127 = vsel %vm2118, %v2078, %v1649
        %v2128 = vsel %vm2118, %v2079, %v1651
        %v2129 = vsel %vm2118, %v2080, %v1653
        %v2130 = vsel %vm2118, %v2081, %v1655
        %v2131 = vsel %vm2118, %v2082, %v1657
        %v2132 = vsel %vm2118, %v2083, %v1659
        %v2133 = vsel %vm2118, %v2084, %v1661
        %v2134 = vsel %vm2118, %v2085, %v1663
        %v2135 = vsel %vm2118, %v2086, %v1665
        %v2136 = vsel %vm2118, %v2087, %v1667
        %v2137 = vsel %vm2118, %v2088, %v1669
        %v2138 = vsel %vm2118, %v2089, %v1671
        %v2139 = vsel %vm2118, %v2090, %v1673
        %v2140 = vsel %vm2118, %v2091, %v1675
        %v2141 = vsel %vm2118, %v2092, %v1677
        %v2142 = vsel %vm2118, %v2093, %v1679
        %v2143 = vsel %vm2118, %v2094, %v1681
        %v2144 = vsel %vm2118, %v2095, %v1683
        %v2145 = vsel %vm2118, %v2096, %v1685
        %v2146 = vsel %vm2118, %v2097, %v1687
        %v2147 = vsel %vm2118, %v2098, %v1689
        %v2148 = vsel %vm2118, %v2099, %v1691
        %v2149 = vsel %vm2118, %v2100, %v1693
        %v2150 = vsel %vm2118, %v2101, %v1695
        %v2151 = vsel %vm2118, %v2102, %v1697
        %v2152 = vsel %vm2118, %v2103, %v1699
        %v2153 = vsel %vm2118, %v2104, %v1701
        %v2154 = vsel %vm2118, %v2105, %v1703
        %v2155 = vsel %vm2118, %v2106, %v1705
        %v2156 = vsel %vm2118, %v2107, %v1707
        %v2157 = vsel %vm2118, %v2108, %v1709
        %v2158 = vsel %vm2118, %v2109, %v1711
        %v2159 = vsel %vm2118, %v2110, %v1713
        %v2160 = vsel %vm2118, %v2111, %v1715
        %v2161 = vsel %vm2118, %v2112, %v1717
        %v2162 = vsel %vm2118, %v2113, %v1719
        %v2163 = vsel %vm2118, %v2114, %v1721
        %v2164 = vsel %vm2118, %v2115, %v1723
        %v2165 = vsel %vm2118, %v2116, %v1725
        %v2166 = vsel %vm2118, %v2117, %v1727
        %vm2215 = vcmask 1040384
        %v2216 = vrot.slane %v2119, 7
        %v2217 = vrot.slane %v2120, 7
        %v2218 = vsel %vm2215, %v2216, %v2217
        %v2219 = vrot.slane %v2121, 7
        %v2220 = vsel %vm2215, %v2217, %v2219
        %v2221 = vrot.slane %v2122, 7
        %v2222 = vrot.slane %v2123, 7
        %v2223 = vsel %vm2215, %v2221, %v2222
        %v2224 = vrot.slane %v2124, 7
        %v2225 = vsel %vm2215, %v2222, %v2224
        %v2226 = vrot.slane %v2125, 7
        %v2227 = vrot.slane %v2126, 7
        %v2228 = vsel %vm2215, %v2226, %v2227
        %v2229 = vrot.slane %v2127, 7
        %v2230 = vsel %vm2215, %v2227, %v2229
        %v2231 = vrot.slane %v2128, 7
        %v2232 = vrot.slane %v2129, 7
        %v2233 = vsel %vm2215, %v2231, %v2232
        %v2234 = vrot.slane %v2130, 7
        %v2235 = vsel %vm2215, %v2232, %v2234
        %v2236 = vrot.slane %v2131, 7
        %v2237 = vrot.slane %v2132, 7
        %v2238 = vsel %vm2215, %v2236, %v2237
        %v2239 = vrot.slane %v2133, 7
        %v2240 = vsel %vm2215, %v2237, %v2239
        %v2241 = vrot.slane %v2134, 7
        %v2242 = vrot.slane %v2135, 7
        %v2243 = vsel %vm2215, %v2241, %v2242
        %v2244 = vrot.slane %v2136, 7
        %v2245 = vsel %vm2215, %v2242, %v2244
        %v2246 = vrot.slane %v2137, 7
        %v2247 = vrot.slane %v2138, 7
        %v2248 = vsel %vm2215, %v2246, %v2247
        %v2249 = vrot.slane %v2139, 7
        %v2250 = vsel %vm2215, %v2247, %v2249
        %v2251 = vrot.slane %v2140, 7
        %v2252 = vrot.slane %v2141, 7
        %v2253 = vsel %vm2215, %v2251, %v2252
        %v2254 = vrot.slane %v2142, 7
        %v2255 = vsel %vm2215, %v2252, %v2254
        %v2256 = vrot.slane %v2143, 7
        %v2257 = vrot.slane %v2144, 7
        %v2258 = vsel %vm2215, %v2256, %v2257
        %v2259 = vrot.slane %v2145, 7
        %v2260 = vsel %vm2215, %v2257, %v2259
        %v2261 = vrot.slane %v2146, 7
        %v2262 = vrot.slane %v2147, 7
        %v2263 = vsel %vm2215, %v2261, %v2262
        %v2264 = vrot.slane %v2148, 7
        %v2265 = vsel %vm2215, %v2262, %v2264
        %v2266 = vrot.slane %v2149, 7
        %v2267 = vrot.slane %v2150, 7
        %v2268 = vsel %vm2215, %v2266, %v2267
        %v2269 = vrot.slane %v2151, 7
        %v2270 = vsel %vm2215, %v2267, %v2269
        %v2271 = vrot.slane %v2152, 7
        %v2272 = vrot.slane %v2153, 7
        %v2273 = vsel %vm2215, %v2271, %v2272
        %v2274 = vrot.slane %v2154, 7
        %v2275 = vsel %vm2215, %v2272, %v2274
        %v2276 = vrot.slane %v2155, 7
        %v2277 = vrot.slane %v2156, 7
        %v2278 = vsel %vm2215, %v2276, %v2277
        %v2279 = vrot.slane %v2157, 7
        %v2280 = vsel %vm2215, %v2277, %v2279
        %v2281 = vrot.slane %v2158, 7
        %v2282 = vrot.slane %v2159, 7
        %v2283 = vsel %vm2215, %v2281, %v2282
        %v2284 = vrot.slane %v2160, 7
        %v2285 = vsel %vm2215, %v2282, %v2284
        %v2286 = vrot.slane %v2161, 7
        %v2287 = vrot.slane %v2162, 7
        %v2288 = vsel %vm2215, %v2286, %v2287
        %v2289 = vrot.slane %v2163, 7
        %v2290 = vsel %vm2215, %v2287, %v2289
        %v2291 = vrot.slane %v2164, 7
        %v2292 = vrot.slane %v2165, 7
        %v2293 = vsel %vm2215, %v2291, %v2292
        %v2294 = vrot.slane %v2166, 7
        %v2295 = vsel %vm2215, %v2292, %v2294
        %v2296 = vld [vmem:[%s1] sm:$0xff]
        %v2297 = vld [vmem:[%s1 + $0x8] sm:$0xff]
        %v2298 = vld [vmem:[%s1 + $0x10] sm:$0xff]
        %v2299 = vld [vmem:[%s1 + $0x18] sm:$0xff]
        %v2300 = vld [vmem:[%s1 + $0x20] sm:$0xff]
        %v2301 = vld [vmem:[%s1 + $0x28] sm:$0xff]
        %v2302 = vld [vmem:[%s1 + $0x30] sm:$0xff]
        %v2303 = vld [vmem:[%s1 + $0x38] sm:$0xff]
        %v2304 = vld [vmem:[%s1 + $0x40] sm:$0xff]
        %vm2305 = vcmask 588800
        %v2306 = vsel %vm2305, %v2218, 0
        %v2308 = vsel %vm2305, %v2220, 0
        %v2310 = vsel %vm2305, %v2223, 0
        %v2312 = vsel %vm2305, %v2225, 0
        %v2314 = vsel %vm2305, %v2228, 0
        %v2316 = vsel %vm2305, %v2230, 0
        %v2318 = vsel %vm2305, %v2233, 0
        %v2320 = vsel %vm2305, %v2235, 0
        %v2322 = vsel %vm2305, %v2238, 0
        %v2324 = vsel %vm2305, %v2240, 0
        %v2326 = vsel %vm2305, %v2243, 0
        %v2328 = vsel %vm2305, %v2245, 0
        %v2330 = vsel %vm2305, %v2248, 0
        %v2332 = vsel %vm2305, %v2250, 0
        %v2334 = vsel %vm2305, %v2253, 0
        %v2336 = vsel %vm2305, %v2255, 0
        %v2338 = vsel %vm2305, %v2258, 0
        %v2340 = vsel %vm2305, %v2260, 0
        %v2342 = vsel %vm2305, %v2263, 0
        %v2344 = vsel %vm2305, %v2265, 0
        %v2346 = vsel %vm2305, %v2268, 0
        %v2348 = vsel %vm2305, %v2270, 0
        %v2350 = vsel %vm2305, %v2273, 0
        %v2352 = vsel %vm2305, %v2275, 0
        %v2354 = vsel %vm2305, %v2278, 0
        %v2356 = vsel %vm2305, %v2280, 0
        %v2358 = vsel %vm2305, %v2283, 0
        %v2360 = vsel %vm2305, %v2285, 0
        %v2362 = vsel %vm2305, %v2288, 0
        %v2364 = vsel %vm2305, %v2290, 0
        %v2366 = vsel %vm2305, %v2293, 0
        %v2368 = vsel %vm2305, %v2295, 0
        %2370 = vmatpush.msra.mxu0 0.0
        %2371 = vmatpush.msra.mxu0 0.0
        %2372 = vmatpush.msra.mxu0 0.0
        %2373 = vmatpush.msra.mxu0 0.0
        %2374 = vmatpush.msra.mxu0 0.0
        %2375 = vmatpush.msra.mxu0 0.0
        %2376 = vmatpush.msra.mxu0 0.0
        %2377 = vmatpush.msra.mxu0 %v2304
        %2378 = vmatpush.msra.mxu0 %v2303
        %2379 = vmatpush.msra.mxu0 %v2302
        %2380 = vmatpush.msra.mxu0 %v2301
        %2381 = vmatpush.msra.mxu0 %v2300
        %2382 = vmatpush.msra.mxu0 %v2299
        %2383 = vmatpush.msra.mxu0 %v2298
        %2384 = vmatpush.msra.mxu0 %v2297
        %2385 = vmatpush.msra.mxu0 %v2296
        %2386 = vmatmul.f32.gmra.mxu0 %v2306
        %v2387 = vpop.f32.mrf.mxu0
        %v2388 = vadd.f32 0.0, %v2387
        %2389 = vmatmul.f32.gmra.mxu0 %v2308
        %v2390 = vpop.f32.mrf.mxu0
        %v2391 = vadd.f32 0.0, %v2390
        %2392 = vmatmul.f32.gmra.mxu0 %v2310
        %v2393 = vpop.f32.mrf.mxu0
        %v2394 = vadd.f32 0.0, %v2393
        %2395 = vmatmul.f32.gmra.mxu0 %v2312
        %v2396 = vpop.f32.mrf.mxu0
        %v2397 = vadd.f32 0.0, %v2396
        %2398 = vmatmul.f32.gmra.mxu0 %v2314
        %v2399 = vpop.f32.mrf.mxu0
        %v2400 = vadd.f32 0.0, %v2399
        %2401 = vmatmul.f32.gmra.mxu0 %v2316
        %v2402 = vpop.f32.mrf.mxu0
        %v2403 = vadd.f32 0.0, %v2402
        %2404 = vmatmul.f32.gmra.mxu0 %v2318
        %v2405 = vpop.f32.mrf.mxu0
        %v2406 = vadd.f32 0.0, %v2405
        %2407 = vmatmul.f32.gmra.mxu0 %v2320
        %v2408 = vpop.f32.mrf.mxu0
        %v2409 = vadd.f32 0.0, %v2408
        %2410 = vmatmul.f32.gmra.mxu0 %v2322
        %v2411 = vpop.f32.mrf.mxu0
        %v2412 = vadd.f32 0.0, %v2411
        %2413 = vmatmul.f32.gmra.mxu0 %v2324
        %v2414 = vpop.f32.mrf.mxu0
        %v2415 = vadd.f32 0.0, %v2414
        %2416 = vmatmul.f32.gmra.mxu0 %v2326
        %v2417 = vpop.f32.mrf.mxu0
        %v2418 = vadd.f32 0.0, %v2417
        %2419 = vmatmul.f32.gmra.mxu0 %v2328
        %v2420 = vpop.f32.mrf.mxu0
        %v2421 = vadd.f32 0.0, %v2420
        %2422 = vmatmul.f32.gmra.mxu0 %v2330
        %v2423 = vpop.f32.mrf.mxu0
        %v2424 = vadd.f32 0.0, %v2423
        %2425 = vmatmul.f32.gmra.mxu0 %v2332
        %v2426 = vpop.f32.mrf.mxu0
        %v2427 = vadd.f32 0.0, %v2426
        %2428 = vmatmul.f32.gmra.mxu0 %v2334
        %v2429 = vpop.f32.mrf.mxu0
        %v2430 = vadd.f32 0.0, %v2429
        %2431 = vmatmul.f32.gmra.mxu0 %v2336
        %v2432 = vpop.f32.mrf.mxu0
        %v2433 = vadd.f32 0.0, %v2432
        %2434 = vmatmul.f32.gmra.mxu0 %v2338
        %v2435 = vpop.f32.mrf.mxu0
        %v2436 = vadd.f32 0.0, %v2435
        %2437 = vmatmul.f32.gmra.mxu0 %v2340
        %v2438 = vpop.f32.mrf.mxu0
        %v2439 = vadd.f32 0.0, %v2438
        %2440 = vmatmul.f32.gmra.mxu0 %v2342
        %v2441 = vpop.f32.mrf.mxu0
        %v2442 = vadd.f32 0.0, %v2441
        %2443 = vmatmul.f32.gmra.mxu0 %v2344
        %v2444 = vpop.f32.mrf.mxu0
        %v2445 = vadd.f32 0.0, %v2444
        %2446 = vmatmul.f32.gmra.mxu0 %v2346
        %v2447 = vpop.f32.mrf.mxu0
        %v2448 = vadd.f32 0.0, %v2447
        %2449 = vmatmul.f32.gmra.mxu0 %v2348
        %v2450 = vpop.f32.mrf.mxu0
        %v2451 = vadd.f32 0.0, %v2450
        %2452 = vmatmul.f32.gmra.mxu0 %v2350
        %v2453 = vpop.f32.mrf.mxu0
        %v2454 = vadd.f32 0.0, %v2453
        %2455 = vmatmul.f32.gmra.mxu0 %v2352
        %v2456 = vpop.f32.mrf.mxu0
        %v2457 = vadd.f32 0.0, %v2456
        %2458 = vmatmul.f32.gmra.mxu0 %v2354
        %v2459 = vpop.f32.mrf.mxu0
        %v2460 = vadd.f32 0.0, %v2459
        %2461 = vmatmul.f32.gmra.mxu0 %v2356
        %v2462 = vpop.f32.mrf.mxu0
        %v2463 = vadd.f32 0.0, %v2462
        %2464 = vmatmul.f32.gmra.mxu0 %v2358
        %v2465 = vpop.f32.mrf.mxu0
        %v2466 = vadd.f32 0.0, %v2465
        %2467 = vmatmul.f32.gmra.mxu0 %v2360
        %v2468 = vpop.f32.mrf.mxu0
        %v2469 = vadd.f32 0.0, %v2468
        %2470 = vmatmul.f32.gmra.mxu0 %v2362
        %v2471 = vpop.f32.mrf.mxu0
        %v2472 = vadd.f32 0.0, %v2471
        %2473 = vmatmul.f32.gmra.mxu0 %v2364
        %v2474 = vpop.f32.mrf.mxu0
        %v2475 = vadd.f32 0.0, %v2474
        %2476 = vmatmul.f32.gmra.mxu0 %v2366
        %v2477 = vpop.f32.mrf.mxu0
        %v2478 = vadd.f32 0.0, %v2477
        %2479 = vmatmul.f32.gmra.mxu0 %v2368
        %v2480 = vpop.f32.mrf.mxu0
        %v2481 = vadd.f32 0.0, %v2480
        %2482 = vdwg.mxu0
        %v2483 = vld [vmem:[%s2] sm:$0x1]
        %v2485 = vperm.slane %v2483, 0
        %v2487 = vmul.f32 %v2388, %v2485
        %v2488 = vmul.f32 %v2391, %v2485
        %v2489 = vmul.f32 %v2394, %v2485
        %v2490 = vmul.f32 %v2397, %v2485
        %v2491 = vmul.f32 %v2400, %v2485
        %v2492 = vmul.f32 %v2403, %v2485
        %v2493 = vmul.f32 %v2406, %v2485
        %v2494 = vmul.f32 %v2409, %v2485
        %v2495 = vmul.f32 %v2412, %v2485
        %v2496 = vmul.f32 %v2415, %v2485
        %v2497 = vmul.f32 %v2418, %v2485
        %v2498 = vmul.f32 %v2421, %v2485
        %v2499 = vmul.f32 %v2424, %v2485
        %v2500 = vmul.f32 %v2427, %v2485
        %v2501 = vmul.f32 %v2430, %v2485
        %v2502 = vmul.f32 %v2433, %v2485
        %v2503 = vmul.f32 %v2436, %v2485
        %v2504 = vmul.f32 %v2439, %v2485
        %v2505 = vmul.f32 %v2442, %v2485
        %v2506 = vmul.f32 %v2445, %v2485
        %v2507 = vmul.f32 %v2448, %v2485
        %v2508 = vmul.f32 %v2451, %v2485
        %v2509 = vmul.f32 %v2454, %v2485
        %v2510 = vmul.f32 %v2457, %v2485
        %v2511 = vmul.f32 %v2460, %v2485
        %v2512 = vmul.f32 %v2463, %v2485
        %v2513 = vmul.f32 %v2466, %v2485
        %v2514 = vmul.f32 %v2469, %v2485
        %v2515 = vmul.f32 %v2472, %v2485
        %v2516 = vmul.f32 %v2475, %v2485
        %v2517 = vmul.f32 %v2478, %v2485
        %v2518 = vmul.f32 %v2481, %v2485
        %v2519 = vld [vmem:[%s3] sm:$0x1]
        %v2521 = vperm.slane %v2519, 0
        %v2523 = vadd.f32 %v2487, %v2521
        %v2524 = vadd.f32 %v2488, %v2521
        %v2525 = vadd.f32 %v2489, %v2521
        %v2526 = vadd.f32 %v2490, %v2521
        %v2527 = vadd.f32 %v2491, %v2521
        %v2528 = vadd.f32 %v2492, %v2521
        %v2529 = vadd.f32 %v2493, %v2521
        %v2530 = vadd.f32 %v2494, %v2521
        %v2531 = vadd.f32 %v2495, %v2521
        %v2532 = vadd.f32 %v2496, %v2521
        %v2533 = vadd.f32 %v2497, %v2521
        %v2534 = vadd.f32 %v2498, %v2521
        %v2535 = vadd.f32 %v2499, %v2521
        %v2536 = vadd.f32 %v2500, %v2521
        %v2537 = vadd.f32 %v2501, %v2521
        %v2538 = vadd.f32 %v2502, %v2521
        %v2539 = vadd.f32 %v2503, %v2521
        %v2540 = vadd.f32 %v2504, %v2521
        %v2541 = vadd.f32 %v2505, %v2521
        %v2542 = vadd.f32 %v2506, %v2521
        %v2543 = vadd.f32 %v2507, %v2521
        %v2544 = vadd.f32 %v2508, %v2521
        %v2545 = vadd.f32 %v2509, %v2521
        %v2546 = vadd.f32 %v2510, %v2521
        %v2547 = vadd.f32 %v2511, %v2521
        %v2548 = vadd.f32 %v2512, %v2521
        %v2549 = vadd.f32 %v2513, %v2521
        %v2550 = vadd.f32 %v2514, %v2521
        %v2551 = vadd.f32 %v2515, %v2521
        %v2552 = vadd.f32 %v2516, %v2521
        %v2553 = vadd.f32 %v2517, %v2521
        %v2554 = vadd.f32 %v2518, %v2521
        %v2555 = vmax.f32 %v2523, 0.0
        %v2556 = vmax.f32 %v2524, 0.0
        %v2557 = vmax.f32 %v2525, 0.0
        %v2558 = vmax.f32 %v2526, 0.0
        %v2559 = vmax.f32 %v2527, 0.0
        %v2560 = vmax.f32 %v2528, 0.0
        %v2561 = vmax.f32 %v2529, 0.0
        %v2562 = vmax.f32 %v2530, 0.0
        %v2563 = vmax.f32 %v2531, 0.0
        %v2564 = vmax.f32 %v2532, 0.0
        %v2565 = vmax.f32 %v2533, 0.0
        %v2566 = vmax.f32 %v2534, 0.0
        %v2567 = vmax.f32 %v2535, 0.0
        %v2568 = vmax.f32 %v2536, 0.0
        %v2569 = vmax.f32 %v2537, 0.0
        %v2570 = vmax.f32 %v2538, 0.0
        %v2571 = vmax.f32 %v2539, 0.0
        %v2572 = vmax.f32 %v2540, 0.0
        %v2573 = vmax.f32 %v2541, 0.0
        %v2574 = vmax.f32 %v2542, 0.0
        %v2575 = vmax.f32 %v2543, 0.0
        %v2576 = vmax.f32 %v2544, 0.0
        %v2577 = vmax.f32 %v2545, 0.0
        %v2578 = vmax.f32 %v2546, 0.0
        %v2579 = vmax.f32 %v2547, 0.0
        %v2580 = vmax.f32 %v2548, 0.0
        %v2581 = vmax.f32 %v2549, 0.0
        %v2582 = vmax.f32 %v2550, 0.0
        %v2583 = vmax.f32 %v2551, 0.0
        %v2584 = vmax.f32 %v2552, 0.0
        %v2585 = vmax.f32 %v2553, 0.0
        %v2586 = vmax.f32 %v2554, 0.0
        %2587 = vst.msk [vmem:[%s301 + $0x8] sm:$0xff] %vm196, %v2555
        %2588 = vst.msk [vmem:[%s301 + $0x10] sm:$0xff] %vm196, %v2556
        %2589 = vst.msk [vmem:[%s301 + $0x28] sm:$0xff] %vm196, %v2557
        %2590 = vst.msk [vmem:[%s301 + $0x30] sm:$0xff] %vm196, %v2558
        %2591 = vst.msk [vmem:[%s301 + $0x48] sm:$0xff] %vm196, %v2559
        %2592 = vst.msk [vmem:[%s301 + $0x50] sm:$0xff] %vm196, %v2560
        %2593 = vst.msk [vmem:[%s301 + $0x68] sm:$0xff] %vm196, %v2561
        %2594 = vst.msk [vmem:[%s301 + $0x70] sm:$0xff] %vm196, %v2562
        %2595 = vst.msk [vmem:[%s301 + $0x88] sm:$0xff] %vm196, %v2563
        %2596 = vst.msk [vmem:[%s301 + $0x90] sm:$0xff] %vm196, %v2564
        %2597 = vst.msk [vmem:[%s301 + $0xa8] sm:$0xff] %vm196, %v2565
        %2598 = vst.msk [vmem:[%s301 + $0xb0] sm:$0xff] %vm196, %v2566
        %2599 = vst.msk [vmem:[%s301 + $0xc8] sm:$0xff] %vm196, %v2567
        %2600 = vst.msk [vmem:[%s301 + $0xd0] sm:$0xff] %vm196, %v2568
        %2601 = vst.msk [vmem:[%s301 + $0xe8] sm:$0xff] %vm196, %v2569
        %2602 = vst.msk [vmem:[%s301 + $0xf0] sm:$0xff] %vm196, %v2570
        %2603 = vst.msk [vmem:[%s301 + $0x108] sm:$0xff] %vm196, %v2571
        %2604 = vst.msk [vmem:[%s301 + $0x110] sm:$0xff] %vm196, %v2572
        %2605 = vst.msk [vmem:[%s301 + $0x128] sm:$0xff] %vm196, %v2573
        %2606 = vst.msk [vmem:[%s301 + $0x130] sm:$0xff] %vm196, %v2574
        %2607 = vst.msk [vmem:[%s301 + $0x148] sm:$0xff] %vm196, %v2575
        %2608 = vst.msk [vmem:[%s301 + $0x150] sm:$0xff] %vm196, %v2576
        %2609 = vst.msk [vmem:[%s301 + $0x168] sm:$0xff] %vm196, %v2577
        %2610 = vst.msk [vmem:[%s301 + $0x170] sm:$0xff] %vm196, %v2578
        %2611 = vst.msk [vmem:[%s301 + $0x188] sm:$0xff] %vm196, %v2579
        %2612 = vst.msk [vmem:[%s301 + $0x190] sm:$0xff] %vm196, %v2580
        %2613 = vst.msk [vmem:[%s301 + $0x1a8] sm:$0xff] %vm196, %v2581
        %2614 = vst.msk [vmem:[%s301 + $0x1b0] sm:$0xff] %vm196, %v2582
        %2615 = vst.msk [vmem:[%s301 + $0x1c8] sm:$0xff] %vm196, %v2583
        %2616 = vst.msk [vmem:[%s301 + $0x1d0] sm:$0xff] %vm196, %v2584
        %2617 = vst.msk [vmem:[%s301 + $0x1e8] sm:$0xff] %vm196, %v2585
        %2618 = vst.msk [vmem:[%s301 + $0x1f0] sm:$0xff] %vm196, %v2586
        %v2619 = vld [vmem:[#allocation2] sm:$0xff]
        %v2620 = vld [vmem:[#allocation2 + $0x8] sm:$0xff]
        %v2621 = vld [vmem:[#allocation2 + $0x10] sm:$0xff]
        %v2622 = vld [vmem:[#allocation2 + $0x18] sm:$0xff]
        %v2623 = vld [vmem:[#allocation2 + $0x20] sm:$0xff]
        %v2624 = vld [vmem:[#allocation2 + $0x28] sm:$0xff]
        %v2625 = vld [vmem:[#allocation2 + $0x30] sm:$0xff]
        %v2626 = vld [vmem:[#allocation2 + $0x38] sm:$0xff]
        %v2627 = vld [vmem:[#allocation2 + $0x40] sm:$0xff]
        %v2628 = vld [vmem:[#allocation2 + $0x48] sm:$0xff]
        %v2629 = vld [vmem:[#allocation2 + $0x50] sm:$0xff]
        %v2630 = vld [vmem:[#allocation2 + $0x58] sm:$0xff]
        %v2631 = vld [vmem:[#allocation2 + $0x60] sm:$0xff]
        %v2632 = vld [vmem:[#allocation2 + $0x68] sm:$0xff]
        %v2633 = vld [vmem:[#allocation2 + $0x70] sm:$0xff]
        %v2634 = vld [vmem:[#allocation2 + $0x78] sm:$0xff]
        %v2635 = vld [vmem:[#allocation2 + $0x80] sm:$0xff]
        %v2636 = vld [vmem:[#allocation2 + $0x88] sm:$0xff]
        %v2637 = vld [vmem:[#allocation2 + $0x90] sm:$0xff]
        %v2638 = vld [vmem:[#allocation2 + $0x98] sm:$0xff]
        %v2639 = vld [vmem:[#allocation2 + $0xa0] sm:$0xff]
        %v2640 = vld [vmem:[#allocation2 + $0xa8] sm:$0xff]
        %v2641 = vld [vmem:[#allocation2 + $0xb0] sm:$0xff]
        %v2642 = vld [vmem:[#allocation2 + $0xb8] sm:$0xff]
        %v2643 = vld [vmem:[#allocation2 + $0xc0] sm:$0xff]
        %v2644 = vld [vmem:[#allocation2 + $0xc8] sm:$0xff]
        %v2645 = vld [vmem:[#allocation2 + $0xd0] sm:$0xff]
        %v2646 = vld [vmem:[#allocation2 + $0xd8] sm:$0xff]
        %v2647 = vld [vmem:[#allocation2 + $0xe0] sm:$0xff]
        %v2648 = vld [vmem:[#allocation2 + $0xe8] sm:$0xff]
        %v2649 = vld [vmem:[#allocation2 + $0xf0] sm:$0xff]
        %v2650 = vld [vmem:[#allocation2 + $0xf8] sm:$0xff]
        %v2651 = vld [vmem:[#allocation2 + $0x100] sm:$0xff]
        %v2652 = vld [vmem:[#allocation2 + $0x108] sm:$0xff]
        %v2653 = vld [vmem:[#allocation2 + $0x110] sm:$0xff]
        %v2654 = vld [vmem:[#allocation2 + $0x118] sm:$0xff]
        %v2655 = vld [vmem:[#allocation2 + $0x120] sm:$0xff]
        %v2656 = vld [vmem:[#allocation2 + $0x128] sm:$0xff]
        %v2657 = vld [vmem:[#allocation2 + $0x130] sm:$0xff]
        %v2658 = vld [vmem:[#allocation2 + $0x138] sm:$0xff]
        %v2659 = vld [vmem:[#allocation2 + $0x140] sm:$0xff]
        %v2660 = vld [vmem:[#allocation2 + $0x148] sm:$0xff]
        %v2661 = vld [vmem:[#allocation2 + $0x150] sm:$0xff]
        %v2662 = vld [vmem:[#allocation2 + $0x158] sm:$0xff]
        %v2663 = vld [vmem:[#allocation2 + $0x160] sm:$0xff]
        %v2664 = vld [vmem:[#allocation2 + $0x168] sm:$0xff]
        %v2665 = vld [vmem:[#allocation2 + $0x170] sm:$0xff]
        %v2666 = vld [vmem:[#allocation2 + $0x178] sm:$0xff]
        %v2667 = vld [vmem:[#allocation2 + $0x180] sm:$0xff]
        %v2668 = vld [vmem:[#allocation2 + $0x188] sm:$0xff]
        %v2669 = vld [vmem:[#allocation2 + $0x190] sm:$0xff]
        %v2670 = vld [vmem:[#allocation2 + $0x198] sm:$0xff]
        %v2671 = vld [vmem:[#allocation2 + $0x1a0] sm:$0xff]
        %v2672 = vld [vmem:[#allocation2 + $0x1a8] sm:$0xff]
        %v2673 = vld [vmem:[#allocation2 + $0x1b0] sm:$0xff]
        %v2674 = vld [vmem:[#allocation2 + $0x1b8] sm:$0xff]
        %v2675 = vld [vmem:[#allocation2 + $0x1c0] sm:$0xff]
        %v2676 = vld [vmem:[#allocation2 + $0x1c8] sm:$0xff]
        %v2677 = vld [vmem:[#allocation2 + $0x1d0] sm:$0xff]
        %v2678 = vld [vmem:[#allocation2 + $0x1d8] sm:$0xff]
        %v2679 = vld [vmem:[#allocation2 + $0x1e0] sm:$0xff]
        %v2680 = vld [vmem:[#allocation2 + $0x1e8] sm:$0xff]
        %v2681 = vld [vmem:[#allocation2 + $0x1f0] sm:$0xff]
        %v2682 = vld [vmem:[#allocation2 + $0x1f8] sm:$0xff]
        %v2683 = vld [vmem:[#allocation2 + $0x200] sm:$0xff]
        %v2684 = vld [vmem:[#allocation2 + $0x208] sm:$0xff]
        %v2685 = vld [vmem:[#allocation2 + $0x210] sm:$0xff]
        %v2686 = vld [vmem:[#allocation2 + $0x218] sm:$0xff]
        %v2687 = vld [vmem:[#allocation2 + $0x220] sm:$0xff]
        %v2688 = vld [vmem:[#allocation2 + $0x228] sm:$0xff]
        %v2689 = vld [vmem:[#allocation2 + $0x230] sm:$0xff]
        %v2690 = vld [vmem:[#allocation2 + $0x238] sm:$0xff]
        %v2723 = vrot.slane %v2620, 1
        %v2724 = vrot.slane %v2621, 1
        %v2725 = vsel %vm439, %v2723, %v2724
        %v2726 = vrot.slane %v2624, 1
        %v2727 = vrot.slane %v2625, 1
        %v2728 = vsel %vm439, %v2726, %v2727
        %v2729 = vrot.slane %v2628, 1
        %v2730 = vrot.slane %v2629, 1
        %v2731 = vsel %vm439, %v2729, %v2730
        %v2732 = vrot.slane %v2632, 1
        %v2733 = vrot.slane %v2633, 1
        %v2734 = vsel %vm439, %v2732, %v2733
        %v2735 = vrot.slane %v2636, 1
        %v2736 = vrot.slane %v2637, 1
        %v2737 = vsel %vm439, %v2735, %v2736
        %v2738 = vrot.slane %v2640, 1
        %v2739 = vrot.slane %v2641, 1
        %v2740 = vsel %vm439, %v2738, %v2739
        %v2741 = vrot.slane %v2644, 1
        %v2742 = vrot.slane %v2645, 1
        %v2743 = vsel %vm439, %v2741, %v2742
        %v2744 = vrot.slane %v2648, 1
        %v2745 = vrot.slane %v2649, 1
        %v2746 = vsel %vm439, %v2744, %v2745
        %v2747 = vrot.slane %v2652, 1
        %v2748 = vrot.slane %v2653, 1
        %v2749 = vsel %vm439, %v2747, %v2748
        %v2750 = vrot.slane %v2656, 1
        %v2751 = vrot.slane %v2657, 1
        %v2752 = vsel %vm439, %v2750, %v2751
        %v2753 = vrot.slane %v2660, 1
        %v2754 = vrot.slane %v2661, 1
        %v2755 = vsel %vm439, %v2753, %v2754
        %v2756 = vrot.slane %v2664, 1
        %v2757 = vrot.slane %v2665, 1
        %v2758 = vsel %vm439, %v2756, %v2757
        %v2759 = vrot.slane %v2668, 1
        %v2760 = vrot.slane %v2669, 1
        %v2761 = vsel %vm439, %v2759, %v2760
        %v2762 = vrot.slane %v2672, 1
        %v2763 = vrot.slane %v2673, 1
        %v2764 = vsel %vm439, %v2762, %v2763
        %v2765 = vrot.slane %v2676, 1
        %v2766 = vrot.slane %v2677, 1
        %v2767 = vsel %vm439, %v2765, %v2766
        %v2768 = vrot.slane %v2680, 1
        %v2769 = vrot.slane %v2681, 1
        %v2770 = vsel %vm439, %v2768, %v2769
        %2771 = vrot.lane.b32.xlu0 %v2723, 8
        %v2772 = vpop.permute.xlu0 %2771
        %2773 = vrot.lane.b32.xlu0 %v2725, 8
        %v2774 = vpop.permute.xlu0 %2773
        %2775 = vrot.lane.b32.xlu0 %v2724, 8
        %v2776 = vpop.permute.xlu0 %2775
        %2777 = vrot.lane.b32.xlu0 %v2726, 8
        %v2778 = vpop.permute.xlu0 %2777
        %2779 = vrot.lane.b32.xlu0 %v2728, 8
        %v2780 = vpop.permute.xlu0 %2779
        %2781 = vrot.lane.b32.xlu0 %v2727, 8
        %v2782 = vpop.permute.xlu0 %2781
        %2783 = vrot.lane.b32.xlu0 %v2729, 8
        %v2784 = vpop.permute.xlu0 %2783
        %2785 = vrot.lane.b32.xlu0 %v2731, 8
        %v2786 = vpop.permute.xlu0 %2785
        %2787 = vrot.lane.b32.xlu0 %v2730, 8
        %v2788 = vpop.permute.xlu0 %2787
        %2789 = vrot.lane.b32.xlu0 %v2732, 8
        %v2790 = vpop.permute.xlu0 %2789
        %2791 = vrot.lane.b32.xlu0 %v2734, 8
        %v2792 = vpop.permute.xlu0 %2791
        %2793 = vrot.lane.b32.xlu0 %v2733, 8
        %v2794 = vpop.permute.xlu0 %2793
        %2795 = vrot.lane.b32.xlu0 %v2735, 8
        %v2796 = vpop.permute.xlu0 %2795
        %2797 = vrot.lane.b32.xlu0 %v2737, 8
        %v2798 = vpop.permute.xlu0 %2797
        %2799 = vrot.lane.b32.xlu0 %v2736, 8
        %v2800 = vpop.permute.xlu0 %2799
        %2801 = vrot.lane.b32.xlu0 %v2738, 8
        %v2802 = vpop.permute.xlu0 %2801
        %2803 = vrot.lane.b32.xlu0 %v2740, 8
        %v2804 = vpop.permute.xlu0 %2803
        %2805 = vrot.lane.b32.xlu0 %v2739, 8
        %v2806 = vpop.permute.xlu0 %2805
        %2807 = vrot.lane.b32.xlu0 %v2741, 8
        %v2808 = vpop.permute.xlu0 %2807
        %2809 = vrot.lane.b32.xlu0 %v2743, 8
        %v2810 = vpop.permute.xlu0 %2809
        %2811 = vrot.lane.b32.xlu0 %v2742, 8
        %v2812 = vpop.permute.xlu0 %2811
        %2813 = vrot.lane.b32.xlu0 %v2744, 8
        %v2814 = vpop.permute.xlu0 %2813
        %2815 = vrot.lane.b32.xlu0 %v2746, 8
        %v2816 = vpop.permute.xlu0 %2815
        %2817 = vrot.lane.b32.xlu0 %v2745, 8
        %v2818 = vpop.permute.xlu0 %2817
        %2819 = vrot.lane.b32.xlu0 %v2747, 8
        %v2820 = vpop.permute.xlu0 %2819
        %2821 = vrot.lane.b32.xlu0 %v2749, 8
        %v2822 = vpop.permute.xlu0 %2821
        %2823 = vrot.lane.b32.xlu0 %v2748, 8
        %v2824 = vpop.permute.xlu0 %2823
        %2825 = vrot.lane.b32.xlu0 %v2750, 8
        %v2826 = vpop.permute.xlu0 %2825
        %2827 = vrot.lane.b32.xlu0 %v2752, 8
        %v2828 = vpop.permute.xlu0 %2827
        %2829 = vrot.lane.b32.xlu0 %v2751, 8
        %v2830 = vpop.permute.xlu0 %2829
        %2831 = vrot.lane.b32.xlu0 %v2753, 8
        %v2832 = vpop.permute.xlu0 %2831
        %2833 = vrot.lane.b32.xlu0 %v2755, 8
        %v2834 = vpop.permute.xlu0 %2833
        %2835 = vrot.lane.b32.xlu0 %v2754, 8
        %v2836 = vpop.permute.xlu0 %2835
        %2837 = vrot.lane.b32.xlu0 %v2756, 8
        %v2838 = vpop.permute.xlu0 %2837
        %2839 = vrot.lane.b32.xlu0 %v2758, 8
        %v2840 = vpop.permute.xlu0 %2839
        %2841 = vrot.lane.b32.xlu0 %v2757, 8
        %v2842 = vpop.permute.xlu0 %2841
        %2843 = vrot.lane.b32.xlu0 %v2759, 8
        %v2844 = vpop.permute.xlu0 %2843
        %2845 = vrot.lane.b32.xlu0 %v2761, 8
        %v2846 = vpop.permute.xlu0 %2845
        %2847 = vrot.lane.b32.xlu0 %v2760, 8
        %v2848 = vpop.permute.xlu0 %2847
        %2849 = vrot.lane.b32.xlu0 %v2762, 8
        %v2850 = vpop.permute.xlu0 %2849
        %2851 = vrot.lane.b32.xlu0 %v2764, 8
        %v2852 = vpop.permute.xlu0 %2851
        %2853 = vrot.lane.b32.xlu0 %v2763, 8
        %v2854 = vpop.permute.xlu0 %2853
        %2855 = vrot.lane.b32.xlu0 %v2765, 8
        %v2856 = vpop.permute.xlu0 %2855
        %2857 = vrot.lane.b32.xlu0 %v2767, 8
        %v2858 = vpop.permute.xlu0 %2857
        %2859 = vrot.lane.b32.xlu0 %v2766, 8
        %v2860 = vpop.permute.xlu0 %2859
        %2861 = vrot.lane.b32.xlu0 %v2768, 8
        %v2862 = vpop.permute.xlu0 %2861
        %2863 = vrot.lane.b32.xlu0 %v2770, 8
        %v2864 = vpop.permute.xlu0 %2863
        %2865 = vrot.lane.b32.xlu0 %v2769, 8
        %v2866 = vpop.permute.xlu0 %2865
        %v2931 = vrot.slane %v2620, 2
        %v2932 = vrot.slane %v2621, 2
        %v2933 = vsel %vm648, %v2931, %v2932
        %v2934 = vrot.slane %v2622, 2
        %v2935 = vsel %vm648, %v2932, %v2934
        %v2936 = vrot.slane %v2624, 2
        %v2937 = vrot.slane %v2625, 2
        %v2938 = vsel %vm648, %v2936, %v2937
        %v2939 = vrot.slane %v2626, 2
        %v2940 = vsel %vm648, %v2937, %v2939
        %v2941 = vrot.slane %v2628, 2
        %v2942 = vrot.slane %v2629, 2
        %v2943 = vsel %vm648, %v2941, %v2942
        %v2944 = vrot.slane %v2630, 2
        %v2945 = vsel %vm648, %v2942, %v2944
        %v2946 = vrot.slane %v2632, 2
        %v2947 = vrot.slane %v2633, 2
        %v2948 = vsel %vm648, %v2946, %v2947
        %v2949 = vrot.slane %v2634, 2
        %v2950 = vsel %vm648, %v2947, %v2949
        %v2951 = vrot.slane %v2636, 2
        %v2952 = vrot.slane %v2637, 2
        %v2953 = vsel %vm648, %v2951, %v2952
        %v2954 = vrot.slane %v2638, 2
        %v2955 = vsel %vm648, %v2952, %v2954
        %v2956 = vrot.slane %v2640, 2
        %v2957 = vrot.slane %v2641, 2
        %v2958 = vsel %vm648, %v2956, %v2957
        %v2959 = vrot.slane %v2642, 2
        %v2960 = vsel %vm648, %v2957, %v2959
        %v2961 = vrot.slane %v2644, 2
        %v2962 = vrot.slane %v2645, 2
        %v2963 = vsel %vm648, %v2961, %v2962
        %v2964 = vrot.slane %v2646, 2
        %v2965 = vsel %vm648, %v2962, %v2964
        %v2966 = vrot.slane %v2648, 2
        %v2967 = vrot.slane %v2649, 2
        %v2968 = vsel %vm648, %v2966, %v2967
        %v2969 = vrot.slane %v2650, 2
        %v2970 = vsel %vm648, %v2967, %v2969
        %v2971 = vrot.slane %v2652, 2
        %v2972 = vrot.slane %v2653, 2
        %v2973 = vsel %vm648, %v2971, %v2972
        %v2974 = vrot.slane %v2654, 2
        %v2975 = vsel %vm648, %v2972, %v2974
        %v2976 = vrot.slane %v2656, 2
        %v2977 = vrot.slane %v2657, 2
        %v2978 = vsel %vm648, %v2976, %v2977
        %v2979 = vrot.slane %v2658, 2
        %v2980 = vsel %vm648, %v2977, %v2979
        %v2981 = vrot.slane %v2660, 2
        %v2982 = vrot.slane %v2661, 2
        %v2983 = vsel %vm648, %v2981, %v2982
        %v2984 = vrot.slane %v2662, 2
        %v2985 = vsel %vm648, %v2982, %v2984
        %v2986 = vrot.slane %v2664, 2
        %v2987 = vrot.slane %v2665, 2
        %v2988 = vsel %vm648, %v2986, %v2987
        %v2989 = vrot.slane %v2666, 2
        %v2990 = vsel %vm648, %v2987, %v2989
        %v2991 = vrot.slane %v2668, 2
        %v2992 = vrot.slane %v2669, 2
        %v2993 = vsel %vm648, %v2991, %v2992
        %v2994 = vrot.slane %v2670, 2
        %v2995 = vsel %vm648, %v2992, %v2994
        %v2996 = vrot.slane %v2672, 2
        %v2997 = vrot.slane %v2673, 2
        %v2998 = vsel %vm648, %v2996, %v2997
        %v2999 = vrot.slane %v2674, 2
        %v3000 = vsel %vm648, %v2997, %v2999
        %v3001 = vrot.slane %v2676, 2
        %v3002 = vrot.slane %v2677, 2
        %v3003 = vsel %vm648, %v3001, %v3002
        %v3004 = vrot.slane %v2678, 2
        %v3005 = vsel %vm648, %v3002, %v3004
        %v3006 = vrot.slane %v2680, 2
        %v3007 = vrot.slane %v2681, 2
        %v3008 = vsel %vm648, %v3006, %v3007
        %v3009 = vrot.slane %v2682, 2
        %v3010 = vsel %vm648, %v3007, %v3009
        %3011 = vrot.lane.b32.xlu0 %v2931, 16
        %v3012 = vpop.permute.xlu0 %3011
        %3013 = vrot.lane.b32.xlu0 %v2933, 16
        %v3014 = vpop.permute.xlu0 %3013
        %3015 = vrot.lane.b32.xlu0 %v2935, 16
        %v3016 = vpop.permute.xlu0 %3015
        %3017 = vrot.lane.b32.xlu0 %v2936, 16
        %v3018 = vpop.permute.xlu0 %3017
        %3019 = vrot.lane.b32.xlu0 %v2938, 16
        %v3020 = vpop.permute.xlu0 %3019
        %3021 = vrot.lane.b32.xlu0 %v2940, 16
        %v3022 = vpop.permute.xlu0 %3021
        %3023 = vrot.lane.b32.xlu0 %v2941, 16
        %v3024 = vpop.permute.xlu0 %3023
        %3025 = vrot.lane.b32.xlu0 %v2943, 16
        %v3026 = vpop.permute.xlu0 %3025
        %3027 = vrot.lane.b32.xlu0 %v2945, 16
        %v3028 = vpop.permute.xlu0 %3027
        %3029 = vrot.lane.b32.xlu0 %v2946, 16
        %v3030 = vpop.permute.xlu0 %3029
        %3031 = vrot.lane.b32.xlu0 %v2948, 16
        %v3032 = vpop.permute.xlu0 %3031
        %3033 = vrot.lane.b32.xlu0 %v2950, 16
        %v3034 = vpop.permute.xlu0 %3033
        %3035 = vrot.lane.b32.xlu0 %v2951, 16
        %v3036 = vpop.permute.xlu0 %3035
        %3037 = vrot.lane.b32.xlu0 %v2953, 16
        %v3038 = vpop.permute.xlu0 %3037
        %3039 = vrot.lane.b32.xlu0 %v2955, 16
        %v3040 = vpop.permute.xlu0 %3039
        %3041 = vrot.lane.b32.xlu0 %v2956, 16
        %v3042 = vpop.permute.xlu0 %3041
        %3043 = vrot.lane.b32.xlu0 %v2958, 16
        %v3044 = vpop.permute.xlu0 %3043
        %3045 = vrot.lane.b32.xlu0 %v2960, 16
        %v3046 = vpop.permute.xlu0 %3045
        %3047 = vrot.lane.b32.xlu0 %v2961, 16
        %v3048 = vpop.permute.xlu0 %3047
        %3049 = vrot.lane.b32.xlu0 %v2963, 16
        %v3050 = vpop.permute.xlu0 %3049
        %3051 = vrot.lane.b32.xlu0 %v2965, 16
        %v3052 = vpop.permute.xlu0 %3051
        %3053 = vrot.lane.b32.xlu0 %v2966, 16
        %v3054 = vpop.permute.xlu0 %3053
        %3055 = vrot.lane.b32.xlu0 %v2968, 16
        %v3056 = vpop.permute.xlu0 %3055
        %3057 = vrot.lane.b32.xlu0 %v2970, 16
        %v3058 = vpop.permute.xlu0 %3057
        %3059 = vrot.lane.b32.xlu0 %v2971, 16
        %v3060 = vpop.permute.xlu0 %3059
        %3061 = vrot.lane.b32.xlu0 %v2973, 16
        %v3062 = vpop.permute.xlu0 %3061
        %3063 = vrot.lane.b32.xlu0 %v2975, 16
        %v3064 = vpop.permute.xlu0 %3063
        %3065 = vrot.lane.b32.xlu0 %v2976, 16
        %v3066 = vpop.permute.xlu0 %3065
        %3067 = vrot.lane.b32.xlu0 %v2978, 16
        %v3068 = vpop.permute.xlu0 %3067
        %3069 = vrot.lane.b32.xlu0 %v2980, 16
        %v3070 = vpop.permute.xlu0 %3069
        %3071 = vrot.lane.b32.xlu0 %v2981, 16
        %v3072 = vpop.permute.xlu0 %3071
        %3073 = vrot.lane.b32.xlu0 %v2983, 16
        %v3074 = vpop.permute.xlu0 %3073
        %3075 = vrot.lane.b32.xlu0 %v2985, 16
        %v3076 = vpop.permute.xlu0 %3075
        %3077 = vrot.lane.b32.xlu0 %v2986, 16
        %v3078 = vpop.permute.xlu0 %3077
        %3079 = vrot.lane.b32.xlu0 %v2988, 16
        %v3080 = vpop.permute.xlu0 %3079
        %3081 = vrot.lane.b32.xlu0 %v2990, 16
        %v3082 = vpop.permute.xlu0 %3081
        %3083 = vrot.lane.b32.xlu0 %v2991, 16
        %v3084 = vpop.permute.xlu0 %3083
        %3085 = vrot.lane.b32.xlu0 %v2993, 16
        %v3086 = vpop.permute.xlu0 %3085
        %3087 = vrot.lane.b32.xlu0 %v2995, 16
        %v3088 = vpop.permute.xlu0 %3087
        %3089 = vrot.lane.b32.xlu0 %v2996, 16
        %v3090 = vpop.permute.xlu0 %3089
        %3091 = vrot.lane.b32.xlu0 %v2998, 16
        %v3092 = vpop.permute.xlu0 %3091
        %3093 = vrot.lane.b32.xlu0 %v3000, 16
        %v3094 = vpop.permute.xlu0 %3093
        %3095 = vrot.lane.b32.xlu0 %v3001, 16
        %v3096 = vpop.permute.xlu0 %3095
        %3097 = vrot.lane.b32.xlu0 %v3003, 16
        %v3098 = vpop.permute.xlu0 %3097
        %3099 = vrot.lane.b32.xlu0 %v3005, 16
        %v3100 = vpop.permute.xlu0 %3099
        %3101 = vrot.lane.b32.xlu0 %v3006, 16
        %v3102 = vpop.permute.xlu0 %3101
        %3103 = vrot.lane.b32.xlu0 %v3008, 16
        %v3104 = vpop.permute.xlu0 %3103
        %3105 = vrot.lane.b32.xlu0 %v3010, 16
        %v3106 = vpop.permute.xlu0 %3105
        %3173 = vrot.lane.b32.xlu0 %v2623, 24
        %v3174 = vpop.permute.xlu0 %3173
        %3175 = vrot.lane.b32.xlu0 %v2624, 24
        %v3176 = vpop.permute.xlu0 %3175
        %3177 = vrot.lane.b32.xlu0 %v2625, 24
        %v3178 = vpop.permute.xlu0 %3177
        %3179 = vrot.lane.b32.xlu0 %v2627, 24
        %v3180 = vpop.permute.xlu0 %3179
        %3181 = vrot.lane.b32.xlu0 %v2628, 24
        %v3182 = vpop.permute.xlu0 %3181
        %3183 = vrot.lane.b32.xlu0 %v2629, 24
        %v3184 = vpop.permute.xlu0 %3183
        %3185 = vrot.lane.b32.xlu0 %v2631, 24
        %v3186 = vpop.permute.xlu0 %3185
        %3187 = vrot.lane.b32.xlu0 %v2632, 24
        %v3188 = vpop.permute.xlu0 %3187
        %3189 = vrot.lane.b32.xlu0 %v2633, 24
        %v3190 = vpop.permute.xlu0 %3189
        %3191 = vrot.lane.b32.xlu0 %v2635, 24
        %v3192 = vpop.permute.xlu0 %3191
        %3193 = vrot.lane.b32.xlu0 %v2636, 24
        %v3194 = vpop.permute.xlu0 %3193
        %3195 = vrot.lane.b32.xlu0 %v2637, 24
        %v3196 = vpop.permute.xlu0 %3195
        %3197 = vrot.lane.b32.xlu0 %v2639, 24
        %v3198 = vpop.permute.xlu0 %3197
        %3199 = vrot.lane.b32.xlu0 %v2640, 24
        %v3200 = vpop.permute.xlu0 %3199
        %3201 = vrot.lane.b32.xlu0 %v2641, 24
        %v3202 = vpop.permute.xlu0 %3201
        %3203 = vrot.lane.b32.xlu0 %v2643, 24
        %v3204 = vpop.permute.xlu0 %3203
        %3205 = vrot.lane.b32.xlu0 %v2644, 24
        %v3206 = vpop.permute.xlu0 %3205
        %3207 = vrot.lane.b32.xlu0 %v2645, 24
        %v3208 = vpop.permute.xlu0 %3207
        %3209 = vrot.lane.b32.xlu0 %v2647, 24
        %v3210 = vpop.permute.xlu0 %3209
        %3211 = vrot.lane.b32.xlu0 %v2648, 24
        %v3212 = vpop.permute.xlu0 %3211
        %3213 = vrot.lane.b32.xlu0 %v2649, 24
        %v3214 = vpop.permute.xlu0 %3213
        %3215 = vrot.lane.b32.xlu0 %v2651, 24
        %v3216 = vpop.permute.xlu0 %3215
        %3217 = vrot.lane.b32.xlu0 %v2652, 24
        %v3218 = vpop.permute.xlu0 %3217
        %3219 = vrot.lane.b32.xlu0 %v2653, 24
        %v3220 = vpop.permute.xlu0 %3219
        %3221 = vrot.lane.b32.xlu0 %v2655, 24
        %v3222 = vpop.permute.xlu0 %3221
        %3223 = vrot.lane.b32.xlu0 %v2656, 24
        %v3224 = vpop.permute.xlu0 %3223
        %3225 = vrot.lane.b32.xlu0 %v2657, 24
        %v3226 = vpop.permute.xlu0 %3225
        %3227 = vrot.lane.b32.xlu0 %v2659, 24
        %v3228 = vpop.permute.xlu0 %3227
        %3229 = vrot.lane.b32.xlu0 %v2660, 24
        %v3230 = vpop.permute.xlu0 %3229
        %3231 = vrot.lane.b32.xlu0 %v2661, 24
        %v3232 = vpop.permute.xlu0 %3231
        %3233 = vrot.lane.b32.xlu0 %v2663, 24
        %v3234 = vpop.permute.xlu0 %3233
        %3235 = vrot.lane.b32.xlu0 %v2664, 24
        %v3236 = vpop.permute.xlu0 %3235
        %3237 = vrot.lane.b32.xlu0 %v2665, 24
        %v3238 = vpop.permute.xlu0 %3237
        %3239 = vrot.lane.b32.xlu0 %v2667, 24
        %v3240 = vpop.permute.xlu0 %3239
        %3241 = vrot.lane.b32.xlu0 %v2668, 24
        %v3242 = vpop.permute.xlu0 %3241
        %3243 = vrot.lane.b32.xlu0 %v2669, 24
        %v3244 = vpop.permute.xlu0 %3243
        %3245 = vrot.lane.b32.xlu0 %v2671, 24
        %v3246 = vpop.permute.xlu0 %3245
        %3247 = vrot.lane.b32.xlu0 %v2672, 24
        %v3248 = vpop.permute.xlu0 %3247
        %3249 = vrot.lane.b32.xlu0 %v2673, 24
        %v3250 = vpop.permute.xlu0 %3249
        %3251 = vrot.lane.b32.xlu0 %v2675, 24
        %v3252 = vpop.permute.xlu0 %3251
        %3253 = vrot.lane.b32.xlu0 %v2676, 24
        %v3254 = vpop.permute.xlu0 %3253
        %3255 = vrot.lane.b32.xlu0 %v2677, 24
        %v3256 = vpop.permute.xlu0 %3255
        %3257 = vrot.lane.b32.xlu0 %v2679, 24
        %v3258 = vpop.permute.xlu0 %3257
        %3259 = vrot.lane.b32.xlu0 %v2680, 24
        %v3260 = vpop.permute.xlu0 %3259
        %3261 = vrot.lane.b32.xlu0 %v2681, 24
        %v3262 = vpop.permute.xlu0 %3261
        %3263 = vrot.lane.b32.xlu0 %v2683, 24
        %v3264 = vpop.permute.xlu0 %3263
        %3265 = vrot.lane.b32.xlu0 %v2684, 24
        %v3266 = vpop.permute.xlu0 %3265
        %3267 = vrot.lane.b32.xlu0 %v2685, 24
        %v3268 = vpop.permute.xlu0 %3267
        %v3317 = vrot.slane %v2684, 1
        %v3318 = vrot.slane %v2685, 1
        %v3319 = vsel %vm439, %v3317, %v3318
        %3320 = vrot.lane.b32.xlu0 %v2726, 32
        %v3321 = vpop.permute.xlu0 %3320
        %3322 = vrot.lane.b32.xlu0 %v2728, 32
        %v3323 = vpop.permute.xlu0 %3322
        %3324 = vrot.lane.b32.xlu0 %v2727, 32
        %v3325 = vpop.permute.xlu0 %3324
        %3326 = vrot.lane.b32.xlu0 %v2729, 32
        %v3327 = vpop.permute.xlu0 %3326
        %3328 = vrot.lane.b32.xlu0 %v2731, 32
        %v3329 = vpop.permute.xlu0 %3328
        %3330 = vrot.lane.b32.xlu0 %v2730, 32
        %v3331 = vpop.permute.xlu0 %3330
        %3332 = vrot.lane.b32.xlu0 %v2732, 32
        %v3333 = vpop.permute.xlu0 %3332
        %3334 = vrot.lane.b32.xlu0 %v2734, 32
        %v3335 = vpop.permute.xlu0 %3334
        %3336 = vrot.lane.b32.xlu0 %v2733, 32
        %v3337 = vpop.permute.xlu0 %3336
        %3338 = vrot.lane.b32.xlu0 %v2735, 32
        %v3339 = vpop.permute.xlu0 %3338
        %3340 = vrot.lane.b32.xlu0 %v2737, 32
        %v3341 = vpop.permute.xlu0 %3340
        %3342 = vrot.lane.b32.xlu0 %v2736, 32
        %v3343 = vpop.permute.xlu0 %3342
        %3344 = vrot.lane.b32.xlu0 %v2738, 32
        %v3345 = vpop.permute.xlu0 %3344
        %3346 = vrot.lane.b32.xlu0 %v2740, 32
        %v3347 = vpop.permute.xlu0 %3346
        %3348 = vrot.lane.b32.xlu0 %v2739, 32
        %v3349 = vpop.permute.xlu0 %3348
        %3350 = vrot.lane.b32.xlu0 %v2741, 32
        %v3351 = vpop.permute.xlu0 %3350
        %3352 = vrot.lane.b32.xlu0 %v2743, 32
        %v3353 = vpop.permute.xlu0 %3352
        %3354 = vrot.lane.b32.xlu0 %v2742, 32
        %v3355 = vpop.permute.xlu0 %3354
        %3356 = vrot.lane.b32.xlu0 %v2744, 32
        %v3357 = vpop.permute.xlu0 %3356
        %3358 = vrot.lane.b32.xlu0 %v2746, 32
        %v3359 = vpop.permute.xlu0 %3358
        %3360 = vrot.lane.b32.xlu0 %v2745, 32
        %v3361 = vpop.permute.xlu0 %3360
        %3362 = vrot.lane.b32.xlu0 %v2747, 32
        %v3363 = vpop.permute.xlu0 %3362
        %3364 = vrot.lane.b32.xlu0 %v2749, 32
        %v3365 = vpop.permute.xlu0 %3364
        %3366 = vrot.lane.b32.xlu0 %v2748, 32
        %v3367 = vpop.permute.xlu0 %3366
        %3368 = vrot.lane.b32.xlu0 %v2750, 32
        %v3369 = vpop.permute.xlu0 %3368
        %3370 = vrot.lane.b32.xlu0 %v2752, 32
        %v3371 = vpop.permute.xlu0 %3370
        %3372 = vrot.lane.b32.xlu0 %v2751, 32
        %v3373 = vpop.permute.xlu0 %3372
        %3374 = vrot.lane.b32.xlu0 %v2753, 32
        %v3375 = vpop.permute.xlu0 %3374
        %3376 = vrot.lane.b32.xlu0 %v2755, 32
        %v3377 = vpop.permute.xlu0 %3376
        %3378 = vrot.lane.b32.xlu0 %v2754, 32
        %v3379 = vpop.permute.xlu0 %3378
        %3380 = vrot.lane.b32.xlu0 %v2756, 32
        %v3381 = vpop.permute.xlu0 %3380
        %3382 = vrot.lane.b32.xlu0 %v2758, 32
        %v3383 = vpop.permute.xlu0 %3382
        %3384 = vrot.lane.b32.xlu0 %v2757, 32
        %v3385 = vpop.permute.xlu0 %3384
        %3386 = vrot.lane.b32.xlu0 %v2759, 32
        %v3387 = vpop.permute.xlu0 %3386
        %3388 = vrot.lane.b32.xlu0 %v2761, 32
        %v3389 = vpop.permute.xlu0 %3388
        %3390 = vrot.lane.b32.xlu0 %v2760, 32
        %v3391 = vpop.permute.xlu0 %3390
        %3392 = vrot.lane.b32.xlu0 %v2762, 32
        %v3393 = vpop.permute.xlu0 %3392
        %3394 = vrot.lane.b32.xlu0 %v2764, 32
        %v3395 = vpop.permute.xlu0 %3394
        %3396 = vrot.lane.b32.xlu0 %v2763, 32
        %v3397 = vpop.permute.xlu0 %3396
        %3398 = vrot.lane.b32.xlu0 %v2765, 32
        %v3399 = vpop.permute.xlu0 %3398
        %3400 = vrot.lane.b32.xlu0 %v2767, 32
        %v3401 = vpop.permute.xlu0 %3400
        %3402 = vrot.lane.b32.xlu0 %v2766, 32
        %v3403 = vpop.permute.xlu0 %3402
        %3404 = vrot.lane.b32.xlu0 %v2768, 32
        %v3405 = vpop.permute.xlu0 %3404
        %3406 = vrot.lane.b32.xlu0 %v2770, 32
        %v3407 = vpop.permute.xlu0 %3406
        %3408 = vrot.lane.b32.xlu0 %v2769, 32
        %v3409 = vpop.permute.xlu0 %3408
        %3410 = vrot.lane.b32.xlu0 %v3317, 32
        %v3411 = vpop.permute.xlu0 %3410
        %3412 = vrot.lane.b32.xlu0 %v3319, 32
        %v3413 = vpop.permute.xlu0 %3412
        %3414 = vrot.lane.b32.xlu0 %v3318, 32
        %v3415 = vpop.permute.xlu0 %3414
        %v3465 = vrot.slane %v2684, 2
        %v3466 = vrot.slane %v2685, 2
        %v3467 = vsel %vm648, %v3465, %v3466
        %v3468 = vrot.slane %v2686, 2
        %v3469 = vsel %vm648, %v3466, %v3468
        %3470 = vrot.lane.b32.xlu0 %v2936, 40
        %v3471 = vpop.permute.xlu0 %3470
        %3472 = vrot.lane.b32.xlu0 %v2938, 40
        %v3473 = vpop.permute.xlu0 %3472
        %3474 = vrot.lane.b32.xlu0 %v2940, 40
        %v3475 = vpop.permute.xlu0 %3474
        %3476 = vrot.lane.b32.xlu0 %v2941, 40
        %v3477 = vpop.permute.xlu0 %3476
        %3478 = vrot.lane.b32.xlu0 %v2943, 40
        %v3479 = vpop.permute.xlu0 %3478
        %3480 = vrot.lane.b32.xlu0 %v2945, 40
        %v3481 = vpop.permute.xlu0 %3480
        %3482 = vrot.lane.b32.xlu0 %v2946, 40
        %v3483 = vpop.permute.xlu0 %3482
        %3484 = vrot.lane.b32.xlu0 %v2948, 40
        %v3485 = vpop.permute.xlu0 %3484
        %3486 = vrot.lane.b32.xlu0 %v2950, 40
        %v3487 = vpop.permute.xlu0 %3486
        %3488 = vrot.lane.b32.xlu0 %v2951, 40
        %v3489 = vpop.permute.xlu0 %3488
        %3490 = vrot.lane.b32.xlu0 %v2953, 40
        %v3491 = vpop.permute.xlu0 %3490
        %3492 = vrot.lane.b32.xlu0 %v2955, 40
        %v3493 = vpop.permute.xlu0 %3492
        %3494 = vrot.lane.b32.xlu0 %v2956, 40
        %v3495 = vpop.permute.xlu0 %3494
        %3496 = vrot.lane.b32.xlu0 %v2958, 40
        %v3497 = vpop.permute.xlu0 %3496
        %3498 = vrot.lane.b32.xlu0 %v2960, 40
        %v3499 = vpop.permute.xlu0 %3498
        %3500 = vrot.lane.b32.xlu0 %v2961, 40
        %v3501 = vpop.permute.xlu0 %3500
        %3502 = vrot.lane.b32.xlu0 %v2963, 40
        %v3503 = vpop.permute.xlu0 %3502
        %3504 = vrot.lane.b32.xlu0 %v2965, 40
        %v3505 = vpop.permute.xlu0 %3504
        %3506 = vrot.lane.b32.xlu0 %v2966, 40
        %v3507 = vpop.permute.xlu0 %3506
        %3508 = vrot.lane.b32.xlu0 %v2968, 40
        %v3509 = vpop.permute.xlu0 %3508
        %3510 = vrot.lane.b32.xlu0 %v2970, 40
        %v3511 = vpop.permute.xlu0 %3510
        %3512 = vrot.lane.b32.xlu0 %v2971, 40
        %v3513 = vpop.permute.xlu0 %3512
        %3514 = vrot.lane.b32.xlu0 %v2973, 40
        %v3515 = vpop.permute.xlu0 %3514
        %3516 = vrot.lane.b32.xlu0 %v2975, 40
        %v3517 = vpop.permute.xlu0 %3516
        %3518 = vrot.lane.b32.xlu0 %v2976, 40
        %v3519 = vpop.permute.xlu0 %3518
        %3520 = vrot.lane.b32.xlu0 %v2978, 40
        %v3521 = vpop.permute.xlu0 %3520
        %3522 = vrot.lane.b32.xlu0 %v2980, 40
        %v3523 = vpop.permute.xlu0 %3522
        %3524 = vrot.lane.b32.xlu0 %v2981, 40
        %v3525 = vpop.permute.xlu0 %3524
        %3526 = vrot.lane.b32.xlu0 %v2983, 40
        %v3527 = vpop.permute.xlu0 %3526
        %3528 = vrot.lane.b32.xlu0 %v2985, 40
        %v3529 = vpop.permute.xlu0 %3528
        %3530 = vrot.lane.b32.xlu0 %v2986, 40
        %v3531 = vpop.permute.xlu0 %3530
        %3532 = vrot.lane.b32.xlu0 %v2988, 40
        %v3533 = vpop.permute.xlu0 %3532
        %3534 = vrot.lane.b32.xlu0 %v2990, 40
        %v3535 = vpop.permute.xlu0 %3534
        %3536 = vrot.lane.b32.xlu0 %v2991, 40
        %v3537 = vpop.permute.xlu0 %3536
        %3538 = vrot.lane.b32.xlu0 %v2993, 40
        %v3539 = vpop.permute.xlu0 %3538
        %3540 = vrot.lane.b32.xlu0 %v2995, 40
        %v3541 = vpop.permute.xlu0 %3540
        %3542 = vrot.lane.b32.xlu0 %v2996, 40
        %v3543 = vpop.permute.xlu0 %3542
        %3544 = vrot.lane.b32.xlu0 %v2998, 40
        %v3545 = vpop.permute.xlu0 %3544
        %3546 = vrot.lane.b32.xlu0 %v3000, 40
        %v3547 = vpop.permute.xlu0 %3546
        %3548 = vrot.lane.b32.xlu0 %v3001, 40
        %v3549 = vpop.permute.xlu0 %3548
        %3550 = vrot.lane.b32.xlu0 %v3003, 40
        %v3551 = vpop.permute.xlu0 %3550
        %3552 = vrot.lane.b32.xlu0 %v3005, 40
        %v3553 = vpop.permute.xlu0 %3552
        %3554 = vrot.lane.b32.xlu0 %v3006, 40
        %v3555 = vpop.permute.xlu0 %3554
        %3556 = vrot.lane.b32.xlu0 %v3008, 40
        %v3557 = vpop.permute.xlu0 %3556
        %3558 = vrot.lane.b32.xlu0 %v3010, 40
        %v3559 = vpop.permute.xlu0 %3558
        %3560 = vrot.lane.b32.xlu0 %v3465, 40
        %v3561 = vpop.permute.xlu0 %3560
        %3562 = vrot.lane.b32.xlu0 %v3467, 40
        %v3563 = vpop.permute.xlu0 %3562
        %3564 = vrot.lane.b32.xlu0 %v3469, 40
        %v3565 = vpop.permute.xlu0 %3564
        %3617 = vrot.lane.b32.xlu0 %v2627, 48
        %v3618 = vpop.permute.xlu0 %3617
        %3619 = vrot.lane.b32.xlu0 %v2628, 48
        %v3620 = vpop.permute.xlu0 %3619
        %3621 = vrot.lane.b32.xlu0 %v2629, 48
        %v3622 = vpop.permute.xlu0 %3621
        %3623 = vrot.lane.b32.xlu0 %v2631, 48
        %v3624 = vpop.permute.xlu0 %3623
        %3625 = vrot.lane.b32.xlu0 %v2632, 48
        %v3626 = vpop.permute.xlu0 %3625
        %3627 = vrot.lane.b32.xlu0 %v2633, 48
        %v3628 = vpop.permute.xlu0 %3627
        %3629 = vrot.lane.b32.xlu0 %v2635, 48
        %v3630 = vpop.permute.xlu0 %3629
        %3631 = vrot.lane.b32.xlu0 %v2636, 48
        %v3632 = vpop.permute.xlu0 %3631
        %3633 = vrot.lane.b32.xlu0 %v2637, 48
        %v3634 = vpop.permute.xlu0 %3633
        %3635 = vrot.lane.b32.xlu0 %v2639, 48
        %v3636 = vpop.permute.xlu0 %3635
        %3637 = vrot.lane.b32.xlu0 %v2640, 48
        %v3638 = vpop.permute.xlu0 %3637
        %3639 = vrot.lane.b32.xlu0 %v2641, 48
        %v3640 = vpop.permute.xlu0 %3639
        %3641 = vrot.lane.b32.xlu0 %v2643, 48
        %v3642 = vpop.permute.xlu0 %3641
        %3643 = vrot.lane.b32.xlu0 %v2644, 48
        %v3644 = vpop.permute.xlu0 %3643
        %3645 = vrot.lane.b32.xlu0 %v2645, 48
        %v3646 = vpop.permute.xlu0 %3645
        %3647 = vrot.lane.b32.xlu0 %v2647, 48
        %v3648 = vpop.permute.xlu0 %3647
        %3649 = vrot.lane.b32.xlu0 %v2648, 48
        %v3650 = vpop.permute.xlu0 %3649
        %3651 = vrot.lane.b32.xlu0 %v2649, 48
        %v3652 = vpop.permute.xlu0 %3651
        %3653 = vrot.lane.b32.xlu0 %v2651, 48
        %v3654 = vpop.permute.xlu0 %3653
        %3655 = vrot.lane.b32.xlu0 %v2652, 48
        %v3656 = vpop.permute.xlu0 %3655
        %3657 = vrot.lane.b32.xlu0 %v2653, 48
        %v3658 = vpop.permute.xlu0 %3657
        %3659 = vrot.lane.b32.xlu0 %v2655, 48
        %v3660 = vpop.permute.xlu0 %3659
        %3661 = vrot.lane.b32.xlu0 %v2656, 48
        %v3662 = vpop.permute.xlu0 %3661
        %3663 = vrot.lane.b32.xlu0 %v2657, 48
        %v3664 = vpop.permute.xlu0 %3663
        %3665 = vrot.lane.b32.xlu0 %v2659, 48
        %v3666 = vpop.permute.xlu0 %3665
        %3667 = vrot.lane.b32.xlu0 %v2660, 48
        %v3668 = vpop.permute.xlu0 %3667
        %3669 = vrot.lane.b32.xlu0 %v2661, 48
        %v3670 = vpop.permute.xlu0 %3669
        %3671 = vrot.lane.b32.xlu0 %v2663, 48
        %v3672 = vpop.permute.xlu0 %3671
        %3673 = vrot.lane.b32.xlu0 %v2664, 48
        %v3674 = vpop.permute.xlu0 %3673
        %3675 = vrot.lane.b32.xlu0 %v2665, 48
        %v3676 = vpop.permute.xlu0 %3675
        %3677 = vrot.lane.b32.xlu0 %v2667, 48
        %v3678 = vpop.permute.xlu0 %3677
        %3679 = vrot.lane.b32.xlu0 %v2668, 48
        %v3680 = vpop.permute.xlu0 %3679
        %3681 = vrot.lane.b32.xlu0 %v2669, 48
        %v3682 = vpop.permute.xlu0 %3681
        %3683 = vrot.lane.b32.xlu0 %v2671, 48
        %v3684 = vpop.permute.xlu0 %3683
        %3685 = vrot.lane.b32.xlu0 %v2672, 48
        %v3686 = vpop.permute.xlu0 %3685
        %3687 = vrot.lane.b32.xlu0 %v2673, 48
        %v3688 = vpop.permute.xlu0 %3687
        %3689 = vrot.lane.b32.xlu0 %v2675, 48
        %v3690 = vpop.permute.xlu0 %3689
        %3691 = vrot.lane.b32.xlu0 %v2676, 48
        %v3692 = vpop.permute.xlu0 %3691
        %3693 = vrot.lane.b32.xlu0 %v2677, 48
        %v3694 = vpop.permute.xlu0 %3693
        %3695 = vrot.lane.b32.xlu0 %v2679, 48
        %v3696 = vpop.permute.xlu0 %3695
        %3697 = vrot.lane.b32.xlu0 %v2680, 48
        %v3698 = vpop.permute.xlu0 %3697
        %3699 = vrot.lane.b32.xlu0 %v2681, 48
        %v3700 = vpop.permute.xlu0 %3699
        %3701 = vrot.lane.b32.xlu0 %v2683, 48
        %v3702 = vpop.permute.xlu0 %3701
        %3703 = vrot.lane.b32.xlu0 %v2684, 48
        %v3704 = vpop.permute.xlu0 %3703
        %3705 = vrot.lane.b32.xlu0 %v2685, 48
        %v3706 = vpop.permute.xlu0 %3705
        %3707 = vrot.lane.b32.xlu0 %v2687, 48
        %v3708 = vpop.permute.xlu0 %3707
        %3709 = vrot.lane.b32.xlu0 %v2688, 48
        %v3710 = vpop.permute.xlu0 %3709
        %3711 = vrot.lane.b32.xlu0 %v2689, 48
        %v3712 = vpop.permute.xlu0 %3711
        %v3761 = vrot.slane %v2688, 1
        %v3762 = vrot.slane %v2689, 1
        %v3763 = vsel %vm439, %v3761, %v3762
        %3764 = vrot.lane.b32.xlu0 %v2729, 56
        %v3765 = vpop.permute.xlu0 %3764
        %3766 = vrot.lane.b32.xlu0 %v2731, 56
        %v3767 = vpop.permute.xlu0 %3766
        %3768 = vrot.lane.b32.xlu0 %v2730, 56
        %v3769 = vpop.permute.xlu0 %3768
        %3770 = vrot.lane.b32.xlu0 %v2732, 56
        %v3771 = vpop.permute.xlu0 %3770
        %3772 = vrot.lane.b32.xlu0 %v2734, 56
        %v3773 = vpop.permute.xlu0 %3772
        %3774 = vrot.lane.b32.xlu0 %v2733, 56
        %v3775 = vpop.permute.xlu0 %3774
        %3776 = vrot.lane.b32.xlu0 %v2735, 56
        %v3777 = vpop.permute.xlu0 %3776
        %3778 = vrot.lane.b32.xlu0 %v2737, 56
        %v3779 = vpop.permute.xlu0 %3778
        %3780 = vrot.lane.b32.xlu0 %v2736, 56
        %v3781 = vpop.permute.xlu0 %3780
        %3782 = vrot.lane.b32.xlu0 %v2738, 56
        %v3783 = vpop.permute.xlu0 %3782
        %3784 = vrot.lane.b32.xlu0 %v2740, 56
        %v3785 = vpop.permute.xlu0 %3784
        %3786 = vrot.lane.b32.xlu0 %v2739, 56
        %v3787 = vpop.permute.xlu0 %3786
        %3788 = vrot.lane.b32.xlu0 %v2741, 56
        %v3789 = vpop.permute.xlu0 %3788
        %3790 = vrot.lane.b32.xlu0 %v2743, 56
        %v3791 = vpop.permute.xlu0 %3790
        %3792 = vrot.lane.b32.xlu0 %v2742, 56
        %v3793 = vpop.permute.xlu0 %3792
        %3794 = vrot.lane.b32.xlu0 %v2744, 56
        %v3795 = vpop.permute.xlu0 %3794
        %3796 = vrot.lane.b32.xlu0 %v2746, 56
        %v3797 = vpop.permute.xlu0 %3796
        %3798 = vrot.lane.b32.xlu0 %v2745, 56
        %v3799 = vpop.permute.xlu0 %3798
        %3800 = vrot.lane.b32.xlu0 %v2747, 56
        %v3801 = vpop.permute.xlu0 %3800
        %3802 = vrot.lane.b32.xlu0 %v2749, 56
        %v3803 = vpop.permute.xlu0 %3802
        %3804 = vrot.lane.b32.xlu0 %v2748, 56
        %v3805 = vpop.permute.xlu0 %3804
        %3806 = vrot.lane.b32.xlu0 %v2750, 56
        %v3807 = vpop.permute.xlu0 %3806
        %3808 = vrot.lane.b32.xlu0 %v2752, 56
        %v3809 = vpop.permute.xlu0 %3808
        %3810 = vrot.lane.b32.xlu0 %v2751, 56
        %v3811 = vpop.permute.xlu0 %3810
        %3812 = vrot.lane.b32.xlu0 %v2753, 56
        %v3813 = vpop.permute.xlu0 %3812
        %3814 = vrot.lane.b32.xlu0 %v2755, 56
        %v3815 = vpop.permute.xlu0 %3814
        %3816 = vrot.lane.b32.xlu0 %v2754, 56
        %v3817 = vpop.permute.xlu0 %3816
        %3818 = vrot.lane.b32.xlu0 %v2756, 56
        %v3819 = vpop.permute.xlu0 %3818
        %3820 = vrot.lane.b32.xlu0 %v2758, 56
        %v3821 = vpop.permute.xlu0 %3820
        %3822 = vrot.lane.b32.xlu0 %v2757, 56
        %v3823 = vpop.permute.xlu0 %3822
        %3824 = vrot.lane.b32.xlu0 %v2759, 56
        %v3825 = vpop.permute.xlu0 %3824
        %3826 = vrot.lane.b32.xlu0 %v2761, 56
        %v3827 = vpop.permute.xlu0 %3826
        %3828 = vrot.lane.b32.xlu0 %v2760, 56
        %v3829 = vpop.permute.xlu0 %3828
        %3830 = vrot.lane.b32.xlu0 %v2762, 56
        %v3831 = vpop.permute.xlu0 %3830
        %3832 = vrot.lane.b32.xlu0 %v2764, 56
        %v3833 = vpop.permute.xlu0 %3832
        %3834 = vrot.lane.b32.xlu0 %v2763, 56
        %v3835 = vpop.permute.xlu0 %3834
        %3836 = vrot.lane.b32.xlu0 %v2765, 56
        %v3837 = vpop.permute.xlu0 %3836
        %3838 = vrot.lane.b32.xlu0 %v2767, 56
        %v3839 = vpop.permute.xlu0 %3838
        %3840 = vrot.lane.b32.xlu0 %v2766, 56
        %v3841 = vpop.permute.xlu0 %3840
        %3842 = vrot.lane.b32.xlu0 %v2768, 56
        %v3843 = vpop.permute.xlu0 %3842
        %3844 = vrot.lane.b32.xlu0 %v2770, 56
        %v3845 = vpop.permute.xlu0 %3844
        %3846 = vrot.lane.b32.xlu0 %v2769, 56
        %v3847 = vpop.permute.xlu0 %3846
        %3848 = vrot.lane.b32.xlu0 %v3317, 56
        %v3849 = vpop.permute.xlu0 %3848
        %3850 = vrot.lane.b32.xlu0 %v3319, 56
        %v3851 = vpop.permute.xlu0 %3850
        %3852 = vrot.lane.b32.xlu0 %v3318, 56
        %v3853 = vpop.permute.xlu0 %3852
        %3854 = vrot.lane.b32.xlu0 %v3761, 56
        %v3855 = vpop.permute.xlu0 %3854
        %3856 = vrot.lane.b32.xlu0 %v3763, 56
        %v3857 = vpop.permute.xlu0 %3856
        %3858 = vrot.lane.b32.xlu0 %v3762, 56
        %v3859 = vpop.permute.xlu0 %3858
        %v3909 = vrot.slane %v2688, 2
        %v3910 = vrot.slane %v2689, 2
        %v3911 = vsel %vm648, %v3909, %v3910
        %v3912 = vrot.slane %v2690, 2
        %v3913 = vsel %vm648, %v3910, %v3912
        %3914 = vrot.lane.b32.xlu0 %v2941, 64
        %v3915 = vpop.permute.xlu0 %3914
        %3916 = vrot.lane.b32.xlu0 %v2943, 64
        %v3917 = vpop.permute.xlu0 %3916
        %3918 = vrot.lane.b32.xlu0 %v2945, 64
        %v3919 = vpop.permute.xlu0 %3918
        %3920 = vrot.lane.b32.xlu0 %v2946, 64
        %v3921 = vpop.permute.xlu0 %3920
        %3922 = vrot.lane.b32.xlu0 %v2948, 64
        %v3923 = vpop.permute.xlu0 %3922
        %3924 = vrot.lane.b32.xlu0 %v2950, 64
        %v3925 = vpop.permute.xlu0 %3924
        %3926 = vrot.lane.b32.xlu0 %v2951, 64
        %v3927 = vpop.permute.xlu0 %3926
        %3928 = vrot.lane.b32.xlu0 %v2953, 64
        %v3929 = vpop.permute.xlu0 %3928
        %3930 = vrot.lane.b32.xlu0 %v2955, 64
        %v3931 = vpop.permute.xlu0 %3930
        %3932 = vrot.lane.b32.xlu0 %v2956, 64
        %v3933 = vpop.permute.xlu0 %3932
        %3934 = vrot.lane.b32.xlu0 %v2958, 64
        %v3935 = vpop.permute.xlu0 %3934
        %3936 = vrot.lane.b32.xlu0 %v2960, 64
        %v3937 = vpop.permute.xlu0 %3936
        %3938 = vrot.lane.b32.xlu0 %v2961, 64
        %v3939 = vpop.permute.xlu0 %3938
        %3940 = vrot.lane.b32.xlu0 %v2963, 64
        %v3941 = vpop.permute.xlu0 %3940
        %3942 = vrot.lane.b32.xlu0 %v2965, 64
        %v3943 = vpop.permute.xlu0 %3942
        %3944 = vrot.lane.b32.xlu0 %v2966, 64
        %v3945 = vpop.permute.xlu0 %3944
        %3946 = vrot.lane.b32.xlu0 %v2968, 64
        %v3947 = vpop.permute.xlu0 %3946
        %3948 = vrot.lane.b32.xlu0 %v2970, 64
        %v3949 = vpop.permute.xlu0 %3948
        %3950 = vrot.lane.b32.xlu0 %v2971, 64
        %v3951 = vpop.permute.xlu0 %3950
        %3952 = vrot.lane.b32.xlu0 %v2973, 64
        %v3953 = vpop.permute.xlu0 %3952
        %3954 = vrot.lane.b32.xlu0 %v2975, 64
        %v3955 = vpop.permute.xlu0 %3954
        %3956 = vrot.lane.b32.xlu0 %v2976, 64
        %v3957 = vpop.permute.xlu0 %3956
        %3958 = vrot.lane.b32.xlu0 %v2978, 64
        %v3959 = vpop.permute.xlu0 %3958
        %3960 = vrot.lane.b32.xlu0 %v2980, 64
        %v3961 = vpop.permute.xlu0 %3960
        %3962 = vrot.lane.b32.xlu0 %v2981, 64
        %v3963 = vpop.permute.xlu0 %3962
        %3964 = vrot.lane.b32.xlu0 %v2983, 64
        %v3965 = vpop.permute.xlu0 %3964
        %3966 = vrot.lane.b32.xlu0 %v2985, 64
        %v3967 = vpop.permute.xlu0 %3966
        %3968 = vrot.lane.b32.xlu0 %v2986, 64
        %v3969 = vpop.permute.xlu0 %3968
        %3970 = vrot.lane.b32.xlu0 %v2988, 64
        %v3971 = vpop.permute.xlu0 %3970
        %3972 = vrot.lane.b32.xlu0 %v2990, 64
        %v3973 = vpop.permute.xlu0 %3972
        %3974 = vrot.lane.b32.xlu0 %v2991, 64
        %v3975 = vpop.permute.xlu0 %3974
        %3976 = vrot.lane.b32.xlu0 %v2993, 64
        %v3977 = vpop.permute.xlu0 %3976
        %3978 = vrot.lane.b32.xlu0 %v2995, 64
        %v3979 = vpop.permute.xlu0 %3978
        %3980 = vrot.lane.b32.xlu0 %v2996, 64
        %v3981 = vpop.permute.xlu0 %3980
        %3982 = vrot.lane.b32.xlu0 %v2998, 64
        %v3983 = vpop.permute.xlu0 %3982
        %3984 = vrot.lane.b32.xlu0 %v3000, 64
        %v3985 = vpop.permute.xlu0 %3984
        %3986 = vrot.lane.b32.xlu0 %v3001, 64
        %v3987 = vpop.permute.xlu0 %3986
        %3988 = vrot.lane.b32.xlu0 %v3003, 64
        %v3989 = vpop.permute.xlu0 %3988
        %3990 = vrot.lane.b32.xlu0 %v3005, 64
        %v3991 = vpop.permute.xlu0 %3990
        %3992 = vrot.lane.b32.xlu0 %v3006, 64
        %v3993 = vpop.permute.xlu0 %3992
        %3994 = vrot.lane.b32.xlu0 %v3008, 64
        %v3995 = vpop.permute.xlu0 %3994
        %3996 = vrot.lane.b32.xlu0 %v3010, 64
        %v3997 = vpop.permute.xlu0 %3996
        %3998 = vrot.lane.b32.xlu0 %v3465, 64
        %v3999 = vpop.permute.xlu0 %3998
        %4000 = vrot.lane.b32.xlu0 %v3467, 64
        %v4001 = vpop.permute.xlu0 %4000
        %4002 = vrot.lane.b32.xlu0 %v3469, 64
        %v4003 = vpop.permute.xlu0 %4002
        %4004 = vrot.lane.b32.xlu0 %v3909, 64
        %v4005 = vpop.permute.xlu0 %4004
        %4006 = vrot.lane.b32.xlu0 %v3911, 64
        %v4007 = vpop.permute.xlu0 %4006
        %4008 = vrot.lane.b32.xlu0 %v3913, 64
        %v4009 = vpop.permute.xlu0 %4008
        %v4058 = vsel %vm196, %v2619, %v2772
        %v4059 = vsel %vm196, %v2620, %v2774
        %v4060 = vsel %vm196, %v2621, %v2776
        %v4061 = vsel %vm196, %v2623, %v2778
        %v4062 = vsel %vm196, %v2624, %v2780
        %v4063 = vsel %vm196, %v2625, %v2782
        %v4064 = vsel %vm196, %v2627, %v2784
        %v4065 = vsel %vm196, %v2628, %v2786
        %v4066 = vsel %vm196, %v2629, %v2788
        %v4067 = vsel %vm196, %v2631, %v2790
        %v4068 = vsel %vm196, %v2632, %v2792
        %v4069 = vsel %vm196, %v2633, %v2794
        %v4070 = vsel %vm196, %v2635, %v2796
        %v4071 = vsel %vm196, %v2636, %v2798
        %v4072 = vsel %vm196, %v2637, %v2800
        %v4073 = vsel %vm196, %v2639, %v2802
        %v4074 = vsel %vm196, %v2640, %v2804
        %v4075 = vsel %vm196, %v2641, %v2806
        %v4076 = vsel %vm196, %v2643, %v2808
        %v4077 = vsel %vm196, %v2644, %v2810
        %v4078 = vsel %vm196, %v2645, %v2812
        %v4079 = vsel %vm196, %v2647, %v2814
        %v4080 = vsel %vm196, %v2648, %v2816
        %v4081 = vsel %vm196, %v2649, %v2818
        %v4082 = vsel %vm196, %v2651, %v2820
        %v4083 = vsel %vm196, %v2652, %v2822
        %v4084 = vsel %vm196, %v2653, %v2824
        %v4085 = vsel %vm196, %v2655, %v2826
        %v4086 = vsel %vm196, %v2656, %v2828
        %v4087 = vsel %vm196, %v2657, %v2830
        %v4088 = vsel %vm196, %v2659, %v2832
        %v4089 = vsel %vm196, %v2660, %v2834
        %v4090 = vsel %vm196, %v2661, %v2836
        %v4091 = vsel %vm196, %v2663, %v2838
        %v4092 = vsel %vm196, %v2664, %v2840
        %v4093 = vsel %vm196, %v2665, %v2842
        %v4094 = vsel %vm196, %v2667, %v2844
        %v4095 = vsel %vm196, %v2668, %v2846
        %v4096 = vsel %vm196, %v2669, %v2848
        %v4097 = vsel %vm196, %v2671, %v2850
        %v4098 = vsel %vm196, %v2672, %v2852
        %v4099 = vsel %vm196, %v2673, %v2854
        %v4100 = vsel %vm196, %v2675, %v2856
        %v4101 = vsel %vm196, %v2676, %v2858
        %v4102 = vsel %vm196, %v2677, %v2860
        %v4103 = vsel %vm196, %v2679, %v2862
        %v4104 = vsel %vm196, %v2680, %v2864
        %v4105 = vsel %vm196, %v2681, %v2866
        %v4106 = vsel %vm1824, %v4058, %v3012
        %v4107 = vsel %vm1824, %v4059, %v3014
        %v4108 = vsel %vm1824, %v4060, %v3016
        %v4109 = vsel %vm1824, %v4061, %v3018
        %v4110 = vsel %vm1824, %v4062, %v3020
        %v4111 = vsel %vm1824, %v4063, %v3022
        %v4112 = vsel %vm1824, %v4064, %v3024
        %v4113 = vsel %vm1824, %v4065, %v3026
        %v4114 = vsel %vm1824, %v4066, %v3028
        %v4115 = vsel %vm1824, %v4067, %v3030
        %v4116 = vsel %vm1824, %v4068, %v3032
        %v4117 = vsel %vm1824, %v4069, %v3034
        %v4118 = vsel %vm1824, %v4070, %v3036
        %v4119 = vsel %vm1824, %v4071, %v3038
        %v4120 = vsel %vm1824, %v4072, %v3040
        %v4121 = vsel %vm1824, %v4073, %v3042
        %v4122 = vsel %vm1824, %v4074, %v3044
        %v4123 = vsel %vm1824, %v4075, %v3046
        %v4124 = vsel %vm1824, %v4076, %v3048
        %v4125 = vsel %vm1824, %v4077, %v3050
        %v4126 = vsel %vm1824, %v4078, %v3052
        %v4127 = vsel %vm1824, %v4079, %v3054
        %v4128 = vsel %vm1824, %v4080, %v3056
        %v4129 = vsel %vm1824, %v4081, %v3058
        %v4130 = vsel %vm1824, %v4082, %v3060
        %v4131 = vsel %vm1824, %v4083, %v3062
        %v4132 = vsel %vm1824, %v4084, %v3064
        %v4133 = vsel %vm1824, %v4085, %v3066
        %v4134 = vsel %vm1824, %v4086, %v3068
        %v4135 = vsel %vm1824, %v4087, %v3070
        %v4136 = vsel %vm1824, %v4088, %v3072
        %v4137 = vsel %vm1824, %v4089, %v3074
        %v4138 = vsel %vm1824, %v4090, %v3076
        %v4139 = vsel %vm1824, %v4091, %v3078
        %v4140 = vsel %vm1824, %v4092, %v3080
        %v4141 = vsel %vm1824, %v4093, %v3082
        %v4142 = vsel %vm1824, %v4094, %v3084
        %v4143 = vsel %vm1824, %v4095, %v3086
        %v4144 = vsel %vm1824, %v4096, %v3088
        %v4145 = vsel %vm1824, %v4097, %v3090
        %v4146 = vsel %vm1824, %v4098, %v3092
        %v4147 = vsel %vm1824, %v4099, %v3094
        %v4148 = vsel %vm1824, %v4100, %v3096
        %v4149 = vsel %vm1824, %v4101, %v3098
        %v4150 = vsel %vm1824, %v4102, %v3100
        %v4151 = vsel %vm1824, %v4103, %v3102
        %v4152 = vsel %vm1824, %v4104, %v3104
        %v4153 = vsel %vm1824, %v4105, %v3106
        %v4154 = vsel %vm1873, %v4106, %v3174
        %v4155 = vsel %vm1873, %v4107, %v3176
        %v4156 = vsel %vm1873, %v4108, %v3178
        %v4157 = vsel %vm1873, %v4109, %v3180
        %v4158 = vsel %vm1873, %v4110, %v3182
        %v4159 = vsel %vm1873, %v4111, %v3184
        %v4160 = vsel %vm1873, %v4112, %v3186
        %v4161 = vsel %vm1873, %v4113, %v3188
        %v4162 = vsel %vm1873, %v4114, %v3190
        %v4163 = vsel %vm1873, %v4115, %v3192
        %v4164 = vsel %vm1873, %v4116, %v3194
        %v4165 = vsel %vm1873, %v4117, %v3196
        %v4166 = vsel %vm1873, %v4118, %v3198
        %v4167 = vsel %vm1873, %v4119, %v3200
        %v4168 = vsel %vm1873, %v4120, %v3202
        %v4169 = vsel %vm1873, %v4121, %v3204
        %v4170 = vsel %vm1873, %v4122, %v3206
        %v4171 = vsel %vm1873, %v4123, %v3208
        %v4172 = vsel %vm1873, %v4124, %v3210
        %v4173 = vsel %vm1873, %v4125, %v3212
        %v4174 = vsel %vm1873, %v4126, %v3214
        %v4175 = vsel %vm1873, %v4127, %v3216
        %v4176 = vsel %vm1873, %v4128, %v3218
        %v4177 = vsel %vm1873, %v4129, %v3220
        %v4178 = vsel %vm1873, %v4130, %v3222
        %v4179 = vsel %vm1873, %v4131, %v3224
        %v4180 = vsel %vm1873, %v4132, %v3226
        %v4181 = vsel %vm1873, %v4133, %v3228
        %v4182 = vsel %vm1873, %v4134, %v3230
        %v4183 = vsel %vm1873, %v4135, %v3232
        %v4184 = vsel %vm1873, %v4136, %v3234
        %v4185 = vsel %vm1873, %v4137, %v3236
        %v4186 = vsel %vm1873, %v4138, %v3238
        %v4187 = vsel %vm1873, %v4139, %v3240
        %v4188 = vsel %vm1873, %v4140, %v3242
        %v4189 = vsel %vm1873, %v4141, %v3244
        %v4190 = vsel %vm1873, %v4142, %v3246
        %v4191 = vsel %vm1873, %v4143, %v3248
        %v4192 = vsel %vm1873, %v4144, %v3250
        %v4193 = vsel %vm1873, %v4145, %v3252
        %v4194 = vsel %vm1873, %v4146, %v3254
        %v4195 = vsel %vm1873, %v4147, %v3256
        %v4196 = vsel %vm1873, %v4148, %v3258
        %v4197 = vsel %vm1873, %v4149, %v3260
        %v4198 = vsel %vm1873, %v4150, %v3262
        %v4199 = vsel %vm1873, %v4151, %v3264
        %v4200 = vsel %vm1873, %v4152, %v3266
        %v4201 = vsel %vm1873, %v4153, %v3268
        %v4202 = vsel %vm1922, %v4154, %v3321
        %v4203 = vsel %vm1922, %v4155, %v3323
        %v4204 = vsel %vm1922, %v4156, %v3325
        %v4205 = vsel %vm1922, %v4157, %v3327
        %v4206 = vsel %vm1922, %v4158, %v3329
        %v4207 = vsel %vm1922, %v4159, %v3331
        %v4208 = vsel %vm1922, %v4160, %v3333
        %v4209 = vsel %vm1922, %v4161, %v3335
        %v4210 = vsel %vm1922, %v4162, %v3337
        %v4211 = vsel %vm1922, %v4163, %v3339
        %v4212 = vsel %vm1922, %v4164, %v3341
        %v4213 = vsel %vm1922, %v4165, %v3343
        %v4214 = vsel %vm1922, %v4166, %v3345
        %v4215 = vsel %vm1922, %v4167, %v3347
        %v4216 = vsel %vm1922, %v4168, %v3349
        %v4217 = vsel %vm1922, %v4169, %v3351
        %v4218 = vsel %vm1922, %v4170, %v3353
        %v4219 = vsel %vm1922, %v4171, %v3355
        %v4220 = vsel %vm1922, %v4172, %v3357
        %v4221 = vsel %vm1922, %v4173, %v3359
        %v4222 = vsel %vm1922, %v4174, %v3361
        %v4223 = vsel %vm1922, %v4175, %v3363
        %v4224 = vsel %vm1922, %v4176, %v3365
        %v4225 = vsel %vm1922, %v4177, %v3367
        %v4226 = vsel %vm1922, %v4178, %v3369
        %v4227 = vsel %vm1922, %v4179, %v3371
        %v4228 = vsel %vm1922, %v4180, %v3373
        %v4229 = vsel %vm1922, %v4181, %v3375
        %v4230 = vsel %vm1922, %v4182, %v3377
        %v4231 = vsel %vm1922, %v4183, %v3379
        %v4232 = vsel %vm1922, %v4184, %v3381
        %v4233 = vsel %vm1922, %v4185, %v3383
        %v4234 = vsel %vm1922, %v4186, %v3385
        %v4235 = vsel %vm1922, %v4187, %v3387
        %v4236 = vsel %vm1922, %v4188, %v3389
        %v4237 = vsel %vm1922, %v4189, %v3391
        %v4238 = vsel %vm1922, %v4190, %v3393
        %v4239 = vsel %vm1922, %v4191, %v3395
        %v4240 = vsel %vm1922, %v4192, %v3397
        %v4241 = vsel %vm1922, %v4193, %v3399
        %v4242 = vsel %vm1922, %v4194, %v3401
        %v4243 = vsel %vm1922, %v4195, %v3403
        %v4244 = vsel %vm1922, %v4196, %v3405
        %v4245 = vsel %vm1922, %v4197, %v3407
        %v4246 = vsel %vm1922, %v4198, %v3409
        %v4247 = vsel %vm1922, %v4199, %v3411
        %v4248 = vsel %vm1922, %v4200, %v3413
        %v4249 = vsel %vm1922, %v4201, %v3415
        %v4250 = vsel %vm1971, %v4202, %v3471
        %v4251 = vsel %vm1971, %v4203, %v3473
        %v4252 = vsel %vm1971, %v4204, %v3475
        %v4253 = vsel %vm1971, %v4205, %v3477
        %v4254 = vsel %vm1971, %v4206, %v3479
        %v4255 = vsel %vm1971, %v4207, %v3481
        %v4256 = vsel %vm1971, %v4208, %v3483
        %v4257 = vsel %vm1971, %v4209, %v3485
        %v4258 = vsel %vm1971, %v4210, %v3487
        %v4259 = vsel %vm1971, %v4211, %v3489
        %v4260 = vsel %vm1971, %v4212, %v3491
        %v4261 = vsel %vm1971, %v4213, %v3493
        %v4262 = vsel %vm1971, %v4214, %v3495
        %v4263 = vsel %vm1971, %v4215, %v3497
        %v4264 = vsel %vm1971, %v4216, %v3499
        %v4265 = vsel %vm1971, %v4217, %v3501
        %v4266 = vsel %vm1971, %v4218, %v3503
        %v4267 = vsel %vm1971, %v4219, %v3505
        %v4268 = vsel %vm1971, %v4220, %v3507
        %v4269 = vsel %vm1971, %v4221, %v3509
        %v4270 = vsel %vm1971, %v4222, %v3511
        %v4271 = vsel %vm1971, %v4223, %v3513
        %v4272 = vsel %vm1971, %v4224, %v3515
        %v4273 = vsel %vm1971, %v4225, %v3517
        %v4274 = vsel %vm1971, %v4226, %v3519
        %v4275 = vsel %vm1971, %v4227, %v3521
        %v4276 = vsel %vm1971, %v4228, %v3523
        %v4277 = vsel %vm1971, %v4229, %v3525
        %v4278 = vsel %vm1971, %v4230, %v3527
        %v4279 = vsel %vm1971, %v4231, %v3529
        %v4280 = vsel %vm1971, %v4232, %v3531
        %v4281 = vsel %vm1971, %v4233, %v3533
        %v4282 = vsel %vm1971, %v4234, %v3535
        %v4283 = vsel %vm1971, %v4235, %v3537
        %v4284 = vsel %vm1971, %v4236, %v3539
        %v4285 = vsel %vm1971, %v4237, %v3541
        %v4286 = vsel %vm1971, %v4238, %v3543
        %v4287 = vsel %vm1971, %v4239, %v3545
        %v4288 = vsel %vm1971, %v4240, %v3547
        %v4289 = vsel %vm1971, %v4241, %v3549
        %v4290 = vsel %vm1971, %v4242, %v3551
        %v4291 = vsel %vm1971, %v4243, %v3553
        %v4292 = vsel %vm1971, %v4244, %v3555
        %v4293 = vsel %vm1971, %v4245, %v3557
        %v4294 = vsel %vm1971, %v4246, %v3559
        %v4295 = vsel %vm1971, %v4247, %v3561
        %v4296 = vsel %vm1971, %v4248, %v3563
        %v4297 = vsel %vm1971, %v4249, %v3565
        %v4298 = vsel %vm2020, %v4250, %v3618
        %v4299 = vsel %vm2020, %v4251, %v3620
        %v4300 = vsel %vm2020, %v4252, %v3622
        %v4301 = vsel %vm2020, %v4253, %v3624
        %v4302 = vsel %vm2020, %v4254, %v3626
        %v4303 = vsel %vm2020, %v4255, %v3628
        %v4304 = vsel %vm2020, %v4256, %v3630
        %v4305 = vsel %vm2020, %v4257, %v3632
        %v4306 = vsel %vm2020, %v4258, %v3634
        %v4307 = vsel %vm2020, %v4259, %v3636
        %v4308 = vsel %vm2020, %v4260, %v3638
        %v4309 = vsel %vm2020, %v4261, %v3640
        %v4310 = vsel %vm2020, %v4262, %v3642
        %v4311 = vsel %vm2020, %v4263, %v3644
        %v4312 = vsel %vm2020, %v4264, %v3646
        %v4313 = vsel %vm2020, %v4265, %v3648
        %v4314 = vsel %vm2020, %v4266, %v3650
        %v4315 = vsel %vm2020, %v4267, %v3652
        %v4316 = vsel %vm2020, %v4268, %v3654
        %v4317 = vsel %vm2020, %v4269, %v3656
        %v4318 = vsel %vm2020, %v4270, %v3658
        %v4319 = vsel %vm2020, %v4271, %v3660
        %v4320 = vsel %vm2020, %v4272, %v3662
        %v4321 = vsel %vm2020, %v4273, %v3664
        %v4322 = vsel %vm2020, %v4274, %v3666
        %v4323 = vsel %vm2020, %v4275, %v3668
        %v4324 = vsel %vm2020, %v4276, %v3670
        %v4325 = vsel %vm2020, %v4277, %v3672
        %v4326 = vsel %vm2020, %v4278, %v3674
        %v4327 = vsel %vm2020, %v4279, %v3676
        %v4328 = vsel %vm2020, %v4280, %v3678
        %v4329 = vsel %vm2020, %v4281, %v3680
        %v4330 = vsel %vm2020, %v4282, %v3682
        %v4331 = vsel %vm2020, %v4283, %v3684
        %v4332 = vsel %vm2020, %v4284, %v3686
        %v4333 = vsel %vm2020, %v4285, %v3688
        %v4334 = vsel %vm2020, %v4286, %v3690
        %v4335 = vsel %vm2020, %v4287, %v3692
        %v4336 = vsel %vm2020, %v4288, %v3694
        %v4337 = vsel %vm2020, %v4289, %v3696
        %v4338 = vsel %vm2020, %v4290, %v3698
        %v4339 = vsel %vm2020, %v4291, %v3700
        %v4340 = vsel %vm2020, %v4292, %v3702
        %v4341 = vsel %vm2020, %v4293, %v3704
        %v4342 = vsel %vm2020, %v4294, %v3706
        %v4343 = vsel %vm2020, %v4295, %v3708
        %v4344 = vsel %vm2020, %v4296, %v3710
        %v4345 = vsel %vm2020, %v4297, %v3712
        %v4346 = vsel %vm2069, %v4298, %v3765
        %v4347 = vsel %vm2069, %v4299, %v3767
        %v4348 = vsel %vm2069, %v4300, %v3769
        %v4349 = vsel %vm2069, %v4301, %v3771
        %v4350 = vsel %vm2069, %v4302, %v3773
        %v4351 = vsel %vm2069, %v4303, %v3775
        %v4352 = vsel %vm2069, %v4304, %v3777
        %v4353 = vsel %vm2069, %v4305, %v3779
        %v4354 = vsel %vm2069, %v4306, %v3781
        %v4355 = vsel %vm2069, %v4307, %v3783
        %v4356 = vsel %vm2069, %v4308, %v3785
        %v4357 = vsel %vm2069, %v4309, %v3787
        %v4358 = vsel %vm2069, %v4310, %v3789
        %v4359 = vsel %vm2069, %v4311, %v3791
        %v4360 = vsel %vm2069, %v4312, %v3793
        %v4361 = vsel %vm2069, %v4313, %v3795
        %v4362 = vsel %vm2069, %v4314, %v3797
        %v4363 = vsel %vm2069, %v4315, %v3799
        %v4364 = vsel %vm2069, %v4316, %v3801
        %v4365 = vsel %vm2069, %v4317, %v3803
        %v4366 = vsel %vm2069, %v4318, %v3805
        %v4367 = vsel %vm2069, %v4319, %v3807
        %v4368 = vsel %vm2069, %v4320, %v3809
        %v4369 = vsel %vm2069, %v4321, %v3811
        %v4370 = vsel %vm2069, %v4322, %v3813
        %v4371 = vsel %vm2069, %v4323, %v3815
        %v4372 = vsel %vm2069, %v4324, %v3817
        %v4373 = vsel %vm2069, %v4325, %v3819
        %v4374 = vsel %vm2069, %v4326, %v3821
        %v4375 = vsel %vm2069, %v4327, %v3823
        %v4376 = vsel %vm2069, %v4328, %v3825
        %v4377 = vsel %vm2069, %v4329, %v3827
        %v4378 = vsel %vm2069, %v4330, %v3829
        %v4379 = vsel %vm2069, %v4331, %v3831
        %v4380 = vsel %vm2069, %v4332, %v3833
        %v4381 = vsel %vm2069, %v4333, %v3835
        %v4382 = vsel %vm2069, %v4334, %v3837
        %v4383 = vsel %vm2069, %v4335, %v3839
        %v4384 = vsel %vm2069, %v4336, %v3841
        %v4385 = vsel %vm2069, %v4337, %v3843
        %v4386 = vsel %vm2069, %v4338, %v3845
        %v4387 = vsel %vm2069, %v4339, %v3847
        %v4388 = vsel %vm2069, %v4340, %v3849
        %v4389 = vsel %vm2069, %v4341, %v3851
        %v4390 = vsel %vm2069, %v4342, %v3853
        %v4391 = vsel %vm2069, %v4343, %v3855
        %v4392 = vsel %vm2069, %v4344, %v3857
        %v4393 = vsel %vm2069, %v4345, %v3859
        %v4394 = vsel %vm2118, %v4346, %v3915
        %v4395 = vsel %vm2118, %v4347, %v3917
        %v4396 = vsel %vm2118, %v4348, %v3919
        %v4397 = vsel %vm2118, %v4349, %v3921
        %v4398 = vsel %vm2118, %v4350, %v3923
        %v4399 = vsel %vm2118, %v4351, %v3925
        %v4400 = vsel %vm2118, %v4352, %v3927
        %v4401 = vsel %vm2118, %v4353, %v3929
        %v4402 = vsel %vm2118, %v4354, %v3931
        %v4403 = vsel %vm2118, %v4355, %v3933
        %v4404 = vsel %vm2118, %v4356, %v3935
        %v4405 = vsel %vm2118, %v4357, %v3937
        %v4406 = vsel %vm2118, %v4358, %v3939
        %v4407 = vsel %vm2118, %v4359, %v3941
        %v4408 = vsel %vm2118, %v4360, %v3943
        %v4409 = vsel %vm2118, %v4361, %v3945
        %v4410 = vsel %vm2118, %v4362, %v3947
        %v4411 = vsel %vm2118, %v4363, %v3949
        %v4412 = vsel %vm2118, %v4364, %v3951
        %v4413 = vsel %vm2118, %v4365, %v3953
        %v4414 = vsel %vm2118, %v4366, %v3955
        %v4415 = vsel %vm2118, %v4367, %v3957
        %v4416 = vsel %vm2118, %v4368, %v3959
        %v4417 = vsel %vm2118, %v4369, %v3961
        %v4418 = vsel %vm2118, %v4370, %v3963
        %v4419 = vsel %vm2118, %v4371, %v3965
        %v4420 = vsel %vm2118, %v4372, %v3967
        %v4421 = vsel %vm2118, %v4373, %v3969
        %v4422 = vsel %vm2118, %v4374, %v3971
        %v4423 = vsel %vm2118, %v4375, %v3973
        %v4424 = vsel %vm2118, %v4376, %v3975
        %v4425 = vsel %vm2118, %v4377, %v3977
        %v4426 = vsel %vm2118, %v4378, %v3979
        %v4427 = vsel %vm2118, %v4379, %v3981
        %v4428 = vsel %vm2118, %v4380, %v3983
        %v4429 = vsel %vm2118, %v4381, %v3985
        %v4430 = vsel %vm2118, %v4382, %v3987
        %v4431 = vsel %vm2118, %v4383, %v3989
        %v4432 = vsel %vm2118, %v4384, %v3991
        %v4433 = vsel %vm2118, %v4385, %v3993
        %v4434 = vsel %vm2118, %v4386, %v3995
        %v4435 = vsel %vm2118, %v4387, %v3997
        %v4436 = vsel %vm2118, %v4388, %v3999
        %v4437 = vsel %vm2118, %v4389, %v4001
        %v4438 = vsel %vm2118, %v4390, %v4003
        %v4439 = vsel %vm2118, %v4391, %v4005
        %v4440 = vsel %vm2118, %v4392, %v4007
        %v4441 = vsel %vm2118, %v4393, %v4009
        %v4490 = vrot.slane %v4394, 7
        %v4491 = vrot.slane %v4395, 7
        %v4492 = vsel %vm2215, %v4490, %v4491
        %v4493 = vrot.slane %v4396, 7
        %v4494 = vsel %vm2215, %v4491, %v4493
        %v4495 = vrot.slane %v4397, 7
        %v4496 = vrot.slane %v4398, 7
        %v4497 = vsel %vm2215, %v4495, %v4496
        %v4498 = vrot.slane %v4399, 7
        %v4499 = vsel %vm2215, %v4496, %v4498
        %v4500 = vrot.slane %v4400, 7
        %v4501 = vrot.slane %v4401, 7
        %v4502 = vsel %vm2215, %v4500, %v4501
        %v4503 = vrot.slane %v4402, 7
        %v4504 = vsel %vm2215, %v4501, %v4503
        %v4505 = vrot.slane %v4403, 7
        %v4506 = vrot.slane %v4404, 7
        %v4507 = vsel %vm2215, %v4505, %v4506
        %v4508 = vrot.slane %v4405, 7
        %v4509 = vsel %vm2215, %v4506, %v4508
        %v4510 = vrot.slane %v4406, 7
        %v4511 = vrot.slane %v4407, 7
        %v4512 = vsel %vm2215, %v4510, %v4511
        %v4513 = vrot.slane %v4408, 7
        %v4514 = vsel %vm2215, %v4511, %v4513
        %v4515 = vrot.slane %v4409, 7
        %v4516 = vrot.slane %v4410, 7
        %v4517 = vsel %vm2215, %v4515, %v4516
        %v4518 = vrot.slane %v4411, 7
        %v4519 = vsel %vm2215, %v4516, %v4518
        %v4520 = vrot.slane %v4412, 7
        %v4521 = vrot.slane %v4413, 7
        %v4522 = vsel %vm2215, %v4520, %v4521
        %v4523 = vrot.slane %v4414, 7
        %v4524 = vsel %vm2215, %v4521, %v4523
        %v4525 = vrot.slane %v4415, 7
        %v4526 = vrot.slane %v4416, 7
        %v4527 = vsel %vm2215, %v4525, %v4526
        %v4528 = vrot.slane %v4417, 7
        %v4529 = vsel %vm2215, %v4526, %v4528
        %v4530 = vrot.slane %v4418, 7
        %v4531 = vrot.slane %v4419, 7
        %v4532 = vsel %vm2215, %v4530, %v4531
        %v4533 = vrot.slane %v4420, 7
        %v4534 = vsel %vm2215, %v4531, %v4533
        %v4535 = vrot.slane %v4421, 7
        %v4536 = vrot.slane %v4422, 7
        %v4537 = vsel %vm2215, %v4535, %v4536
        %v4538 = vrot.slane %v4423, 7
        %v4539 = vsel %vm2215, %v4536, %v4538
        %v4540 = vrot.slane %v4424, 7
        %v4541 = vrot.slane %v4425, 7
        %v4542 = vsel %vm2215, %v4540, %v4541
        %v4543 = vrot.slane %v4426, 7
        %v4544 = vsel %vm2215, %v4541, %v4543
        %v4545 = vrot.slane %v4427, 7
        %v4546 = vrot.slane %v4428, 7
        %v4547 = vsel %vm2215, %v4545, %v4546
        %v4548 = vrot.slane %v4429, 7
        %v4549 = vsel %vm2215, %v4546, %v4548
        %v4550 = vrot.slane %v4430, 7
        %v4551 = vrot.slane %v4431, 7
        %v4552 = vsel %vm2215, %v4550, %v4551
        %v4553 = vrot.slane %v4432, 7
        %v4554 = vsel %vm2215, %v4551, %v4553
        %v4555 = vrot.slane %v4433, 7
        %v4556 = vrot.slane %v4434, 7
        %v4557 = vsel %vm2215, %v4555, %v4556
        %v4558 = vrot.slane %v4435, 7
        %v4559 = vsel %vm2215, %v4556, %v4558
        %v4560 = vrot.slane %v4436, 7
        %v4561 = vrot.slane %v4437, 7
        %v4562 = vsel %vm2215, %v4560, %v4561
        %v4563 = vrot.slane %v4438, 7
        %v4564 = vsel %vm2215, %v4561, %v4563
        %v4565 = vrot.slane %v4439, 7
        %v4566 = vrot.slane %v4440, 7
        %v4567 = vsel %vm2215, %v4565, %v4566
        %v4568 = vrot.slane %v4441, 7
        %v4569 = vsel %vm2215, %v4566, %v4568
        %s4570 = scalar_lea.vmem %s1, 72
        %v4571 = vld [vmem:[%s4570] sm:$0xff]
        %v4572 = vld [vmem:[%s4570 + $0x8] sm:$0xff]
        %v4573 = vld [vmem:[%s4570 + $0x10] sm:$0xff]
        %v4574 = vld [vmem:[%s4570 + $0x18] sm:$0xff]
        %v4575 = vld [vmem:[%s4570 + $0x20] sm:$0xff]
        %v4576 = vld [vmem:[%s4570 + $0x28] sm:$0xff]
        %v4577 = vld [vmem:[%s4570 + $0x30] sm:$0xff]
        %v4578 = vld [vmem:[%s4570 + $0x38] sm:$0xff]
        %v4579 = vld [vmem:[%s4570 + $0x40] sm:$0xff]
        %v4580 = vsel %vm2305, %v4492, 0
        %v4582 = vsel %vm2305, %v4494, 0
        %v4584 = vsel %vm2305, %v4497, 0
        %v4586 = vsel %vm2305, %v4499, 0
        %v4588 = vsel %vm2305, %v4502, 0
        %v4590 = vsel %vm2305, %v4504, 0
        %v4592 = vsel %vm2305, %v4507, 0
        %v4594 = vsel %vm2305, %v4509, 0
        %v4596 = vsel %vm2305, %v4512, 0
        %v4598 = vsel %vm2305, %v4514, 0
        %v4600 = vsel %vm2305, %v4517, 0
        %v4602 = vsel %vm2305, %v4519, 0
        %v4604 = vsel %vm2305, %v4522, 0
        %v4606 = vsel %vm2305, %v4524, 0
        %v4608 = vsel %vm2305, %v4527, 0
        %v4610 = vsel %vm2305, %v4529, 0
        %v4612 = vsel %vm2305, %v4532, 0
        %v4614 = vsel %vm2305, %v4534, 0
        %v4616 = vsel %vm2305, %v4537, 0
        %v4618 = vsel %vm2305, %v4539, 0
        %v4620 = vsel %vm2305, %v4542, 0
        %v4622 = vsel %vm2305, %v4544, 0
        %v4624 = vsel %vm2305, %v4547, 0
        %v4626 = vsel %vm2305, %v4549, 0
        %v4628 = vsel %vm2305, %v4552, 0
        %v4630 = vsel %vm2305, %v4554, 0
        %v4632 = vsel %vm2305, %v4557, 0
        %v4634 = vsel %vm2305, %v4559, 0
        %v4636 = vsel %vm2305, %v4562, 0
        %v4638 = vsel %vm2305, %v4564, 0
        %v4640 = vsel %vm2305, %v4567, 0
        %v4642 = vsel %vm2305, %v4569, 0
        %4644 = vmatpush.msra.mxu0 0.0
        %4645 = vmatpush.msra.mxu0 0.0
        %4646 = vmatpush.msra.mxu0 0.0
        %4647 = vmatpush.msra.mxu0 0.0
        %4648 = vmatpush.msra.mxu0 0.0
        %4649 = vmatpush.msra.mxu0 0.0
        %4650 = vmatpush.msra.mxu0 0.0
        %4651 = vmatpush.msra.mxu0 %v4579
        %4652 = vmatpush.msra.mxu0 %v4578
        %4653 = vmatpush.msra.mxu0 %v4577
        %4654 = vmatpush.msra.mxu0 %v4576
        %4655 = vmatpush.msra.mxu0 %v4575
        %4656 = vmatpush.msra.mxu0 %v4574
        %4657 = vmatpush.msra.mxu0 %v4573
        %4658 = vmatpush.msra.mxu0 %v4572
        %4659 = vmatpush.msra.mxu0 %v4571
        %4660 = vmatmul.f32.gmra.mxu0 %v4580
        %v4661 = vpop.f32.mrf.mxu0
        %v4662 = vadd.f32 0.0, %v4661
        %4663 = vmatmul.f32.gmra.mxu0 %v4582
        %v4664 = vpop.f32.mrf.mxu0
        %v4665 = vadd.f32 0.0, %v4664
        %4666 = vmatmul.f32.gmra.mxu0 %v4584
        %v4667 = vpop.f32.mrf.mxu0
        %v4668 = vadd.f32 0.0, %v4667
        %4669 = vmatmul.f32.gmra.mxu0 %v4586
        %v4670 = vpop.f32.mrf.mxu0
        %v4671 = vadd.f32 0.0, %v4670
        %4672 = vmatmul.f32.gmra.mxu0 %v4588
        %v4673 = vpop.f32.mrf.mxu0
        %v4674 = vadd.f32 0.0, %v4673
        %4675 = vmatmul.f32.gmra.mxu0 %v4590
        %v4676 = vpop.f32.mrf.mxu0
        %v4677 = vadd.f32 0.0, %v4676
        %4678 = vmatmul.f32.gmra.mxu0 %v4592
        %v4679 = vpop.f32.mrf.mxu0
        %v4680 = vadd.f32 0.0, %v4679
        %4681 = vmatmul.f32.gmra.mxu0 %v4594
        %v4682 = vpop.f32.mrf.mxu0
        %v4683 = vadd.f32 0.0, %v4682
        %4684 = vmatmul.f32.gmra.mxu0 %v4596
        %v4685 = vpop.f32.mrf.mxu0
        %v4686 = vadd.f32 0.0, %v4685
        %4687 = vmatmul.f32.gmra.mxu0 %v4598
        %v4688 = vpop.f32.mrf.mxu0
        %v4689 = vadd.f32 0.0, %v4688
        %4690 = vmatmul.f32.gmra.mxu0 %v4600
        %v4691 = vpop.f32.mrf.mxu0
        %v4692 = vadd.f32 0.0, %v4691
        %4693 = vmatmul.f32.gmra.mxu0 %v4602
        %v4694 = vpop.f32.mrf.mxu0
        %v4695 = vadd.f32 0.0, %v4694
        %4696 = vmatmul.f32.gmra.mxu0 %v4604
        %v4697 = vpop.f32.mrf.mxu0
        %v4698 = vadd.f32 0.0, %v4697
        %4699 = vmatmul.f32.gmra.mxu0 %v4606
        %v4700 = vpop.f32.mrf.mxu0
        %v4701 = vadd.f32 0.0, %v4700
        %4702 = vmatmul.f32.gmra.mxu0 %v4608
        %v4703 = vpop.f32.mrf.mxu0
        %v4704 = vadd.f32 0.0, %v4703
        %4705 = vmatmul.f32.gmra.mxu0 %v4610
        %v4706 = vpop.f32.mrf.mxu0
        %v4707 = vadd.f32 0.0, %v4706
        %4708 = vmatmul.f32.gmra.mxu0 %v4612
        %v4709 = vpop.f32.mrf.mxu0
        %v4710 = vadd.f32 0.0, %v4709
        %4711 = vmatmul.f32.gmra.mxu0 %v4614
        %v4712 = vpop.f32.mrf.mxu0
        %v4713 = vadd.f32 0.0, %v4712
        %4714 = vmatmul.f32.gmra.mxu0 %v4616
        %v4715 = vpop.f32.mrf.mxu0
        %v4716 = vadd.f32 0.0, %v4715
        %4717 = vmatmul.f32.gmra.mxu0 %v4618
        %v4718 = vpop.f32.mrf.mxu0
        %v4719 = vadd.f32 0.0, %v4718
        %4720 = vmatmul.f32.gmra.mxu0 %v4620
        %v4721 = vpop.f32.mrf.mxu0
        %v4722 = vadd.f32 0.0, %v4721
        %4723 = vmatmul.f32.gmra.mxu0 %v4622
        %v4724 = vpop.f32.mrf.mxu0
        %v4725 = vadd.f32 0.0, %v4724
        %4726 = vmatmul.f32.gmra.mxu0 %v4624
        %v4727 = vpop.f32.mrf.mxu0
        %v4728 = vadd.f32 0.0, %v4727
        %4729 = vmatmul.f32.gmra.mxu0 %v4626
        %v4730 = vpop.f32.mrf.mxu0
        %v4731 = vadd.f32 0.0, %v4730
        %4732 = vmatmul.f32.gmra.mxu0 %v4628
        %v4733 = vpop.f32.mrf.mxu0
        %v4734 = vadd.f32 0.0, %v4733
        %4735 = vmatmul.f32.gmra.mxu0 %v4630
        %v4736 = vpop.f32.mrf.mxu0
        %v4737 = vadd.f32 0.0, %v4736
        %4738 = vmatmul.f32.gmra.mxu0 %v4632
        %v4739 = vpop.f32.mrf.mxu0
        %v4740 = vadd.f32 0.0, %v4739
        %4741 = vmatmul.f32.gmra.mxu0 %v4634
        %v4742 = vpop.f32.mrf.mxu0
        %v4743 = vadd.f32 0.0, %v4742
        %4744 = vmatmul.f32.gmra.mxu0 %v4636
        %v4745 = vpop.f32.mrf.mxu0
        %v4746 = vadd.f32 0.0, %v4745
        %4747 = vmatmul.f32.gmra.mxu0 %v4638
        %v4748 = vpop.f32.mrf.mxu0
        %v4749 = vadd.f32 0.0, %v4748
        %4750 = vmatmul.f32.gmra.mxu0 %v4640
        %v4751 = vpop.f32.mrf.mxu0
        %v4752 = vadd.f32 0.0, %v4751
        %4753 = vmatmul.f32.gmra.mxu0 %v4642
        %v4754 = vpop.f32.mrf.mxu0
        %v4755 = vadd.f32 0.0, %v4754
        %4756 = vdwg.mxu0
        %s4757 = scalar_lea.vmem %s2, 1
        %v4758 = vld [vmem:[%s4757] sm:$0x1]
        %v4760 = vperm.slane %v4758, 0
        %v4762 = vmul.f32 %v4662, %v4760
        %v4763 = vmul.f32 %v4665, %v4760
        %v4764 = vmul.f32 %v4668, %v4760
        %v4765 = vmul.f32 %v4671, %v4760
        %v4766 = vmul.f32 %v4674, %v4760
        %v4767 = vmul.f32 %v4677, %v4760
        %v4768 = vmul.f32 %v4680, %v4760
        %v4769 = vmul.f32 %v4683, %v4760
        %v4770 = vmul.f32 %v4686, %v4760
        %v4771 = vmul.f32 %v4689, %v4760
        %v4772 = vmul.f32 %v4692, %v4760
        %v4773 = vmul.f32 %v4695, %v4760
        %v4774 = vmul.f32 %v4698, %v4760
        %v4775 = vmul.f32 %v4701, %v4760
        %v4776 = vmul.f32 %v4704, %v4760
        %v4777 = vmul.f32 %v4707, %v4760
        %v4778 = vmul.f32 %v4710, %v4760
        %v4779 = vmul.f32 %v4713, %v4760
        %v4780 = vmul.f32 %v4716, %v4760
        %v4781 = vmul.f32 %v4719, %v4760
        %v4782 = vmul.f32 %v4722, %v4760
        %v4783 = vmul.f32 %v4725, %v4760
        %v4784 = vmul.f32 %v4728, %v4760
        %v4785 = vmul.f32 %v4731, %v4760
        %v4786 = vmul.f32 %v4734, %v4760
        %v4787 = vmul.f32 %v4737, %v4760
        %v4788 = vmul.f32 %v4740, %v4760
        %v4789 = vmul.f32 %v4743, %v4760
        %v4790 = vmul.f32 %v4746, %v4760
        %v4791 = vmul.f32 %v4749, %v4760
        %v4792 = vmul.f32 %v4752, %v4760
        %v4793 = vmul.f32 %v4755, %v4760
        %s4794 = scalar_lea.vmem %s3, 1
        %v4795 = vld [vmem:[%s4794] sm:$0x1]
        %v4797 = vperm.slane %v4795, 0
        %v4799 = vadd.f32 %v4762, %v4797
        %v4800 = vadd.f32 %v4763, %v4797
        %v4801 = vadd.f32 %v4764, %v4797
        %v4802 = vadd.f32 %v4765, %v4797
        %v4803 = vadd.f32 %v4766, %v4797
        %v4804 = vadd.f32 %v4767, %v4797
        %v4805 = vadd.f32 %v4768, %v4797
        %v4806 = vadd.f32 %v4769, %v4797
        %v4807 = vadd.f32 %v4770, %v4797
        %v4808 = vadd.f32 %v4771, %v4797
        %v4809 = vadd.f32 %v4772, %v4797
        %v4810 = vadd.f32 %v4773, %v4797
        %v4811 = vadd.f32 %v4774, %v4797
        %v4812 = vadd.f32 %v4775, %v4797
        %v4813 = vadd.f32 %v4776, %v4797
        %v4814 = vadd.f32 %v4777, %v4797
        %v4815 = vadd.f32 %v4778, %v4797
        %v4816 = vadd.f32 %v4779, %v4797
        %v4817 = vadd.f32 %v4780, %v4797
        %v4818 = vadd.f32 %v4781, %v4797
        %v4819 = vadd.f32 %v4782, %v4797
        %v4820 = vadd.f32 %v4783, %v4797
        %v4821 = vadd.f32 %v4784, %v4797
        %v4822 = vadd.f32 %v4785, %v4797
        %v4823 = vadd.f32 %v4786, %v4797
        %v4824 = vadd.f32 %v4787, %v4797
        %v4825 = vadd.f32 %v4788, %v4797
        %v4826 = vadd.f32 %v4789, %v4797
        %v4827 = vadd.f32 %v4790, %v4797
        %v4828 = vadd.f32 %v4791, %v4797
        %v4829 = vadd.f32 %v4792, %v4797
        %v4830 = vadd.f32 %v4793, %v4797
        %v4831 = vmax.f32 %v4799, 0.0
        %v4832 = vmax.f32 %v4800, 0.0
        %v4833 = vmax.f32 %v4801, 0.0
        %v4834 = vmax.f32 %v4802, 0.0
        %v4835 = vmax.f32 %v4803, 0.0
        %v4836 = vmax.f32 %v4804, 0.0
        %v4837 = vmax.f32 %v4805, 0.0
        %v4838 = vmax.f32 %v4806, 0.0
        %v4839 = vmax.f32 %v4807, 0.0
        %v4840 = vmax.f32 %v4808, 0.0
        %v4841 = vmax.f32 %v4809, 0.0
        %v4842 = vmax.f32 %v4810, 0.0
        %v4843 = vmax.f32 %v4811, 0.0
        %v4844 = vmax.f32 %v4812, 0.0
        %v4845 = vmax.f32 %v4813, 0.0
        %v4846 = vmax.f32 %v4814, 0.0
        %v4847 = vmax.f32 %v4815, 0.0
        %v4848 = vmax.f32 %v4816, 0.0
        %v4849 = vmax.f32 %v4817, 0.0
        %v4850 = vmax.f32 %v4818, 0.0
        %v4851 = vmax.f32 %v4819, 0.0
        %v4852 = vmax.f32 %v4820, 0.0
        %v4853 = vmax.f32 %v4821, 0.0
        %v4854 = vmax.f32 %v4822, 0.0
        %v4855 = vmax.f32 %v4823, 0.0
        %v4856 = vmax.f32 %v4824, 0.0
        %v4857 = vmax.f32 %v4825, 0.0
        %v4858 = vmax.f32 %v4826, 0.0
        %v4859 = vmax.f32 %v4827, 0.0
        %v4860 = vmax.f32 %v4828, 0.0
        %v4861 = vmax.f32 %v4829, 0.0
        %v4862 = vmax.f32 %v4830, 0.0
        %4863 = vst.msk [vmem:[%s301 + $0x8] sm:$0xff] %vm196, %v4831
        %4864 = vst.msk [vmem:[%s301 + $0x10] sm:$0xff] %vm196, %v4832
        %4865 = vst.msk [vmem:[%s301 + $0x28] sm:$0xff] %vm196, %v4833
        %4866 = vst.msk [vmem:[%s301 + $0x30] sm:$0xff] %vm196, %v4834
        %4867 = vst.msk [vmem:[%s301 + $0x48] sm:$0xff] %vm196, %v4835
        %4868 = vst.msk [vmem:[%s301 + $0x50] sm:$0xff] %vm196, %v4836
        %4869 = vst.msk [vmem:[%s301 + $0x68] sm:$0xff] %vm196, %v4837
        %4870 = vst.msk [vmem:[%s301 + $0x70] sm:$0xff] %vm196, %v4838
        %4871 = vst.msk [vmem:[%s301 + $0x88] sm:$0xff] %vm196, %v4839
        %4872 = vst.msk [vmem:[%s301 + $0x90] sm:$0xff] %vm196, %v4840
        %4873 = vst.msk [vmem:[%s301 + $0xa8] sm:$0xff] %vm196, %v4841
        %4874 = vst.msk [vmem:[%s301 + $0xb0] sm:$0xff] %vm196, %v4842
        %4875 = vst.msk [vmem:[%s301 + $0xc8] sm:$0xff] %vm196, %v4843
        %4876 = vst.msk [vmem:[%s301 + $0xd0] sm:$0xff] %vm196, %v4844
        %4877 = vst.msk [vmem:[%s301 + $0xe8] sm:$0xff] %vm196, %v4845
        %4878 = vst.msk [vmem:[%s301 + $0xf0] sm:$0xff] %vm196, %v4846
        %4879 = vst.msk [vmem:[%s301 + $0x108] sm:$0xff] %vm196, %v4847
        %4880 = vst.msk [vmem:[%s301 + $0x110] sm:$0xff] %vm196, %v4848
        %4881 = vst.msk [vmem:[%s301 + $0x128] sm:$0xff] %vm196, %v4849
        %4882 = vst.msk [vmem:[%s301 + $0x130] sm:$0xff] %vm196, %v4850
        %4883 = vst.msk [vmem:[%s301 + $0x148] sm:$0xff] %vm196, %v4851
        %4884 = vst.msk [vmem:[%s301 + $0x150] sm:$0xff] %vm196, %v4852
        %4885 = vst.msk [vmem:[%s301 + $0x168] sm:$0xff] %vm196, %v4853
        %4886 = vst.msk [vmem:[%s301 + $0x170] sm:$0xff] %vm196, %v4854
        %4887 = vst.msk [vmem:[%s301 + $0x188] sm:$0xff] %vm196, %v4855
        %4888 = vst.msk [vmem:[%s301 + $0x190] sm:$0xff] %vm196, %v4856
        %4889 = vst.msk [vmem:[%s301 + $0x1a8] sm:$0xff] %vm196, %v4857
        %4890 = vst.msk [vmem:[%s301 + $0x1b0] sm:$0xff] %vm196, %v4858
        %4891 = vst.msk [vmem:[%s301 + $0x1c8] sm:$0xff] %vm196, %v4859
        %4892 = vst.msk [vmem:[%s301 + $0x1d0] sm:$0xff] %vm196, %v4860
        %4893 = vst.msk [vmem:[%s301 + $0x1e8] sm:$0xff] %vm196, %v4861
        %4894 = vst.msk [vmem:[%s301 + $0x1f0] sm:$0xff] %vm196, %v4862
        %v4895 = vld [vmem:[#allocation2] sm:$0xff]
        %v4896 = vld [vmem:[#allocation2 + $0x8] sm:$0xff]
        %v4897 = vld [vmem:[#allocation2 + $0x10] sm:$0xff]
        %v4898 = vld [vmem:[#allocation2 + $0x18] sm:$0xff]
        %v4899 = vld [vmem:[#allocation2 + $0x20] sm:$0xff]
        %v4900 = vld [vmem:[#allocation2 + $0x28] sm:$0xff]
        %v4901 = vld [vmem:[#allocation2 + $0x30] sm:$0xff]
        %v4902 = vld [vmem:[#allocation2 + $0x38] sm:$0xff]
        %v4903 = vld [vmem:[#allocation2 + $0x40] sm:$0xff]
        %v4904 = vld [vmem:[#allocation2 + $0x48] sm:$0xff]
        %v4905 = vld [vmem:[#allocation2 + $0x50] sm:$0xff]
        %v4906 = vld [vmem:[#allocation2 + $0x58] sm:$0xff]
        %v4907 = vld [vmem:[#allocation2 + $0x60] sm:$0xff]
        %v4908 = vld [vmem:[#allocation2 + $0x68] sm:$0xff]
        %v4909 = vld [vmem:[#allocation2 + $0x70] sm:$0xff]
        %v4910 = vld [vmem:[#allocation2 + $0x78] sm:$0xff]
        %v4911 = vld [vmem:[#allocation2 + $0x80] sm:$0xff]
        %v4912 = vld [vmem:[#allocation2 + $0x88] sm:$0xff]
        %v4913 = vld [vmem:[#allocation2 + $0x90] sm:$0xff]
        %v4914 = vld [vmem:[#allocation2 + $0x98] sm:$0xff]
        %v4915 = vld [vmem:[#allocation2 + $0xa0] sm:$0xff]
        %v4916 = vld [vmem:[#allocation2 + $0xa8] sm:$0xff]
        %v4917 = vld [vmem:[#allocation2 + $0xb0] sm:$0xff]
        %v4918 = vld [vmem:[#allocation2 + $0xb8] sm:$0xff]
        %v4919 = vld [vmem:[#allocation2 + $0xc0] sm:$0xff]
        %v4920 = vld [vmem:[#allocation2 + $0xc8] sm:$0xff]
        %v4921 = vld [vmem:[#allocation2 + $0xd0] sm:$0xff]
        %v4922 = vld [vmem:[#allocation2 + $0xd8] sm:$0xff]
        %v4923 = vld [vmem:[#allocation2 + $0xe0] sm:$0xff]
        %v4924 = vld [vmem:[#allocation2 + $0xe8] sm:$0xff]
        %v4925 = vld [vmem:[#allocation2 + $0xf0] sm:$0xff]
        %v4926 = vld [vmem:[#allocation2 + $0xf8] sm:$0xff]
        %v4927 = vld [vmem:[#allocation2 + $0x100] sm:$0xff]
        %v4928 = vld [vmem:[#allocation2 + $0x108] sm:$0xff]
        %v4929 = vld [vmem:[#allocation2 + $0x110] sm:$0xff]
        %v4930 = vld [vmem:[#allocation2 + $0x118] sm:$0xff]
        %v4931 = vld [vmem:[#allocation2 + $0x120] sm:$0xff]
        %v4932 = vld [vmem:[#allocation2 + $0x128] sm:$0xff]
        %v4933 = vld [vmem:[#allocation2 + $0x130] sm:$0xff]
        %v4934 = vld [vmem:[#allocation2 + $0x138] sm:$0xff]
        %v4935 = vld [vmem:[#allocation2 + $0x140] sm:$0xff]
        %v4936 = vld [vmem:[#allocation2 + $0x148] sm:$0xff]
        %v4937 = vld [vmem:[#allocation2 + $0x150] sm:$0xff]
        %v4938 = vld [vmem:[#allocation2 + $0x158] sm:$0xff]
        %v4939 = vld [vmem:[#allocation2 + $0x160] sm:$0xff]
        %v4940 = vld [vmem:[#allocation2 + $0x168] sm:$0xff]
        %v4941 = vld [vmem:[#allocation2 + $0x170] sm:$0xff]
        %v4942 = vld [vmem:[#allocation2 + $0x178] sm:$0xff]
        %v4943 = vld [vmem:[#allocation2 + $0x180] sm:$0xff]
        %v4944 = vld [vmem:[#allocation2 + $0x188] sm:$0xff]
        %v4945 = vld [vmem:[#allocation2 + $0x190] sm:$0xff]
        %v4946 = vld [vmem:[#allocation2 + $0x198] sm:$0xff]
        %v4947 = vld [vmem:[#allocation2 + $0x1a0] sm:$0xff]
        %v4948 = vld [vmem:[#allocation2 + $0x1a8] sm:$0xff]
        %v4949 = vld [vmem:[#allocation2 + $0x1b0] sm:$0xff]
        %v4950 = vld [vmem:[#allocation2 + $0x1b8] sm:$0xff]
        %v4951 = vld [vmem:[#allocation2 + $0x1c0] sm:$0xff]
        %v4952 = vld [vmem:[#allocation2 + $0x1c8] sm:$0xff]
        %v4953 = vld [vmem:[#allocation2 + $0x1d0] sm:$0xff]
        %v4954 = vld [vmem:[#allocation2 + $0x1d8] sm:$0xff]
        %v4955 = vld [vmem:[#allocation2 + $0x1e0] sm:$0xff]
        %v4956 = vld [vmem:[#allocation2 + $0x1e8] sm:$0xff]
        %v4957 = vld [vmem:[#allocation2 + $0x1f0] sm:$0xff]
        %v4958 = vld [vmem:[#allocation2 + $0x1f8] sm:$0xff]
        %v4959 = vld [vmem:[#allocation2 + $0x200] sm:$0xff]
        %v4960 = vld [vmem:[#allocation2 + $0x208] sm:$0xff]
        %v4961 = vld [vmem:[#allocation2 + $0x210] sm:$0xff]
        %v4962 = vld [vmem:[#allocation2 + $0x218] sm:$0xff]
        %v4963 = vld [vmem:[#allocation2 + $0x220] sm:$0xff]
        %v4964 = vld [vmem:[#allocation2 + $0x228] sm:$0xff]
        %v4965 = vld [vmem:[#allocation2 + $0x230] sm:$0xff]
        %v4966 = vld [vmem:[#allocation2 + $0x238] sm:$0xff]
        %v4999 = vrot.slane %v4896, 1
        %v5000 = vrot.slane %v4897, 1
        %v5001 = vsel %vm439, %v4999, %v5000
        %v5002 = vrot.slane %v4900, 1
        %v5003 = vrot.slane %v4901, 1
        %v5004 = vsel %vm439, %v5002, %v5003
        %v5005 = vrot.slane %v4904, 1
        %v5006 = vrot.slane %v4905, 1
        %v5007 = vsel %vm439, %v5005, %v5006
        %v5008 = vrot.slane %v4908, 1
        %v5009 = vrot.slane %v4909, 1
        %v5010 = vsel %vm439, %v5008, %v5009
        %v5011 = vrot.slane %v4912, 1
        %v5012 = vrot.slane %v4913, 1
        %v5013 = vsel %vm439, %v5011, %v5012
        %v5014 = vrot.slane %v4916, 1
        %v5015 = vrot.slane %v4917, 1
        %v5016 = vsel %vm439, %v5014, %v5015
        %v5017 = vrot.slane %v4920, 1
        %v5018 = vrot.slane %v4921, 1
        %v5019 = vsel %vm439, %v5017, %v5018
        %v5020 = vrot.slane %v4924, 1
        %v5021 = vrot.slane %v4925, 1
        %v5022 = vsel %vm439, %v5020, %v5021
        %v5023 = vrot.slane %v4928, 1
        %v5024 = vrot.slane %v4929, 1
        %v5025 = vsel %vm439, %v5023, %v5024
        %v5026 = vrot.slane %v4932, 1
        %v5027 = vrot.slane %v4933, 1
        %v5028 = vsel %vm439, %v5026, %v5027
        %v5029 = vrot.slane %v4936, 1
        %v5030 = vrot.slane %v4937, 1
        %v5031 = vsel %vm439, %v5029, %v5030
        %v5032 = vrot.slane %v4940, 1
        %v5033 = vrot.slane %v4941, 1
        %v5034 = vsel %vm439, %v5032, %v5033
        %v5035 = vrot.slane %v4944, 1
        %v5036 = vrot.slane %v4945, 1
        %v5037 = vsel %vm439, %v5035, %v5036
        %v5038 = vrot.slane %v4948, 1
        %v5039 = vrot.slane %v4949, 1
        %v5040 = vsel %vm439, %v5038, %v5039
        %v5041 = vrot.slane %v4952, 1
        %v5042 = vrot.slane %v4953, 1
        %v5043 = vsel %vm439, %v5041, %v5042
        %v5044 = vrot.slane %v4956, 1
        %v5045 = vrot.slane %v4957, 1
        %v5046 = vsel %vm439, %v5044, %v5045
        %5047 = vrot.lane.b32.xlu0 %v4999, 8
        %v5048 = vpop.permute.xlu0 %5047
        %5049 = vrot.lane.b32.xlu0 %v5001, 8
        %v5050 = vpop.permute.xlu0 %5049
        %5051 = vrot.lane.b32.xlu0 %v5000, 8
        %v5052 = vpop.permute.xlu0 %5051
        %5053 = vrot.lane.b32.xlu0 %v5002, 8
        %v5054 = vpop.permute.xlu0 %5053
        %5055 = vrot.lane.b32.xlu0 %v5004, 8
        %v5056 = vpop.permute.xlu0 %5055
        %5057 = vrot.lane.b32.xlu0 %v5003, 8
        %v5058 = vpop.permute.xlu0 %5057
        %5059 = vrot.lane.b32.xlu0 %v5005, 8
        %v5060 = vpop.permute.xlu0 %5059
        %5061 = vrot.lane.b32.xlu0 %v5007, 8
        %v5062 = vpop.permute.xlu0 %5061
        %5063 = vrot.lane.b32.xlu0 %v5006, 8
        %v5064 = vpop.permute.xlu0 %5063
        %5065 = vrot.lane.b32.xlu0 %v5008, 8
        %v5066 = vpop.permute.xlu0 %5065
        %5067 = vrot.lane.b32.xlu0 %v5010, 8
        %v5068 = vpop.permute.xlu0 %5067
        %5069 = vrot.lane.b32.xlu0 %v5009, 8
        %v5070 = vpop.permute.xlu0 %5069
        %5071 = vrot.lane.b32.xlu0 %v5011, 8
        %v5072 = vpop.permute.xlu0 %5071
        %5073 = vrot.lane.b32.xlu0 %v5013, 8
        %v5074 = vpop.permute.xlu0 %5073
        %5075 = vrot.lane.b32.xlu0 %v5012, 8
        %v5076 = vpop.permute.xlu0 %5075
        %5077 = vrot.lane.b32.xlu0 %v5014, 8
        %v5078 = vpop.permute.xlu0 %5077
        %5079 = vrot.lane.b32.xlu0 %v5016, 8
        %v5080 = vpop.permute.xlu0 %5079
        %5081 = vrot.lane.b32.xlu0 %v5015, 8
        %v5082 = vpop.permute.xlu0 %5081
        %5083 = vrot.lane.b32.xlu0 %v5017, 8
        %v5084 = vpop.permute.xlu0 %5083
        %5085 = vrot.lane.b32.xlu0 %v5019, 8
        %v5086 = vpop.permute.xlu0 %5085
        %5087 = vrot.lane.b32.xlu0 %v5018, 8
        %v5088 = vpop.permute.xlu0 %5087
        %5089 = vrot.lane.b32.xlu0 %v5020, 8
        %v5090 = vpop.permute.xlu0 %5089
        %5091 = vrot.lane.b32.xlu0 %v5022, 8
        %v5092 = vpop.permute.xlu0 %5091
        %5093 = vrot.lane.b32.xlu0 %v5021, 8
        %v5094 = vpop.permute.xlu0 %5093
        %5095 = vrot.lane.b32.xlu0 %v5023, 8
        %v5096 = vpop.permute.xlu0 %5095
        %5097 = vrot.lane.b32.xlu0 %v5025, 8
        %v5098 = vpop.permute.xlu0 %5097
        %5099 = vrot.lane.b32.xlu0 %v5024, 8
        %v5100 = vpop.permute.xlu0 %5099
        %5101 = vrot.lane.b32.xlu0 %v5026, 8
        %v5102 = vpop.permute.xlu0 %5101
        %5103 = vrot.lane.b32.xlu0 %v5028, 8
        %v5104 = vpop.permute.xlu0 %5103
        %5105 = vrot.lane.b32.xlu0 %v5027, 8
        %v5106 = vpop.permute.xlu0 %5105
        %5107 = vrot.lane.b32.xlu0 %v5029, 8
        %v5108 = vpop.permute.xlu0 %5107
        %5109 = vrot.lane.b32.xlu0 %v5031, 8
        %v5110 = vpop.permute.xlu0 %5109
        %5111 = vrot.lane.b32.xlu0 %v5030, 8
        %v5112 = vpop.permute.xlu0 %5111
        %5113 = vrot.lane.b32.xlu0 %v5032, 8
        %v5114 = vpop.permute.xlu0 %5113
        %5115 = vrot.lane.b32.xlu0 %v5034, 8
        %v5116 = vpop.permute.xlu0 %5115
        %5117 = vrot.lane.b32.xlu0 %v5033, 8
        %v5118 = vpop.permute.xlu0 %5117
        %5119 = vrot.lane.b32.xlu0 %v5035, 8
        %v5120 = vpop.permute.xlu0 %5119
        %5121 = vrot.lane.b32.xlu0 %v5037, 8
        %v5122 = vpop.permute.xlu0 %5121
        %5123 = vrot.lane.b32.xlu0 %v5036, 8
        %v5124 = vpop.permute.xlu0 %5123
        %5125 = vrot.lane.b32.xlu0 %v5038, 8
        %v5126 = vpop.permute.xlu0 %5125
        %5127 = vrot.lane.b32.xlu0 %v5040, 8
        %v5128 = vpop.permute.xlu0 %5127
        %5129 = vrot.lane.b32.xlu0 %v5039, 8
        %v5130 = vpop.permute.xlu0 %5129
        %5131 = vrot.lane.b32.xlu0 %v5041, 8
        %v5132 = vpop.permute.xlu0 %5131
        %5133 = vrot.lane.b32.xlu0 %v5043, 8
        %v5134 = vpop.permute.xlu0 %5133
        %5135 = vrot.lane.b32.xlu0 %v5042, 8
        %v5136 = vpop.permute.xlu0 %5135
        %5137 = vrot.lane.b32.xlu0 %v5044, 8
        %v5138 = vpop.permute.xlu0 %5137
        %5139 = vrot.lane.b32.xlu0 %v5046, 8
        %v5140 = vpop.permute.xlu0 %5139
        %5141 = vrot.lane.b32.xlu0 %v5045, 8
        %v5142 = vpop.permute.xlu0 %5141
        %v5207 = vrot.slane %v4896, 2
        %v5208 = vrot.slane %v4897, 2
        %v5209 = vsel %vm648, %v5207, %v5208
        %v5210 = vrot.slane %v4898, 2
        %v5211 = vsel %vm648, %v5208, %v5210
        %v5212 = vrot.slane %v4900, 2
        %v5213 = vrot.slane %v4901, 2
        %v5214 = vsel %vm648, %v5212, %v5213
        %v5215 = vrot.slane %v4902, 2
        %v5216 = vsel %vm648, %v5213, %v5215
        %v5217 = vrot.slane %v4904, 2
        %v5218 = vrot.slane %v4905, 2
        %v5219 = vsel %vm648, %v5217, %v5218
        %v5220 = vrot.slane %v4906, 2
        %v5221 = vsel %vm648, %v5218, %v5220
        %v5222 = vrot.slane %v4908, 2
        %v5223 = vrot.slane %v4909, 2
        %v5224 = vsel %vm648, %v5222, %v5223
        %v5225 = vrot.slane %v4910, 2
        %v5226 = vsel %vm648, %v5223, %v5225
        %v5227 = vrot.slane %v4912, 2
        %v5228 = vrot.slane %v4913, 2
        %v5229 = vsel %vm648, %v5227, %v5228
        %v5230 = vrot.slane %v4914, 2
        %v5231 = vsel %vm648, %v5228, %v5230
        %v5232 = vrot.slane %v4916, 2
        %v5233 = vrot.slane %v4917, 2
        %v5234 = vsel %vm648, %v5232, %v5233
        %v5235 = vrot.slane %v4918, 2
        %v5236 = vsel %vm648, %v5233, %v5235
        %v5237 = vrot.slane %v4920, 2
        %v5238 = vrot.slane %v4921, 2
        %v5239 = vsel %vm648, %v5237, %v5238
        %v5240 = vrot.slane %v4922, 2
        %v5241 = vsel %vm648, %v5238, %v5240
        %v5242 = vrot.slane %v4924, 2
        %v5243 = vrot.slane %v4925, 2
        %v5244 = vsel %vm648, %v5242, %v5243
        %v5245 = vrot.slane %v4926, 2
        %v5246 = vsel %vm648, %v5243, %v5245
        %v5247 = vrot.slane %v4928, 2
        %v5248 = vrot.slane %v4929, 2
        %v5249 = vsel %vm648, %v5247, %v5248
        %v5250 = vrot.slane %v4930, 2
        %v5251 = vsel %vm648, %v5248, %v5250
        %v5252 = vrot.slane %v4932, 2
        %v5253 = vrot.slane %v4933, 2
        %v5254 = vsel %vm648, %v5252, %v5253
        %v5255 = vrot.slane %v4934, 2
        %v5256 = vsel %vm648, %v5253, %v5255
        %v5257 = vrot.slane %v4936, 2
        %v5258 = vrot.slane %v4937, 2
        %v5259 = vsel %vm648, %v5257, %v5258
        %v5260 = vrot.slane %v4938, 2
        %v5261 = vsel %vm648, %v5258, %v5260
        %v5262 = vrot.slane %v4940, 2
        %v5263 = vrot.slane %v4941, 2
        %v5264 = vsel %vm648, %v5262, %v5263
        %v5265 = vrot.slane %v4942, 2
        %v5266 = vsel %vm648, %v5263, %v5265
        %v5267 = vrot.slane %v4944, 2
        %v5268 = vrot.slane %v4945, 2
        %v5269 = vsel %vm648, %v5267, %v5268
        %v5270 = vrot.slane %v4946, 2
        %v5271 = vsel %vm648, %v5268, %v5270
        %v5272 = vrot.slane %v4948, 2
        %v5273 = vrot.slane %v4949, 2
        %v5274 = vsel %vm648, %v5272, %v5273
        %v5275 = vrot.slane %v4950, 2
        %v5276 = vsel %vm648, %v5273, %v5275
        %v5277 = vrot.slane %v4952, 2
        %v5278 = vrot.slane %v4953, 2
        %v5279 = vsel %vm648, %v5277, %v5278
        %v5280 = vrot.slane %v4954, 2
        %v5281 = vsel %vm648, %v5278, %v5280
        %v5282 = vrot.slane %v4956, 2
        %v5283 = vrot.slane %v4957, 2
        %v5284 = vsel %vm648, %v5282, %v5283
        %v5285 = vrot.slane %v4958, 2
        %v5286 = vsel %vm648, %v5283, %v5285
        %5287 = vrot.lane.b32.xlu0 %v5207, 16
        %v5288 = vpop.permute.xlu0 %5287
        %5289 = vrot.lane.b32.xlu0 %v5209, 16
        %v5290 = vpop.permute.xlu0 %5289
        %5291 = vrot.lane.b32.xlu0 %v5211, 16
        %v5292 = vpop.permute.xlu0 %5291
        %5293 = vrot.lane.b32.xlu0 %v5212, 16
        %v5294 = vpop.permute.xlu0 %5293
        %5295 = vrot.lane.b32.xlu0 %v5214, 16
        %v5296 = vpop.permute.xlu0 %5295
        %5297 = vrot.lane.b32.xlu0 %v5216, 16
        %v5298 = vpop.permute.xlu0 %5297
        %5299 = vrot.lane.b32.xlu0 %v5217, 16
        %v5300 = vpop.permute.xlu0 %5299
        %5301 = vrot.lane.b32.xlu0 %v5219, 16
        %v5302 = vpop.permute.xlu0 %5301
        %5303 = vrot.lane.b32.xlu0 %v5221, 16
        %v5304 = vpop.permute.xlu0 %5303
        %5305 = vrot.lane.b32.xlu0 %v5222, 16
        %v5306 = vpop.permute.xlu0 %5305
        %5307 = vrot.lane.b32.xlu0 %v5224, 16
        %v5308 = vpop.permute.xlu0 %5307
        %5309 = vrot.lane.b32.xlu0 %v5226, 16
        %v5310 = vpop.permute.xlu0 %5309
        %5311 = vrot.lane.b32.xlu0 %v5227, 16
        %v5312 = vpop.permute.xlu0 %5311
        %5313 = vrot.lane.b32.xlu0 %v5229, 16
        %v5314 = vpop.permute.xlu0 %5313
        %5315 = vrot.lane.b32.xlu0 %v5231, 16
        %v5316 = vpop.permute.xlu0 %5315
        %5317 = vrot.lane.b32.xlu0 %v5232, 16
        %v5318 = vpop.permute.xlu0 %5317
        %5319 = vrot.lane.b32.xlu0 %v5234, 16
        %v5320 = vpop.permute.xlu0 %5319
        %5321 = vrot.lane.b32.xlu0 %v5236, 16
        %v5322 = vpop.permute.xlu0 %5321
        %5323 = vrot.lane.b32.xlu0 %v5237, 16
        %v5324 = vpop.permute.xlu0 %5323
        %5325 = vrot.lane.b32.xlu0 %v5239, 16
        %v5326 = vpop.permute.xlu0 %5325
        %5327 = vrot.lane.b32.xlu0 %v5241, 16
        %v5328 = vpop.permute.xlu0 %5327
        %5329 = vrot.lane.b32.xlu0 %v5242, 16
        %v5330 = vpop.permute.xlu0 %5329
        %5331 = vrot.lane.b32.xlu0 %v5244, 16
        %v5332 = vpop.permute.xlu0 %5331
        %5333 = vrot.lane.b32.xlu0 %v5246, 16
        %v5334 = vpop.permute.xlu0 %5333
        %5335 = vrot.lane.b32.xlu0 %v5247, 16
        %v5336 = vpop.permute.xlu0 %5335
        %5337 = vrot.lane.b32.xlu0 %v5249, 16
        %v5338 = vpop.permute.xlu0 %5337
        %5339 = vrot.lane.b32.xlu0 %v5251, 16
        %v5340 = vpop.permute.xlu0 %5339
        %5341 = vrot.lane.b32.xlu0 %v5252, 16
        %v5342 = vpop.permute.xlu0 %5341
        %5343 = vrot.lane.b32.xlu0 %v5254, 16
        %v5344 = vpop.permute.xlu0 %5343
        %5345 = vrot.lane.b32.xlu0 %v5256, 16
        %v5346 = vpop.permute.xlu0 %5345
        %5347 = vrot.lane.b32.xlu0 %v5257, 16
        %v5348 = vpop.permute.xlu0 %5347
        %5349 = vrot.lane.b32.xlu0 %v5259, 16
        %v5350 = vpop.permute.xlu0 %5349
        %5351 = vrot.lane.b32.xlu0 %v5261, 16
        %v5352 = vpop.permute.xlu0 %5351
        %5353 = vrot.lane.b32.xlu0 %v5262, 16
        %v5354 = vpop.permute.xlu0 %5353
        %5355 = vrot.lane.b32.xlu0 %v5264, 16
        %v5356 = vpop.permute.xlu0 %5355
        %5357 = vrot.lane.b32.xlu0 %v5266, 16
        %v5358 = vpop.permute.xlu0 %5357
        %5359 = vrot.lane.b32.xlu0 %v5267, 16
        %v5360 = vpop.permute.xlu0 %5359
        %5361 = vrot.lane.b32.xlu0 %v5269, 16
        %v5362 = vpop.permute.xlu0 %5361
        %5363 = vrot.lane.b32.xlu0 %v5271, 16
        %v5364 = vpop.permute.xlu0 %5363
        %5365 = vrot.lane.b32.xlu0 %v5272, 16
        %v5366 = vpop.permute.xlu0 %5365
        %5367 = vrot.lane.b32.xlu0 %v5274, 16
        %v5368 = vpop.permute.xlu0 %5367
        %5369 = vrot.lane.b32.xlu0 %v5276, 16
        %v5370 = vpop.permute.xlu0 %5369
        %5371 = vrot.lane.b32.xlu0 %v5277, 16
        %v5372 = vpop.permute.xlu0 %5371
        %5373 = vrot.lane.b32.xlu0 %v5279, 16
        %v5374 = vpop.permute.xlu0 %5373
        %5375 = vrot.lane.b32.xlu0 %v5281, 16
        %v5376 = vpop.permute.xlu0 %5375
        %5377 = vrot.lane.b32.xlu0 %v5282, 16
        %v5378 = vpop.permute.xlu0 %5377
        %5379 = vrot.lane.b32.xlu0 %v5284, 16
        %v5380 = vpop.permute.xlu0 %5379
        %5381 = vrot.lane.b32.xlu0 %v5286, 16
        %v5382 = vpop.permute.xlu0 %5381
        %5449 = vrot.lane.b32.xlu0 %v4899, 24
        %v5450 = vpop.permute.xlu0 %5449
        %5451 = vrot.lane.b32.xlu0 %v4900, 24
        %v5452 = vpop.permute.xlu0 %5451
        %5453 = vrot.lane.b32.xlu0 %v4901, 24
        %v5454 = vpop.permute.xlu0 %5453
        %5455 = vrot.lane.b32.xlu0 %v4903, 24
        %v5456 = vpop.permute.xlu0 %5455
        %5457 = vrot.lane.b32.xlu0 %v4904, 24
        %v5458 = vpop.permute.xlu0 %5457
        %5459 = vrot.lane.b32.xlu0 %v4905, 24
        %v5460 = vpop.permute.xlu0 %5459
        %5461 = vrot.lane.b32.xlu0 %v4907, 24
        %v5462 = vpop.permute.xlu0 %5461
        %5463 = vrot.lane.b32.xlu0 %v4908, 24
        %v5464 = vpop.permute.xlu0 %5463
        %5465 = vrot.lane.b32.xlu0 %v4909, 24
        %v5466 = vpop.permute.xlu0 %5465
        %5467 = vrot.lane.b32.xlu0 %v4911, 24
        %v5468 = vpop.permute.xlu0 %5467
        %5469 = vrot.lane.b32.xlu0 %v4912, 24
        %v5470 = vpop.permute.xlu0 %5469
        %5471 = vrot.lane.b32.xlu0 %v4913, 24
        %v5472 = vpop.permute.xlu0 %5471
        %5473 = vrot.lane.b32.xlu0 %v4915, 24
        %v5474 = vpop.permute.xlu0 %5473
        %5475 = vrot.lane.b32.xlu0 %v4916, 24
        %v5476 = vpop.permute.xlu0 %5475
        %5477 = vrot.lane.b32.xlu0 %v4917, 24
        %v5478 = vpop.permute.xlu0 %5477
        %5479 = vrot.lane.b32.xlu0 %v4919, 24
        %v5480 = vpop.permute.xlu0 %5479
        %5481 = vrot.lane.b32.xlu0 %v4920, 24
        %v5482 = vpop.permute.xlu0 %5481
        %5483 = vrot.lane.b32.xlu0 %v4921, 24
        %v5484 = vpop.permute.xlu0 %5483
        %5485 = vrot.lane.b32.xlu0 %v4923, 24
        %v5486 = vpop.permute.xlu0 %5485
        %5487 = vrot.lane.b32.xlu0 %v4924, 24
        %v5488 = vpop.permute.xlu0 %5487
        %5489 = vrot.lane.b32.xlu0 %v4925, 24
        %v5490 = vpop.permute.xlu0 %5489
        %5491 = vrot.lane.b32.xlu0 %v4927, 24
        %v5492 = vpop.permute.xlu0 %5491
        %5493 = vrot.lane.b32.xlu0 %v4928, 24
        %v5494 = vpop.permute.xlu0 %5493
        %5495 = vrot.lane.b32.xlu0 %v4929, 24
        %v5496 = vpop.permute.xlu0 %5495
        %5497 = vrot.lane.b32.xlu0 %v4931, 24
        %v5498 = vpop.permute.xlu0 %5497
        %5499 = vrot.lane.b32.xlu0 %v4932, 24
        %v5500 = vpop.permute.xlu0 %5499
        %5501 = vrot.lane.b32.xlu0 %v4933, 24
        %v5502 = vpop.permute.xlu0 %5501
        %5503 = vrot.lane.b32.xlu0 %v4935, 24
        %v5504 = vpop.permute.xlu0 %5503
        %5505 = vrot.lane.b32.xlu0 %v4936, 24
        %v5506 = vpop.permute.xlu0 %5505
        %5507 = vrot.lane.b32.xlu0 %v4937, 24
        %v5508 = vpop.permute.xlu0 %5507
        %5509 = vrot.lane.b32.xlu0 %v4939, 24
        %v5510 = vpop.permute.xlu0 %5509
        %5511 = vrot.lane.b32.xlu0 %v4940, 24
        %v5512 = vpop.permute.xlu0 %5511
        %5513 = vrot.lane.b32.xlu0 %v4941, 24
        %v5514 = vpop.permute.xlu0 %5513
        %5515 = vrot.lane.b32.xlu0 %v4943, 24
        %v5516 = vpop.permute.xlu0 %5515
        %5517 = vrot.lane.b32.xlu0 %v4944, 24
        %v5518 = vpop.permute.xlu0 %5517
        %5519 = vrot.lane.b32.xlu0 %v4945, 24
        %v5520 = vpop.permute.xlu0 %5519
        %5521 = vrot.lane.b32.xlu0 %v4947, 24
        %v5522 = vpop.permute.xlu0 %5521
        %5523 = vrot.lane.b32.xlu0 %v4948, 24
        %v5524 = vpop.permute.xlu0 %5523
        %5525 = vrot.lane.b32.xlu0 %v4949, 24
        %v5526 = vpop.permute.xlu0 %5525
        %5527 = vrot.lane.b32.xlu0 %v4951, 24
        %v5528 = vpop.permute.xlu0 %5527
        %5529 = vrot.lane.b32.xlu0 %v4952, 24
        %v5530 = vpop.permute.xlu0 %5529
        %5531 = vrot.lane.b32.xlu0 %v4953, 24
        %v5532 = vpop.permute.xlu0 %5531
        %5533 = vrot.lane.b32.xlu0 %v4955, 24
        %v5534 = vpop.permute.xlu0 %5533
        %5535 = vrot.lane.b32.xlu0 %v4956, 24
        %v5536 = vpop.permute.xlu0 %5535
        %5537 = vrot.lane.b32.xlu0 %v4957, 24
        %v5538 = vpop.permute.xlu0 %5537
        %5539 = vrot.lane.b32.xlu0 %v4959, 24
        %v5540 = vpop.permute.xlu0 %5539
        %5541 = vrot.lane.b32.xlu0 %v4960, 24
        %v5542 = vpop.permute.xlu0 %5541
        %5543 = vrot.lane.b32.xlu0 %v4961, 24
        %v5544 = vpop.permute.xlu0 %5543
        %v5593 = vrot.slane %v4960, 1
        %v5594 = vrot.slane %v4961, 1
        %v5595 = vsel %vm439, %v5593, %v5594
        %5596 = vrot.lane.b32.xlu0 %v5002, 32
        %v5597 = vpop.permute.xlu0 %5596
        %5598 = vrot.lane.b32.xlu0 %v5004, 32
        %v5599 = vpop.permute.xlu0 %5598
        %5600 = vrot.lane.b32.xlu0 %v5003, 32
        %v5601 = vpop.permute.xlu0 %5600
        %5602 = vrot.lane.b32.xlu0 %v5005, 32
        %v5603 = vpop.permute.xlu0 %5602
        %5604 = vrot.lane.b32.xlu0 %v5007, 32
        %v5605 = vpop.permute.xlu0 %5604
        %5606 = vrot.lane.b32.xlu0 %v5006, 32
        %v5607 = vpop.permute.xlu0 %5606
        %5608 = vrot.lane.b32.xlu0 %v5008, 32
        %v5609 = vpop.permute.xlu0 %5608
        %5610 = vrot.lane.b32.xlu0 %v5010, 32
        %v5611 = vpop.permute.xlu0 %5610
        %5612 = vrot.lane.b32.xlu0 %v5009, 32
        %v5613 = vpop.permute.xlu0 %5612
        %5614 = vrot.lane.b32.xlu0 %v5011, 32
        %v5615 = vpop.permute.xlu0 %5614
        %5616 = vrot.lane.b32.xlu0 %v5013, 32
        %v5617 = vpop.permute.xlu0 %5616
        %5618 = vrot.lane.b32.xlu0 %v5012, 32
        %v5619 = vpop.permute.xlu0 %5618
        %5620 = vrot.lane.b32.xlu0 %v5014, 32
        %v5621 = vpop.permute.xlu0 %5620
        %5622 = vrot.lane.b32.xlu0 %v5016, 32
        %v5623 = vpop.permute.xlu0 %5622
        %5624 = vrot.lane.b32.xlu0 %v5015, 32
        %v5625 = vpop.permute.xlu0 %5624
        %5626 = vrot.lane.b32.xlu0 %v5017, 32
        %v5627 = vpop.permute.xlu0 %5626
        %5628 = vrot.lane.b32.xlu0 %v5019, 32
        %v5629 = vpop.permute.xlu0 %5628
        %5630 = vrot.lane.b32.xlu0 %v5018, 32
        %v5631 = vpop.permute.xlu0 %5630
        %5632 = vrot.lane.b32.xlu0 %v5020, 32
        %v5633 = vpop.permute.xlu0 %5632
        %5634 = vrot.lane.b32.xlu0 %v5022, 32
        %v5635 = vpop.permute.xlu0 %5634
        %5636 = vrot.lane.b32.xlu0 %v5021, 32
        %v5637 = vpop.permute.xlu0 %5636
        %5638 = vrot.lane.b32.xlu0 %v5023, 32
        %v5639 = vpop.permute.xlu0 %5638
        %5640 = vrot.lane.b32.xlu0 %v5025, 32
        %v5641 = vpop.permute.xlu0 %5640
        %5642 = vrot.lane.b32.xlu0 %v5024, 32
        %v5643 = vpop.permute.xlu0 %5642
        %5644 = vrot.lane.b32.xlu0 %v5026, 32
        %v5645 = vpop.permute.xlu0 %5644
        %5646 = vrot.lane.b32.xlu0 %v5028, 32
        %v5647 = vpop.permute.xlu0 %5646
        %5648 = vrot.lane.b32.xlu0 %v5027, 32
        %v5649 = vpop.permute.xlu0 %5648
        %5650 = vrot.lane.b32.xlu0 %v5029, 32
        %v5651 = vpop.permute.xlu0 %5650
        %5652 = vrot.lane.b32.xlu0 %v5031, 32
        %v5653 = vpop.permute.xlu0 %5652
        %5654 = vrot.lane.b32.xlu0 %v5030, 32
        %v5655 = vpop.permute.xlu0 %5654
        %5656 = vrot.lane.b32.xlu0 %v5032, 32
        %v5657 = vpop.permute.xlu0 %5656
        %5658 = vrot.lane.b32.xlu0 %v5034, 32
        %v5659 = vpop.permute.xlu0 %5658
        %5660 = vrot.lane.b32.xlu0 %v5033, 32
        %v5661 = vpop.permute.xlu0 %5660
        %5662 = vrot.lane.b32.xlu0 %v5035, 32
        %v5663 = vpop.permute.xlu0 %5662
        %5664 = vrot.lane.b32.xlu0 %v5037, 32
        %v5665 = vpop.permute.xlu0 %5664
        %5666 = vrot.lane.b32.xlu0 %v5036, 32
        %v5667 = vpop.permute.xlu0 %5666
        %5668 = vrot.lane.b32.xlu0 %v5038, 32
        %v5669 = vpop.permute.xlu0 %5668
        %5670 = vrot.lane.b32.xlu0 %v5040, 32
        %v5671 = vpop.permute.xlu0 %5670
        %5672 = vrot.lane.b32.xlu0 %v5039, 32
        %v5673 = vpop.permute.xlu0 %5672
        %5674 = vrot.lane.b32.xlu0 %v5041, 32
        %v5675 = vpop.permute.xlu0 %5674
        %5676 = vrot.lane.b32.xlu0 %v5043, 32
        %v5677 = vpop.permute.xlu0 %5676
        %5678 = vrot.lane.b32.xlu0 %v5042, 32
        %v5679 = vpop.permute.xlu0 %5678
        %5680 = vrot.lane.b32.xlu0 %v5044, 32
        %v5681 = vpop.permute.xlu0 %5680
        %5682 = vrot.lane.b32.xlu0 %v5046, 32
        %v5683 = vpop.permute.xlu0 %5682
        %5684 = vrot.lane.b32.xlu0 %v5045, 32
        %v5685 = vpop.permute.xlu0 %5684
        %5686 = vrot.lane.b32.xlu0 %v5593, 32
        %v5687 = vpop.permute.xlu0 %5686
        %5688 = vrot.lane.b32.xlu0 %v5595, 32
        %v5689 = vpop.permute.xlu0 %5688
        %5690 = vrot.lane.b32.xlu0 %v5594, 32
        %v5691 = vpop.permute.xlu0 %5690
        %v5741 = vrot.slane %v4960, 2
        %v5742 = vrot.slane %v4961, 2
        %v5743 = vsel %vm648, %v5741, %v5742
        %v5744 = vrot.slane %v4962, 2
        %v5745 = vsel %vm648, %v5742, %v5744
        %5746 = vrot.lane.b32.xlu0 %v5212, 40
        %v5747 = vpop.permute.xlu0 %5746
        %5748 = vrot.lane.b32.xlu0 %v5214, 40
        %v5749 = vpop.permute.xlu0 %5748
        %5750 = vrot.lane.b32.xlu0 %v5216, 40
        %v5751 = vpop.permute.xlu0 %5750
        %5752 = vrot.lane.b32.xlu0 %v5217, 40
        %v5753 = vpop.permute.xlu0 %5752
        %5754 = vrot.lane.b32.xlu0 %v5219, 40
        %v5755 = vpop.permute.xlu0 %5754
        %5756 = vrot.lane.b32.xlu0 %v5221, 40
        %v5757 = vpop.permute.xlu0 %5756
        %5758 = vrot.lane.b32.xlu0 %v5222, 40
        %v5759 = vpop.permute.xlu0 %5758
        %5760 = vrot.lane.b32.xlu0 %v5224, 40
        %v5761 = vpop.permute.xlu0 %5760
        %5762 = vrot.lane.b32.xlu0 %v5226, 40
        %v5763 = vpop.permute.xlu0 %5762
        %5764 = vrot.lane.b32.xlu0 %v5227, 40
        %v5765 = vpop.permute.xlu0 %5764
        %5766 = vrot.lane.b32.xlu0 %v5229, 40
        %v5767 = vpop.permute.xlu0 %5766
        %5768 = vrot.lane.b32.xlu0 %v5231, 40
        %v5769 = vpop.permute.xlu0 %5768
        %5770 = vrot.lane.b32.xlu0 %v5232, 40
        %v5771 = vpop.permute.xlu0 %5770
        %5772 = vrot.lane.b32.xlu0 %v5234, 40
        %v5773 = vpop.permute.xlu0 %5772
        %5774 = vrot.lane.b32.xlu0 %v5236, 40
        %v5775 = vpop.permute.xlu0 %5774
        %5776 = vrot.lane.b32.xlu0 %v5237, 40
        %v5777 = vpop.permute.xlu0 %5776
        %5778 = vrot.lane.b32.xlu0 %v5239, 40
        %v5779 = vpop.permute.xlu0 %5778
        %5780 = vrot.lane.b32.xlu0 %v5241, 40
        %v5781 = vpop.permute.xlu0 %5780
        %5782 = vrot.lane.b32.xlu0 %v5242, 40
        %v5783 = vpop.permute.xlu0 %5782
        %5784 = vrot.lane.b32.xlu0 %v5244, 40
        %v5785 = vpop.permute.xlu0 %5784
        %5786 = vrot.lane.b32.xlu0 %v5246, 40
        %v5787 = vpop.permute.xlu0 %5786
        %5788 = vrot.lane.b32.xlu0 %v5247, 40
        %v5789 = vpop.permute.xlu0 %5788
        %5790 = vrot.lane.b32.xlu0 %v5249, 40
        %v5791 = vpop.permute.xlu0 %5790
        %5792 = vrot.lane.b32.xlu0 %v5251, 40
        %v5793 = vpop.permute.xlu0 %5792
        %5794 = vrot.lane.b32.xlu0 %v5252, 40
        %v5795 = vpop.permute.xlu0 %5794
        %5796 = vrot.lane.b32.xlu0 %v5254, 40
        %v5797 = vpop.permute.xlu0 %5796
        %5798 = vrot.lane.b32.xlu0 %v5256, 40
        %v5799 = vpop.permute.xlu0 %5798
        %5800 = vrot.lane.b32.xlu0 %v5257, 40
        %v5801 = vpop.permute.xlu0 %5800
        %5802 = vrot.lane.b32.xlu0 %v5259, 40
        %v5803 = vpop.permute.xlu0 %5802
        %5804 = vrot.lane.b32.xlu0 %v5261, 40
        %v5805 = vpop.permute.xlu0 %5804
        %5806 = vrot.lane.b32.xlu0 %v5262, 40
        %v5807 = vpop.permute.xlu0 %5806
        %5808 = vrot.lane.b32.xlu0 %v5264, 40
        %v5809 = vpop.permute.xlu0 %5808
        %5810 = vrot.lane.b32.xlu0 %v5266, 40
        %v5811 = vpop.permute.xlu0 %5810
        %5812 = vrot.lane.b32.xlu0 %v5267, 40
        %v5813 = vpop.permute.xlu0 %5812
        %5814 = vrot.lane.b32.xlu0 %v5269, 40
        %v5815 = vpop.permute.xlu0 %5814
        %5816 = vrot.lane.b32.xlu0 %v5271, 40
        %v5817 = vpop.permute.xlu0 %5816
        %5818 = vrot.lane.b32.xlu0 %v5272, 40
        %v5819 = vpop.permute.xlu0 %5818
        %5820 = vrot.lane.b32.xlu0 %v5274, 40
        %v5821 = vpop.permute.xlu0 %5820
        %5822 = vrot.lane.b32.xlu0 %v5276, 40
        %v5823 = vpop.permute.xlu0 %5822
        %5824 = vrot.lane.b32.xlu0 %v5277, 40
        %v5825 = vpop.permute.xlu0 %5824
        %5826 = vrot.lane.b32.xlu0 %v5279, 40
        %v5827 = vpop.permute.xlu0 %5826
        %5828 = vrot.lane.b32.xlu0 %v5281, 40
        %v5829 = vpop.permute.xlu0 %5828
        %5830 = vrot.lane.b32.xlu0 %v5282, 40
        %v5831 = vpop.permute.xlu0 %5830
        %5832 = vrot.lane.b32.xlu0 %v5284, 40
        %v5833 = vpop.permute.xlu0 %5832
        %5834 = vrot.lane.b32.xlu0 %v5286, 40
        %v5835 = vpop.permute.xlu0 %5834
        %5836 = vrot.lane.b32.xlu0 %v5741, 40
        %v5837 = vpop.permute.xlu0 %5836
        %5838 = vrot.lane.b32.xlu0 %v5743, 40
        %v5839 = vpop.permute.xlu0 %5838
        %5840 = vrot.lane.b32.xlu0 %v5745, 40
        %v5841 = vpop.permute.xlu0 %5840
        %5893 = vrot.lane.b32.xlu0 %v4903, 48
        %v5894 = vpop.permute.xlu0 %5893
        %5895 = vrot.lane.b32.xlu0 %v4904, 48
        %v5896 = vpop.permute.xlu0 %5895
        %5897 = vrot.lane.b32.xlu0 %v4905, 48
        %v5898 = vpop.permute.xlu0 %5897
        %5899 = vrot.lane.b32.xlu0 %v4907, 48
        %v5900 = vpop.permute.xlu0 %5899
        %5901 = vrot.lane.b32.xlu0 %v4908, 48
        %v5902 = vpop.permute.xlu0 %5901
        %5903 = vrot.lane.b32.xlu0 %v4909, 48
        %v5904 = vpop.permute.xlu0 %5903
        %5905 = vrot.lane.b32.xlu0 %v4911, 48
        %v5906 = vpop.permute.xlu0 %5905
        %5907 = vrot.lane.b32.xlu0 %v4912, 48
        %v5908 = vpop.permute.xlu0 %5907
        %5909 = vrot.lane.b32.xlu0 %v4913, 48
        %v5910 = vpop.permute.xlu0 %5909
        %5911 = vrot.lane.b32.xlu0 %v4915, 48
        %v5912 = vpop.permute.xlu0 %5911
        %5913 = vrot.lane.b32.xlu0 %v4916, 48
        %v5914 = vpop.permute.xlu0 %5913
        %5915 = vrot.lane.b32.xlu0 %v4917, 48
        %v5916 = vpop.permute.xlu0 %5915
        %5917 = vrot.lane.b32.xlu0 %v4919, 48
        %v5918 = vpop.permute.xlu0 %5917
        %5919 = vrot.lane.b32.xlu0 %v4920, 48
        %v5920 = vpop.permute.xlu0 %5919
        %5921 = vrot.lane.b32.xlu0 %v4921, 48
        %v5922 = vpop.permute.xlu0 %5921
        %5923 = vrot.lane.b32.xlu0 %v4923, 48
        %v5924 = vpop.permute.xlu0 %5923
        %5925 = vrot.lane.b32.xlu0 %v4924, 48
        %v5926 = vpop.permute.xlu0 %5925
        %5927 = vrot.lane.b32.xlu0 %v4925, 48
        %v5928 = vpop.permute.xlu0 %5927
        %5929 = vrot.lane.b32.xlu0 %v4927, 48
        %v5930 = vpop.permute.xlu0 %5929
        %5931 = vrot.lane.b32.xlu0 %v4928, 48
        %v5932 = vpop.permute.xlu0 %5931
        %5933 = vrot.lane.b32.xlu0 %v4929, 48
        %v5934 = vpop.permute.xlu0 %5933
        %5935 = vrot.lane.b32.xlu0 %v4931, 48
        %v5936 = vpop.permute.xlu0 %5935
        %5937 = vrot.lane.b32.xlu0 %v4932, 48
        %v5938 = vpop.permute.xlu0 %5937
        %5939 = vrot.lane.b32.xlu0 %v4933, 48
        %v5940 = vpop.permute.xlu0 %5939
        %5941 = vrot.lane.b32.xlu0 %v4935, 48
        %v5942 = vpop.permute.xlu0 %5941
        %5943 = vrot.lane.b32.xlu0 %v4936, 48
        %v5944 = vpop.permute.xlu0 %5943
        %5945 = vrot.lane.b32.xlu0 %v4937, 48
        %v5946 = vpop.permute.xlu0 %5945
        %5947 = vrot.lane.b32.xlu0 %v4939, 48
        %v5948 = vpop.permute.xlu0 %5947
        %5949 = vrot.lane.b32.xlu0 %v4940, 48
        %v5950 = vpop.permute.xlu0 %5949
        %5951 = vrot.lane.b32.xlu0 %v4941, 48
        %v5952 = vpop.permute.xlu0 %5951
        %5953 = vrot.lane.b32.xlu0 %v4943, 48
        %v5954 = vpop.permute.xlu0 %5953
        %5955 = vrot.lane.b32.xlu0 %v4944, 48
        %v5956 = vpop.permute.xlu0 %5955
        %5957 = vrot.lane.b32.xlu0 %v4945, 48
        %v5958 = vpop.permute.xlu0 %5957
        %5959 = vrot.lane.b32.xlu0 %v4947, 48
        %v5960 = vpop.permute.xlu0 %5959
        %5961 = vrot.lane.b32.xlu0 %v4948, 48
        %v5962 = vpop.permute.xlu0 %5961
        %5963 = vrot.lane.b32.xlu0 %v4949, 48
        %v5964 = vpop.permute.xlu0 %5963
        %5965 = vrot.lane.b32.xlu0 %v4951, 48
        %v5966 = vpop.permute.xlu0 %5965
        %5967 = vrot.lane.b32.xlu0 %v4952, 48
        %v5968 = vpop.permute.xlu0 %5967
        %5969 = vrot.lane.b32.xlu0 %v4953, 48
        %v5970 = vpop.permute.xlu0 %5969
        %5971 = vrot.lane.b32.xlu0 %v4955, 48
        %v5972 = vpop.permute.xlu0 %5971
        %5973 = vrot.lane.b32.xlu0 %v4956, 48
        %v5974 = vpop.permute.xlu0 %5973
        %5975 = vrot.lane.b32.xlu0 %v4957, 48
        %v5976 = vpop.permute.xlu0 %5975
        %5977 = vrot.lane.b32.xlu0 %v4959, 48
        %v5978 = vpop.permute.xlu0 %5977
        %5979 = vrot.lane.b32.xlu0 %v4960, 48
        %v5980 = vpop.permute.xlu0 %5979
        %5981 = vrot.lane.b32.xlu0 %v4961, 48
        %v5982 = vpop.permute.xlu0 %5981
        %5983 = vrot.lane.b32.xlu0 %v4963, 48
        %v5984 = vpop.permute.xlu0 %5983
        %5985 = vrot.lane.b32.xlu0 %v4964, 48
        %v5986 = vpop.permute.xlu0 %5985
        %5987 = vrot.lane.b32.xlu0 %v4965, 48
        %v5988 = vpop.permute.xlu0 %5987
        %v6037 = vrot.slane %v4964, 1
        %v6038 = vrot.slane %v4965, 1
        %v6039 = vsel %vm439, %v6037, %v6038
        %6040 = vrot.lane.b32.xlu0 %v5005, 56
        %v6041 = vpop.permute.xlu0 %6040
        %6042 = vrot.lane.b32.xlu0 %v5007, 56
        %v6043 = vpop.permute.xlu0 %6042
        %6044 = vrot.lane.b32.xlu0 %v5006, 56
        %v6045 = vpop.permute.xlu0 %6044
        %6046 = vrot.lane.b32.xlu0 %v5008, 56
        %v6047 = vpop.permute.xlu0 %6046
        %6048 = vrot.lane.b32.xlu0 %v5010, 56
        %v6049 = vpop.permute.xlu0 %6048
        %6050 = vrot.lane.b32.xlu0 %v5009, 56
        %v6051 = vpop.permute.xlu0 %6050
        %6052 = vrot.lane.b32.xlu0 %v5011, 56
        %v6053 = vpop.permute.xlu0 %6052
        %6054 = vrot.lane.b32.xlu0 %v5013, 56
        %v6055 = vpop.permute.xlu0 %6054
        %6056 = vrot.lane.b32.xlu0 %v5012, 56
        %v6057 = vpop.permute.xlu0 %6056
        %6058 = vrot.lane.b32.xlu0 %v5014, 56
        %v6059 = vpop.permute.xlu0 %6058
        %6060 = vrot.lane.b32.xlu0 %v5016, 56
        %v6061 = vpop.permute.xlu0 %6060
        %6062 = vrot.lane.b32.xlu0 %v5015, 56
        %v6063 = vpop.permute.xlu0 %6062
        %6064 = vrot.lane.b32.xlu0 %v5017, 56
        %v6065 = vpop.permute.xlu0 %6064
        %6066 = vrot.lane.b32.xlu0 %v5019, 56
        %v6067 = vpop.permute.xlu0 %6066
        %6068 = vrot.lane.b32.xlu0 %v5018, 56
        %v6069 = vpop.permute.xlu0 %6068
        %6070 = vrot.lane.b32.xlu0 %v5020, 56
        %v6071 = vpop.permute.xlu0 %6070
        %6072 = vrot.lane.b32.xlu0 %v5022, 56
        %v6073 = vpop.permute.xlu0 %6072
        %6074 = vrot.lane.b32.xlu0 %v5021, 56
        %v6075 = vpop.permute.xlu0 %6074
        %6076 = vrot.lane.b32.xlu0 %v5023, 56
        %v6077 = vpop.permute.xlu0 %6076
        %6078 = vrot.lane.b32.xlu0 %v5025, 56
        %v6079 = vpop.permute.xlu0 %6078
        %6080 = vrot.lane.b32.xlu0 %v5024, 56
        %v6081 = vpop.permute.xlu0 %6080
        %6082 = vrot.lane.b32.xlu0 %v5026, 56
        %v6083 = vpop.permute.xlu0 %6082
        %6084 = vrot.lane.b32.xlu0 %v5028, 56
        %v6085 = vpop.permute.xlu0 %6084
        %6086 = vrot.lane.b32.xlu0 %v5027, 56
        %v6087 = vpop.permute.xlu0 %6086
        %6088 = vrot.lane.b32.xlu0 %v5029, 56
        %v6089 = vpop.permute.xlu0 %6088
        %6090 = vrot.lane.b32.xlu0 %v5031, 56
        %v6091 = vpop.permute.xlu0 %6090
        %6092 = vrot.lane.b32.xlu0 %v5030, 56
        %v6093 = vpop.permute.xlu0 %6092
        %6094 = vrot.lane.b32.xlu0 %v5032, 56
        %v6095 = vpop.permute.xlu0 %6094
        %6096 = vrot.lane.b32.xlu0 %v5034, 56
        %v6097 = vpop.permute.xlu0 %6096
        %6098 = vrot.lane.b32.xlu0 %v5033, 56
        %v6099 = vpop.permute.xlu0 %6098
        %6100 = vrot.lane.b32.xlu0 %v5035, 56
        %v6101 = vpop.permute.xlu0 %6100
        %6102 = vrot.lane.b32.xlu0 %v5037, 56
        %v6103 = vpop.permute.xlu0 %6102
        %6104 = vrot.lane.b32.xlu0 %v5036, 56
        %v6105 = vpop.permute.xlu0 %6104
        %6106 = vrot.lane.b32.xlu0 %v5038, 56
        %v6107 = vpop.permute.xlu0 %6106
        %6108 = vrot.lane.b32.xlu0 %v5040, 56
        %v6109 = vpop.permute.xlu0 %6108
        %6110 = vrot.lane.b32.xlu0 %v5039, 56
        %v6111 = vpop.permute.xlu0 %6110
        %6112 = vrot.lane.b32.xlu0 %v5041, 56
        %v6113 = vpop.permute.xlu0 %6112
        %6114 = vrot.lane.b32.xlu0 %v5043, 56
        %v6115 = vpop.permute.xlu0 %6114
        %6116 = vrot.lane.b32.xlu0 %v5042, 56
        %v6117 = vpop.permute.xlu0 %6116
        %6118 = vrot.lane.b32.xlu0 %v5044, 56
        %v6119 = vpop.permute.xlu0 %6118
        %6120 = vrot.lane.b32.xlu0 %v5046, 56
        %v6121 = vpop.permute.xlu0 %6120
        %6122 = vrot.lane.b32.xlu0 %v5045, 56
        %v6123 = vpop.permute.xlu0 %6122
        %6124 = vrot.lane.b32.xlu0 %v5593, 56
        %v6125 = vpop.permute.xlu0 %6124
        %6126 = vrot.lane.b32.xlu0 %v5595, 56
        %v6127 = vpop.permute.xlu0 %6126
        %6128 = vrot.lane.b32.xlu0 %v5594, 56
        %v6129 = vpop.permute.xlu0 %6128
        %6130 = vrot.lane.b32.xlu0 %v6037, 56
        %v6131 = vpop.permute.xlu0 %6130
        %6132 = vrot.lane.b32.xlu0 %v6039, 56
        %v6133 = vpop.permute.xlu0 %6132
        %6134 = vrot.lane.b32.xlu0 %v6038, 56
        %v6135 = vpop.permute.xlu0 %6134
        %v6185 = vrot.slane %v4964, 2
        %v6186 = vrot.slane %v4965, 2
        %v6187 = vsel %vm648, %v6185, %v6186
        %v6188 = vrot.slane %v4966, 2
        %v6189 = vsel %vm648, %v6186, %v6188
        %6190 = vrot.lane.b32.xlu0 %v5217, 64
        %v6191 = vpop.permute.xlu0 %6190
        %6192 = vrot.lane.b32.xlu0 %v5219, 64
        %v6193 = vpop.permute.xlu0 %6192
        %6194 = vrot.lane.b32.xlu0 %v5221, 64
        %v6195 = vpop.permute.xlu0 %6194
        %6196 = vrot.lane.b32.xlu0 %v5222, 64
        %v6197 = vpop.permute.xlu0 %6196
        %6198 = vrot.lane.b32.xlu0 %v5224, 64
        %v6199 = vpop.permute.xlu0 %6198
        %6200 = vrot.lane.b32.xlu0 %v5226, 64
        %v6201 = vpop.permute.xlu0 %6200
        %6202 = vrot.lane.b32.xlu0 %v5227, 64
        %v6203 = vpop.permute.xlu0 %6202
        %6204 = vrot.lane.b32.xlu0 %v5229, 64
        %v6205 = vpop.permute.xlu0 %6204
        %6206 = vrot.lane.b32.xlu0 %v5231, 64
        %v6207 = vpop.permute.xlu0 %6206
        %6208 = vrot.lane.b32.xlu0 %v5232, 64
        %v6209 = vpop.permute.xlu0 %6208
        %6210 = vrot.lane.b32.xlu0 %v5234, 64
        %v6211 = vpop.permute.xlu0 %6210
        %6212 = vrot.lane.b32.xlu0 %v5236, 64
        %v6213 = vpop.permute.xlu0 %6212
        %6214 = vrot.lane.b32.xlu0 %v5237, 64
        %v6215 = vpop.permute.xlu0 %6214
        %6216 = vrot.lane.b32.xlu0 %v5239, 64
        %v6217 = vpop.permute.xlu0 %6216
        %6218 = vrot.lane.b32.xlu0 %v5241, 64
        %v6219 = vpop.permute.xlu0 %6218
        %6220 = vrot.lane.b32.xlu0 %v5242, 64
        %v6221 = vpop.permute.xlu0 %6220
        %6222 = vrot.lane.b32.xlu0 %v5244, 64
        %v6223 = vpop.permute.xlu0 %6222
        %6224 = vrot.lane.b32.xlu0 %v5246, 64
        %v6225 = vpop.permute.xlu0 %6224
        %6226 = vrot.lane.b32.xlu0 %v5247, 64
        %v6227 = vpop.permute.xlu0 %6226
        %6228 = vrot.lane.b32.xlu0 %v5249, 64
        %v6229 = vpop.permute.xlu0 %6228
        %6230 = vrot.lane.b32.xlu0 %v5251, 64
        %v6231 = vpop.permute.xlu0 %6230
        %6232 = vrot.lane.b32.xlu0 %v5252, 64
        %v6233 = vpop.permute.xlu0 %6232
        %6234 = vrot.lane.b32.xlu0 %v5254, 64
        %v6235 = vpop.permute.xlu0 %6234
        %6236 = vrot.lane.b32.xlu0 %v5256, 64
        %v6237 = vpop.permute.xlu0 %6236
        %6238 = vrot.lane.b32.xlu0 %v5257, 64
        %v6239 = vpop.permute.xlu0 %6238
        %6240 = vrot.lane.b32.xlu0 %v5259, 64
        %v6241 = vpop.permute.xlu0 %6240
        %6242 = vrot.lane.b32.xlu0 %v5261, 64
        %v6243 = vpop.permute.xlu0 %6242
        %6244 = vrot.lane.b32.xlu0 %v5262, 64
        %v6245 = vpop.permute.xlu0 %6244
        %6246 = vrot.lane.b32.xlu0 %v5264, 64
        %v6247 = vpop.permute.xlu0 %6246
        %6248 = vrot.lane.b32.xlu0 %v5266, 64
        %v6249 = vpop.permute.xlu0 %6248
        %6250 = vrot.lane.b32.xlu0 %v5267, 64
        %v6251 = vpop.permute.xlu0 %6250
        %6252 = vrot.lane.b32.xlu0 %v5269, 64
        %v6253 = vpop.permute.xlu0 %6252
        %6254 = vrot.lane.b32.xlu0 %v5271, 64
        %v6255 = vpop.permute.xlu0 %6254
        %6256 = vrot.lane.b32.xlu0 %v5272, 64
        %v6257 = vpop.permute.xlu0 %6256
        %6258 = vrot.lane.b32.xlu0 %v5274, 64
        %v6259 = vpop.permute.xlu0 %6258
        %6260 = vrot.lane.b32.xlu0 %v5276, 64
        %v6261 = vpop.permute.xlu0 %6260
        %6262 = vrot.lane.b32.xlu0 %v5277, 64
        %v6263 = vpop.permute.xlu0 %6262
        %6264 = vrot.lane.b32.xlu0 %v5279, 64
        %v6265 = vpop.permute.xlu0 %6264
        %6266 = vrot.lane.b32.xlu0 %v5281, 64
        %v6267 = vpop.permute.xlu0 %6266
        %6268 = vrot.lane.b32.xlu0 %v5282, 64
        %v6269 = vpop.permute.xlu0 %6268
        %6270 = vrot.lane.b32.xlu0 %v5284, 64
        %v6271 = vpop.permute.xlu0 %6270
        %6272 = vrot.lane.b32.xlu0 %v5286, 64
        %v6273 = vpop.permute.xlu0 %6272
        %6274 = vrot.lane.b32.xlu0 %v5741, 64
        %v6275 = vpop.permute.xlu0 %6274
        %6276 = vrot.lane.b32.xlu0 %v5743, 64
        %v6277 = vpop.permute.xlu0 %6276
        %6278 = vrot.lane.b32.xlu0 %v5745, 64
        %v6279 = vpop.permute.xlu0 %6278
        %6280 = vrot.lane.b32.xlu0 %v6185, 64
        %v6281 = vpop.permute.xlu0 %6280
        %6282 = vrot.lane.b32.xlu0 %v6187, 64
        %v6283 = vpop.permute.xlu0 %6282
        %6284 = vrot.lane.b32.xlu0 %v6189, 64
        %v6285 = vpop.permute.xlu0 %6284
        %v6334 = vsel %vm196, %v4895, %v5048
        %v6335 = vsel %vm196, %v4896, %v5050
        %v6336 = vsel %vm196, %v4897, %v5052
        %v6337 = vsel %vm196, %v4899, %v5054
        %v6338 = vsel %vm196, %v4900, %v5056
        %v6339 = vsel %vm196, %v4901, %v5058
        %v6340 = vsel %vm196, %v4903, %v5060
        %v6341 = vsel %vm196, %v4904, %v5062
        %v6342 = vsel %vm196, %v4905, %v5064
        %v6343 = vsel %vm196, %v4907, %v5066
        %v6344 = vsel %vm196, %v4908, %v5068
        %v6345 = vsel %vm196, %v4909, %v5070
        %v6346 = vsel %vm196, %v4911, %v5072
        %v6347 = vsel %vm196, %v4912, %v5074
        %v6348 = vsel %vm196, %v4913, %v5076
        %v6349 = vsel %vm196, %v4915, %v5078
        %v6350 = vsel %vm196, %v4916, %v5080
        %v6351 = vsel %vm196, %v4917, %v5082
        %v6352 = vsel %vm196, %v4919, %v5084
        %v6353 = vsel %vm196, %v4920, %v5086
        %v6354 = vsel %vm196, %v4921, %v5088
        %v6355 = vsel %vm196, %v4923, %v5090
        %v6356 = vsel %vm196, %v4924, %v5092
        %v6357 = vsel %vm196, %v4925, %v5094
        %v6358 = vsel %vm196, %v4927, %v5096
        %v6359 = vsel %vm196, %v4928, %v5098
        %v6360 = vsel %vm196, %v4929, %v5100
        %v6361 = vsel %vm196, %v4931, %v5102
        %v6362 = vsel %vm196, %v4932, %v5104
        %v6363 = vsel %vm196, %v4933, %v5106
        %v6364 = vsel %vm196, %v4935, %v5108
        %v6365 = vsel %vm196, %v4936, %v5110
        %v6366 = vsel %vm196, %v4937, %v5112
        %v6367 = vsel %vm196, %v4939, %v5114
        %v6368 = vsel %vm196, %v4940, %v5116
        %v6369 = vsel %vm196, %v4941, %v5118
        %v6370 = vsel %vm196, %v4943, %v5120
        %v6371 = vsel %vm196, %v4944, %v5122
        %v6372 = vsel %vm196, %v4945, %v5124
        %v6373 = vsel %vm196, %v4947, %v5126
        %v6374 = vsel %vm196, %v4948, %v5128
        %v6375 = vsel %vm196, %v4949, %v5130
        %v6376 = vsel %vm196, %v4951, %v5132
        %v6377 = vsel %vm196, %v4952, %v5134
        %v6378 = vsel %vm196, %v4953, %v5136
        %v6379 = vsel %vm196, %v4955, %v5138
        %v6380 = vsel %vm196, %v4956, %v5140
        %v6381 = vsel %vm196, %v4957, %v5142
        %v6382 = vsel %vm1824, %v6334, %v5288
        %v6383 = vsel %vm1824, %v6335, %v5290
        %v6384 = vsel %vm1824, %v6336, %v5292
        %v6385 = vsel %vm1824, %v6337, %v5294
        %v6386 = vsel %vm1824, %v6338, %v5296
        %v6387 = vsel %vm1824, %v6339, %v5298
        %v6388 = vsel %vm1824, %v6340, %v5300
        %v6389 = vsel %vm1824, %v6341, %v5302
        %v6390 = vsel %vm1824, %v6342, %v5304
        %v6391 = vsel %vm1824, %v6343, %v5306
        %v6392 = vsel %vm1824, %v6344, %v5308
        %v6393 = vsel %vm1824, %v6345, %v5310
        %v6394 = vsel %vm1824, %v6346, %v5312
        %v6395 = vsel %vm1824, %v6347, %v5314
        %v6396 = vsel %vm1824, %v6348, %v5316
        %v6397 = vsel %vm1824, %v6349, %v5318
        %v6398 = vsel %vm1824, %v6350, %v5320
        %v6399 = vsel %vm1824, %v6351, %v5322
        %v6400 = vsel %vm1824, %v6352, %v5324
        %v6401 = vsel %vm1824, %v6353, %v5326
        %v6402 = vsel %vm1824, %v6354, %v5328
        %v6403 = vsel %vm1824, %v6355, %v5330
        %v6404 = vsel %vm1824, %v6356, %v5332
        %v6405 = vsel %vm1824, %v6357, %v5334
        %v6406 = vsel %vm1824, %v6358, %v5336
        %v6407 = vsel %vm1824, %v6359, %v5338
        %v6408 = vsel %vm1824, %v6360, %v5340
        %v6409 = vsel %vm1824, %v6361, %v5342
        %v6410 = vsel %vm1824, %v6362, %v5344
        %v6411 = vsel %vm1824, %v6363, %v5346
        %v6412 = vsel %vm1824, %v6364, %v5348
        %v6413 = vsel %vm1824, %v6365, %v5350
        %v6414 = vsel %vm1824, %v6366, %v5352
        %v6415 = vsel %vm1824, %v6367, %v5354
        %v6416 = vsel %vm1824, %v6368, %v5356
        %v6417 = vsel %vm1824, %v6369, %v5358
        %v6418 = vsel %vm1824, %v6370, %v5360
        %v6419 = vsel %vm1824, %v6371, %v5362
        %v6420 = vsel %vm1824, %v6372, %v5364
        %v6421 = vsel %vm1824, %v6373, %v5366
        %v6422 = vsel %vm1824, %v6374, %v5368
        %v6423 = vsel %vm1824, %v6375, %v5370
        %v6424 = vsel %vm1824, %v6376, %v5372
        %v6425 = vsel %vm1824, %v6377, %v5374
        %v6426 = vsel %vm1824, %v6378, %v5376
        %v6427 = vsel %vm1824, %v6379, %v5378
        %v6428 = vsel %vm1824, %v6380, %v5380
        %v6429 = vsel %vm1824, %v6381, %v5382
        %v6430 = vsel %vm1873, %v6382, %v5450
        %v6431 = vsel %vm1873, %v6383, %v5452
        %v6432 = vsel %vm1873, %v6384, %v5454
        %v6433 = vsel %vm1873, %v6385, %v5456
        %v6434 = vsel %vm1873, %v6386, %v5458
        %v6435 = vsel %vm1873, %v6387, %v5460
        %v6436 = vsel %vm1873, %v6388, %v5462
        %v6437 = vsel %vm1873, %v6389, %v5464
        %v6438 = vsel %vm1873, %v6390, %v5466
        %v6439 = vsel %vm1873, %v6391, %v5468
        %v6440 = vsel %vm1873, %v6392, %v5470
        %v6441 = vsel %vm1873, %v6393, %v5472
        %v6442 = vsel %vm1873, %v6394, %v5474
        %v6443 = vsel %vm1873, %v6395, %v5476
        %v6444 = vsel %vm1873, %v6396, %v5478
        %v6445 = vsel %vm1873, %v6397, %v5480
        %v6446 = vsel %vm1873, %v6398, %v5482
        %v6447 = vsel %vm1873, %v6399, %v5484
        %v6448 = vsel %vm1873, %v6400, %v5486
        %v6449 = vsel %vm1873, %v6401, %v5488
        %v6450 = vsel %vm1873, %v6402, %v5490
        %v6451 = vsel %vm1873, %v6403, %v5492
        %v6452 = vsel %vm1873, %v6404, %v5494
        %v6453 = vsel %vm1873, %v6405, %v5496
        %v6454 = vsel %vm1873, %v6406, %v5498
        %v6455 = vsel %vm1873, %v6407, %v5500
        %v6456 = vsel %vm1873, %v6408, %v5502
        %v6457 = vsel %vm1873, %v6409, %v5504
        %v6458 = vsel %vm1873, %v6410, %v5506
        %v6459 = vsel %vm1873, %v6411, %v5508
        %v6460 = vsel %vm1873, %v6412, %v5510
        %v6461 = vsel %vm1873, %v6413, %v5512
        %v6462 = vsel %vm1873, %v6414, %v5514
        %v6463 = vsel %vm1873, %v6415, %v5516
        %v6464 = vsel %vm1873, %v6416, %v5518
        %v6465 = vsel %vm1873, %v6417, %v5520
        %v6466 = vsel %vm1873, %v6418, %v5522
        %v6467 = vsel %vm1873, %v6419, %v5524
        %v6468 = vsel %vm1873, %v6420, %v5526
        %v6469 = vsel %vm1873, %v6421, %v5528
        %v6470 = vsel %vm1873, %v6422, %v5530
        %v6471 = vsel %vm1873, %v6423, %v5532
        %v6472 = vsel %vm1873, %v6424, %v5534
        %v6473 = vsel %vm1873, %v6425, %v5536
        %v6474 = vsel %vm1873, %v6426, %v5538
        %v6475 = vsel %vm1873, %v6427, %v5540
        %v6476 = vsel %vm1873, %v6428, %v5542
        %v6477 = vsel %vm1873, %v6429, %v5544
        %v6478 = vsel %vm1922, %v6430, %v5597
        %v6479 = vsel %vm1922, %v6431, %v5599
        %v6480 = vsel %vm1922, %v6432, %v5601
        %v6481 = vsel %vm1922, %v6433, %v5603
        %v6482 = vsel %vm1922, %v6434, %v5605
        %v6483 = vsel %vm1922, %v6435, %v5607
        %v6484 = vsel %vm1922, %v6436, %v5609
        %v6485 = vsel %vm1922, %v6437, %v5611
        %v6486 = vsel %vm1922, %v6438, %v5613
        %v6487 = vsel %vm1922, %v6439, %v5615
        %v6488 = vsel %vm1922, %v6440, %v5617
        %v6489 = vsel %vm1922, %v6441, %v5619
        %v6490 = vsel %vm1922, %v6442, %v5621
        %v6491 = vsel %vm1922, %v6443, %v5623
        %v6492 = vsel %vm1922, %v6444, %v5625
        %v6493 = vsel %vm1922, %v6445, %v5627
        %v6494 = vsel %vm1922, %v6446, %v5629
        %v6495 = vsel %vm1922, %v6447, %v5631
        %v6496 = vsel %vm1922, %v6448, %v5633
        %v6497 = vsel %vm1922, %v6449, %v5635
        %v6498 = vsel %vm1922, %v6450, %v5637
        %v6499 = vsel %vm1922, %v6451, %v5639
        %v6500 = vsel %vm1922, %v6452, %v5641
        %v6501 = vsel %vm1922, %v6453, %v5643
        %v6502 = vsel %vm1922, %v6454, %v5645
        %v6503 = vsel %vm1922, %v6455, %v5647
        %v6504 = vsel %vm1922, %v6456, %v5649
        %v6505 = vsel %vm1922, %v6457, %v5651
        %v6506 = vsel %vm1922, %v6458, %v5653
        %v6507 = vsel %vm1922, %v6459, %v5655
        %v6508 = vsel %vm1922, %v6460, %v5657
        %v6509 = vsel %vm1922, %v6461, %v5659
        %v6510 = vsel %vm1922, %v6462, %v5661
        %v6511 = vsel %vm1922, %v6463, %v5663
        %v6512 = vsel %vm1922, %v6464, %v5665
        %v6513 = vsel %vm1922, %v6465, %v5667
        %v6514 = vsel %vm1922, %v6466, %v5669
        %v6515 = vsel %vm1922, %v6467, %v5671
        %v6516 = vsel %vm1922, %v6468, %v5673
        %v6517 = vsel %vm1922, %v6469, %v5675
        %v6518 = vsel %vm1922, %v6470, %v5677
        %v6519 = vsel %vm1922, %v6471, %v5679
        %v6520 = vsel %vm1922, %v6472, %v5681
        %v6521 = vsel %vm1922, %v6473, %v5683
        %v6522 = vsel %vm1922, %v6474, %v5685
        %v6523 = vsel %vm1922, %v6475, %v5687
        %v6524 = vsel %vm1922, %v6476, %v5689
        %v6525 = vsel %vm1922, %v6477, %v5691
        %v6526 = vsel %vm1971, %v6478, %v5747
        %v6527 = vsel %vm1971, %v6479, %v5749
        %v6528 = vsel %vm1971, %v6480, %v5751
        %v6529 = vsel %vm1971, %v6481, %v5753
        %v6530 = vsel %vm1971, %v6482, %v5755
        %v6531 = vsel %vm1971, %v6483, %v5757
        %v6532 = vsel %vm1971, %v6484, %v5759
        %v6533 = vsel %vm1971, %v6485, %v5761
        %v6534 = vsel %vm1971, %v6486, %v5763
        %v6535 = vsel %vm1971, %v6487, %v5765
        %v6536 = vsel %vm1971, %v6488, %v5767
        %v6537 = vsel %vm1971, %v6489, %v5769
        %v6538 = vsel %vm1971, %v6490, %v5771
        %v6539 = vsel %vm1971, %v6491, %v5773
        %v6540 = vsel %vm1971, %v6492, %v5775
        %v6541 = vsel %vm1971, %v6493, %v5777
        %v6542 = vsel %vm1971, %v6494, %v5779
        %v6543 = vsel %vm1971, %v6495, %v5781
        %v6544 = vsel %vm1971, %v6496, %v5783
        %v6545 = vsel %vm1971, %v6497, %v5785
        %v6546 = vsel %vm1971, %v6498, %v5787
        %v6547 = vsel %vm1971, %v6499, %v5789
        %v6548 = vsel %vm1971, %v6500, %v5791
        %v6549 = vsel %vm1971, %v6501, %v5793
        %v6550 = vsel %vm1971, %v6502, %v5795
        %v6551 = vsel %vm1971, %v6503, %v5797
        %v6552 = vsel %vm1971, %v6504, %v5799
        %v6553 = vsel %vm1971, %v6505, %v5801
        %v6554 = vsel %vm1971, %v6506, %v5803
        %v6555 = vsel %vm1971, %v6507, %v5805
        %v6556 = vsel %vm1971, %v6508, %v5807
        %v6557 = vsel %vm1971, %v6509, %v5809
        %v6558 = vsel %vm1971, %v6510, %v5811
        %v6559 = vsel %vm1971, %v6511, %v5813
        %v6560 = vsel %vm1971, %v6512, %v5815
        %v6561 = vsel %vm1971, %v6513, %v5817
        %v6562 = vsel %vm1971, %v6514, %v5819
        %v6563 = vsel %vm1971, %v6515, %v5821
        %v6564 = vsel %vm1971, %v6516, %v5823
        %v6565 = vsel %vm1971, %v6517, %v5825
        %v6566 = vsel %vm1971, %v6518, %v5827
        %v6567 = vsel %vm1971, %v6519, %v5829
        %v6568 = vsel %vm1971, %v6520, %v5831
        %v6569 = vsel %vm1971, %v6521, %v5833
        %v6570 = vsel %vm1971, %v6522, %v5835
        %v6571 = vsel %vm1971, %v6523, %v5837
        %v6572 = vsel %vm1971, %v6524, %v5839
        %v6573 = vsel %vm1971, %v6525, %v5841
        %v6574 = vsel %vm2020, %v6526, %v5894
        %v6575 = vsel %vm2020, %v6527, %v5896
        %v6576 = vsel %vm2020, %v6528, %v5898
        %v6577 = vsel %vm2020, %v6529, %v5900
        %v6578 = vsel %vm2020, %v6530, %v5902
        %v6579 = vsel %vm2020, %v6531, %v5904
        %v6580 = vsel %vm2020, %v6532, %v5906
        %v6581 = vsel %vm2020, %v6533, %v5908
        %v6582 = vsel %vm2020, %v6534, %v5910
        %v6583 = vsel %vm2020, %v6535, %v5912
        %v6584 = vsel %vm2020, %v6536, %v5914
        %v6585 = vsel %vm2020, %v6537, %v5916
        %v6586 = vsel %vm2020, %v6538, %v5918
        %v6587 = vsel %vm2020, %v6539, %v5920
        %v6588 = vsel %vm2020, %v6540, %v5922
        %v6589 = vsel %vm2020, %v6541, %v5924
        %v6590 = vsel %vm2020, %v6542, %v5926
        %v6591 = vsel %vm2020, %v6543, %v5928
        %v6592 = vsel %vm2020, %v6544, %v5930
        %v6593 = vsel %vm2020, %v6545, %v5932
        %v6594 = vsel %vm2020, %v6546, %v5934
        %v6595 = vsel %vm2020, %v6547, %v5936
        %v6596 = vsel %vm2020, %v6548, %v5938
        %v6597 = vsel %vm2020, %v6549, %v5940
        %v6598 = vsel %vm2020, %v6550, %v5942
        %v6599 = vsel %vm2020, %v6551, %v5944
        %v6600 = vsel %vm2020, %v6552, %v5946
        %v6601 = vsel %vm2020, %v6553, %v5948
        %v6602 = vsel %vm2020, %v6554, %v5950
        %v6603 = vsel %vm2020, %v6555, %v5952
        %v6604 = vsel %vm2020, %v6556, %v5954
        %v6605 = vsel %vm2020, %v6557, %v5956
        %v6606 = vsel %vm2020, %v6558, %v5958
        %v6607 = vsel %vm2020, %v6559, %v5960
        %v6608 = vsel %vm2020, %v6560, %v5962
        %v6609 = vsel %vm2020, %v6561, %v5964
        %v6610 = vsel %vm2020, %v6562, %v5966
        %v6611 = vsel %vm2020, %v6563, %v5968
        %v6612 = vsel %vm2020, %v6564, %v5970
        %v6613 = vsel %vm2020, %v6565, %v5972
        %v6614 = vsel %vm2020, %v6566, %v5974
        %v6615 = vsel %vm2020, %v6567, %v5976
        %v6616 = vsel %vm2020, %v6568, %v5978
        %v6617 = vsel %vm2020, %v6569, %v5980
        %v6618 = vsel %vm2020, %v6570, %v5982
        %v6619 = vsel %vm2020, %v6571, %v5984
        %v6620 = vsel %vm2020, %v6572, %v5986
        %v6621 = vsel %vm2020, %v6573, %v5988
        %v6622 = vsel %vm2069, %v6574, %v6041
        %v6623 = vsel %vm2069, %v6575, %v6043
        %v6624 = vsel %vm2069, %v6576, %v6045
        %v6625 = vsel %vm2069, %v6577, %v6047
        %v6626 = vsel %vm2069, %v6578, %v6049
        %v6627 = vsel %vm2069, %v6579, %v6051
        %v6628 = vsel %vm2069, %v6580, %v6053
        %v6629 = vsel %vm2069, %v6581, %v6055
        %v6630 = vsel %vm2069, %v6582, %v6057
        %v6631 = vsel %vm2069, %v6583, %v6059
        %v6632 = vsel %vm2069, %v6584, %v6061
        %v6633 = vsel %vm2069, %v6585, %v6063
        %v6634 = vsel %vm2069, %v6586, %v6065
        %v6635 = vsel %vm2069, %v6587, %v6067
        %v6636 = vsel %vm2069, %v6588, %v6069
        %v6637 = vsel %vm2069, %v6589, %v6071
        %v6638 = vsel %vm2069, %v6590, %v6073
        %v6639 = vsel %vm2069, %v6591, %v6075
        %v6640 = vsel %vm2069, %v6592, %v6077
        %v6641 = vsel %vm2069, %v6593, %v6079
        %v6642 = vsel %vm2069, %v6594, %v6081
        %v6643 = vsel %vm2069, %v6595, %v6083
        %v6644 = vsel %vm2069, %v6596, %v6085
        %v6645 = vsel %vm2069, %v6597, %v6087
        %v6646 = vsel %vm2069, %v6598, %v6089
        %v6647 = vsel %vm2069, %v6599, %v6091
        %v6648 = vsel %vm2069, %v6600, %v6093
        %v6649 = vsel %vm2069, %v6601, %v6095
        %v6650 = vsel %vm2069, %v6602, %v6097
        %v6651 = vsel %vm2069, %v6603, %v6099
        %v6652 = vsel %vm2069, %v6604, %v6101
        %v6653 = vsel %vm2069, %v6605, %v6103
        %v6654 = vsel %vm2069, %v6606, %v6105
        %v6655 = vsel %vm2069, %v6607, %v6107
        %v6656 = vsel %vm2069, %v6608, %v6109
        %v6657 = vsel %vm2069, %v6609, %v6111
        %v6658 = vsel %vm2069, %v6610, %v6113
        %v6659 = vsel %vm2069, %v6611, %v6115
        %v6660 = vsel %vm2069, %v6612, %v6117
        %v6661 = vsel %vm2069, %v6613, %v6119
        %v6662 = vsel %vm2069, %v6614, %v6121
        %v6663 = vsel %vm2069, %v6615, %v6123
        %v6664 = vsel %vm2069, %v6616, %v6125
        %v6665 = vsel %vm2069, %v6617, %v6127
        %v6666 = vsel %vm2069, %v6618, %v6129
        %v6667 = vsel %vm2069, %v6619, %v6131
        %v6668 = vsel %vm2069, %v6620, %v6133
        %v6669 = vsel %vm2069, %v6621, %v6135
        %v6670 = vsel %vm2118, %v6622, %v6191
        %v6671 = vsel %vm2118, %v6623, %v6193
        %v6672 = vsel %vm2118, %v6624, %v6195
        %v6673 = vsel %vm2118, %v6625, %v6197
        %v6674 = vsel %vm2118, %v6626, %v6199
        %v6675 = vsel %vm2118, %v6627, %v6201
        %v6676 = vsel %vm2118, %v6628, %v6203
        %v6677 = vsel %vm2118, %v6629, %v6205
        %v6678 = vsel %vm2118, %v6630, %v6207
        %v6679 = vsel %vm2118, %v6631, %v6209
        %v6680 = vsel %vm2118, %v6632, %v6211
        %v6681 = vsel %vm2118, %v6633, %v6213
        %v6682 = vsel %vm2118, %v6634, %v6215
        %v6683 = vsel %vm2118, %v6635, %v6217
        %v6684 = vsel %vm2118, %v6636, %v6219
        %v6685 = vsel %vm2118, %v6637, %v6221
        %v6686 = vsel %vm2118, %v6638, %v6223
        %v6687 = vsel %vm2118, %v6639, %v6225
        %v6688 = vsel %vm2118, %v6640, %v6227
        %v6689 = vsel %vm2118, %v6641, %v6229
        %v6690 = vsel %vm2118, %v6642, %v6231
        %v6691 = vsel %vm2118, %v6643, %v6233
        %v6692 = vsel %vm2118, %v6644, %v6235
        %v6693 = vsel %vm2118, %v6645, %v6237
        %v6694 = vsel %vm2118, %v6646, %v6239
        %v6695 = vsel %vm2118, %v6647, %v6241
        %v6696 = vsel %vm2118, %v6648, %v6243
        %v6697 = vsel %vm2118, %v6649, %v6245
        %v6698 = vsel %vm2118, %v6650, %v6247
        %v6699 = vsel %vm2118, %v6651, %v6249
        %v6700 = vsel %vm2118, %v6652, %v6251
        %v6701 = vsel %vm2118, %v6653, %v6253
        %v6702 = vsel %vm2118, %v6654, %v6255
        %v6703 = vsel %vm2118, %v6655, %v6257
        %v6704 = vsel %vm2118, %v6656, %v6259
        %v6705 = vsel %vm2118, %v6657, %v6261
        %v6706 = vsel %vm2118, %v6658, %v6263
        %v6707 = vsel %vm2118, %v6659, %v6265
        %v6708 = vsel %vm2118, %v6660, %v6267
        %v6709 = vsel %vm2118, %v6661, %v6269
        %v6710 = vsel %vm2118, %v6662, %v6271
        %v6711 = vsel %vm2118, %v6663, %v6273
        %v6712 = vsel %vm2118, %v6664, %v6275
        %v6713 = vsel %vm2118, %v6665, %v6277
        %v6714 = vsel %vm2118, %v6666, %v6279
        %v6715 = vsel %vm2118, %v6667, %v6281
        %v6716 = vsel %vm2118, %v6668, %v6283
        %v6717 = vsel %vm2118, %v6669, %v6285
        %v6766 = vrot.slane %v6670, 7
        %v6767 = vrot.slane %v6671, 7
        %v6768 = vsel %vm2215, %v6766, %v6767
        %v6769 = vrot.slane %v6672, 7
        %v6770 = vsel %vm2215, %v6767, %v6769
        %v6771 = vrot.slane %v6673, 7
        %v6772 = vrot.slane %v6674, 7
        %v6773 = vsel %vm2215, %v6771, %v6772
        %v6774 = vrot.slane %v6675, 7
        %v6775 = vsel %vm2215, %v6772, %v6774
        %v6776 = vrot.slane %v6676, 7
        %v6777 = vrot.slane %v6677, 7
        %v6778 = vsel %vm2215, %v6776, %v6777
        %v6779 = vrot.slane %v6678, 7
        %v6780 = vsel %vm2215, %v6777, %v6779
        %v6781 = vrot.slane %v6679, 7
        %v6782 = vrot.slane %v6680, 7
        %v6783 = vsel %vm2215, %v6781, %v6782
        %v6784 = vrot.slane %v6681, 7
        %v6785 = vsel %vm2215, %v6782, %v6784
        %v6786 = vrot.slane %v6682, 7
        %v6787 = vrot.slane %v6683, 7
        %v6788 = vsel %vm2215, %v6786, %v6787
        %v6789 = vrot.slane %v6684, 7
        %v6790 = vsel %vm2215, %v6787, %v6789
        %v6791 = vrot.slane %v6685, 7
        %v6792 = vrot.slane %v6686, 7
        %v6793 = vsel %vm2215, %v6791, %v6792
        %v6794 = vrot.slane %v6687, 7
        %v6795 = vsel %vm2215, %v6792, %v6794
        %v6796 = vrot.slane %v6688, 7
        %v6797 = vrot.slane %v6689, 7
        %v6798 = vsel %vm2215, %v6796, %v6797
        %v6799 = vrot.slane %v6690, 7
        %v6800 = vsel %vm2215, %v6797, %v6799
        %v6801 = vrot.slane %v6691, 7
        %v6802 = vrot.slane %v6692, 7
        %v6803 = vsel %vm2215, %v6801, %v6802
        %v6804 = vrot.slane %v6693, 7
        %v6805 = vsel %vm2215, %v6802, %v6804
        %v6806 = vrot.slane %v6694, 7
        %v6807 = vrot.slane %v6695, 7
        %v6808 = vsel %vm2215, %v6806, %v6807
        %v6809 = vrot.slane %v6696, 7
        %v6810 = vsel %vm2215, %v6807, %v6809
        %v6811 = vrot.slane %v6697, 7
        %v6812 = vrot.slane %v6698, 7
        %v6813 = vsel %vm2215, %v6811, %v6812
        %v6814 = vrot.slane %v6699, 7
        %v6815 = vsel %vm2215, %v6812, %v6814
        %v6816 = vrot.slane %v6700, 7
        %v6817 = vrot.slane %v6701, 7
        %v6818 = vsel %vm2215, %v6816, %v6817
        %v6819 = vrot.slane %v6702, 7
        %v6820 = vsel %vm2215, %v6817, %v6819
        %v6821 = vrot.slane %v6703, 7
        %v6822 = vrot.slane %v6704, 7
        %v6823 = vsel %vm2215, %v6821, %v6822
        %v6824 = vrot.slane %v6705, 7
        %v6825 = vsel %vm2215, %v6822, %v6824
        %v6826 = vrot.slane %v6706, 7
        %v6827 = vrot.slane %v6707, 7
        %v6828 = vsel %vm2215, %v6826, %v6827
        %v6829 = vrot.slane %v6708, 7
        %v6830 = vsel %vm2215, %v6827, %v6829
        %v6831 = vrot.slane %v6709, 7
        %v6832 = vrot.slane %v6710, 7
        %v6833 = vsel %vm2215, %v6831, %v6832
        %v6834 = vrot.slane %v6711, 7
        %v6835 = vsel %vm2215, %v6832, %v6834
        %v6836 = vrot.slane %v6712, 7
        %v6837 = vrot.slane %v6713, 7
        %v6838 = vsel %vm2215, %v6836, %v6837
        %v6839 = vrot.slane %v6714, 7
        %v6840 = vsel %vm2215, %v6837, %v6839
        %v6841 = vrot.slane %v6715, 7
        %v6842 = vrot.slane %v6716, 7
        %v6843 = vsel %vm2215, %v6841, %v6842
        %v6844 = vrot.slane %v6717, 7
        %v6845 = vsel %vm2215, %v6842, %v6844
        %s6846 = scalar_lea.vmem %s1, 144
        %v6847 = vld [vmem:[%s6846] sm:$0xff]
        %v6848 = vld [vmem:[%s6846 + $0x8] sm:$0xff]
        %v6849 = vld [vmem:[%s6846 + $0x10] sm:$0xff]
        %v6850 = vld [vmem:[%s6846 + $0x18] sm:$0xff]
        %v6851 = vld [vmem:[%s6846 + $0x20] sm:$0xff]
        %v6852 = vld [vmem:[%s6846 + $0x28] sm:$0xff]
        %v6853 = vld [vmem:[%s6846 + $0x30] sm:$0xff]
        %v6854 = vld [vmem:[%s6846 + $0x38] sm:$0xff]
        %v6855 = vld [vmem:[%s6846 + $0x40] sm:$0xff]
        %v6856 = vsel %vm2305, %v6768, 0
        %v6858 = vsel %vm2305, %v6770, 0
        %v6860 = vsel %vm2305, %v6773, 0
        %v6862 = vsel %vm2305, %v6775, 0
        %v6864 = vsel %vm2305, %v6778, 0
        %v6866 = vsel %vm2305, %v6780, 0
        %v6868 = vsel %vm2305, %v6783, 0
        %v6870 = vsel %vm2305, %v6785, 0
        %v6872 = vsel %vm2305, %v6788, 0
        %v6874 = vsel %vm2305, %v6790, 0
        %v6876 = vsel %vm2305, %v6793, 0
        %v6878 = vsel %vm2305, %v6795, 0
        %v6880 = vsel %vm2305, %v6798, 0
        %v6882 = vsel %vm2305, %v6800, 0
        %v6884 = vsel %vm2305, %v6803, 0
        %v6886 = vsel %vm2305, %v6805, 0
        %v6888 = vsel %vm2305, %v6808, 0
        %v6890 = vsel %vm2305, %v6810, 0
        %v6892 = vsel %vm2305, %v6813, 0
        %v6894 = vsel %vm2305, %v6815, 0
        %v6896 = vsel %vm2305, %v6818, 0
        %v6898 = vsel %vm2305, %v6820, 0
        %v6900 = vsel %vm2305, %v6823, 0
        %v6902 = vsel %vm2305, %v6825, 0
        %v6904 = vsel %vm2305, %v6828, 0
        %v6906 = vsel %vm2305, %v6830, 0
        %v6908 = vsel %vm2305, %v6833, 0
        %v6910 = vsel %vm2305, %v6835, 0
        %v6912 = vsel %vm2305, %v6838, 0
        %v6914 = vsel %vm2305, %v6840, 0
        %v6916 = vsel %vm2305, %v6843, 0
        %v6918 = vsel %vm2305, %v6845, 0
        %6920 = vmatpush.msra.mxu0 0.0
        %6921 = vmatpush.msra.mxu0 0.0
        %6922 = vmatpush.msra.mxu0 0.0
        %6923 = vmatpush.msra.mxu0 0.0
        %6924 = vmatpush.msra.mxu0 0.0
        %6925 = vmatpush.msra.mxu0 0.0
        %6926 = vmatpush.msra.mxu0 0.0
        %6927 = vmatpush.msra.mxu0 %v6855
        %6928 = vmatpush.msra.mxu0 %v6854
        %6929 = vmatpush.msra.mxu0 %v6853
        %6930 = vmatpush.msra.mxu0 %v6852
        %6931 = vmatpush.msra.mxu0 %v6851
        %6932 = vmatpush.msra.mxu0 %v6850
        %6933 = vmatpush.msra.mxu0 %v6849
        %6934 = vmatpush.msra.mxu0 %v6848
        %6935 = vmatpush.msra.mxu0 %v6847
        %6936 = vmatmul.f32.gmra.mxu0 %v6856
        %v6937 = vpop.f32.mrf.mxu0
        %v6938 = vadd.f32 0.0, %v6937
        %6939 = vmatmul.f32.gmra.mxu0 %v6858
        %v6940 = vpop.f32.mrf.mxu0
        %v6941 = vadd.f32 0.0, %v6940
        %6942 = vmatmul.f32.gmra.mxu0 %v6860
        %v6943 = vpop.f32.mrf.mxu0
        %v6944 = vadd.f32 0.0, %v6943
        %6945 = vmatmul.f32.gmra.mxu0 %v6862
        %v6946 = vpop.f32.mrf.mxu0
        %v6947 = vadd.f32 0.0, %v6946
        %6948 = vmatmul.f32.gmra.mxu0 %v6864
        %v6949 = vpop.f32.mrf.mxu0
        %v6950 = vadd.f32 0.0, %v6949
        %6951 = vmatmul.f32.gmra.mxu0 %v6866
        %v6952 = vpop.f32.mrf.mxu0
        %v6953 = vadd.f32 0.0, %v6952
        %6954 = vmatmul.f32.gmra.mxu0 %v6868
        %v6955 = vpop.f32.mrf.mxu0
        %v6956 = vadd.f32 0.0, %v6955
        %6957 = vmatmul.f32.gmra.mxu0 %v6870
        %v6958 = vpop.f32.mrf.mxu0
        %v6959 = vadd.f32 0.0, %v6958
        %6960 = vmatmul.f32.gmra.mxu0 %v6872
        %v6961 = vpop.f32.mrf.mxu0
        %v6962 = vadd.f32 0.0, %v6961
        %6963 = vmatmul.f32.gmra.mxu0 %v6874
        %v6964 = vpop.f32.mrf.mxu0
        %v6965 = vadd.f32 0.0, %v6964
        %6966 = vmatmul.f32.gmra.mxu0 %v6876
        %v6967 = vpop.f32.mrf.mxu0
        %v6968 = vadd.f32 0.0, %v6967
        %6969 = vmatmul.f32.gmra.mxu0 %v6878
        %v6970 = vpop.f32.mrf.mxu0
        %v6971 = vadd.f32 0.0, %v6970
        %6972 = vmatmul.f32.gmra.mxu0 %v6880
        %v6973 = vpop.f32.mrf.mxu0
        %v6974 = vadd.f32 0.0, %v6973
        %6975 = vmatmul.f32.gmra.mxu0 %v6882
        %v6976 = vpop.f32.mrf.mxu0
        %v6977 = vadd.f32 0.0, %v6976
        %6978 = vmatmul.f32.gmra.mxu0 %v6884
        %v6979 = vpop.f32.mrf.mxu0
        %v6980 = vadd.f32 0.0, %v6979
        %6981 = vmatmul.f32.gmra.mxu0 %v6886
        %v6982 = vpop.f32.mrf.mxu0
        %v6983 = vadd.f32 0.0, %v6982
        %6984 = vmatmul.f32.gmra.mxu0 %v6888
        %v6985 = vpop.f32.mrf.mxu0
        %v6986 = vadd.f32 0.0, %v6985
        %6987 = vmatmul.f32.gmra.mxu0 %v6890
        %v6988 = vpop.f32.mrf.mxu0
        %v6989 = vadd.f32 0.0, %v6988
        %6990 = vmatmul.f32.gmra.mxu0 %v6892
        %v6991 = vpop.f32.mrf.mxu0
        %v6992 = vadd.f32 0.0, %v6991
        %6993 = vmatmul.f32.gmra.mxu0 %v6894
        %v6994 = vpop.f32.mrf.mxu0
        %v6995 = vadd.f32 0.0, %v6994
        %6996 = vmatmul.f32.gmra.mxu0 %v6896
        %v6997 = vpop.f32.mrf.mxu0
        %v6998 = vadd.f32 0.0, %v6997
        %6999 = vmatmul.f32.gmra.mxu0 %v6898
        %v7000 = vpop.f32.mrf.mxu0
        %v7001 = vadd.f32 0.0, %v7000
        %7002 = vmatmul.f32.gmra.mxu0 %v6900
        %v7003 = vpop.f32.mrf.mxu0
        %v7004 = vadd.f32 0.0, %v7003
        %7005 = vmatmul.f32.gmra.mxu0 %v6902
        %v7006 = vpop.f32.mrf.mxu0
        %v7007 = vadd.f32 0.0, %v7006
        %7008 = vmatmul.f32.gmra.mxu0 %v6904
        %v7009 = vpop.f32.mrf.mxu0
        %v7010 = vadd.f32 0.0, %v7009
        %7011 = vmatmul.f32.gmra.mxu0 %v6906
        %v7012 = vpop.f32.mrf.mxu0
        %v7013 = vadd.f32 0.0, %v7012
        %7014 = vmatmul.f32.gmra.mxu0 %v6908
        %v7015 = vpop.f32.mrf.mxu0
        %v7016 = vadd.f32 0.0, %v7015
        %7017 = vmatmul.f32.gmra.mxu0 %v6910
        %v7018 = vpop.f32.mrf.mxu0
        %v7019 = vadd.f32 0.0, %v7018
        %7020 = vmatmul.f32.gmra.mxu0 %v6912
        %v7021 = vpop.f32.mrf.mxu0
        %v7022 = vadd.f32 0.0, %v7021
        %7023 = vmatmul.f32.gmra.mxu0 %v6914
        %v7024 = vpop.f32.mrf.mxu0
        %v7025 = vadd.f32 0.0, %v7024
        %7026 = vmatmul.f32.gmra.mxu0 %v6916
        %v7027 = vpop.f32.mrf.mxu0
        %v7028 = vadd.f32 0.0, %v7027
        %7029 = vmatmul.f32.gmra.mxu0 %v6918
        %v7030 = vpop.f32.mrf.mxu0
        %v7031 = vadd.f32 0.0, %v7030
        %7032 = vdwg.mxu0
        %s7033 = scalar_lea.vmem %s2, 2
        %v7034 = vld [vmem:[%s7033] sm:$0x1]
        %v7036 = vperm.slane %v7034, 0
        %v7038 = vmul.f32 %v6938, %v7036
        %v7039 = vmul.f32 %v6941, %v7036
        %v7040 = vmul.f32 %v6944, %v7036
        %v7041 = vmul.f32 %v6947, %v7036
        %v7042 = vmul.f32 %v6950, %v7036
        %v7043 = vmul.f32 %v6953, %v7036
        %v7044 = vmul.f32 %v6956, %v7036
        %v7045 = vmul.f32 %v6959, %v7036
        %v7046 = vmul.f32 %v6962, %v7036
        %v7047 = vmul.f32 %v6965, %v7036
        %v7048 = vmul.f32 %v6968, %v7036
        %v7049 = vmul.f32 %v6971, %v7036
        %v7050 = vmul.f32 %v6974, %v7036
        %v7051 = vmul.f32 %v6977, %v7036
        %v7052 = vmul.f32 %v6980, %v7036
        %v7053 = vmul.f32 %v6983, %v7036
        %v7054 = vmul.f32 %v6986, %v7036
        %v7055 = vmul.f32 %v6989, %v7036
        %v7056 = vmul.f32 %v6992, %v7036
        %v7057 = vmul.f32 %v6995, %v7036
        %v7058 = vmul.f32 %v6998, %v7036
        %v7059 = vmul.f32 %v7001, %v7036
        %v7060 = vmul.f32 %v7004, %v7036
        %v7061 = vmul.f32 %v7007, %v7036
        %v7062 = vmul.f32 %v7010, %v7036
        %v7063 = vmul.f32 %v7013, %v7036
        %v7064 = vmul.f32 %v7016, %v7036
        %v7065 = vmul.f32 %v7019, %v7036
        %v7066 = vmul.f32 %v7022, %v7036
        %v7067 = vmul.f32 %v7025, %v7036
        %v7068 = vmul.f32 %v7028, %v7036
        %v7069 = vmul.f32 %v7031, %v7036
        %s7070 = scalar_lea.vmem %s3, 2
        %v7071 = vld [vmem:[%s7070] sm:$0x1]
        %v7073 = vperm.slane %v7071, 0
        %v7075 = vadd.f32 %v7038, %v7073
        %v7076 = vadd.f32 %v7039, %v7073
        %v7077 = vadd.f32 %v7040, %v7073
        %v7078 = vadd.f32 %v7041, %v7073
        %v7079 = vadd.f32 %v7042, %v7073
        %v7080 = vadd.f32 %v7043, %v7073
        %v7081 = vadd.f32 %v7044, %v7073
        %v7082 = vadd.f32 %v7045, %v7073
        %v7083 = vadd.f32 %v7046, %v7073
        %v7084 = vadd.f32 %v7047, %v7073
        %v7085 = vadd.f32 %v7048, %v7073
        %v7086 = vadd.f32 %v7049, %v7073
        %v7087 = vadd.f32 %v7050, %v7073
        %v7088 = vadd.f32 %v7051, %v7073
        %v7089 = vadd.f32 %v7052, %v7073
        %v7090 = vadd.f32 %v7053, %v7073
        %v7091 = vadd.f32 %v7054, %v7073
        %v7092 = vadd.f32 %v7055, %v7073
        %v7093 = vadd.f32 %v7056, %v7073
        %v7094 = vadd.f32 %v7057, %v7073
        %v7095 = vadd.f32 %v7058, %v7073
        %v7096 = vadd.f32 %v7059, %v7073
        %v7097 = vadd.f32 %v7060, %v7073
        %v7098 = vadd.f32 %v7061, %v7073
        %v7099 = vadd.f32 %v7062, %v7073
        %v7100 = vadd.f32 %v7063, %v7073
        %v7101 = vadd.f32 %v7064, %v7073
        %v7102 = vadd.f32 %v7065, %v7073
        %v7103 = vadd.f32 %v7066, %v7073
        %v7104 = vadd.f32 %v7067, %v7073
        %v7105 = vadd.f32 %v7068, %v7073
        %v7106 = vadd.f32 %v7069, %v7073
        %v7107 = vadd.f32 %v7075, %v2555
        %v7108 = vadd.f32 %v7076, %v2556
        %v7109 = vadd.f32 %v7077, %v2557
        %v7110 = vadd.f32 %v7078, %v2558
        %v7111 = vadd.f32 %v7079, %v2559
        %v7112 = vadd.f32 %v7080, %v2560
        %v7113 = vadd.f32 %v7081, %v2561
        %v7114 = vadd.f32 %v7082, %v2562
        %v7115 = vadd.f32 %v7083, %v2563
        %v7116 = vadd.f32 %v7084, %v2564
        %v7117 = vadd.f32 %v7085, %v2565
        %v7118 = vadd.f32 %v7086, %v2566
        %v7119 = vadd.f32 %v7087, %v2567
        %v7120 = vadd.f32 %v7088, %v2568
        %v7121 = vadd.f32 %v7089, %v2569
        %v7122 = vadd.f32 %v7090, %v2570
        %v7123 = vadd.f32 %v7091, %v2571
        %v7124 = vadd.f32 %v7092, %v2572
        %v7125 = vadd.f32 %v7093, %v2573
        %v7126 = vadd.f32 %v7094, %v2574
        %v7127 = vadd.f32 %v7095, %v2575
        %v7128 = vadd.f32 %v7096, %v2576
        %v7129 = vadd.f32 %v7097, %v2577
        %v7130 = vadd.f32 %v7098, %v2578
        %v7131 = vadd.f32 %v7099, %v2579
        %v7132 = vadd.f32 %v7100, %v2580
        %v7133 = vadd.f32 %v7101, %v2581
        %v7134 = vadd.f32 %v7102, %v2582
        %v7135 = vadd.f32 %v7103, %v2583
        %v7136 = vadd.f32 %v7104, %v2584
        %v7137 = vadd.f32 %v7105, %v2585
        %v7138 = vadd.f32 %v7106, %v2586
        %v7139 = vmax.f32 %v7107, 0.0
        %v7140 = vmax.f32 %v7108, 0.0
        %v7141 = vmax.f32 %v7109, 0.0
        %v7142 = vmax.f32 %v7110, 0.0
        %v7143 = vmax.f32 %v7111, 0.0
        %v7144 = vmax.f32 %v7112, 0.0
        %v7145 = vmax.f32 %v7113, 0.0
        %v7146 = vmax.f32 %v7114, 0.0
        %v7147 = vmax.f32 %v7115, 0.0
        %v7148 = vmax.f32 %v7116, 0.0
        %v7149 = vmax.f32 %v7117, 0.0
        %v7150 = vmax.f32 %v7118, 0.0
        %v7151 = vmax.f32 %v7119, 0.0
        %v7152 = vmax.f32 %v7120, 0.0
        %v7153 = vmax.f32 %v7121, 0.0
        %v7154 = vmax.f32 %v7122, 0.0
        %v7155 = vmax.f32 %v7123, 0.0
        %v7156 = vmax.f32 %v7124, 0.0
        %v7157 = vmax.f32 %v7125, 0.0
        %v7158 = vmax.f32 %v7126, 0.0
        %v7159 = vmax.f32 %v7127, 0.0
        %v7160 = vmax.f32 %v7128, 0.0
        %v7161 = vmax.f32 %v7129, 0.0
        %v7162 = vmax.f32 %v7130, 0.0
        %v7163 = vmax.f32 %v7131, 0.0
        %v7164 = vmax.f32 %v7132, 0.0
        %v7165 = vmax.f32 %v7133, 0.0
        %v7166 = vmax.f32 %v7134, 0.0
        %v7167 = vmax.f32 %v7135, 0.0
        %v7168 = vmax.f32 %v7136, 0.0
        %v7169 = vmax.f32 %v7137, 0.0
        %v7170 = vmax.f32 %v7138, 0.0
        %7171 = vst.msk [vmem:[%s301 + $0x8] sm:$0xff] %vm196, %v7139
        %7172 = vst.msk [vmem:[%s301 + $0x10] sm:$0xff] %vm196, %v7140
        %7173 = vst.msk [vmem:[%s301 + $0x28] sm:$0xff] %vm196, %v7141
        %7174 = vst.msk [vmem:[%s301 + $0x30] sm:$0xff] %vm196, %v7142
        %7175 = vst.msk [vmem:[%s301 + $0x48] sm:$0xff] %vm196, %v7143
        %7176 = vst.msk [vmem:[%s301 + $0x50] sm:$0xff] %vm196, %v7144
        %7177 = vst.msk [vmem:[%s301 + $0x68] sm:$0xff] %vm196, %v7145
        %7178 = vst.msk [vmem:[%s301 + $0x70] sm:$0xff] %vm196, %v7146
        %7179 = vst.msk [vmem:[%s301 + $0x88] sm:$0xff] %vm196, %v7147
        %7180 = vst.msk [vmem:[%s301 + $0x90] sm:$0xff] %vm196, %v7148
        %7181 = vst.msk [vmem:[%s301 + $0xa8] sm:$0xff] %vm196, %v7149
        %7182 = vst.msk [vmem:[%s301 + $0xb0] sm:$0xff] %vm196, %v7150
        %7183 = vst.msk [vmem:[%s301 + $0xc8] sm:$0xff] %vm196, %v7151
        %7184 = vst.msk [vmem:[%s301 + $0xd0] sm:$0xff] %vm196, %v7152
        %7185 = vst.msk [vmem:[%s301 + $0xe8] sm:$0xff] %vm196, %v7153
        %7186 = vst.msk [vmem:[%s301 + $0xf0] sm:$0xff] %vm196, %v7154
        %7187 = vst.msk [vmem:[%s301 + $0x108] sm:$0xff] %vm196, %v7155
        %7188 = vst.msk [vmem:[%s301 + $0x110] sm:$0xff] %vm196, %v7156
        %7189 = vst.msk [vmem:[%s301 + $0x128] sm:$0xff] %vm196, %v7157
        %7190 = vst.msk [vmem:[%s301 + $0x130] sm:$0xff] %vm196, %v7158
        %7191 = vst.msk [vmem:[%s301 + $0x148] sm:$0xff] %vm196, %v7159
        %7192 = vst.msk [vmem:[%s301 + $0x150] sm:$0xff] %vm196, %v7160
        %7193 = vst.msk [vmem:[%s301 + $0x168] sm:$0xff] %vm196, %v7161
        %7194 = vst.msk [vmem:[%s301 + $0x170] sm:$0xff] %vm196, %v7162
        %7195 = vst.msk [vmem:[%s301 + $0x188] sm:$0xff] %vm196, %v7163
        %7196 = vst.msk [vmem:[%s301 + $0x190] sm:$0xff] %vm196, %v7164
        %7197 = vst.msk [vmem:[%s301 + $0x1a8] sm:$0xff] %vm196, %v7165
        %7198 = vst.msk [vmem:[%s301 + $0x1b0] sm:$0xff] %vm196, %v7166
        %7199 = vst.msk [vmem:[%s301 + $0x1c8] sm:$0xff] %vm196, %v7167
        %7200 = vst.msk [vmem:[%s301 + $0x1d0] sm:$0xff] %vm196, %v7168
        %7201 = vst.msk [vmem:[%s301 + $0x1e8] sm:$0xff] %vm196, %v7169
        %7202 = vst.msk [vmem:[%s301 + $0x1f0] sm:$0xff] %vm196, %v7170
        %v7203 = vld [vmem:[#allocation2] sm:$0xff]
        %v7204 = vld [vmem:[#allocation2 + $0x8] sm:$0xff]
        %v7205 = vld [vmem:[#allocation2 + $0x10] sm:$0xff]
        %v7206 = vld [vmem:[#allocation2 + $0x18] sm:$0xff]
        %v7207 = vld [vmem:[#allocation2 + $0x20] sm:$0xff]
        %v7208 = vld [vmem:[#allocation2 + $0x28] sm:$0xff]
        %v7209 = vld [vmem:[#allocation2 + $0x30] sm:$0xff]
        %v7210 = vld [vmem:[#allocation2 + $0x38] sm:$0xff]
        %v7211 = vld [vmem:[#allocation2 + $0x40] sm:$0xff]
        %v7212 = vld [vmem:[#allocation2 + $0x48] sm:$0xff]
        %v7213 = vld [vmem:[#allocation2 + $0x50] sm:$0xff]
        %v7214 = vld [vmem:[#allocation2 + $0x58] sm:$0xff]
        %v7215 = vld [vmem:[#allocation2 + $0x60] sm:$0xff]
        %v7216 = vld [vmem:[#allocation2 + $0x68] sm:$0xff]
        %v7217 = vld [vmem:[#allocation2 + $0x70] sm:$0xff]
        %v7218 = vld [vmem:[#allocation2 + $0x78] sm:$0xff]
        %v7219 = vld [vmem:[#allocation2 + $0x80] sm:$0xff]
        %v7220 = vld [vmem:[#allocation2 + $0x88] sm:$0xff]
        %v7221 = vld [vmem:[#allocation2 + $0x90] sm:$0xff]
        %v7222 = vld [vmem:[#allocation2 + $0x98] sm:$0xff]
        %v7223 = vld [vmem:[#allocation2 + $0xa0] sm:$0xff]
        %v7224 = vld [vmem:[#allocation2 + $0xa8] sm:$0xff]
        %v7225 = vld [vmem:[#allocation2 + $0xb0] sm:$0xff]
        %v7226 = vld [vmem:[#allocation2 + $0xb8] sm:$0xff]
        %v7227 = vld [vmem:[#allocation2 + $0xc0] sm:$0xff]
        %v7228 = vld [vmem:[#allocation2 + $0xc8] sm:$0xff]
        %v7229 = vld [vmem:[#allocation2 + $0xd0] sm:$0xff]
        %v7230 = vld [vmem:[#allocation2 + $0xd8] sm:$0xff]
        %v7231 = vld [vmem:[#allocation2 + $0xe0] sm:$0xff]
        %v7232 = vld [vmem:[#allocation2 + $0xe8] sm:$0xff]
        %v7233 = vld [vmem:[#allocation2 + $0xf0] sm:$0xff]
        %v7234 = vld [vmem:[#allocation2 + $0xf8] sm:$0xff]
        %v7235 = vld [vmem:[#allocation2 + $0x100] sm:$0xff]
        %v7236 = vld [vmem:[#allocation2 + $0x108] sm:$0xff]
        %v7237 = vld [vmem:[#allocation2 + $0x110] sm:$0xff]
        %v7238 = vld [vmem:[#allocation2 + $0x118] sm:$0xff]
        %v7239 = vld [vmem:[#allocation2 + $0x120] sm:$0xff]
        %v7240 = vld [vmem:[#allocation2 + $0x128] sm:$0xff]
        %v7241 = vld [vmem:[#allocation2 + $0x130] sm:$0xff]
        %v7242 = vld [vmem:[#allocation2 + $0x138] sm:$0xff]
        %v7243 = vld [vmem:[#allocation2 + $0x140] sm:$0xff]
        %v7244 = vld [vmem:[#allocation2 + $0x148] sm:$0xff]
        %v7245 = vld [vmem:[#allocation2 + $0x150] sm:$0xff]
        %v7246 = vld [vmem:[#allocation2 + $0x158] sm:$0xff]
        %v7247 = vld [vmem:[#allocation2 + $0x160] sm:$0xff]
        %v7248 = vld [vmem:[#allocation2 + $0x168] sm:$0xff]
        %v7249 = vld [vmem:[#allocation2 + $0x170] sm:$0xff]
        %v7250 = vld [vmem:[#allocation2 + $0x178] sm:$0xff]
        %v7251 = vld [vmem:[#allocation2 + $0x180] sm:$0xff]
        %v7252 = vld [vmem:[#allocation2 + $0x188] sm:$0xff]
        %v7253 = vld [vmem:[#allocation2 + $0x190] sm:$0xff]
        %v7254 = vld [vmem:[#allocation2 + $0x198] sm:$0xff]
        %v7255 = vld [vmem:[#allocation2 + $0x1a0] sm:$0xff]
        %v7256 = vld [vmem:[#allocation2 + $0x1a8] sm:$0xff]
        %v7257 = vld [vmem:[#allocation2 + $0x1b0] sm:$0xff]
        %v7258 = vld [vmem:[#allocation2 + $0x1b8] sm:$0xff]
        %v7259 = vld [vmem:[#allocation2 + $0x1c0] sm:$0xff]
        %v7260 = vld [vmem:[#allocation2 + $0x1c8] sm:$0xff]
        %v7261 = vld [vmem:[#allocation2 + $0x1d0] sm:$0xff]
        %v7262 = vld [vmem:[#allocation2 + $0x1d8] sm:$0xff]
        %v7263 = vld [vmem:[#allocation2 + $0x1e0] sm:$0xff]
        %v7264 = vld [vmem:[#allocation2 + $0x1e8] sm:$0xff]
        %v7265 = vld [vmem:[#allocation2 + $0x1f0] sm:$0xff]
        %v7266 = vld [vmem:[#allocation2 + $0x1f8] sm:$0xff]
        %v7267 = vld [vmem:[#allocation2 + $0x200] sm:$0xff]
        %v7268 = vld [vmem:[#allocation2 + $0x208] sm:$0xff]
        %v7269 = vld [vmem:[#allocation2 + $0x210] sm:$0xff]
        %v7270 = vld [vmem:[#allocation2 + $0x218] sm:$0xff]
        %v7271 = vld [vmem:[#allocation2 + $0x220] sm:$0xff]
        %v7272 = vld [vmem:[#allocation2 + $0x228] sm:$0xff]
        %v7273 = vld [vmem:[#allocation2 + $0x230] sm:$0xff]
        %v7274 = vld [vmem:[#allocation2 + $0x238] sm:$0xff]
        %v7307 = vrot.slane %v7204, 1
        %v7308 = vrot.slane %v7205, 1
        %v7309 = vsel %vm439, %v7307, %v7308
        %v7310 = vrot.slane %v7208, 1
        %v7311 = vrot.slane %v7209, 1
        %v7312 = vsel %vm439, %v7310, %v7311
        %v7313 = vrot.slane %v7212, 1
        %v7314 = vrot.slane %v7213, 1
        %v7315 = vsel %vm439, %v7313, %v7314
        %v7316 = vrot.slane %v7216, 1
        %v7317 = vrot.slane %v7217, 1
        %v7318 = vsel %vm439, %v7316, %v7317
        %v7319 = vrot.slane %v7220, 1
        %v7320 = vrot.slane %v7221, 1
        %v7321 = vsel %vm439, %v7319, %v7320
        %v7322 = vrot.slane %v7224, 1
        %v7323 = vrot.slane %v7225, 1
        %v7324 = vsel %vm439, %v7322, %v7323
        %v7325 = vrot.slane %v7228, 1
        %v7326 = vrot.slane %v7229, 1
        %v7327 = vsel %vm439, %v7325, %v7326
        %v7328 = vrot.slane %v7232, 1
        %v7329 = vrot.slane %v7233, 1
        %v7330 = vsel %vm439, %v7328, %v7329
        %v7331 = vrot.slane %v7236, 1
        %v7332 = vrot.slane %v7237, 1
        %v7333 = vsel %vm439, %v7331, %v7332
        %v7334 = vrot.slane %v7240, 1
        %v7335 = vrot.slane %v7241, 1
        %v7336 = vsel %vm439, %v7334, %v7335
        %v7337 = vrot.slane %v7244, 1
        %v7338 = vrot.slane %v7245, 1
        %v7339 = vsel %vm439, %v7337, %v7338
        %v7340 = vrot.slane %v7248, 1
        %v7341 = vrot.slane %v7249, 1
        %v7342 = vsel %vm439, %v7340, %v7341
        %v7343 = vrot.slane %v7252, 1
        %v7344 = vrot.slane %v7253, 1
        %v7345 = vsel %vm439, %v7343, %v7344
        %v7346 = vrot.slane %v7256, 1
        %v7347 = vrot.slane %v7257, 1
        %v7348 = vsel %vm439, %v7346, %v7347
        %v7349 = vrot.slane %v7260, 1
        %v7350 = vrot.slane %v7261, 1
        %v7351 = vsel %vm439, %v7349, %v7350
        %v7352 = vrot.slane %v7264, 1
        %v7353 = vrot.slane %v7265, 1
        %v7354 = vsel %vm439, %v7352, %v7353
        %7355 = vrot.lane.b32.xlu0 %v7307, 8
        %v7356 = vpop.permute.xlu0 %7355
        %7357 = vrot.lane.b32.xlu0 %v7309, 8
        %v7358 = vpop.permute.xlu0 %7357
        %7359 = vrot.lane.b32.xlu0 %v7308, 8
        %v7360 = vpop.permute.xlu0 %7359
        %7361 = vrot.lane.b32.xlu0 %v7310, 8
        %v7362 = vpop.permute.xlu0 %7361
        %7363 = vrot.lane.b32.xlu0 %v7312, 8
        %v7364 = vpop.permute.xlu0 %7363
        %7365 = vrot.lane.b32.xlu0 %v7311, 8
        %v7366 = vpop.permute.xlu0 %7365
        %7367 = vrot.lane.b32.xlu0 %v7313, 8
        %v7368 = vpop.permute.xlu0 %7367
        %7369 = vrot.lane.b32.xlu0 %v7315, 8
        %v7370 = vpop.permute.xlu0 %7369
        %7371 = vrot.lane.b32.xlu0 %v7314, 8
        %v7372 = vpop.permute.xlu0 %7371
        %7373 = vrot.lane.b32.xlu0 %v7316, 8
        %v7374 = vpop.permute.xlu0 %7373
        %7375 = vrot.lane.b32.xlu0 %v7318, 8
        %v7376 = vpop.permute.xlu0 %7375
        %7377 = vrot.lane.b32.xlu0 %v7317, 8
        %v7378 = vpop.permute.xlu0 %7377
        %7379 = vrot.lane.b32.xlu0 %v7319, 8
        %v7380 = vpop.permute.xlu0 %7379
        %7381 = vrot.lane.b32.xlu0 %v7321, 8
        %v7382 = vpop.permute.xlu0 %7381
        %7383 = vrot.lane.b32.xlu0 %v7320, 8
        %v7384 = vpop.permute.xlu0 %7383
        %7385 = vrot.lane.b32.xlu0 %v7322, 8
        %v7386 = vpop.permute.xlu0 %7385
        %7387 = vrot.lane.b32.xlu0 %v7324, 8
        %v7388 = vpop.permute.xlu0 %7387
        %7389 = vrot.lane.b32.xlu0 %v7323, 8
        %v7390 = vpop.permute.xlu0 %7389
        %7391 = vrot.lane.b32.xlu0 %v7325, 8
        %v7392 = vpop.permute.xlu0 %7391
        %7393 = vrot.lane.b32.xlu0 %v7327, 8
        %v7394 = vpop.permute.xlu0 %7393
        %7395 = vrot.lane.b32.xlu0 %v7326, 8
        %v7396 = vpop.permute.xlu0 %7395
        %7397 = vrot.lane.b32.xlu0 %v7328, 8
        %v7398 = vpop.permute.xlu0 %7397
        %7399 = vrot.lane.b32.xlu0 %v7330, 8
        %v7400 = vpop.permute.xlu0 %7399
        %7401 = vrot.lane.b32.xlu0 %v7329, 8
        %v7402 = vpop.permute.xlu0 %7401
        %7403 = vrot.lane.b32.xlu0 %v7331, 8
        %v7404 = vpop.permute.xlu0 %7403
        %7405 = vrot.lane.b32.xlu0 %v7333, 8
        %v7406 = vpop.permute.xlu0 %7405
        %7407 = vrot.lane.b32.xlu0 %v7332, 8
        %v7408 = vpop.permute.xlu0 %7407
        %7409 = vrot.lane.b32.xlu0 %v7334, 8
        %v7410 = vpop.permute.xlu0 %7409
        %7411 = vrot.lane.b32.xlu0 %v7336, 8
        %v7412 = vpop.permute.xlu0 %7411
        %7413 = vrot.lane.b32.xlu0 %v7335, 8
        %v7414 = vpop.permute.xlu0 %7413
        %7415 = vrot.lane.b32.xlu0 %v7337, 8
        %v7416 = vpop.permute.xlu0 %7415
        %7417 = vrot.lane.b32.xlu0 %v7339, 8
        %v7418 = vpop.permute.xlu0 %7417
        %7419 = vrot.lane.b32.xlu0 %v7338, 8
        %v7420 = vpop.permute.xlu0 %7419
        %7421 = vrot.lane.b32.xlu0 %v7340, 8
        %v7422 = vpop.permute.xlu0 %7421
        %7423 = vrot.lane.b32.xlu0 %v7342, 8
        %v7424 = vpop.permute.xlu0 %7423
        %7425 = vrot.lane.b32.xlu0 %v7341, 8
        %v7426 = vpop.permute.xlu0 %7425
        %7427 = vrot.lane.b32.xlu0 %v7343, 8
        %v7428 = vpop.permute.xlu0 %7427
        %7429 = vrot.lane.b32.xlu0 %v7345, 8
        %v7430 = vpop.permute.xlu0 %7429
        %7431 = vrot.lane.b32.xlu0 %v7344, 8
        %v7432 = vpop.permute.xlu0 %7431
        %7433 = vrot.lane.b32.xlu0 %v7346, 8
        %v7434 = vpop.permute.xlu0 %7433
        %7435 = vrot.lane.b32.xlu0 %v7348, 8
        %v7436 = vpop.permute.xlu0 %7435
        %7437 = vrot.lane.b32.xlu0 %v7347, 8
        %v7438 = vpop.permute.xlu0 %7437
        %7439 = vrot.lane.b32.xlu0 %v7349, 8
        %v7440 = vpop.permute.xlu0 %7439
        %7441 = vrot.lane.b32.xlu0 %v7351, 8
        %v7442 = vpop.permute.xlu0 %7441
        %7443 = vrot.lane.b32.xlu0 %v7350, 8
        %v7444 = vpop.permute.xlu0 %7443
        %7445 = vrot.lane.b32.xlu0 %v7352, 8
        %v7446 = vpop.permute.xlu0 %7445
        %7447 = vrot.lane.b32.xlu0 %v7354, 8
        %v7448 = vpop.permute.xlu0 %7447
        %7449 = vrot.lane.b32.xlu0 %v7353, 8
        %v7450 = vpop.permute.xlu0 %7449
        %v7515 = vrot.slane %v7204, 2
        %v7516 = vrot.slane %v7205, 2
        %v7517 = vsel %vm648, %v7515, %v7516
        %v7518 = vrot.slane %v7206, 2
        %v7519 = vsel %vm648, %v7516, %v7518
        %v7520 = vrot.slane %v7208, 2
        %v7521 = vrot.slane %v7209, 2
        %v7522 = vsel %vm648, %v7520, %v7521
        %v7523 = vrot.slane %v7210, 2
        %v7524 = vsel %vm648, %v7521, %v7523
        %v7525 = vrot.slane %v7212, 2
        %v7526 = vrot.slane %v7213, 2
        %v7527 = vsel %vm648, %v7525, %v7526
        %v7528 = vrot.slane %v7214, 2
        %v7529 = vsel %vm648, %v7526, %v7528
        %v7530 = vrot.slane %v7216, 2
        %v7531 = vrot.slane %v7217, 2
        %v7532 = vsel %vm648, %v7530, %v7531
        %v7533 = vrot.slane %v7218, 2
        %v7534 = vsel %vm648, %v7531, %v7533
        %v7535 = vrot.slane %v7220, 2
        %v7536 = vrot.slane %v7221, 2
        %v7537 = vsel %vm648, %v7535, %v7536
        %v7538 = vrot.slane %v7222, 2
        %v7539 = vsel %vm648, %v7536, %v7538
        %v7540 = vrot.slane %v7224, 2
        %v7541 = vrot.slane %v7225, 2
        %v7542 = vsel %vm648, %v7540, %v7541
        %v7543 = vrot.slane %v7226, 2
        %v7544 = vsel %vm648, %v7541, %v7543
        %v7545 = vrot.slane %v7228, 2
        %v7546 = vrot.slane %v7229, 2
        %v7547 = vsel %vm648, %v7545, %v7546
        %v7548 = vrot.slane %v7230, 2
        %v7549 = vsel %vm648, %v7546, %v7548
        %v7550 = vrot.slane %v7232, 2
        %v7551 = vrot.slane %v7233, 2
        %v7552 = vsel %vm648, %v7550, %v7551
        %v7553 = vrot.slane %v7234, 2
        %v7554 = vsel %vm648, %v7551, %v7553
        %v7555 = vrot.slane %v7236, 2
        %v7556 = vrot.slane %v7237, 2
        %v7557 = vsel %vm648, %v7555, %v7556
        %v7558 = vrot.slane %v7238, 2
        %v7559 = vsel %vm648, %v7556, %v7558
        %v7560 = vrot.slane %v7240, 2
        %v7561 = vrot.slane %v7241, 2
        %v7562 = vsel %vm648, %v7560, %v7561
        %v7563 = vrot.slane %v7242, 2
        %v7564 = vsel %vm648, %v7561, %v7563
        %v7565 = vrot.slane %v7244, 2
        %v7566 = vrot.slane %v7245, 2
        %v7567 = vsel %vm648, %v7565, %v7566
        %v7568 = vrot.slane %v7246, 2
        %v7569 = vsel %vm648, %v7566, %v7568
        %v7570 = vrot.slane %v7248, 2
        %v7571 = vrot.slane %v7249, 2
        %v7572 = vsel %vm648, %v7570, %v7571
        %v7573 = vrot.slane %v7250, 2
        %v7574 = vsel %vm648, %v7571, %v7573
        %v7575 = vrot.slane %v7252, 2
        %v7576 = vrot.slane %v7253, 2
        %v7577 = vsel %vm648, %v7575, %v7576
        %v7578 = vrot.slane %v7254, 2
        %v7579 = vsel %vm648, %v7576, %v7578
        %v7580 = vrot.slane %v7256, 2
        %v7581 = vrot.slane %v7257, 2
        %v7582 = vsel %vm648, %v7580, %v7581
        %v7583 = vrot.slane %v7258, 2
        %v7584 = vsel %vm648, %v7581, %v7583
        %v7585 = vrot.slane %v7260, 2
        %v7586 = vrot.slane %v7261, 2
        %v7587 = vsel %vm648, %v7585, %v7586
        %v7588 = vrot.slane %v7262, 2
        %v7589 = vsel %vm648, %v7586, %v7588
        %v7590 = vrot.slane %v7264, 2
        %v7591 = vrot.slane %v7265, 2
        %v7592 = vsel %vm648, %v7590, %v7591
        %v7593 = vrot.slane %v7266, 2
        %v7594 = vsel %vm648, %v7591, %v7593
        %7595 = vrot.lane.b32.xlu0 %v7515, 16
        %v7596 = vpop.permute.xlu0 %7595
        %7597 = vrot.lane.b32.xlu0 %v7517, 16
        %v7598 = vpop.permute.xlu0 %7597
        %7599 = vrot.lane.b32.xlu0 %v7519, 16
        %v7600 = vpop.permute.xlu0 %7599
        %7601 = vrot.lane.b32.xlu0 %v7520, 16
        %v7602 = vpop.permute.xlu0 %7601
        %7603 = vrot.lane.b32.xlu0 %v7522, 16
        %v7604 = vpop.permute.xlu0 %7603
        %7605 = vrot.lane.b32.xlu0 %v7524, 16
        %v7606 = vpop.permute.xlu0 %7605
        %7607 = vrot.lane.b32.xlu0 %v7525, 16
        %v7608 = vpop.permute.xlu0 %7607
        %7609 = vrot.lane.b32.xlu0 %v7527, 16
        %v7610 = vpop.permute.xlu0 %7609
        %7611 = vrot.lane.b32.xlu0 %v7529, 16
        %v7612 = vpop.permute.xlu0 %7611
        %7613 = vrot.lane.b32.xlu0 %v7530, 16
        %v7614 = vpop.permute.xlu0 %7613
        %7615 = vrot.lane.b32.xlu0 %v7532, 16
        %v7616 = vpop.permute.xlu0 %7615
        %7617 = vrot.lane.b32.xlu0 %v7534, 16
        %v7618 = vpop.permute.xlu0 %7617
        %7619 = vrot.lane.b32.xlu0 %v7535, 16
        %v7620 = vpop.permute.xlu0 %7619
        %7621 = vrot.lane.b32.xlu0 %v7537, 16
        %v7622 = vpop.permute.xlu0 %7621
        %7623 = vrot.lane.b32.xlu0 %v7539, 16
        %v7624 = vpop.permute.xlu0 %7623
        %7625 = vrot.lane.b32.xlu0 %v7540, 16
        %v7626 = vpop.permute.xlu0 %7625
        %7627 = vrot.lane.b32.xlu0 %v7542, 16
        %v7628 = vpop.permute.xlu0 %7627
        %7629 = vrot.lane.b32.xlu0 %v7544, 16
        %v7630 = vpop.permute.xlu0 %7629
        %7631 = vrot.lane.b32.xlu0 %v7545, 16
        %v7632 = vpop.permute.xlu0 %7631
        %7633 = vrot.lane.b32.xlu0 %v7547, 16
        %v7634 = vpop.permute.xlu0 %7633
        %7635 = vrot.lane.b32.xlu0 %v7549, 16
        %v7636 = vpop.permute.xlu0 %7635
        %7637 = vrot.lane.b32.xlu0 %v7550, 16
        %v7638 = vpop.permute.xlu0 %7637
        %7639 = vrot.lane.b32.xlu0 %v7552, 16
        %v7640 = vpop.permute.xlu0 %7639
        %7641 = vrot.lane.b32.xlu0 %v7554, 16
        %v7642 = vpop.permute.xlu0 %7641
        %7643 = vrot.lane.b32.xlu0 %v7555, 16
        %v7644 = vpop.permute.xlu0 %7643
        %7645 = vrot.lane.b32.xlu0 %v7557, 16
        %v7646 = vpop.permute.xlu0 %7645
        %7647 = vrot.lane.b32.xlu0 %v7559, 16
        %v7648 = vpop.permute.xlu0 %7647
        %7649 = vrot.lane.b32.xlu0 %v7560, 16
        %v7650 = vpop.permute.xlu0 %7649
        %7651 = vrot.lane.b32.xlu0 %v7562, 16
        %v7652 = vpop.permute.xlu0 %7651
        %7653 = vrot.lane.b32.xlu0 %v7564, 16
        %v7654 = vpop.permute.xlu0 %7653
        %7655 = vrot.lane.b32.xlu0 %v7565, 16
        %v7656 = vpop.permute.xlu0 %7655
        %7657 = vrot.lane.b32.xlu0 %v7567, 16
        %v7658 = vpop.permute.xlu0 %7657
        %7659 = vrot.lane.b32.xlu0 %v7569, 16
        %v7660 = vpop.permute.xlu0 %7659
        %7661 = vrot.lane.b32.xlu0 %v7570, 16
        %v7662 = vpop.permute.xlu0 %7661
        %7663 = vrot.lane.b32.xlu0 %v7572, 16
        %v7664 = vpop.permute.xlu0 %7663
        %7665 = vrot.lane.b32.xlu0 %v7574, 16
        %v7666 = vpop.permute.xlu0 %7665
        %7667 = vrot.lane.b32.xlu0 %v7575, 16
        %v7668 = vpop.permute.xlu0 %7667
        %7669 = vrot.lane.b32.xlu0 %v7577, 16
        %v7670 = vpop.permute.xlu0 %7669
        %7671 = vrot.lane.b32.xlu0 %v7579, 16
        %v7672 = vpop.permute.xlu0 %7671
        %7673 = vrot.lane.b32.xlu0 %v7580, 16
        %v7674 = vpop.permute.xlu0 %7673
        %7675 = vrot.lane.b32.xlu0 %v7582, 16
        %v7676 = vpop.permute.xlu0 %7675
        %7677 = vrot.lane.b32.xlu0 %v7584, 16
        %v7678 = vpop.permute.xlu0 %7677
        %7679 = vrot.lane.b32.xlu0 %v7585, 16
        %v7680 = vpop.permute.xlu0 %7679
        %7681 = vrot.lane.b32.xlu0 %v7587, 16
        %v7682 = vpop.permute.xlu0 %7681
        %7683 = vrot.lane.b32.xlu0 %v7589, 16
        %v7684 = vpop.permute.xlu0 %7683
        %7685 = vrot.lane.b32.xlu0 %v7590, 16
        %v7686 = vpop.permute.xlu0 %7685
        %7687 = vrot.lane.b32.xlu0 %v7592, 16
        %v7688 = vpop.permute.xlu0 %7687
        %7689 = vrot.lane.b32.xlu0 %v7594, 16
        %v7690 = vpop.permute.xlu0 %7689
        %7757 = vrot.lane.b32.xlu0 %v7207, 24
        %v7758 = vpop.permute.xlu0 %7757
        %7759 = vrot.lane.b32.xlu0 %v7208, 24
        %v7760 = vpop.permute.xlu0 %7759
        %7761 = vrot.lane.b32.xlu0 %v7209, 24
        %v7762 = vpop.permute.xlu0 %7761
        %7763 = vrot.lane.b32.xlu0 %v7211, 24
        %v7764 = vpop.permute.xlu0 %7763
        %7765 = vrot.lane.b32.xlu0 %v7212, 24
        %v7766 = vpop.permute.xlu0 %7765
        %7767 = vrot.lane.b32.xlu0 %v7213, 24
        %v7768 = vpop.permute.xlu0 %7767
        %7769 = vrot.lane.b32.xlu0 %v7215, 24
        %v7770 = vpop.permute.xlu0 %7769
        %7771 = vrot.lane.b32.xlu0 %v7216, 24
        %v7772 = vpop.permute.xlu0 %7771
        %7773 = vrot.lane.b32.xlu0 %v7217, 24
        %v7774 = vpop.permute.xlu0 %7773
        %7775 = vrot.lane.b32.xlu0 %v7219, 24
        %v7776 = vpop.permute.xlu0 %7775
        %7777 = vrot.lane.b32.xlu0 %v7220, 24
        %v7778 = vpop.permute.xlu0 %7777
        %7779 = vrot.lane.b32.xlu0 %v7221, 24
        %v7780 = vpop.permute.xlu0 %7779
        %7781 = vrot.lane.b32.xlu0 %v7223, 24
        %v7782 = vpop.permute.xlu0 %7781
        %7783 = vrot.lane.b32.xlu0 %v7224, 24
        %v7784 = vpop.permute.xlu0 %7783
        %7785 = vrot.lane.b32.xlu0 %v7225, 24
        %v7786 = vpop.permute.xlu0 %7785
        %7787 = vrot.lane.b32.xlu0 %v7227, 24
        %v7788 = vpop.permute.xlu0 %7787
        %7789 = vrot.lane.b32.xlu0 %v7228, 24
        %v7790 = vpop.permute.xlu0 %7789
        %7791 = vrot.lane.b32.xlu0 %v7229, 24
        %v7792 = vpop.permute.xlu0 %7791
        %7793 = vrot.lane.b32.xlu0 %v7231, 24
        %v7794 = vpop.permute.xlu0 %7793
        %7795 = vrot.lane.b32.xlu0 %v7232, 24
        %v7796 = vpop.permute.xlu0 %7795
        %7797 = vrot.lane.b32.xlu0 %v7233, 24
        %v7798 = vpop.permute.xlu0 %7797
        %7799 = vrot.lane.b32.xlu0 %v7235, 24
        %v7800 = vpop.permute.xlu0 %7799
        %7801 = vrot.lane.b32.xlu0 %v7236, 24
        %v7802 = vpop.permute.xlu0 %7801
        %7803 = vrot.lane.b32.xlu0 %v7237, 24
        %v7804 = vpop.permute.xlu0 %7803
        %7805 = vrot.lane.b32.xlu0 %v7239, 24
        %v7806 = vpop.permute.xlu0 %7805
        %7807 = vrot.lane.b32.xlu0 %v7240, 24
        %v7808 = vpop.permute.xlu0 %7807
        %7809 = vrot.lane.b32.xlu0 %v7241, 24
        %v7810 = vpop.permute.xlu0 %7809
        %7811 = vrot.lane.b32.xlu0 %v7243, 24
        %v7812 = vpop.permute.xlu0 %7811
        %7813 = vrot.lane.b32.xlu0 %v7244, 24
        %v7814 = vpop.permute.xlu0 %7813
        %7815 = vrot.lane.b32.xlu0 %v7245, 24
        %v7816 = vpop.permute.xlu0 %7815
        %7817 = vrot.lane.b32.xlu0 %v7247, 24
        %v7818 = vpop.permute.xlu0 %7817
        %7819 = vrot.lane.b32.xlu0 %v7248, 24
        %v7820 = vpop.permute.xlu0 %7819
        %7821 = vrot.lane.b32.xlu0 %v7249, 24
        %v7822 = vpop.permute.xlu0 %7821
        %7823 = vrot.lane.b32.xlu0 %v7251, 24
        %v7824 = vpop.permute.xlu0 %7823
        %7825 = vrot.lane.b32.xlu0 %v7252, 24
        %v7826 = vpop.permute.xlu0 %7825
        %7827 = vrot.lane.b32.xlu0 %v7253, 24
        %v7828 = vpop.permute.xlu0 %7827
        %7829 = vrot.lane.b32.xlu0 %v7255, 24
        %v7830 = vpop.permute.xlu0 %7829
        %7831 = vrot.lane.b32.xlu0 %v7256, 24
        %v7832 = vpop.permute.xlu0 %7831
        %7833 = vrot.lane.b32.xlu0 %v7257, 24
        %v7834 = vpop.permute.xlu0 %7833
        %7835 = vrot.lane.b32.xlu0 %v7259, 24
        %v7836 = vpop.permute.xlu0 %7835
        %7837 = vrot.lane.b32.xlu0 %v7260, 24
        %v7838 = vpop.permute.xlu0 %7837
        %7839 = vrot.lane.b32.xlu0 %v7261, 24
        %v7840 = vpop.permute.xlu0 %7839
        %7841 = vrot.lane.b32.xlu0 %v7263, 24
        %v7842 = vpop.permute.xlu0 %7841
        %7843 = vrot.lane.b32.xlu0 %v7264, 24
        %v7844 = vpop.permute.xlu0 %7843
        %7845 = vrot.lane.b32.xlu0 %v7265, 24
        %v7846 = vpop.permute.xlu0 %7845
        %7847 = vrot.lane.b32.xlu0 %v7267, 24
        %v7848 = vpop.permute.xlu0 %7847
        %7849 = vrot.lane.b32.xlu0 %v7268, 24
        %v7850 = vpop.permute.xlu0 %7849
        %7851 = vrot.lane.b32.xlu0 %v7269, 24
        %v7852 = vpop.permute.xlu0 %7851
        %v7901 = vrot.slane %v7268, 1
        %v7902 = vrot.slane %v7269, 1
        %v7903 = vsel %vm439, %v7901, %v7902
        %7904 = vrot.lane.b32.xlu0 %v7310, 32
        %v7905 = vpop.permute.xlu0 %7904
        %7906 = vrot.lane.b32.xlu0 %v7312, 32
        %v7907 = vpop.permute.xlu0 %7906
        %7908 = vrot.lane.b32.xlu0 %v7311, 32
        %v7909 = vpop.permute.xlu0 %7908
        %7910 = vrot.lane.b32.xlu0 %v7313, 32
        %v7911 = vpop.permute.xlu0 %7910
        %7912 = vrot.lane.b32.xlu0 %v7315, 32
        %v7913 = vpop.permute.xlu0 %7912
        %7914 = vrot.lane.b32.xlu0 %v7314, 32
        %v7915 = vpop.permute.xlu0 %7914
        %7916 = vrot.lane.b32.xlu0 %v7316, 32
        %v7917 = vpop.permute.xlu0 %7916
        %7918 = vrot.lane.b32.xlu0 %v7318, 32
        %v7919 = vpop.permute.xlu0 %7918
        %7920 = vrot.lane.b32.xlu0 %v7317, 32
        %v7921 = vpop.permute.xlu0 %7920
        %7922 = vrot.lane.b32.xlu0 %v7319, 32
        %v7923 = vpop.permute.xlu0 %7922
        %7924 = vrot.lane.b32.xlu0 %v7321, 32
        %v7925 = vpop.permute.xlu0 %7924
        %7926 = vrot.lane.b32.xlu0 %v7320, 32
        %v7927 = vpop.permute.xlu0 %7926
        %7928 = vrot.lane.b32.xlu0 %v7322, 32
        %v7929 = vpop.permute.xlu0 %7928
        %7930 = vrot.lane.b32.xlu0 %v7324, 32
        %v7931 = vpop.permute.xlu0 %7930
        %7932 = vrot.lane.b32.xlu0 %v7323, 32
        %v7933 = vpop.permute.xlu0 %7932
        %7934 = vrot.lane.b32.xlu0 %v7325, 32
        %v7935 = vpop.permute.xlu0 %7934
        %7936 = vrot.lane.b32.xlu0 %v7327, 32
        %v7937 = vpop.permute.xlu0 %7936
        %7938 = vrot.lane.b32.xlu0 %v7326, 32
        %v7939 = vpop.permute.xlu0 %7938
        %7940 = vrot.lane.b32.xlu0 %v7328, 32
        %v7941 = vpop.permute.xlu0 %7940
        %7942 = vrot.lane.b32.xlu0 %v7330, 32
        %v7943 = vpop.permute.xlu0 %7942
        %7944 = vrot.lane.b32.xlu0 %v7329, 32
        %v7945 = vpop.permute.xlu0 %7944
        %7946 = vrot.lane.b32.xlu0 %v7331, 32
        %v7947 = vpop.permute.xlu0 %7946
        %7948 = vrot.lane.b32.xlu0 %v7333, 32
        %v7949 = vpop.permute.xlu0 %7948
        %7950 = vrot.lane.b32.xlu0 %v7332, 32
        %v7951 = vpop.permute.xlu0 %7950
        %7952 = vrot.lane.b32.xlu0 %v7334, 32
        %v7953 = vpop.permute.xlu0 %7952
        %7954 = vrot.lane.b32.xlu0 %v7336, 32
        %v7955 = vpop.permute.xlu0 %7954
        %7956 = vrot.lane.b32.xlu0 %v7335, 32
        %v7957 = vpop.permute.xlu0 %7956
        %7958 = vrot.lane.b32.xlu0 %v7337, 32
        %v7959 = vpop.permute.xlu0 %7958
        %7960 = vrot.lane.b32.xlu0 %v7339, 32
        %v7961 = vpop.permute.xlu0 %7960
        %7962 = vrot.lane.b32.xlu0 %v7338, 32
        %v7963 = vpop.permute.xlu0 %7962
        %7964 = vrot.lane.b32.xlu0 %v7340, 32
        %v7965 = vpop.permute.xlu0 %7964
        %7966 = vrot.lane.b32.xlu0 %v7342, 32
        %v7967 = vpop.permute.xlu0 %7966
        %7968 = vrot.lane.b32.xlu0 %v7341, 32
        %v7969 = vpop.permute.xlu0 %7968
        %7970 = vrot.lane.b32.xlu0 %v7343, 32
        %v7971 = vpop.permute.xlu0 %7970
        %7972 = vrot.lane.b32.xlu0 %v7345, 32
        %v7973 = vpop.permute.xlu0 %7972
        %7974 = vrot.lane.b32.xlu0 %v7344, 32
        %v7975 = vpop.permute.xlu0 %7974
        %7976 = vrot.lane.b32.xlu0 %v7346, 32
        %v7977 = vpop.permute.xlu0 %7976
        %7978 = vrot.lane.b32.xlu0 %v7348, 32
        %v7979 = vpop.permute.xlu0 %7978
        %7980 = vrot.lane.b32.xlu0 %v7347, 32
        %v7981 = vpop.permute.xlu0 %7980
        %7982 = vrot.lane.b32.xlu0 %v7349, 32
        %v7983 = vpop.permute.xlu0 %7982
        %7984 = vrot.lane.b32.xlu0 %v7351, 32
        %v7985 = vpop.permute.xlu0 %7984
        %7986 = vrot.lane.b32.xlu0 %v7350, 32
        %v7987 = vpop.permute.xlu0 %7986
        %7988 = vrot.lane.b32.xlu0 %v7352, 32
        %v7989 = vpop.permute.xlu0 %7988
        %7990 = vrot.lane.b32.xlu0 %v7354, 32
        %v7991 = vpop.permute.xlu0 %7990
        %7992 = vrot.lane.b32.xlu0 %v7353, 32
        %v7993 = vpop.permute.xlu0 %7992
        %7994 = vrot.lane.b32.xlu0 %v7901, 32
        %v7995 = vpop.permute.xlu0 %7994
        %7996 = vrot.lane.b32.xlu0 %v7903, 32
        %v7997 = vpop.permute.xlu0 %7996
        %7998 = vrot.lane.b32.xlu0 %v7902, 32
        %v7999 = vpop.permute.xlu0 %7998
        %v8049 = vrot.slane %v7268, 2
        %v8050 = vrot.slane %v7269, 2
        %v8051 = vsel %vm648, %v8049, %v8050
        %v8052 = vrot.slane %v7270, 2
        %v8053 = vsel %vm648, %v8050, %v8052
        %8054 = vrot.lane.b32.xlu0 %v7520, 40
        %v8055 = vpop.permute.xlu0 %8054
        %8056 = vrot.lane.b32.xlu0 %v7522, 40
        %v8057 = vpop.permute.xlu0 %8056
        %8058 = vrot.lane.b32.xlu0 %v7524, 40
        %v8059 = vpop.permute.xlu0 %8058
        %8060 = vrot.lane.b32.xlu0 %v7525, 40
        %v8061 = vpop.permute.xlu0 %8060
        %8062 = vrot.lane.b32.xlu0 %v7527, 40
        %v8063 = vpop.permute.xlu0 %8062
        %8064 = vrot.lane.b32.xlu0 %v7529, 40
        %v8065 = vpop.permute.xlu0 %8064
        %8066 = vrot.lane.b32.xlu0 %v7530, 40
        %v8067 = vpop.permute.xlu0 %8066
        %8068 = vrot.lane.b32.xlu0 %v7532, 40
        %v8069 = vpop.permute.xlu0 %8068
        %8070 = vrot.lane.b32.xlu0 %v7534, 40
        %v8071 = vpop.permute.xlu0 %8070
        %8072 = vrot.lane.b32.xlu0 %v7535, 40
        %v8073 = vpop.permute.xlu0 %8072
        %8074 = vrot.lane.b32.xlu0 %v7537, 40
        %v8075 = vpop.permute.xlu0 %8074
        %8076 = vrot.lane.b32.xlu0 %v7539, 40
        %v8077 = vpop.permute.xlu0 %8076
        %8078 = vrot.lane.b32.xlu0 %v7540, 40
        %v8079 = vpop.permute.xlu0 %8078
        %8080 = vrot.lane.b32.xlu0 %v7542, 40
        %v8081 = vpop.permute.xlu0 %8080
        %8082 = vrot.lane.b32.xlu0 %v7544, 40
        %v8083 = vpop.permute.xlu0 %8082
        %8084 = vrot.lane.b32.xlu0 %v7545, 40
        %v8085 = vpop.permute.xlu0 %8084
        %8086 = vrot.lane.b32.xlu0 %v7547, 40
        %v8087 = vpop.permute.xlu0 %8086
        %8088 = vrot.lane.b32.xlu0 %v7549, 40
        %v8089 = vpop.permute.xlu0 %8088
        %8090 = vrot.lane.b32.xlu0 %v7550, 40
        %v8091 = vpop.permute.xlu0 %8090
        %8092 = vrot.lane.b32.xlu0 %v7552, 40
        %v8093 = vpop.permute.xlu0 %8092
        %8094 = vrot.lane.b32.xlu0 %v7554, 40
        %v8095 = vpop.permute.xlu0 %8094
        %8096 = vrot.lane.b32.xlu0 %v7555, 40
        %v8097 = vpop.permute.xlu0 %8096
        %8098 = vrot.lane.b32.xlu0 %v7557, 40
        %v8099 = vpop.permute.xlu0 %8098
        %8100 = vrot.lane.b32.xlu0 %v7559, 40
        %v8101 = vpop.permute.xlu0 %8100
        %8102 = vrot.lane.b32.xlu0 %v7560, 40
        %v8103 = vpop.permute.xlu0 %8102
        %8104 = vrot.lane.b32.xlu0 %v7562, 40
        %v8105 = vpop.permute.xlu0 %8104
        %8106 = vrot.lane.b32.xlu0 %v7564, 40
        %v8107 = vpop.permute.xlu0 %8106
        %8108 = vrot.lane.b32.xlu0 %v7565, 40
        %v8109 = vpop.permute.xlu0 %8108
        %8110 = vrot.lane.b32.xlu0 %v7567, 40
        %v8111 = vpop.permute.xlu0 %8110
        %8112 = vrot.lane.b32.xlu0 %v7569, 40
        %v8113 = vpop.permute.xlu0 %8112
        %8114 = vrot.lane.b32.xlu0 %v7570, 40
        %v8115 = vpop.permute.xlu0 %8114
        %8116 = vrot.lane.b32.xlu0 %v7572, 40
        %v8117 = vpop.permute.xlu0 %8116
        %8118 = vrot.lane.b32.xlu0 %v7574, 40
        %v8119 = vpop.permute.xlu0 %8118
        %8120 = vrot.lane.b32.xlu0 %v7575, 40
        %v8121 = vpop.permute.xlu0 %8120
        %8122 = vrot.lane.b32.xlu0 %v7577, 40
        %v8123 = vpop.permute.xlu0 %8122
        %8124 = vrot.lane.b32.xlu0 %v7579, 40
        %v8125 = vpop.permute.xlu0 %8124
        %8126 = vrot.lane.b32.xlu0 %v7580, 40
        %v8127 = vpop.permute.xlu0 %8126
        %8128 = vrot.lane.b32.xlu0 %v7582, 40
        %v8129 = vpop.permute.xlu0 %8128
        %8130 = vrot.lane.b32.xlu0 %v7584, 40
        %v8131 = vpop.permute.xlu0 %8130
        %8132 = vrot.lane.b32.xlu0 %v7585, 40
        %v8133 = vpop.permute.xlu0 %8132
        %8134 = vrot.lane.b32.xlu0 %v7587, 40
        %v8135 = vpop.permute.xlu0 %8134
        %8136 = vrot.lane.b32.xlu0 %v7589, 40
        %v8137 = vpop.permute.xlu0 %8136
        %8138 = vrot.lane.b32.xlu0 %v7590, 40
        %v8139 = vpop.permute.xlu0 %8138
        %8140 = vrot.lane.b32.xlu0 %v7592, 40
        %v8141 = vpop.permute.xlu0 %8140
        %8142 = vrot.lane.b32.xlu0 %v7594, 40
        %v8143 = vpop.permute.xlu0 %8142
        %8144 = vrot.lane.b32.xlu0 %v8049, 40
        %v8145 = vpop.permute.xlu0 %8144
        %8146 = vrot.lane.b32.xlu0 %v8051, 40
        %v8147 = vpop.permute.xlu0 %8146
        %8148 = vrot.lane.b32.xlu0 %v8053, 40
        %v8149 = vpop.permute.xlu0 %8148
        %8201 = vrot.lane.b32.xlu0 %v7211, 48
        %v8202 = vpop.permute.xlu0 %8201
        %8203 = vrot.lane.b32.xlu0 %v7212, 48
        %v8204 = vpop.permute.xlu0 %8203
        %8205 = vrot.lane.b32.xlu0 %v7213, 48
        %v8206 = vpop.permute.xlu0 %8205
        %8207 = vrot.lane.b32.xlu0 %v7215, 48
        %v8208 = vpop.permute.xlu0 %8207
        %8209 = vrot.lane.b32.xlu0 %v7216, 48
        %v8210 = vpop.permute.xlu0 %8209
        %8211 = vrot.lane.b32.xlu0 %v7217, 48
        %v8212 = vpop.permute.xlu0 %8211
        %8213 = vrot.lane.b32.xlu0 %v7219, 48
        %v8214 = vpop.permute.xlu0 %8213
        %8215 = vrot.lane.b32.xlu0 %v7220, 48
        %v8216 = vpop.permute.xlu0 %8215
        %8217 = vrot.lane.b32.xlu0 %v7221, 48
        %v8218 = vpop.permute.xlu0 %8217
        %8219 = vrot.lane.b32.xlu0 %v7223, 48
        %v8220 = vpop.permute.xlu0 %8219
        %8221 = vrot.lane.b32.xlu0 %v7224, 48
        %v8222 = vpop.permute.xlu0 %8221
        %8223 = vrot.lane.b32.xlu0 %v7225, 48
        %v8224 = vpop.permute.xlu0 %8223
        %8225 = vrot.lane.b32.xlu0 %v7227, 48
        %v8226 = vpop.permute.xlu0 %8225
        %8227 = vrot.lane.b32.xlu0 %v7228, 48
        %v8228 = vpop.permute.xlu0 %8227
        %8229 = vrot.lane.b32.xlu0 %v7229, 48
        %v8230 = vpop.permute.xlu0 %8229
        %8231 = vrot.lane.b32.xlu0 %v7231, 48
        %v8232 = vpop.permute.xlu0 %8231
        %8233 = vrot.lane.b32.xlu0 %v7232, 48
        %v8234 = vpop.permute.xlu0 %8233
        %8235 = vrot.lane.b32.xlu0 %v7233, 48
        %v8236 = vpop.permute.xlu0 %8235
        %8237 = vrot.lane.b32.xlu0 %v7235, 48
        %v8238 = vpop.permute.xlu0 %8237
        %8239 = vrot.lane.b32.xlu0 %v7236, 48
        %v8240 = vpop.permute.xlu0 %8239
        %8241 = vrot.lane.b32.xlu0 %v7237, 48
        %v8242 = vpop.permute.xlu0 %8241
        %8243 = vrot.lane.b32.xlu0 %v7239, 48
        %v8244 = vpop.permute.xlu0 %8243
        %8245 = vrot.lane.b32.xlu0 %v7240, 48
        %v8246 = vpop.permute.xlu0 %8245
        %8247 = vrot.lane.b32.xlu0 %v7241, 48
        %v8248 = vpop.permute.xlu0 %8247
        %8249 = vrot.lane.b32.xlu0 %v7243, 48
        %v8250 = vpop.permute.xlu0 %8249
        %8251 = vrot.lane.b32.xlu0 %v7244, 48
        %v8252 = vpop.permute.xlu0 %8251
        %8253 = vrot.lane.b32.xlu0 %v7245, 48
        %v8254 = vpop.permute.xlu0 %8253
        %8255 = vrot.lane.b32.xlu0 %v7247, 48
        %v8256 = vpop.permute.xlu0 %8255
        %8257 = vrot.lane.b32.xlu0 %v7248, 48
        %v8258 = vpop.permute.xlu0 %8257
        %8259 = vrot.lane.b32.xlu0 %v7249, 48
        %v8260 = vpop.permute.xlu0 %8259
        %8261 = vrot.lane.b32.xlu0 %v7251, 48
        %v8262 = vpop.permute.xlu0 %8261
        %8263 = vrot.lane.b32.xlu0 %v7252, 48
        %v8264 = vpop.permute.xlu0 %8263
        %8265 = vrot.lane.b32.xlu0 %v7253, 48
        %v8266 = vpop.permute.xlu0 %8265
        %8267 = vrot.lane.b32.xlu0 %v7255, 48
        %v8268 = vpop.permute.xlu0 %8267
        %8269 = vrot.lane.b32.xlu0 %v7256, 48
        %v8270 = vpop.permute.xlu0 %8269
        %8271 = vrot.lane.b32.xlu0 %v7257, 48
        %v8272 = vpop.permute.xlu0 %8271
        %8273 = vrot.lane.b32.xlu0 %v7259, 48
        %v8274 = vpop.permute.xlu0 %8273
        %8275 = vrot.lane.b32.xlu0 %v7260, 48
        %v8276 = vpop.permute.xlu0 %8275
        %8277 = vrot.lane.b32.xlu0 %v7261, 48
        %v8278 = vpop.permute.xlu0 %8277
        %8279 = vrot.lane.b32.xlu0 %v7263, 48
        %v8280 = vpop.permute.xlu0 %8279
        %8281 = vrot.lane.b32.xlu0 %v7264, 48
        %v8282 = vpop.permute.xlu0 %8281
        %8283 = vrot.lane.b32.xlu0 %v7265, 48
        %v8284 = vpop.permute.xlu0 %8283
        %8285 = vrot.lane.b32.xlu0 %v7267, 48
        %v8286 = vpop.permute.xlu0 %8285
        %8287 = vrot.lane.b32.xlu0 %v7268, 48
        %v8288 = vpop.permute.xlu0 %8287
        %8289 = vrot.lane.b32.xlu0 %v7269, 48
        %v8290 = vpop.permute.xlu0 %8289
        %8291 = vrot.lane.b32.xlu0 %v7271, 48
        %v8292 = vpop.permute.xlu0 %8291
        %8293 = vrot.lane.b32.xlu0 %v7272, 48
        %v8294 = vpop.permute.xlu0 %8293
        %8295 = vrot.lane.b32.xlu0 %v7273, 48
        %v8296 = vpop.permute.xlu0 %8295
        %v8345 = vrot.slane %v7272, 1
        %v8346 = vrot.slane %v7273, 1
        %v8347 = vsel %vm439, %v8345, %v8346
        %8348 = vrot.lane.b32.xlu0 %v7313, 56
        %v8349 = vpop.permute.xlu0 %8348
        %8350 = vrot.lane.b32.xlu0 %v7315, 56
        %v8351 = vpop.permute.xlu0 %8350
        %8352 = vrot.lane.b32.xlu0 %v7314, 56
        %v8353 = vpop.permute.xlu0 %8352
        %8354 = vrot.lane.b32.xlu0 %v7316, 56
        %v8355 = vpop.permute.xlu0 %8354
        %8356 = vrot.lane.b32.xlu0 %v7318, 56
        %v8357 = vpop.permute.xlu0 %8356
        %8358 = vrot.lane.b32.xlu0 %v7317, 56
        %v8359 = vpop.permute.xlu0 %8358
        %8360 = vrot.lane.b32.xlu0 %v7319, 56
        %v8361 = vpop.permute.xlu0 %8360
        %8362 = vrot.lane.b32.xlu0 %v7321, 56
        %v8363 = vpop.permute.xlu0 %8362
        %8364 = vrot.lane.b32.xlu0 %v7320, 56
        %v8365 = vpop.permute.xlu0 %8364
        %8366 = vrot.lane.b32.xlu0 %v7322, 56
        %v8367 = vpop.permute.xlu0 %8366
        %8368 = vrot.lane.b32.xlu0 %v7324, 56
        %v8369 = vpop.permute.xlu0 %8368
        %8370 = vrot.lane.b32.xlu0 %v7323, 56
        %v8371 = vpop.permute.xlu0 %8370
        %8372 = vrot.lane.b32.xlu0 %v7325, 56
        %v8373 = vpop.permute.xlu0 %8372
        %8374 = vrot.lane.b32.xlu0 %v7327, 56
        %v8375 = vpop.permute.xlu0 %8374
        %8376 = vrot.lane.b32.xlu0 %v7326, 56
        %v8377 = vpop.permute.xlu0 %8376
        %8378 = vrot.lane.b32.xlu0 %v7328, 56
        %v8379 = vpop.permute.xlu0 %8378
        %8380 = vrot.lane.b32.xlu0 %v7330, 56
        %v8381 = vpop.permute.xlu0 %8380
        %8382 = vrot.lane.b32.xlu0 %v7329, 56
        %v8383 = vpop.permute.xlu0 %8382
        %8384 = vrot.lane.b32.xlu0 %v7331, 56
        %v8385 = vpop.permute.xlu0 %8384
        %8386 = vrot.lane.b32.xlu0 %v7333, 56
        %v8387 = vpop.permute.xlu0 %8386
        %8388 = vrot.lane.b32.xlu0 %v7332, 56
        %v8389 = vpop.permute.xlu0 %8388
        %8390 = vrot.lane.b32.xlu0 %v7334, 56
        %v8391 = vpop.permute.xlu0 %8390
        %8392 = vrot.lane.b32.xlu0 %v7336, 56
        %v8393 = vpop.permute.xlu0 %8392
        %8394 = vrot.lane.b32.xlu0 %v7335, 56
        %v8395 = vpop.permute.xlu0 %8394
        %8396 = vrot.lane.b32.xlu0 %v7337, 56
        %v8397 = vpop.permute.xlu0 %8396
        %8398 = vrot.lane.b32.xlu0 %v7339, 56
        %v8399 = vpop.permute.xlu0 %8398
        %8400 = vrot.lane.b32.xlu0 %v7338, 56
        %v8401 = vpop.permute.xlu0 %8400
        %8402 = vrot.lane.b32.xlu0 %v7340, 56
        %v8403 = vpop.permute.xlu0 %8402
        %8404 = vrot.lane.b32.xlu0 %v7342, 56
        %v8405 = vpop.permute.xlu0 %8404
        %8406 = vrot.lane.b32.xlu0 %v7341, 56
        %v8407 = vpop.permute.xlu0 %8406
        %8408 = vrot.lane.b32.xlu0 %v7343, 56
        %v8409 = vpop.permute.xlu0 %8408
        %8410 = vrot.lane.b32.xlu0 %v7345, 56
        %v8411 = vpop.permute.xlu0 %8410
        %8412 = vrot.lane.b32.xlu0 %v7344, 56
        %v8413 = vpop.permute.xlu0 %8412
        %8414 = vrot.lane.b32.xlu0 %v7346, 56
        %v8415 = vpop.permute.xlu0 %8414
        %8416 = vrot.lane.b32.xlu0 %v7348, 56
        %v8417 = vpop.permute.xlu0 %8416
        %8418 = vrot.lane.b32.xlu0 %v7347, 56
        %v8419 = vpop.permute.xlu0 %8418
        %8420 = vrot.lane.b32.xlu0 %v7349, 56
        %v8421 = vpop.permute.xlu0 %8420
        %8422 = vrot.lane.b32.xlu0 %v7351, 56
        %v8423 = vpop.permute.xlu0 %8422
        %8424 = vrot.lane.b32.xlu0 %v7350, 56
        %v8425 = vpop.permute.xlu0 %8424
        %8426 = vrot.lane.b32.xlu0 %v7352, 56
        %v8427 = vpop.permute.xlu0 %8426
        %8428 = vrot.lane.b32.xlu0 %v7354, 56
        %v8429 = vpop.permute.xlu0 %8428
        %8430 = vrot.lane.b32.xlu0 %v7353, 56
        %v8431 = vpop.permute.xlu0 %8430
        %8432 = vrot.lane.b32.xlu0 %v7901, 56
        %v8433 = vpop.permute.xlu0 %8432
        %8434 = vrot.lane.b32.xlu0 %v7903, 56
        %v8435 = vpop.permute.xlu0 %8434
        %8436 = vrot.lane.b32.xlu0 %v7902, 56
        %v8437 = vpop.permute.xlu0 %8436
        %8438 = vrot.lane.b32.xlu0 %v8345, 56
        %v8439 = vpop.permute.xlu0 %8438
        %8440 = vrot.lane.b32.xlu0 %v8347, 56
        %v8441 = vpop.permute.xlu0 %8440
        %8442 = vrot.lane.b32.xlu0 %v8346, 56
        %v8443 = vpop.permute.xlu0 %8442
        %v8493 = vrot.slane %v7272, 2
        %v8494 = vrot.slane %v7273, 2
        %v8495 = vsel %vm648, %v8493, %v8494
        %v8496 = vrot.slane %v7274, 2
        %v8497 = vsel %vm648, %v8494, %v8496
        %8498 = vrot.lane.b32.xlu0 %v7525, 64
        %v8499 = vpop.permute.xlu0 %8498
        %8500 = vrot.lane.b32.xlu0 %v7527, 64
        %v8501 = vpop.permute.xlu0 %8500
        %8502 = vrot.lane.b32.xlu0 %v7529, 64
        %v8503 = vpop.permute.xlu0 %8502
        %8504 = vrot.lane.b32.xlu0 %v7530, 64
        %v8505 = vpop.permute.xlu0 %8504
        %8506 = vrot.lane.b32.xlu0 %v7532, 64
        %v8507 = vpop.permute.xlu0 %8506
        %8508 = vrot.lane.b32.xlu0 %v7534, 64
        %v8509 = vpop.permute.xlu0 %8508
        %8510 = vrot.lane.b32.xlu0 %v7535, 64
        %v8511 = vpop.permute.xlu0 %8510
        %8512 = vrot.lane.b32.xlu0 %v7537, 64
        %v8513 = vpop.permute.xlu0 %8512
        %8514 = vrot.lane.b32.xlu0 %v7539, 64
        %v8515 = vpop.permute.xlu0 %8514
        %8516 = vrot.lane.b32.xlu0 %v7540, 64
        %v8517 = vpop.permute.xlu0 %8516
        %8518 = vrot.lane.b32.xlu0 %v7542, 64
        %v8519 = vpop.permute.xlu0 %8518
        %8520 = vrot.lane.b32.xlu0 %v7544, 64
        %v8521 = vpop.permute.xlu0 %8520
        %8522 = vrot.lane.b32.xlu0 %v7545, 64
        %v8523 = vpop.permute.xlu0 %8522
        %8524 = vrot.lane.b32.xlu0 %v7547, 64
        %v8525 = vpop.permute.xlu0 %8524
        %8526 = vrot.lane.b32.xlu0 %v7549, 64
        %v8527 = vpop.permute.xlu0 %8526
        %8528 = vrot.lane.b32.xlu0 %v7550, 64
        %v8529 = vpop.permute.xlu0 %8528
        %8530 = vrot.lane.b32.xlu0 %v7552, 64
        %v8531 = vpop.permute.xlu0 %8530
        %8532 = vrot.lane.b32.xlu0 %v7554, 64
        %v8533 = vpop.permute.xlu0 %8532
        %8534 = vrot.lane.b32.xlu0 %v7555, 64
        %v8535 = vpop.permute.xlu0 %8534
        %8536 = vrot.lane.b32.xlu0 %v7557, 64
        %v8537 = vpop.permute.xlu0 %8536
        %8538 = vrot.lane.b32.xlu0 %v7559, 64
        %v8539 = vpop.permute.xlu0 %8538
        %8540 = vrot.lane.b32.xlu0 %v7560, 64
        %v8541 = vpop.permute.xlu0 %8540
        %8542 = vrot.lane.b32.xlu0 %v7562, 64
        %v8543 = vpop.permute.xlu0 %8542
        %8544 = vrot.lane.b32.xlu0 %v7564, 64
        %v8545 = vpop.permute.xlu0 %8544
        %8546 = vrot.lane.b32.xlu0 %v7565, 64
        %v8547 = vpop.permute.xlu0 %8546
        %8548 = vrot.lane.b32.xlu0 %v7567, 64
        %v8549 = vpop.permute.xlu0 %8548
        %8550 = vrot.lane.b32.xlu0 %v7569, 64
        %v8551 = vpop.permute.xlu0 %8550
        %8552 = vrot.lane.b32.xlu0 %v7570, 64
        %v8553 = vpop.permute.xlu0 %8552
        %8554 = vrot.lane.b32.xlu0 %v7572, 64
        %v8555 = vpop.permute.xlu0 %8554
        %8556 = vrot.lane.b32.xlu0 %v7574, 64
        %v8557 = vpop.permute.xlu0 %8556
        %8558 = vrot.lane.b32.xlu0 %v7575, 64
        %v8559 = vpop.permute.xlu0 %8558
        %8560 = vrot.lane.b32.xlu0 %v7577, 64
        %v8561 = vpop.permute.xlu0 %8560
        %8562 = vrot.lane.b32.xlu0 %v7579, 64
        %v8563 = vpop.permute.xlu0 %8562
        %8564 = vrot.lane.b32.xlu0 %v7580, 64
        %v8565 = vpop.permute.xlu0 %8564
        %8566 = vrot.lane.b32.xlu0 %v7582, 64
        %v8567 = vpop.permute.xlu0 %8566
        %8568 = vrot.lane.b32.xlu0 %v7584, 64
        %v8569 = vpop.permute.xlu0 %8568
        %8570 = vrot.lane.b32.xlu0 %v7585, 64
        %v8571 = vpop.permute.xlu0 %8570
        %8572 = vrot.lane.b32.xlu0 %v7587, 64
        %v8573 = vpop.permute.xlu0 %8572
        %8574 = vrot.lane.b32.xlu0 %v7589, 64
        %v8575 = vpop.permute.xlu0 %8574
        %8576 = vrot.lane.b32.xlu0 %v7590, 64
        %v8577 = vpop.permute.xlu0 %8576
        %8578 = vrot.lane.b32.xlu0 %v7592, 64
        %v8579 = vpop.permute.xlu0 %8578
        %8580 = vrot.lane.b32.xlu0 %v7594, 64
        %v8581 = vpop.permute.xlu0 %8580
        %8582 = vrot.lane.b32.xlu0 %v8049, 64
        %v8583 = vpop.permute.xlu0 %8582
        %8584 = vrot.lane.b32.xlu0 %v8051, 64
        %v8585 = vpop.permute.xlu0 %8584
        %8586 = vrot.lane.b32.xlu0 %v8053, 64
        %v8587 = vpop.permute.xlu0 %8586
        %8588 = vrot.lane.b32.xlu0 %v8493, 64
        %v8589 = vpop.permute.xlu0 %8588
        %8590 = vrot.lane.b32.xlu0 %v8495, 64
        %v8591 = vpop.permute.xlu0 %8590
        %8592 = vrot.lane.b32.xlu0 %v8497, 64
        %v8593 = vpop.permute.xlu0 %8592
        %v8642 = vsel %vm196, %v7203, %v7356
        %v8643 = vsel %vm196, %v7204, %v7358
        %v8644 = vsel %vm196, %v7205, %v7360
        %v8645 = vsel %vm196, %v7207, %v7362
        %v8646 = vsel %vm196, %v7208, %v7364
        %v8647 = vsel %vm196, %v7209, %v7366
        %v8648 = vsel %vm196, %v7211, %v7368
        %v8649 = vsel %vm196, %v7212, %v7370
        %v8650 = vsel %vm196, %v7213, %v7372
        %v8651 = vsel %vm196, %v7215, %v7374
        %v8652 = vsel %vm196, %v7216, %v7376
        %v8653 = vsel %vm196, %v7217, %v7378
        %v8654 = vsel %vm196, %v7219, %v7380
        %v8655 = vsel %vm196, %v7220, %v7382
        %v8656 = vsel %vm196, %v7221, %v7384
        %v8657 = vsel %vm196, %v7223, %v7386
        %v8658 = vsel %vm196, %v7224, %v7388
        %v8659 = vsel %vm196, %v7225, %v7390
        %v8660 = vsel %vm196, %v7227, %v7392
        %v8661 = vsel %vm196, %v7228, %v7394
        %v8662 = vsel %vm196, %v7229, %v7396
        %v8663 = vsel %vm196, %v7231, %v7398
        %v8664 = vsel %vm196, %v7232, %v7400
        %v8665 = vsel %vm196, %v7233, %v7402
        %v8666 = vsel %vm196, %v7235, %v7404
        %v8667 = vsel %vm196, %v7236, %v7406
        %v8668 = vsel %vm196, %v7237, %v7408
        %v8669 = vsel %vm196, %v7239, %v7410
        %v8670 = vsel %vm196, %v7240, %v7412
        %v8671 = vsel %vm196, %v7241, %v7414
        %v8672 = vsel %vm196, %v7243, %v7416
        %v8673 = vsel %vm196, %v7244, %v7418
        %v8674 = vsel %vm196, %v7245, %v7420
        %v8675 = vsel %vm196, %v7247, %v7422
        %v8676 = vsel %vm196, %v7248, %v7424
        %v8677 = vsel %vm196, %v7249, %v7426
        %v8678 = vsel %vm196, %v7251, %v7428
        %v8679 = vsel %vm196, %v7252, %v7430
        %v8680 = vsel %vm196, %v7253, %v7432
        %v8681 = vsel %vm196, %v7255, %v7434
        %v8682 = vsel %vm196, %v7256, %v7436
        %v8683 = vsel %vm196, %v7257, %v7438
        %v8684 = vsel %vm196, %v7259, %v7440
        %v8685 = vsel %vm196, %v7260, %v7442
        %v8686 = vsel %vm196, %v7261, %v7444
        %v8687 = vsel %vm196, %v7263, %v7446
        %v8688 = vsel %vm196, %v7264, %v7448
        %v8689 = vsel %vm196, %v7265, %v7450
        %v8690 = vsel %vm1824, %v8642, %v7596
        %v8691 = vsel %vm1824, %v8643, %v7598
        %v8692 = vsel %vm1824, %v8644, %v7600
        %v8693 = vsel %vm1824, %v8645, %v7602
        %v8694 = vsel %vm1824, %v8646, %v7604
        %v8695 = vsel %vm1824, %v8647, %v7606
        %v8696 = vsel %vm1824, %v8648, %v7608
        %v8697 = vsel %vm1824, %v8649, %v7610
        %v8698 = vsel %vm1824, %v8650, %v7612
        %v8699 = vsel %vm1824, %v8651, %v7614
        %v8700 = vsel %vm1824, %v8652, %v7616
        %v8701 = vsel %vm1824, %v8653, %v7618
        %v8702 = vsel %vm1824, %v8654, %v7620
        %v8703 = vsel %vm1824, %v8655, %v7622
        %v8704 = vsel %vm1824, %v8656, %v7624
        %v8705 = vsel %vm1824, %v8657, %v7626
        %v8706 = vsel %vm1824, %v8658, %v7628
        %v8707 = vsel %vm1824, %v8659, %v7630
        %v8708 = vsel %vm1824, %v8660, %v7632
        %v8709 = vsel %vm1824, %v8661, %v7634
        %v8710 = vsel %vm1824, %v8662, %v7636
        %v8711 = vsel %vm1824, %v8663, %v7638
        %v8712 = vsel %vm1824, %v8664, %v7640
        %v8713 = vsel %vm1824, %v8665, %v7642
        %v8714 = vsel %vm1824, %v8666, %v7644
        %v8715 = vsel %vm1824, %v8667, %v7646
        %v8716 = vsel %vm1824, %v8668, %v7648
        %v8717 = vsel %vm1824, %v8669, %v7650
        %v8718 = vsel %vm1824, %v8670, %v7652
        %v8719 = vsel %vm1824, %v8671, %v7654
        %v8720 = vsel %vm1824, %v8672, %v7656
        %v8721 = vsel %vm1824, %v8673, %v7658
        %v8722 = vsel %vm1824, %v8674, %v7660
        %v8723 = vsel %vm1824, %v8675, %v7662
        %v8724 = vsel %vm1824, %v8676, %v7664
        %v8725 = vsel %vm1824, %v8677, %v7666
        %v8726 = vsel %vm1824, %v8678, %v7668
        %v8727 = vsel %vm1824, %v8679, %v7670
        %v8728 = vsel %vm1824, %v8680, %v7672
        %v8729 = vsel %vm1824, %v8681, %v7674
        %v8730 = vsel %vm1824, %v8682, %v7676
        %v8731 = vsel %vm1824, %v8683, %v7678
        %v8732 = vsel %vm1824, %v8684, %v7680
        %v8733 = vsel %vm1824, %v8685, %v7682
        %v8734 = vsel %vm1824, %v8686, %v7684
        %v8735 = vsel %vm1824, %v8687, %v7686
        %v8736 = vsel %vm1824, %v8688, %v7688
        %v8737 = vsel %vm1824, %v8689, %v7690
        %v8738 = vsel %vm1873, %v8690, %v7758
        %v8739 = vsel %vm1873, %v8691, %v7760
        %v8740 = vsel %vm1873, %v8692, %v7762
        %v8741 = vsel %vm1873, %v8693, %v7764
        %v8742 = vsel %vm1873, %v8694, %v7766
        %v8743 = vsel %vm1873, %v8695, %v7768
        %v8744 = vsel %vm1873, %v8696, %v7770
        %v8745 = vsel %vm1873, %v8697, %v7772
        %v8746 = vsel %vm1873, %v8698, %v7774
        %v8747 = vsel %vm1873, %v8699, %v7776
        %v8748 = vsel %vm1873, %v8700, %v7778
        %v8749 = vsel %vm1873, %v8701, %v7780
        %v8750 = vsel %vm1873, %v8702, %v7782
        %v8751 = vsel %vm1873, %v8703, %v7784
        %v8752 = vsel %vm1873, %v8704, %v7786
        %v8753 = vsel %vm1873, %v8705, %v7788
        %v8754 = vsel %vm1873, %v8706, %v7790
        %v8755 = vsel %vm1873, %v8707, %v7792
        %v8756 = vsel %vm1873, %v8708, %v7794
        %v8757 = vsel %vm1873, %v8709, %v7796
        %v8758 = vsel %vm1873, %v8710, %v7798
        %v8759 = vsel %vm1873, %v8711, %v7800
        %v8760 = vsel %vm1873, %v8712, %v7802
        %v8761 = vsel %vm1873, %v8713, %v7804
        %v8762 = vsel %vm1873, %v8714, %v7806
        %v8763 = vsel %vm1873, %v8715, %v7808
        %v8764 = vsel %vm1873, %v8716, %v7810
        %v8765 = vsel %vm1873, %v8717, %v7812
        %v8766 = vsel %vm1873, %v8718, %v7814
        %v8767 = vsel %vm1873, %v8719, %v7816
        %v8768 = vsel %vm1873, %v8720, %v7818
        %v8769 = vsel %vm1873, %v8721, %v7820
        %v8770 = vsel %vm1873, %v8722, %v7822
        %v8771 = vsel %vm1873, %v8723, %v7824
        %v8772 = vsel %vm1873, %v8724, %v7826
        %v8773 = vsel %vm1873, %v8725, %v7828
        %v8774 = vsel %vm1873, %v8726, %v7830
        %v8775 = vsel %vm1873, %v8727, %v7832
        %v8776 = vsel %vm1873, %v8728, %v7834
        %v8777 = vsel %vm1873, %v8729, %v7836
        %v8778 = vsel %vm1873, %v8730, %v7838
        %v8779 = vsel %vm1873, %v8731, %v7840
        %v8780 = vsel %vm1873, %v8732, %v7842
        %v8781 = vsel %vm1873, %v8733, %v7844
        %v8782 = vsel %vm1873, %v8734, %v7846
        %v8783 = vsel %vm1873, %v8735, %v7848
        %v8784 = vsel %vm1873, %v8736, %v7850
        %v8785 = vsel %vm1873, %v8737, %v7852
        %v8786 = vsel %vm1922, %v8738, %v7905
        %v8787 = vsel %vm1922, %v8739, %v7907
        %v8788 = vsel %vm1922, %v8740, %v7909
        %v8789 = vsel %vm1922, %v8741, %v7911
        %v8790 = vsel %vm1922, %v8742, %v7913
        %v8791 = vsel %vm1922, %v8743, %v7915
        %v8792 = vsel %vm1922, %v8744, %v7917
        %v8793 = vsel %vm1922, %v8745, %v7919
        %v8794 = vsel %vm1922, %v8746, %v7921
        %v8795 = vsel %vm1922, %v8747, %v7923
        %v8796 = vsel %vm1922, %v8748, %v7925
        %v8797 = vsel %vm1922, %v8749, %v7927
        %v8798 = vsel %vm1922, %v8750, %v7929
        %v8799 = vsel %vm1922, %v8751, %v7931
        %v8800 = vsel %vm1922, %v8752, %v7933
        %v8801 = vsel %vm1922, %v8753, %v7935
        %v8802 = vsel %vm1922, %v8754, %v7937
        %v8803 = vsel %vm1922, %v8755, %v7939
        %v8804 = vsel %vm1922, %v8756, %v7941
        %v8805 = vsel %vm1922, %v8757, %v7943
        %v8806 = vsel %vm1922, %v8758, %v7945
        %v8807 = vsel %vm1922, %v8759, %v7947
        %v8808 = vsel %vm1922, %v8760, %v7949
        %v8809 = vsel %vm1922, %v8761, %v7951
        %v8810 = vsel %vm1922, %v8762, %v7953
        %v8811 = vsel %vm1922, %v8763, %v7955
        %v8812 = vsel %vm1922, %v8764, %v7957
        %v8813 = vsel %vm1922, %v8765, %v7959
        %v8814 = vsel %vm1922, %v8766, %v7961
        %v8815 = vsel %vm1922, %v8767, %v7963
        %v8816 = vsel %vm1922, %v8768, %v7965
        %v8817 = vsel %vm1922, %v8769, %v7967
        %v8818 = vsel %vm1922, %v8770, %v7969
        %v8819 = vsel %vm1922, %v8771, %v7971
        %v8820 = vsel %vm1922, %v8772, %v7973
        %v8821 = vsel %vm1922, %v8773, %v7975
        %v8822 = vsel %vm1922, %v8774, %v7977
        %v8823 = vsel %vm1922, %v8775, %v7979
        %v8824 = vsel %vm1922, %v8776, %v7981
        %v8825 = vsel %vm1922, %v8777, %v7983
        %v8826 = vsel %vm1922, %v8778, %v7985
        %v8827 = vsel %vm1922, %v8779, %v7987
        %v8828 = vsel %vm1922, %v8780, %v7989
        %v8829 = vsel %vm1922, %v8781, %v7991
        %v8830 = vsel %vm1922, %v8782, %v7993
        %v8831 = vsel %vm1922, %v8783, %v7995
        %v8832 = vsel %vm1922, %v8784, %v7997
        %v8833 = vsel %vm1922, %v8785, %v7999
        %v8834 = vsel %vm1971, %v8786, %v8055
        %v8835 = vsel %vm1971, %v8787, %v8057
        %v8836 = vsel %vm1971, %v8788, %v8059
        %v8837 = vsel %vm1971, %v8789, %v8061
        %v8838 = vsel %vm1971, %v8790, %v8063
        %v8839 = vsel %vm1971, %v8791, %v8065
        %v8840 = vsel %vm1971, %v8792, %v8067
        %v8841 = vsel %vm1971, %v8793, %v8069
        %v8842 = vsel %vm1971, %v8794, %v8071
        %v8843 = vsel %vm1971, %v8795, %v8073
        %v8844 = vsel %vm1971, %v8796, %v8075
        %v8845 = vsel %vm1971, %v8797, %v8077
        %v8846 = vsel %vm1971, %v8798, %v8079
        %v8847 = vsel %vm1971, %v8799, %v8081
        %v8848 = vsel %vm1971, %v8800, %v8083
        %v8849 = vsel %vm1971, %v8801, %v8085
        %v8850 = vsel %vm1971, %v8802, %v8087
        %v8851 = vsel %vm1971, %v8803, %v8089
        %v8852 = vsel %vm1971, %v8804, %v8091
        %v8853 = vsel %vm1971, %v8805, %v8093
        %v8854 = vsel %vm1971, %v8806, %v8095
        %v8855 = vsel %vm1971, %v8807, %v8097
        %v8856 = vsel %vm1971, %v8808, %v8099
        %v8857 = vsel %vm1971, %v8809, %v8101
        %v8858 = vsel %vm1971, %v8810, %v8103
        %v8859 = vsel %vm1971, %v8811, %v8105
        %v8860 = vsel %vm1971, %v8812, %v8107
        %v8861 = vsel %vm1971, %v8813, %v8109
        %v8862 = vsel %vm1971, %v8814, %v8111
        %v8863 = vsel %vm1971, %v8815, %v8113
        %v8864 = vsel %vm1971, %v8816, %v8115
        %v8865 = vsel %vm1971, %v8817, %v8117
        %v8866 = vsel %vm1971, %v8818, %v8119
        %v8867 = vsel %vm1971, %v8819, %v8121
        %v8868 = vsel %vm1971, %v8820, %v8123
        %v8869 = vsel %vm1971, %v8821, %v8125
        %v8870 = vsel %vm1971, %v8822, %v8127
        %v8871 = vsel %vm1971, %v8823, %v8129
        %v8872 = vsel %vm1971, %v8824, %v8131
        %v8873 = vsel %vm1971, %v8825, %v8133
        %v8874 = vsel %vm1971, %v8826, %v8135
        %v8875 = vsel %vm1971, %v8827, %v8137
        %v8876 = vsel %vm1971, %v8828, %v8139
        %v8877 = vsel %vm1971, %v8829, %v8141
        %v8878 = vsel %vm1971, %v8830, %v8143
        %v8879 = vsel %vm1971, %v8831, %v8145
        %v8880 = vsel %vm1971, %v8832, %v8147
        %v8881 = vsel %vm1971, %v8833, %v8149
        %v8882 = vsel %vm2020, %v8834, %v8202
        %v8883 = vsel %vm2020, %v8835, %v8204
        %v8884 = vsel %vm2020, %v8836, %v8206
        %v8885 = vsel %vm2020, %v8837, %v8208
        %v8886 = vsel %vm2020, %v8838, %v8210
        %v8887 = vsel %vm2020, %v8839, %v8212
        %v8888 = vsel %vm2020, %v8840, %v8214
        %v8889 = vsel %vm2020, %v8841, %v8216
        %v8890 = vsel %vm2020, %v8842, %v8218
        %v8891 = vsel %vm2020, %v8843, %v8220
        %v8892 = vsel %vm2020, %v8844, %v8222
        %v8893 = vsel %vm2020, %v8845, %v8224
        %v8894 = vsel %vm2020, %v8846, %v8226
        %v8895 = vsel %vm2020, %v8847, %v8228
        %v8896 = vsel %vm2020, %v8848, %v8230
        %v8897 = vsel %vm2020, %v8849, %v8232
        %v8898 = vsel %vm2020, %v8850, %v8234
        %v8899 = vsel %vm2020, %v8851, %v8236
        %v8900 = vsel %vm2020, %v8852, %v8238
        %v8901 = vsel %vm2020, %v8853, %v8240
        %v8902 = vsel %vm2020, %v8854, %v8242
        %v8903 = vsel %vm2020, %v8855, %v8244
        %v8904 = vsel %vm2020, %v8856, %v8246
        %v8905 = vsel %vm2020, %v8857, %v8248
        %v8906 = vsel %vm2020, %v8858, %v8250
        %v8907 = vsel %vm2020, %v8859, %v8252
        %v8908 = vsel %vm2020, %v8860, %v8254
        %v8909 = vsel %vm2020, %v8861, %v8256
        %v8910 = vsel %vm2020, %v8862, %v8258
        %v8911 = vsel %vm2020, %v8863, %v8260
        %v8912 = vsel %vm2020, %v8864, %v8262
        %v8913 = vsel %vm2020, %v8865, %v8264
        %v8914 = vsel %vm2020, %v8866, %v8266
        %v8915 = vsel %vm2020, %v8867, %v8268
        %v8916 = vsel %vm2020, %v8868, %v8270
        %v8917 = vsel %vm2020, %v8869, %v8272
        %v8918 = vsel %vm2020, %v8870, %v8274
        %v8919 = vsel %vm2020, %v8871, %v8276
        %v8920 = vsel %vm2020, %v8872, %v8278
        %v8921 = vsel %vm2020, %v8873, %v8280
        %v8922 = vsel %vm2020, %v8874, %v8282
        %v8923 = vsel %vm2020, %v8875, %v8284
        %v8924 = vsel %vm2020, %v8876, %v8286
        %v8925 = vsel %vm2020, %v8877, %v8288
        %v8926 = vsel %vm2020, %v8878, %v8290
        %v8927 = vsel %vm2020, %v8879, %v8292
        %v8928 = vsel %vm2020, %v8880, %v8294
        %v8929 = vsel %vm2020, %v8881, %v8296
        %v8930 = vsel %vm2069, %v8882, %v8349
        %v8931 = vsel %vm2069, %v8883, %v8351
        %v8932 = vsel %vm2069, %v8884, %v8353
        %v8933 = vsel %vm2069, %v8885, %v8355
        %v8934 = vsel %vm2069, %v8886, %v8357
        %v8935 = vsel %vm2069, %v8887, %v8359
        %v8936 = vsel %vm2069, %v8888, %v8361
        %v8937 = vsel %vm2069, %v8889, %v8363
        %v8938 = vsel %vm2069, %v8890, %v8365
        %v8939 = vsel %vm2069, %v8891, %v8367
        %v8940 = vsel %vm2069, %v8892, %v8369
        %v8941 = vsel %vm2069, %v8893, %v8371
        %v8942 = vsel %vm2069, %v8894, %v8373
        %v8943 = vsel %vm2069, %v8895, %v8375
        %v8944 = vsel %vm2069, %v8896, %v8377
        %v8945 = vsel %vm2069, %v8897, %v8379
        %v8946 = vsel %vm2069, %v8898, %v8381
        %v8947 = vsel %vm2069, %v8899, %v8383
        %v8948 = vsel %vm2069, %v8900, %v8385
        %v8949 = vsel %vm2069, %v8901, %v8387
        %v8950 = vsel %vm2069, %v8902, %v8389
        %v8951 = vsel %vm2069, %v8903, %v8391
        %v8952 = vsel %vm2069, %v8904, %v8393
        %v8953 = vsel %vm2069, %v8905, %v8395
        %v8954 = vsel %vm2069, %v8906, %v8397
        %v8955 = vsel %vm2069, %v8907, %v8399
        %v8956 = vsel %vm2069, %v8908, %v8401
        %v8957 = vsel %vm2069, %v8909, %v8403
        %v8958 = vsel %vm2069, %v8910, %v8405
        %v8959 = vsel %vm2069, %v8911, %v8407
        %v8960 = vsel %vm2069, %v8912, %v8409
        %v8961 = vsel %vm2069, %v8913, %v8411
        %v8962 = vsel %vm2069, %v8914, %v8413
        %v8963 = vsel %vm2069, %v8915, %v8415
        %v8964 = vsel %vm2069, %v8916, %v8417
        %v8965 = vsel %vm2069, %v8917, %v8419
        %v8966 = vsel %vm2069, %v8918, %v8421
        %v8967 = vsel %vm2069, %v8919, %v8423
        %v8968 = vsel %vm2069, %v8920, %v8425
        %v8969 = vsel %vm2069, %v8921, %v8427
        %v8970 = vsel %vm2069, %v8922, %v8429
        %v8971 = vsel %vm2069, %v8923, %v8431
        %v8972 = vsel %vm2069, %v8924, %v8433
        %v8973 = vsel %vm2069, %v8925, %v8435
        %v8974 = vsel %vm2069, %v8926, %v8437
        %v8975 = vsel %vm2069, %v8927, %v8439
        %v8976 = vsel %vm2069, %v8928, %v8441
        %v8977 = vsel %vm2069, %v8929, %v8443
        %v8978 = vsel %vm2118, %v8930, %v8499
        %v8979 = vsel %vm2118, %v8931, %v8501
        %v8980 = vsel %vm2118, %v8932, %v8503
        %v8981 = vsel %vm2118, %v8933, %v8505
        %v8982 = vsel %vm2118, %v8934, %v8507
        %v8983 = vsel %vm2118, %v8935, %v8509
        %v8984 = vsel %vm2118, %v8936, %v8511
        %v8985 = vsel %vm2118, %v8937, %v8513
        %v8986 = vsel %vm2118, %v8938, %v8515
        %v8987 = vsel %vm2118, %v8939, %v8517
        %v8988 = vsel %vm2118, %v8940, %v8519
        %v8989 = vsel %vm2118, %v8941, %v8521
        %v8990 = vsel %vm2118, %v8942, %v8523
        %v8991 = vsel %vm2118, %v8943, %v8525
        %v8992 = vsel %vm2118, %v8944, %v8527
        %v8993 = vsel %vm2118, %v8945, %v8529
        %v8994 = vsel %vm2118, %v8946, %v8531
        %v8995 = vsel %vm2118, %v8947, %v8533
        %v8996 = vsel %vm2118, %v8948, %v8535
        %v8997 = vsel %vm2118, %v8949, %v8537
        %v8998 = vsel %vm2118, %v8950, %v8539
        %v8999 = vsel %vm2118, %v8951, %v8541
        %v9000 = vsel %vm2118, %v8952, %v8543
        %v9001 = vsel %vm2118, %v8953, %v8545
        %v9002 = vsel %vm2118, %v8954, %v8547
        %v9003 = vsel %vm2118, %v8955, %v8549
        %v9004 = vsel %vm2118, %v8956, %v8551
        %v9005 = vsel %vm2118, %v8957, %v8553
        %v9006 = vsel %vm2118, %v8958, %v8555
        %v9007 = vsel %vm2118, %v8959, %v8557
        %v9008 = vsel %vm2118, %v8960, %v8559
        %v9009 = vsel %vm2118, %v8961, %v8561
        %v9010 = vsel %vm2118, %v8962, %v8563
        %v9011 = vsel %vm2118, %v8963, %v8565
        %v9012 = vsel %vm2118, %v8964, %v8567
        %v9013 = vsel %vm2118, %v8965, %v8569
        %v9014 = vsel %vm2118, %v8966, %v8571
        %v9015 = vsel %vm2118, %v8967, %v8573
        %v9016 = vsel %vm2118, %v8968, %v8575
        %v9017 = vsel %vm2118, %v8969, %v8577
        %v9018 = vsel %vm2118, %v8970, %v8579
        %v9019 = vsel %vm2118, %v8971, %v8581
        %v9020 = vsel %vm2118, %v8972, %v8583
        %v9021 = vsel %vm2118, %v8973, %v8585
        %v9022 = vsel %vm2118, %v8974, %v8587
        %v9023 = vsel %vm2118, %v8975, %v8589
        %v9024 = vsel %vm2118, %v8976, %v8591
        %v9025 = vsel %vm2118, %v8977, %v8593
        %v9074 = vrot.slane %v8978, 7
        %v9075 = vrot.slane %v8979, 7
        %v9076 = vsel %vm2215, %v9074, %v9075
        %v9077 = vrot.slane %v8980, 7
        %v9078 = vsel %vm2215, %v9075, %v9077
        %v9079 = vrot.slane %v8981, 7
        %v9080 = vrot.slane %v8982, 7
        %v9081 = vsel %vm2215, %v9079, %v9080
        %v9082 = vrot.slane %v8983, 7
        %v9083 = vsel %vm2215, %v9080, %v9082
        %v9084 = vrot.slane %v8984, 7
        %v9085 = vrot.slane %v8985, 7
        %v9086 = vsel %vm2215, %v9084, %v9085
        %v9087 = vrot.slane %v8986, 7
        %v9088 = vsel %vm2215, %v9085, %v9087
        %v9089 = vrot.slane %v8987, 7
        %v9090 = vrot.slane %v8988, 7
        %v9091 = vsel %vm2215, %v9089, %v9090
        %v9092 = vrot.slane %v8989, 7
        %v9093 = vsel %vm2215, %v9090, %v9092
        %v9094 = vrot.slane %v8990, 7
        %v9095 = vrot.slane %v8991, 7
        %v9096 = vsel %vm2215, %v9094, %v9095
        %v9097 = vrot.slane %v8992, 7
        %v9098 = vsel %vm2215, %v9095, %v9097
        %v9099 = vrot.slane %v8993, 7
        %v9100 = vrot.slane %v8994, 7
        %v9101 = vsel %vm2215, %v9099, %v9100
        %v9102 = vrot.slane %v8995, 7
        %v9103 = vsel %vm2215, %v9100, %v9102
        %v9104 = vrot.slane %v8996, 7
        %v9105 = vrot.slane %v8997, 7
        %v9106 = vsel %vm2215, %v9104, %v9105
        %v9107 = vrot.slane %v8998, 7
        %v9108 = vsel %vm2215, %v9105, %v9107
        %v9109 = vrot.slane %v8999, 7
        %v9110 = vrot.slane %v9000, 7
        %v9111 = vsel %vm2215, %v9109, %v9110
        %v9112 = vrot.slane %v9001, 7
        %v9113 = vsel %vm2215, %v9110, %v9112
        %v9114 = vrot.slane %v9002, 7
        %v9115 = vrot.slane %v9003, 7
        %v9116 = vsel %vm2215, %v9114, %v9115
        %v9117 = vrot.slane %v9004, 7
        %v9118 = vsel %vm2215, %v9115, %v9117
        %v9119 = vrot.slane %v9005, 7
        %v9120 = vrot.slane %v9006, 7
        %v9121 = vsel %vm2215, %v9119, %v9120
        %v9122 = vrot.slane %v9007, 7
        %v9123 = vsel %vm2215, %v9120, %v9122
        %v9124 = vrot.slane %v9008, 7
        %v9125 = vrot.slane %v9009, 7
        %v9126 = vsel %vm2215, %v9124, %v9125
        %v9127 = vrot.slane %v9010, 7
        %v9128 = vsel %vm2215, %v9125, %v9127
        %v9129 = vrot.slane %v9011, 7
        %v9130 = vrot.slane %v9012, 7
        %v9131 = vsel %vm2215, %v9129, %v9130
        %v9132 = vrot.slane %v9013, 7
        %v9133 = vsel %vm2215, %v9130, %v9132
        %v9134 = vrot.slane %v9014, 7
        %v9135 = vrot.slane %v9015, 7
        %v9136 = vsel %vm2215, %v9134, %v9135
        %v9137 = vrot.slane %v9016, 7
        %v9138 = vsel %vm2215, %v9135, %v9137
        %v9139 = vrot.slane %v9017, 7
        %v9140 = vrot.slane %v9018, 7
        %v9141 = vsel %vm2215, %v9139, %v9140
        %v9142 = vrot.slane %v9019, 7
        %v9143 = vsel %vm2215, %v9140, %v9142
        %v9144 = vrot.slane %v9020, 7
        %v9145 = vrot.slane %v9021, 7
        %v9146 = vsel %vm2215, %v9144, %v9145
        %v9147 = vrot.slane %v9022, 7
        %v9148 = vsel %vm2215, %v9145, %v9147
        %v9149 = vrot.slane %v9023, 7
        %v9150 = vrot.slane %v9024, 7
        %v9151 = vsel %vm2215, %v9149, %v9150
        %v9152 = vrot.slane %v9025, 7
        %v9153 = vsel %vm2215, %v9150, %v9152
        %s9154 = scalar_lea.vmem %s1, 216
        %v9155 = vld [vmem:[%s9154] sm:$0xff]
        %v9156 = vld [vmem:[%s9154 + $0x8] sm:$0xff]
        %v9157 = vld [vmem:[%s9154 + $0x10] sm:$0xff]
        %v9158 = vld [vmem:[%s9154 + $0x18] sm:$0xff]
        %v9159 = vld [vmem:[%s9154 + $0x20] sm:$0xff]
        %v9160 = vld [vmem:[%s9154 + $0x28] sm:$0xff]
        %v9161 = vld [vmem:[%s9154 + $0x30] sm:$0xff]
        %v9162 = vld [vmem:[%s9154 + $0x38] sm:$0xff]
        %v9163 = vld [vmem:[%s9154 + $0x40] sm:$0xff]
        %v9164 = vsel %vm2305, %v9076, 0
        %v9166 = vsel %vm2305, %v9078, 0
        %v9168 = vsel %vm2305, %v9081, 0
        %v9170 = vsel %vm2305, %v9083, 0
        %v9172 = vsel %vm2305, %v9086, 0
        %v9174 = vsel %vm2305, %v9088, 0
        %v9176 = vsel %vm2305, %v9091, 0
        %v9178 = vsel %vm2305, %v9093, 0
        %v9180 = vsel %vm2305, %v9096, 0
        %v9182 = vsel %vm2305, %v9098, 0
        %v9184 = vsel %vm2305, %v9101, 0
        %v9186 = vsel %vm2305, %v9103, 0
        %v9188 = vsel %vm2305, %v9106, 0
        %v9190 = vsel %vm2305, %v9108, 0
        %v9192 = vsel %vm2305, %v9111, 0
        %v9194 = vsel %vm2305, %v9113, 0
        %v9196 = vsel %vm2305, %v9116, 0
        %v9198 = vsel %vm2305, %v9118, 0
        %v9200 = vsel %vm2305, %v9121, 0
        %v9202 = vsel %vm2305, %v9123, 0
        %v9204 = vsel %vm2305, %v9126, 0
        %v9206 = vsel %vm2305, %v9128, 0
        %v9208 = vsel %vm2305, %v9131, 0
        %v9210 = vsel %vm2305, %v9133, 0
        %v9212 = vsel %vm2305, %v9136, 0
        %v9214 = vsel %vm2305, %v9138, 0
        %v9216 = vsel %vm2305, %v9141, 0
        %v9218 = vsel %vm2305, %v9143, 0
        %v9220 = vsel %vm2305, %v9146, 0
        %v9222 = vsel %vm2305, %v9148, 0
        %v9224 = vsel %vm2305, %v9151, 0
        %v9226 = vsel %vm2305, %v9153, 0
        %9228 = vmatpush.msra.mxu0 0.0
        %9229 = vmatpush.msra.mxu0 0.0
        %9230 = vmatpush.msra.mxu0 0.0
        %9231 = vmatpush.msra.mxu0 0.0
        %9232 = vmatpush.msra.mxu0 0.0
        %9233 = vmatpush.msra.mxu0 0.0
        %9234 = vmatpush.msra.mxu0 0.0
        %9235 = vmatpush.msra.mxu0 %v9163
        %9236 = vmatpush.msra.mxu0 %v9162
        %9237 = vmatpush.msra.mxu0 %v9161
        %9238 = vmatpush.msra.mxu0 %v9160
        %9239 = vmatpush.msra.mxu0 %v9159
        %9240 = vmatpush.msra.mxu0 %v9158
        %9241 = vmatpush.msra.mxu0 %v9157
        %9242 = vmatpush.msra.mxu0 %v9156
        %9243 = vmatpush.msra.mxu0 %v9155
        %9244 = vmatmul.f32.gmra.mxu0 %v9164
        %v9245 = vpop.f32.mrf.mxu0
        %v9246 = vadd.f32 0.0, %v9245
        %9247 = vmatmul.f32.gmra.mxu0 %v9166
        %v9248 = vpop.f32.mrf.mxu0
        %v9249 = vadd.f32 0.0, %v9248
        %9250 = vmatmul.f32.gmra.mxu0 %v9168
        %v9251 = vpop.f32.mrf.mxu0
        %v9252 = vadd.f32 0.0, %v9251
        %9253 = vmatmul.f32.gmra.mxu0 %v9170
        %v9254 = vpop.f32.mrf.mxu0
        %v9255 = vadd.f32 0.0, %v9254
        %9256 = vmatmul.f32.gmra.mxu0 %v9172
        %v9257 = vpop.f32.mrf.mxu0
        %v9258 = vadd.f32 0.0, %v9257
        %9259 = vmatmul.f32.gmra.mxu0 %v9174
        %v9260 = vpop.f32.mrf.mxu0
        %v9261 = vadd.f32 0.0, %v9260
        %9262 = vmatmul.f32.gmra.mxu0 %v9176
        %v9263 = vpop.f32.mrf.mxu0
        %v9264 = vadd.f32 0.0, %v9263
        %9265 = vmatmul.f32.gmra.mxu0 %v9178
        %v9266 = vpop.f32.mrf.mxu0
        %v9267 = vadd.f32 0.0, %v9266
        %9268 = vmatmul.f32.gmra.mxu0 %v9180
        %v9269 = vpop.f32.mrf.mxu0
        %v9270 = vadd.f32 0.0, %v9269
        %9271 = vmatmul.f32.gmra.mxu0 %v9182
        %v9272 = vpop.f32.mrf.mxu0
        %v9273 = vadd.f32 0.0, %v9272
        %9274 = vmatmul.f32.gmra.mxu0 %v9184
        %v9275 = vpop.f32.mrf.mxu0
        %v9276 = vadd.f32 0.0, %v9275
        %9277 = vmatmul.f32.gmra.mxu0 %v9186
        %v9278 = vpop.f32.mrf.mxu0
        %v9279 = vadd.f32 0.0, %v9278
        %9280 = vmatmul.f32.gmra.mxu0 %v9188
        %v9281 = vpop.f32.mrf.mxu0
        %v9282 = vadd.f32 0.0, %v9281
        %9283 = vmatmul.f32.gmra.mxu0 %v9190
        %v9284 = vpop.f32.mrf.mxu0
        %v9285 = vadd.f32 0.0, %v9284
        %9286 = vmatmul.f32.gmra.mxu0 %v9192
        %v9287 = vpop.f32.mrf.mxu0
        %v9288 = vadd.f32 0.0, %v9287
        %9289 = vmatmul.f32.gmra.mxu0 %v9194
        %v9290 = vpop.f32.mrf.mxu0
        %v9291 = vadd.f32 0.0, %v9290
        %9292 = vmatmul.f32.gmra.mxu0 %v9196
        %v9293 = vpop.f32.mrf.mxu0
        %v9294 = vadd.f32 0.0, %v9293
        %9295 = vmatmul.f32.gmra.mxu0 %v9198
        %v9296 = vpop.f32.mrf.mxu0
        %v9297 = vadd.f32 0.0, %v9296
        %9298 = vmatmul.f32.gmra.mxu0 %v9200
        %v9299 = vpop.f32.mrf.mxu0
        %v9300 = vadd.f32 0.0, %v9299
        %9301 = vmatmul.f32.gmra.mxu0 %v9202
        %v9302 = vpop.f32.mrf.mxu0
        %v9303 = vadd.f32 0.0, %v9302
        %9304 = vmatmul.f32.gmra.mxu0 %v9204
        %v9305 = vpop.f32.mrf.mxu0
        %v9306 = vadd.f32 0.0, %v9305
        %9307 = vmatmul.f32.gmra.mxu0 %v9206
        %v9308 = vpop.f32.mrf.mxu0
        %v9309 = vadd.f32 0.0, %v9308
        %9310 = vmatmul.f32.gmra.mxu0 %v9208
        %v9311 = vpop.f32.mrf.mxu0
        %v9312 = vadd.f32 0.0, %v9311
        %9313 = vmatmul.f32.gmra.mxu0 %v9210
        %v9314 = vpop.f32.mrf.mxu0
        %v9315 = vadd.f32 0.0, %v9314
        %9316 = vmatmul.f32.gmra.mxu0 %v9212
        %v9317 = vpop.f32.mrf.mxu0
        %v9318 = vadd.f32 0.0, %v9317
        %9319 = vmatmul.f32.gmra.mxu0 %v9214
        %v9320 = vpop.f32.mrf.mxu0
        %v9321 = vadd.f32 0.0, %v9320
        %9322 = vmatmul.f32.gmra.mxu0 %v9216
        %v9323 = vpop.f32.mrf.mxu0
        %v9324 = vadd.f32 0.0, %v9323
        %9325 = vmatmul.f32.gmra.mxu0 %v9218
        %v9326 = vpop.f32.mrf.mxu0
        %v9327 = vadd.f32 0.0, %v9326
        %9328 = vmatmul.f32.gmra.mxu0 %v9220
        %v9329 = vpop.f32.mrf.mxu0
        %v9330 = vadd.f32 0.0, %v9329
        %9331 = vmatmul.f32.gmra.mxu0 %v9222
        %v9332 = vpop.f32.mrf.mxu0
        %v9333 = vadd.f32 0.0, %v9332
        %9334 = vmatmul.f32.gmra.mxu0 %v9224
        %v9335 = vpop.f32.mrf.mxu0
        %v9336 = vadd.f32 0.0, %v9335
        %9337 = vmatmul.f32.gmra.mxu0 %v9226
        %v9338 = vpop.f32.mrf.mxu0
        %v9339 = vadd.f32 0.0, %v9338
        %9340 = vdwg.mxu0
        %s9341 = scalar_lea.vmem %s2, 3
        %v9342 = vld [vmem:[%s9341] sm:$0x1]
        %v9344 = vperm.slane %v9342, 0
        %v9346 = vmul.f32 %v9246, %v9344
        %v9347 = vmul.f32 %v9249, %v9344
        %v9348 = vmul.f32 %v9252, %v9344
        %v9349 = vmul.f32 %v9255, %v9344
        %v9350 = vmul.f32 %v9258, %v9344
        %v9351 = vmul.f32 %v9261, %v9344
        %v9352 = vmul.f32 %v9264, %v9344
        %v9353 = vmul.f32 %v9267, %v9344
        %v9354 = vmul.f32 %v9270, %v9344
        %v9355 = vmul.f32 %v9273, %v9344
        %v9356 = vmul.f32 %v9276, %v9344
        %v9357 = vmul.f32 %v9279, %v9344
        %v9358 = vmul.f32 %v9282, %v9344
        %v9359 = vmul.f32 %v9285, %v9344
        %v9360 = vmul.f32 %v9288, %v9344
        %v9361 = vmul.f32 %v9291, %v9344
        %v9362 = vmul.f32 %v9294, %v9344
        %v9363 = vmul.f32 %v9297, %v9344
        %v9364 = vmul.f32 %v9300, %v9344
        %v9365 = vmul.f32 %v9303, %v9344
        %v9366 = vmul.f32 %v9306, %v9344
        %v9367 = vmul.f32 %v9309, %v9344
        %v9368 = vmul.f32 %v9312, %v9344
        %v9369 = vmul.f32 %v9315, %v9344
        %v9370 = vmul.f32 %v9318, %v9344
        %v9371 = vmul.f32 %v9321, %v9344
        %v9372 = vmul.f32 %v9324, %v9344
        %v9373 = vmul.f32 %v9327, %v9344
        %v9374 = vmul.f32 %v9330, %v9344
        %v9375 = vmul.f32 %v9333, %v9344
        %v9376 = vmul.f32 %v9336, %v9344
        %v9377 = vmul.f32 %v9339, %v9344
        %s9378 = scalar_lea.vmem %s3, 3
        %v9379 = vld [vmem:[%s9378] sm:$0x1]
        %v9381 = vperm.slane %v9379, 0
        %v9383 = vadd.f32 %v9346, %v9381
        %v9384 = vadd.f32 %v9347, %v9381
        %v9385 = vadd.f32 %v9348, %v9381
        %v9386 = vadd.f32 %v9349, %v9381
        %v9387 = vadd.f32 %v9350, %v9381
        %v9388 = vadd.f32 %v9351, %v9381
        %v9389 = vadd.f32 %v9352, %v9381
        %v9390 = vadd.f32 %v9353, %v9381
        %v9391 = vadd.f32 %v9354, %v9381
        %v9392 = vadd.f32 %v9355, %v9381
        %v9393 = vadd.f32 %v9356, %v9381
        %v9394 = vadd.f32 %v9357, %v9381
        %v9395 = vadd.f32 %v9358, %v9381
        %v9396 = vadd.f32 %v9359, %v9381
        %v9397 = vadd.f32 %v9360, %v9381
        %v9398 = vadd.f32 %v9361, %v9381
        %v9399 = vadd.f32 %v9362, %v9381
        %v9400 = vadd.f32 %v9363, %v9381
        %v9401 = vadd.f32 %v9364, %v9381
        %v9402 = vadd.f32 %v9365, %v9381
        %v9403 = vadd.f32 %v9366, %v9381
        %v9404 = vadd.f32 %v9367, %v9381
        %v9405 = vadd.f32 %v9368, %v9381
        %v9406 = vadd.f32 %v9369, %v9381
        %v9407 = vadd.f32 %v9370, %v9381
        %v9408 = vadd.f32 %v9371, %v9381
        %v9409 = vadd.f32 %v9372, %v9381
        %v9410 = vadd.f32 %v9373, %v9381
        %v9411 = vadd.f32 %v9374, %v9381
        %v9412 = vadd.f32 %v9375, %v9381
        %v9413 = vadd.f32 %v9376, %v9381
        %v9414 = vadd.f32 %v9377, %v9381
        %v9415 = vmax.f32 %v9383, 0.0
        %v9416 = vmax.f32 %v9384, 0.0
        %v9417 = vmax.f32 %v9385, 0.0
        %v9418 = vmax.f32 %v9386, 0.0
        %v9419 = vmax.f32 %v9387, 0.0
        %v9420 = vmax.f32 %v9388, 0.0
        %v9421 = vmax.f32 %v9389, 0.0
        %v9422 = vmax.f32 %v9390, 0.0
        %v9423 = vmax.f32 %v9391, 0.0
        %v9424 = vmax.f32 %v9392, 0.0
        %v9425 = vmax.f32 %v9393, 0.0
        %v9426 = vmax.f32 %v9394, 0.0
        %v9427 = vmax.f32 %v9395, 0.0
        %v9428 = vmax.f32 %v9396, 0.0
        %v9429 = vmax.f32 %v9397, 0.0
        %v9430 = vmax.f32 %v9398, 0.0
        %v9431 = vmax.f32 %v9399, 0.0
        %v9432 = vmax.f32 %v9400, 0.0
        %v9433 = vmax.f32 %v9401, 0.0
        %v9434 = vmax.f32 %v9402, 0.0
        %v9435 = vmax.f32 %v9403, 0.0
        %v9436 = vmax.f32 %v9404, 0.0
        %v9437 = vmax.f32 %v9405, 0.0
        %v9438 = vmax.f32 %v9406, 0.0
        %v9439 = vmax.f32 %v9407, 0.0
        %v9440 = vmax.f32 %v9408, 0.0
        %v9441 = vmax.f32 %v9409, 0.0
        %v9442 = vmax.f32 %v9410, 0.0
        %v9443 = vmax.f32 %v9411, 0.0
        %v9444 = vmax.f32 %v9412, 0.0
        %v9445 = vmax.f32 %v9413, 0.0
        %v9446 = vmax.f32 %v9414, 0.0
        %9447 = vst.msk [vmem:[%s301 + $0x8] sm:$0xff] %vm196, %v9415
        %9448 = vst.msk [vmem:[%s301 + $0x10] sm:$0xff] %vm196, %v9416
        %9449 = vst.msk [vmem:[%s301 + $0x28] sm:$0xff] %vm196, %v9417
        %9450 = vst.msk [vmem:[%s301 + $0x30] sm:$0xff] %vm196, %v9418
        %9451 = vst.msk [vmem:[%s301 + $0x48] sm:$0xff] %vm196, %v9419
        %9452 = vst.msk [vmem:[%s301 + $0x50] sm:$0xff] %vm196, %v9420
        %9453 = vst.msk [vmem:[%s301 + $0x68] sm:$0xff] %vm196, %v9421
        %9454 = vst.msk [vmem:[%s301 + $0x70] sm:$0xff] %vm196, %v9422
        %9455 = vst.msk [vmem:[%s301 + $0x88] sm:$0xff] %vm196, %v9423
        %9456 = vst.msk [vmem:[%s301 + $0x90] sm:$0xff] %vm196, %v9424
        %9457 = vst.msk [vmem:[%s301 + $0xa8] sm:$0xff] %vm196, %v9425
        %9458 = vst.msk [vmem:[%s301 + $0xb0] sm:$0xff] %vm196, %v9426
        %9459 = vst.msk [vmem:[%s301 + $0xc8] sm:$0xff] %vm196, %v9427
        %9460 = vst.msk [vmem:[%s301 + $0xd0] sm:$0xff] %vm196, %v9428
        %9461 = vst.msk [vmem:[%s301 + $0xe8] sm:$0xff] %vm196, %v9429
        %9462 = vst.msk [vmem:[%s301 + $0xf0] sm:$0xff] %vm196, %v9430
        %9463 = vst.msk [vmem:[%s301 + $0x108] sm:$0xff] %vm196, %v9431
        %9464 = vst.msk [vmem:[%s301 + $0x110] sm:$0xff] %vm196, %v9432
        %9465 = vst.msk [vmem:[%s301 + $0x128] sm:$0xff] %vm196, %v9433
        %9466 = vst.msk [vmem:[%s301 + $0x130] sm:$0xff] %vm196, %v9434
        %9467 = vst.msk [vmem:[%s301 + $0x148] sm:$0xff] %vm196, %v9435
        %9468 = vst.msk [vmem:[%s301 + $0x150] sm:$0xff] %vm196, %v9436
        %9469 = vst.msk [vmem:[%s301 + $0x168] sm:$0xff] %vm196, %v9437
        %9470 = vst.msk [vmem:[%s301 + $0x170] sm:$0xff] %vm196, %v9438
        %9471 = vst.msk [vmem:[%s301 + $0x188] sm:$0xff] %vm196, %v9439
        %9472 = vst.msk [vmem:[%s301 + $0x190] sm:$0xff] %vm196, %v9440
        %9473 = vst.msk [vmem:[%s301 + $0x1a8] sm:$0xff] %vm196, %v9441
        %9474 = vst.msk [vmem:[%s301 + $0x1b0] sm:$0xff] %vm196, %v9442
        %9475 = vst.msk [vmem:[%s301 + $0x1c8] sm:$0xff] %vm196, %v9443
        %9476 = vst.msk [vmem:[%s301 + $0x1d0] sm:$0xff] %vm196, %v9444
        %9477 = vst.msk [vmem:[%s301 + $0x1e8] sm:$0xff] %vm196, %v9445
        %9478 = vst.msk [vmem:[%s301 + $0x1f0] sm:$0xff] %vm196, %v9446
        %v9479 = vld [vmem:[#allocation2] sm:$0xff]
        %v9480 = vld [vmem:[#allocation2 + $0x8] sm:$0xff]
        %v9481 = vld [vmem:[#allocation2 + $0x10] sm:$0xff]
        %v9482 = vld [vmem:[#allocation2 + $0x18] sm:$0xff]
        %v9483 = vld [vmem:[#allocation2 + $0x20] sm:$0xff]
        %v9484 = vld [vmem:[#allocation2 + $0x28] sm:$0xff]
        %v9485 = vld [vmem:[#allocation2 + $0x30] sm:$0xff]
        %v9486 = vld [vmem:[#allocation2 + $0x38] sm:$0xff]
        %v9487 = vld [vmem:[#allocation2 + $0x40] sm:$0xff]
        %v9488 = vld [vmem:[#allocation2 + $0x48] sm:$0xff]
        %v9489 = vld [vmem:[#allocation2 + $0x50] sm:$0xff]
        %v9490 = vld [vmem:[#allocation2 + $0x58] sm:$0xff]
        %v9491 = vld [vmem:[#allocation2 + $0x60] sm:$0xff]
        %v9492 = vld [vmem:[#allocation2 + $0x68] sm:$0xff]
        %v9493 = vld [vmem:[#allocation2 + $0x70] sm:$0xff]
        %v9494 = vld [vmem:[#allocation2 + $0x78] sm:$0xff]
        %v9495 = vld [vmem:[#allocation2 + $0x80] sm:$0xff]
        %v9496 = vld [vmem:[#allocation2 + $0x88] sm:$0xff]
        %v9497 = vld [vmem:[#allocation2 + $0x90] sm:$0xff]
        %v9498 = vld [vmem:[#allocation2 + $0x98] sm:$0xff]
        %v9499 = vld [vmem:[#allocation2 + $0xa0] sm:$0xff]
        %v9500 = vld [vmem:[#allocation2 + $0xa8] sm:$0xff]
        %v9501 = vld [vmem:[#allocation2 + $0xb0] sm:$0xff]
        %v9502 = vld [vmem:[#allocation2 + $0xb8] sm:$0xff]
        %v9503 = vld [vmem:[#allocation2 + $0xc0] sm:$0xff]
        %v9504 = vld [vmem:[#allocation2 + $0xc8] sm:$0xff]
        %v9505 = vld [vmem:[#allocation2 + $0xd0] sm:$0xff]
        %v9506 = vld [vmem:[#allocation2 + $0xd8] sm:$0xff]
        %v9507 = vld [vmem:[#allocation2 + $0xe0] sm:$0xff]
        %v9508 = vld [vmem:[#allocation2 + $0xe8] sm:$0xff]
        %v9509 = vld [vmem:[#allocation2 + $0xf0] sm:$0xff]
        %v9510 = vld [vmem:[#allocation2 + $0xf8] sm:$0xff]
        %v9511 = vld [vmem:[#allocation2 + $0x100] sm:$0xff]
        %v9512 = vld [vmem:[#allocation2 + $0x108] sm:$0xff]
        %v9513 = vld [vmem:[#allocation2 + $0x110] sm:$0xff]
        %v9514 = vld [vmem:[#allocation2 + $0x118] sm:$0xff]
        %v9515 = vld [vmem:[#allocation2 + $0x120] sm:$0xff]
        %v9516 = vld [vmem:[#allocation2 + $0x128] sm:$0xff]
        %v9517 = vld [vmem:[#allocation2 + $0x130] sm:$0xff]
        %v9518 = vld [vmem:[#allocation2 + $0x138] sm:$0xff]
        %v9519 = vld [vmem:[#allocation2 + $0x140] sm:$0xff]
        %v9520 = vld [vmem:[#allocation2 + $0x148] sm:$0xff]
        %v9521 = vld [vmem:[#allocation2 + $0x150] sm:$0xff]
        %v9522 = vld [vmem:[#allocation2 + $0x158] sm:$0xff]
        %v9523 = vld [vmem:[#allocation2 + $0x160] sm:$0xff]
        %v9524 = vld [vmem:[#allocation2 + $0x168] sm:$0xff]
        %v9525 = vld [vmem:[#allocation2 + $0x170] sm:$0xff]
        %v9526 = vld [vmem:[#allocation2 + $0x178] sm:$0xff]
        %v9527 = vld [vmem:[#allocation2 + $0x180] sm:$0xff]
        %v9528 = vld [vmem:[#allocation2 + $0x188] sm:$0xff]
        %v9529 = vld [vmem:[#allocation2 + $0x190] sm:$0xff]
        %v9530 = vld [vmem:[#allocation2 + $0x198] sm:$0xff]
        %v9531 = vld [vmem:[#allocation2 + $0x1a0] sm:$0xff]
        %v9532 = vld [vmem:[#allocation2 + $0x1a8] sm:$0xff]
        %v9533 = vld [vmem:[#allocation2 + $0x1b0] sm:$0xff]
        %v9534 = vld [vmem:[#allocation2 + $0x1b8] sm:$0xff]
        %v9535 = vld [vmem:[#allocation2 + $0x1c0] sm:$0xff]
        %v9536 = vld [vmem:[#allocation2 + $0x1c8] sm:$0xff]
        %v9537 = vld [vmem:[#allocation2 + $0x1d0] sm:$0xff]
        %v9538 = vld [vmem:[#allocation2 + $0x1d8] sm:$0xff]
        %v9539 = vld [vmem:[#allocation2 + $0x1e0] sm:$0xff]
        %v9540 = vld [vmem:[#allocation2 + $0x1e8] sm:$0xff]
        %v9541 = vld [vmem:[#allocation2 + $0x1f0] sm:$0xff]
        %v9542 = vld [vmem:[#allocation2 + $0x1f8] sm:$0xff]
        %v9543 = vld [vmem:[#allocation2 + $0x200] sm:$0xff]
        %v9544 = vld [vmem:[#allocation2 + $0x208] sm:$0xff]
        %v9545 = vld [vmem:[#allocation2 + $0x210] sm:$0xff]
        %v9546 = vld [vmem:[#allocation2 + $0x218] sm:$0xff]
        %v9547 = vld [vmem:[#allocation2 + $0x220] sm:$0xff]
        %v9548 = vld [vmem:[#allocation2 + $0x228] sm:$0xff]
        %v9549 = vld [vmem:[#allocation2 + $0x230] sm:$0xff]
        %v9550 = vld [vmem:[#allocation2 + $0x238] sm:$0xff]
        %v9583 = vrot.slane %v9480, 1
        %v9584 = vrot.slane %v9481, 1
        %v9585 = vsel %vm439, %v9583, %v9584
        %v9586 = vrot.slane %v9484, 1
        %v9587 = vrot.slane %v9485, 1
        %v9588 = vsel %vm439, %v9586, %v9587
        %v9589 = vrot.slane %v9488, 1
        %v9590 = vrot.slane %v9489, 1
        %v9591 = vsel %vm439, %v9589, %v9590
        %v9592 = vrot.slane %v9492, 1
        %v9593 = vrot.slane %v9493, 1
        %v9594 = vsel %vm439, %v9592, %v9593
        %v9595 = vrot.slane %v9496, 1
        %v9596 = vrot.slane %v9497, 1
        %v9597 = vsel %vm439, %v9595, %v9596
        %v9598 = vrot.slane %v9500, 1
        %v9599 = vrot.slane %v9501, 1
        %v9600 = vsel %vm439, %v9598, %v9599
        %v9601 = vrot.slane %v9504, 1
        %v9602 = vrot.slane %v9505, 1
        %v9603 = vsel %vm439, %v9601, %v9602
        %v9604 = vrot.slane %v9508, 1
        %v9605 = vrot.slane %v9509, 1
        %v9606 = vsel %vm439, %v9604, %v9605
        %v9607 = vrot.slane %v9512, 1
        %v9608 = vrot.slane %v9513, 1
        %v9609 = vsel %vm439, %v9607, %v9608
        %v9610 = vrot.slane %v9516, 1
        %v9611 = vrot.slane %v9517, 1
        %v9612 = vsel %vm439, %v9610, %v9611
        %v9613 = vrot.slane %v9520, 1
        %v9614 = vrot.slane %v9521, 1
        %v9615 = vsel %vm439, %v9613, %v9614
        %v9616 = vrot.slane %v9524, 1
        %v9617 = vrot.slane %v9525, 1
        %v9618 = vsel %vm439, %v9616, %v9617
        %v9619 = vrot.slane %v9528, 1
        %v9620 = vrot.slane %v9529, 1
        %v9621 = vsel %vm439, %v9619, %v9620
        %v9622 = vrot.slane %v9532, 1
        %v9623 = vrot.slane %v9533, 1
        %v9624 = vsel %vm439, %v9622, %v9623
        %v9625 = vrot.slane %v9536, 1
        %v9626 = vrot.slane %v9537, 1
        %v9627 = vsel %vm439, %v9625, %v9626
        %v9628 = vrot.slane %v9540, 1
        %v9629 = vrot.slane %v9541, 1
        %v9630 = vsel %vm439, %v9628, %v9629
        %9631 = vrot.lane.b32.xlu0 %v9583, 8
        %v9632 = vpop.permute.xlu0 %9631
        %9633 = vrot.lane.b32.xlu0 %v9585, 8
        %v9634 = vpop.permute.xlu0 %9633
        %9635 = vrot.lane.b32.xlu0 %v9584, 8
        %v9636 = vpop.permute.xlu0 %9635
        %9637 = vrot.lane.b32.xlu0 %v9586, 8
        %v9638 = vpop.permute.xlu0 %9637
        %9639 = vrot.lane.b32.xlu0 %v9588, 8
        %v9640 = vpop.permute.xlu0 %9639
        %9641 = vrot.lane.b32.xlu0 %v9587, 8
        %v9642 = vpop.permute.xlu0 %9641
        %9643 = vrot.lane.b32.xlu0 %v9589, 8
        %v9644 = vpop.permute.xlu0 %9643
        %9645 = vrot.lane.b32.xlu0 %v9591, 8
        %v9646 = vpop.permute.xlu0 %9645
        %9647 = vrot.lane.b32.xlu0 %v9590, 8
        %v9648 = vpop.permute.xlu0 %9647
        %9649 = vrot.lane.b32.xlu0 %v9592, 8
        %v9650 = vpop.permute.xlu0 %9649
        %9651 = vrot.lane.b32.xlu0 %v9594, 8
        %v9652 = vpop.permute.xlu0 %9651
        %9653 = vrot.lane.b32.xlu0 %v9593, 8
        %v9654 = vpop.permute.xlu0 %9653
        %9655 = vrot.lane.b32.xlu0 %v9595, 8
        %v9656 = vpop.permute.xlu0 %9655
        %9657 = vrot.lane.b32.xlu0 %v9597, 8
        %v9658 = vpop.permute.xlu0 %9657
        %9659 = vrot.lane.b32.xlu0 %v9596, 8
        %v9660 = vpop.permute.xlu0 %9659
        %9661 = vrot.lane.b32.xlu0 %v9598, 8
        %v9662 = vpop.permute.xlu0 %9661
        %9663 = vrot.lane.b32.xlu0 %v9600, 8
        %v9664 = vpop.permute.xlu0 %9663
        %9665 = vrot.lane.b32.xlu0 %v9599, 8
        %v9666 = vpop.permute.xlu0 %9665
        %9667 = vrot.lane.b32.xlu0 %v9601, 8
        %v9668 = vpop.permute.xlu0 %9667
        %9669 = vrot.lane.b32.xlu0 %v9603, 8
        %v9670 = vpop.permute.xlu0 %9669
        %9671 = vrot.lane.b32.xlu0 %v9602, 8
        %v9672 = vpop.permute.xlu0 %9671
        %9673 = vrot.lane.b32.xlu0 %v9604, 8
        %v9674 = vpop.permute.xlu0 %9673
        %9675 = vrot.lane.b32.xlu0 %v9606, 8
        %v9676 = vpop.permute.xlu0 %9675
        %9677 = vrot.lane.b32.xlu0 %v9605, 8
        %v9678 = vpop.permute.xlu0 %9677
        %9679 = vrot.lane.b32.xlu0 %v9607, 8
        %v9680 = vpop.permute.xlu0 %9679
        %9681 = vrot.lane.b32.xlu0 %v9609, 8
        %v9682 = vpop.permute.xlu0 %9681
        %9683 = vrot.lane.b32.xlu0 %v9608, 8
        %v9684 = vpop.permute.xlu0 %9683
        %9685 = vrot.lane.b32.xlu0 %v9610, 8
        %v9686 = vpop.permute.xlu0 %9685
        %9687 = vrot.lane.b32.xlu0 %v9612, 8
        %v9688 = vpop.permute.xlu0 %9687
        %9689 = vrot.lane.b32.xlu0 %v9611, 8
        %v9690 = vpop.permute.xlu0 %9689
        %9691 = vrot.lane.b32.xlu0 %v9613, 8
        %v9692 = vpop.permute.xlu0 %9691
        %9693 = vrot.lane.b32.xlu0 %v9615, 8
        %v9694 = vpop.permute.xlu0 %9693
        %9695 = vrot.lane.b32.xlu0 %v9614, 8
        %v9696 = vpop.permute.xlu0 %9695
        %9697 = vrot.lane.b32.xlu0 %v9616, 8
        %v9698 = vpop.permute.xlu0 %9697
        %9699 = vrot.lane.b32.xlu0 %v9618, 8
        %v9700 = vpop.permute.xlu0 %9699
        %9701 = vrot.lane.b32.xlu0 %v9617, 8
        %v9702 = vpop.permute.xlu0 %9701
        %9703 = vrot.lane.b32.xlu0 %v9619, 8
        %v9704 = vpop.permute.xlu0 %9703
        %9705 = vrot.lane.b32.xlu0 %v9621, 8
        %v9706 = vpop.permute.xlu0 %9705
        %9707 = vrot.lane.b32.xlu0 %v9620, 8
        %v9708 = vpop.permute.xlu0 %9707
        %9709 = vrot.lane.b32.xlu0 %v9622, 8
        %v9710 = vpop.permute.xlu0 %9709
        %9711 = vrot.lane.b32.xlu0 %v9624, 8
        %v9712 = vpop.permute.xlu0 %9711
        %9713 = vrot.lane.b32.xlu0 %v9623, 8
        %v9714 = vpop.permute.xlu0 %9713
        %9715 = vrot.lane.b32.xlu0 %v9625, 8
        %v9716 = vpop.permute.xlu0 %9715
        %9717 = vrot.lane.b32.xlu0 %v9627, 8
        %v9718 = vpop.permute.xlu0 %9717
        %9719 = vrot.lane.b32.xlu0 %v9626, 8
        %v9720 = vpop.permute.xlu0 %9719
        %9721 = vrot.lane.b32.xlu0 %v9628, 8
        %v9722 = vpop.permute.xlu0 %9721
        %9723 = vrot.lane.b32.xlu0 %v9630, 8
        %v9724 = vpop.permute.xlu0 %9723
        %9725 = vrot.lane.b32.xlu0 %v9629, 8
        %v9726 = vpop.permute.xlu0 %9725
        %v9791 = vrot.slane %v9480, 2
        %v9792 = vrot.slane %v9481, 2
        %v9793 = vsel %vm648, %v9791, %v9792
        %v9794 = vrot.slane %v9482, 2
        %v9795 = vsel %vm648, %v9792, %v9794
        %v9796 = vrot.slane %v9484, 2
        %v9797 = vrot.slane %v9485, 2
        %v9798 = vsel %vm648, %v9796, %v9797
        %v9799 = vrot.slane %v9486, 2
        %v9800 = vsel %vm648, %v9797, %v9799
        %v9801 = vrot.slane %v9488, 2
        %v9802 = vrot.slane %v9489, 2
        %v9803 = vsel %vm648, %v9801, %v9802
        %v9804 = vrot.slane %v9490, 2
        %v9805 = vsel %vm648, %v9802, %v9804
        %v9806 = vrot.slane %v9492, 2
        %v9807 = vrot.slane %v9493, 2
        %v9808 = vsel %vm648, %v9806, %v9807
        %v9809 = vrot.slane %v9494, 2
        %v9810 = vsel %vm648, %v9807, %v9809
        %v9811 = vrot.slane %v9496, 2
        %v9812 = vrot.slane %v9497, 2
        %v9813 = vsel %vm648, %v9811, %v9812
        %v9814 = vrot.slane %v9498, 2
        %v9815 = vsel %vm648, %v9812, %v9814
        %v9816 = vrot.slane %v9500, 2
        %v9817 = vrot.slane %v9501, 2
        %v9818 = vsel %vm648, %v9816, %v9817
        %v9819 = vrot.slane %v9502, 2
        %v9820 = vsel %vm648, %v9817, %v9819
        %v9821 = vrot.slane %v9504, 2
        %v9822 = vrot.slane %v9505, 2
        %v9823 = vsel %vm648, %v9821, %v9822
        %v9824 = vrot.slane %v9506, 2
        %v9825 = vsel %vm648, %v9822, %v9824
        %v9826 = vrot.slane %v9508, 2
        %v9827 = vrot.slane %v9509, 2
        %v9828 = vsel %vm648, %v9826, %v9827
        %v9829 = vrot.slane %v9510, 2
        %v9830 = vsel %vm648, %v9827, %v9829
        %v9831 = vrot.slane %v9512, 2
        %v9832 = vrot.slane %v9513, 2
        %v9833 = vsel %vm648, %v9831, %v9832
        %v9834 = vrot.slane %v9514, 2
        %v9835 = vsel %vm648, %v9832, %v9834
        %v9836 = vrot.slane %v9516, 2
        %v9837 = vrot.slane %v9517, 2
        %v9838 = vsel %vm648, %v9836, %v9837
        %v9839 = vrot.slane %v9518, 2
        %v9840 = vsel %vm648, %v9837, %v9839
        %v9841 = vrot.slane %v9520, 2
        %v9842 = vrot.slane %v9521, 2
        %v9843 = vsel %vm648, %v9841, %v9842
        %v9844 = vrot.slane %v9522, 2
        %v9845 = vsel %vm648, %v9842, %v9844
        %v9846 = vrot.slane %v9524, 2
        %v9847 = vrot.slane %v9525, 2
        %v9848 = vsel %vm648, %v9846, %v9847
        %v9849 = vrot.slane %v9526, 2
        %v9850 = vsel %vm648, %v9847, %v9849
        %v9851 = vrot.slane %v9528, 2
        %v9852 = vrot.slane %v9529, 2
        %v9853 = vsel %vm648, %v9851, %v9852
        %v9854 = vrot.slane %v9530, 2
        %v9855 = vsel %vm648, %v9852, %v9854
        %v9856 = vrot.slane %v9532, 2
        %v9857 = vrot.slane %v9533, 2
        %v9858 = vsel %vm648, %v9856, %v9857
        %v9859 = vrot.slane %v9534, 2
        %v9860 = vsel %vm648, %v9857, %v9859
        %v9861 = vrot.slane %v9536, 2
        %v9862 = vrot.slane %v9537, 2
        %v9863 = vsel %vm648, %v9861, %v9862
        %v9864 = vrot.slane %v9538, 2
        %v9865 = vsel %vm648, %v9862, %v9864
        %v9866 = vrot.slane %v9540, 2
        %v9867 = vrot.slane %v9541, 2
        %v9868 = vsel %vm648, %v9866, %v9867
        %v9869 = vrot.slane %v9542, 2
        %v9870 = vsel %vm648, %v9867, %v9869
        %9871 = vrot.lane.b32.xlu0 %v9791, 16
        %v9872 = vpop.permute.xlu0 %9871
        %9873 = vrot.lane.b32.xlu0 %v9793, 16
        %v9874 = vpop.permute.xlu0 %9873
        %9875 = vrot.lane.b32.xlu0 %v9795, 16
        %v9876 = vpop.permute.xlu0 %9875
        %9877 = vrot.lane.b32.xlu0 %v9796, 16
        %v9878 = vpop.permute.xlu0 %9877
        %9879 = vrot.lane.b32.xlu0 %v9798, 16
        %v9880 = vpop.permute.xlu0 %9879
        %9881 = vrot.lane.b32.xlu0 %v9800, 16
        %v9882 = vpop.permute.xlu0 %9881
        %9883 = vrot.lane.b32.xlu0 %v9801, 16
        %v9884 = vpop.permute.xlu0 %9883
        %9885 = vrot.lane.b32.xlu0 %v9803, 16
        %v9886 = vpop.permute.xlu0 %9885
        %9887 = vrot.lane.b32.xlu0 %v9805, 16
        %v9888 = vpop.permute.xlu0 %9887
        %9889 = vrot.lane.b32.xlu0 %v9806, 16
        %v9890 = vpop.permute.xlu0 %9889
        %9891 = vrot.lane.b32.xlu0 %v9808, 16
        %v9892 = vpop.permute.xlu0 %9891
        %9893 = vrot.lane.b32.xlu0 %v9810, 16
        %v9894 = vpop.permute.xlu0 %9893
        %9895 = vrot.lane.b32.xlu0 %v9811, 16
        %v9896 = vpop.permute.xlu0 %9895
        %9897 = vrot.lane.b32.xlu0 %v9813, 16
        %v9898 = vpop.permute.xlu0 %9897
        %9899 = vrot.lane.b32.xlu0 %v9815, 16
        %v9900 = vpop.permute.xlu0 %9899
        %9901 = vrot.lane.b32.xlu0 %v9816, 16
        %v9902 = vpop.permute.xlu0 %9901
        %9903 = vrot.lane.b32.xlu0 %v9818, 16
        %v9904 = vpop.permute.xlu0 %9903
        %9905 = vrot.lane.b32.xlu0 %v9820, 16
        %v9906 = vpop.permute.xlu0 %9905
        %9907 = vrot.lane.b32.xlu0 %v9821, 16
        %v9908 = vpop.permute.xlu0 %9907
        %9909 = vrot.lane.b32.xlu0 %v9823, 16
        %v9910 = vpop.permute.xlu0 %9909
        %9911 = vrot.lane.b32.xlu0 %v9825, 16
        %v9912 = vpop.permute.xlu0 %9911
        %9913 = vrot.lane.b32.xlu0 %v9826, 16
        %v9914 = vpop.permute.xlu0 %9913
        %9915 = vrot.lane.b32.xlu0 %v9828, 16
        %v9916 = vpop.permute.xlu0 %9915
        %9917 = vrot.lane.b32.xlu0 %v9830, 16
        %v9918 = vpop.permute.xlu0 %9917
        %9919 = vrot.lane.b32.xlu0 %v9831, 16
        %v9920 = vpop.permute.xlu0 %9919
        %9921 = vrot.lane.b32.xlu0 %v9833, 16
        %v9922 = vpop.permute.xlu0 %9921
        %9923 = vrot.lane.b32.xlu0 %v9835, 16
        %v9924 = vpop.permute.xlu0 %9923
        %9925 = vrot.lane.b32.xlu0 %v9836, 16
        %v9926 = vpop.permute.xlu0 %9925
        %9927 = vrot.lane.b32.xlu0 %v9838, 16
        %v9928 = vpop.permute.xlu0 %9927
        %9929 = vrot.lane.b32.xlu0 %v9840, 16
        %v9930 = vpop.permute.xlu0 %9929
        %9931 = vrot.lane.b32.xlu0 %v9841, 16
        %v9932 = vpop.permute.xlu0 %9931
        %9933 = vrot.lane.b32.xlu0 %v9843, 16
        %v9934 = vpop.permute.xlu0 %9933
        %9935 = vrot.lane.b32.xlu0 %v9845, 16
        %v9936 = vpop.permute.xlu0 %9935
        %9937 = vrot.lane.b32.xlu0 %v9846, 16
        %v9938 = vpop.permute.xlu0 %9937
        %9939 = vrot.lane.b32.xlu0 %v9848, 16
        %v9940 = vpop.permute.xlu0 %9939
        %9941 = vrot.lane.b32.xlu0 %v9850, 16
        %v9942 = vpop.permute.xlu0 %9941
        %9943 = vrot.lane.b32.xlu0 %v9851, 16
        %v9944 = vpop.permute.xlu0 %9943
        %9945 = vrot.lane.b32.xlu0 %v9853, 16
        %v9946 = vpop.permute.xlu0 %9945
        %9947 = vrot.lane.b32.xlu0 %v9855, 16
        %v9948 = vpop.permute.xlu0 %9947
        %9949 = vrot.lane.b32.xlu0 %v9856, 16
        %v9950 = vpop.permute.xlu0 %9949
        %9951 = vrot.lane.b32.xlu0 %v9858, 16
        %v9952 = vpop.permute.xlu0 %9951
        %9953 = vrot.lane.b32.xlu0 %v9860, 16
        %v9954 = vpop.permute.xlu0 %9953
        %9955 = vrot.lane.b32.xlu0 %v9861, 16
        %v9956 = vpop.permute.xlu0 %9955
        %9957 = vrot.lane.b32.xlu0 %v9863, 16
        %v9958 = vpop.permute.xlu0 %9957
        %9959 = vrot.lane.b32.xlu0 %v9865, 16
        %v9960 = vpop.permute.xlu0 %9959
        %9961 = vrot.lane.b32.xlu0 %v9866, 16
        %v9962 = vpop.permute.xlu0 %9961
        %9963 = vrot.lane.b32.xlu0 %v9868, 16
        %v9964 = vpop.permute.xlu0 %9963
        %9965 = vrot.lane.b32.xlu0 %v9870, 16
        %v9966 = vpop.permute.xlu0 %9965
        %10033 = vrot.lane.b32.xlu0 %v9483, 24
        %v10034 = vpop.permute.xlu0 %10033
        %10035 = vrot.lane.b32.xlu0 %v9484, 24
        %v10036 = vpop.permute.xlu0 %10035
        %10037 = vrot.lane.b32.xlu0 %v9485, 24
        %v10038 = vpop.permute.xlu0 %10037
        %10039 = vrot.lane.b32.xlu0 %v9487, 24
        %v10040 = vpop.permute.xlu0 %10039
        %10041 = vrot.lane.b32.xlu0 %v9488, 24
        %v10042 = vpop.permute.xlu0 %10041
        %10043 = vrot.lane.b32.xlu0 %v9489, 24
        %v10044 = vpop.permute.xlu0 %10043
        %10045 = vrot.lane.b32.xlu0 %v9491, 24
        %v10046 = vpop.permute.xlu0 %10045
        %10047 = vrot.lane.b32.xlu0 %v9492, 24
        %v10048 = vpop.permute.xlu0 %10047
        %10049 = vrot.lane.b32.xlu0 %v9493, 24
        %v10050 = vpop.permute.xlu0 %10049
        %10051 = vrot.lane.b32.xlu0 %v9495, 24
        %v10052 = vpop.permute.xlu0 %10051
        %10053 = vrot.lane.b32.xlu0 %v9496, 24
        %v10054 = vpop.permute.xlu0 %10053
        %10055 = vrot.lane.b32.xlu0 %v9497, 24
        %v10056 = vpop.permute.xlu0 %10055
        %10057 = vrot.lane.b32.xlu0 %v9499, 24
        %v10058 = vpop.permute.xlu0 %10057
        %10059 = vrot.lane.b32.xlu0 %v9500, 24
        %v10060 = vpop.permute.xlu0 %10059
        %10061 = vrot.lane.b32.xlu0 %v9501, 24
        %v10062 = vpop.permute.xlu0 %10061
        %10063 = vrot.lane.b32.xlu0 %v9503, 24
        %v10064 = vpop.permute.xlu0 %10063
        %10065 = vrot.lane.b32.xlu0 %v9504, 24
        %v10066 = vpop.permute.xlu0 %10065
        %10067 = vrot.lane.b32.xlu0 %v9505, 24
        %v10068 = vpop.permute.xlu0 %10067
        %10069 = vrot.lane.b32.xlu0 %v9507, 24
        %v10070 = vpop.permute.xlu0 %10069
        %10071 = vrot.lane.b32.xlu0 %v9508, 24
        %v10072 = vpop.permute.xlu0 %10071
        %10073 = vrot.lane.b32.xlu0 %v9509, 24
        %v10074 = vpop.permute.xlu0 %10073
        %10075 = vrot.lane.b32.xlu0 %v9511, 24
        %v10076 = vpop.permute.xlu0 %10075
        %10077 = vrot.lane.b32.xlu0 %v9512, 24
        %v10078 = vpop.permute.xlu0 %10077
        %10079 = vrot.lane.b32.xlu0 %v9513, 24
        %v10080 = vpop.permute.xlu0 %10079
        %10081 = vrot.lane.b32.xlu0 %v9515, 24
        %v10082 = vpop.permute.xlu0 %10081
        %10083 = vrot.lane.b32.xlu0 %v9516, 24
        %v10084 = vpop.permute.xlu0 %10083
        %10085 = vrot.lane.b32.xlu0 %v9517, 24
        %v10086 = vpop.permute.xlu0 %10085
        %10087 = vrot.lane.b32.xlu0 %v9519, 24
        %v10088 = vpop.permute.xlu0 %10087
        %10089 = vrot.lane.b32.xlu0 %v9520, 24
        %v10090 = vpop.permute.xlu0 %10089
        %10091 = vrot.lane.b32.xlu0 %v9521, 24
        %v10092 = vpop.permute.xlu0 %10091
        %10093 = vrot.lane.b32.xlu0 %v9523, 24
        %v10094 = vpop.permute.xlu0 %10093
        %10095 = vrot.lane.b32.xlu0 %v9524, 24
        %v10096 = vpop.permute.xlu0 %10095
        %10097 = vrot.lane.b32.xlu0 %v9525, 24
        %v10098 = vpop.permute.xlu0 %10097
        %10099 = vrot.lane.b32.xlu0 %v9527, 24
        %v10100 = vpop.permute.xlu0 %10099
        %10101 = vrot.lane.b32.xlu0 %v9528, 24
        %v10102 = vpop.permute.xlu0 %10101
        %10103 = vrot.lane.b32.xlu0 %v9529, 24
        %v10104 = vpop.permute.xlu0 %10103
        %10105 = vrot.lane.b32.xlu0 %v9531, 24
        %v10106 = vpop.permute.xlu0 %10105
        %10107 = vrot.lane.b32.xlu0 %v9532, 24
        %v10108 = vpop.permute.xlu0 %10107
        %10109 = vrot.lane.b32.xlu0 %v9533, 24
        %v10110 = vpop.permute.xlu0 %10109
        %10111 = vrot.lane.b32.xlu0 %v9535, 24
        %v10112 = vpop.permute.xlu0 %10111
        %10113 = vrot.lane.b32.xlu0 %v9536, 24
        %v10114 = vpop.permute.xlu0 %10113
        %10115 = vrot.lane.b32.xlu0 %v9537, 24
        %v10116 = vpop.permute.xlu0 %10115
        %10117 = vrot.lane.b32.xlu0 %v9539, 24
        %v10118 = vpop.permute.xlu0 %10117
        %10119 = vrot.lane.b32.xlu0 %v9540, 24
        %v10120 = vpop.permute.xlu0 %10119
        %10121 = vrot.lane.b32.xlu0 %v9541, 24
        %v10122 = vpop.permute.xlu0 %10121
        %10123 = vrot.lane.b32.xlu0 %v9543, 24
        %v10124 = vpop.permute.xlu0 %10123
        %10125 = vrot.lane.b32.xlu0 %v9544, 24
        %v10126 = vpop.permute.xlu0 %10125
        %10127 = vrot.lane.b32.xlu0 %v9545, 24
        %v10128 = vpop.permute.xlu0 %10127
        %v10177 = vrot.slane %v9544, 1
        %v10178 = vrot.slane %v9545, 1
        %v10179 = vsel %vm439, %v10177, %v10178
        %10180 = vrot.lane.b32.xlu0 %v9586, 32
        %v10181 = vpop.permute.xlu0 %10180
        %10182 = vrot.lane.b32.xlu0 %v9588, 32
        %v10183 = vpop.permute.xlu0 %10182
        %10184 = vrot.lane.b32.xlu0 %v9587, 32
        %v10185 = vpop.permute.xlu0 %10184
        %10186 = vrot.lane.b32.xlu0 %v9589, 32
        %v10187 = vpop.permute.xlu0 %10186
        %10188 = vrot.lane.b32.xlu0 %v9591, 32
        %v10189 = vpop.permute.xlu0 %10188
        %10190 = vrot.lane.b32.xlu0 %v9590, 32
        %v10191 = vpop.permute.xlu0 %10190
        %10192 = vrot.lane.b32.xlu0 %v9592, 32
        %v10193 = vpop.permute.xlu0 %10192
        %10194 = vrot.lane.b32.xlu0 %v9594, 32
        %v10195 = vpop.permute.xlu0 %10194
        %10196 = vrot.lane.b32.xlu0 %v9593, 32
        %v10197 = vpop.permute.xlu0 %10196
        %10198 = vrot.lane.b32.xlu0 %v9595, 32
        %v10199 = vpop.permute.xlu0 %10198
        %10200 = vrot.lane.b32.xlu0 %v9597, 32
        %v10201 = vpop.permute.xlu0 %10200
        %10202 = vrot.lane.b32.xlu0 %v9596, 32
        %v10203 = vpop.permute.xlu0 %10202
        %10204 = vrot.lane.b32.xlu0 %v9598, 32
        %v10205 = vpop.permute.xlu0 %10204
        %10206 = vrot.lane.b32.xlu0 %v9600, 32
        %v10207 = vpop.permute.xlu0 %10206
        %10208 = vrot.lane.b32.xlu0 %v9599, 32
        %v10209 = vpop.permute.xlu0 %10208
        %10210 = vrot.lane.b32.xlu0 %v9601, 32
        %v10211 = vpop.permute.xlu0 %10210
        %10212 = vrot.lane.b32.xlu0 %v9603, 32
        %v10213 = vpop.permute.xlu0 %10212
        %10214 = vrot.lane.b32.xlu0 %v9602, 32
        %v10215 = vpop.permute.xlu0 %10214
        %10216 = vrot.lane.b32.xlu0 %v9604, 32
        %v10217 = vpop.permute.xlu0 %10216
        %10218 = vrot.lane.b32.xlu0 %v9606, 32
        %v10219 = vpop.permute.xlu0 %10218
        %10220 = vrot.lane.b32.xlu0 %v9605, 32
        %v10221 = vpop.permute.xlu0 %10220
        %10222 = vrot.lane.b32.xlu0 %v9607, 32
        %v10223 = vpop.permute.xlu0 %10222
        %10224 = vrot.lane.b32.xlu0 %v9609, 32
        %v10225 = vpop.permute.xlu0 %10224
        %10226 = vrot.lane.b32.xlu0 %v9608, 32
        %v10227 = vpop.permute.xlu0 %10226
        %10228 = vrot.lane.b32.xlu0 %v9610, 32
        %v10229 = vpop.permute.xlu0 %10228
        %10230 = vrot.lane.b32.xlu0 %v9612, 32
        %v10231 = vpop.permute.xlu0 %10230
        %10232 = vrot.lane.b32.xlu0 %v9611, 32
        %v10233 = vpop.permute.xlu0 %10232
        %10234 = vrot.lane.b32.xlu0 %v9613, 32
        %v10235 = vpop.permute.xlu0 %10234
        %10236 = vrot.lane.b32.xlu0 %v9615, 32
        %v10237 = vpop.permute.xlu0 %10236
        %10238 = vrot.lane.b32.xlu0 %v9614, 32
        %v10239 = vpop.permute.xlu0 %10238
        %10240 = vrot.lane.b32.xlu0 %v9616, 32
        %v10241 = vpop.permute.xlu0 %10240
        %10242 = vrot.lane.b32.xlu0 %v9618, 32
        %v10243 = vpop.permute.xlu0 %10242
        %10244 = vrot.lane.b32.xlu0 %v9617, 32
        %v10245 = vpop.permute.xlu0 %10244
        %10246 = vrot.lane.b32.xlu0 %v9619, 32
        %v10247 = vpop.permute.xlu0 %10246
        %10248 = vrot.lane.b32.xlu0 %v9621, 32
        %v10249 = vpop.permute.xlu0 %10248
        %10250 = vrot.lane.b32.xlu0 %v9620, 32
        %v10251 = vpop.permute.xlu0 %10250
        %10252 = vrot.lane.b32.xlu0 %v9622, 32
        %v10253 = vpop.permute.xlu0 %10252
        %10254 = vrot.lane.b32.xlu0 %v9624, 32
        %v10255 = vpop.permute.xlu0 %10254
        %10256 = vrot.lane.b32.xlu0 %v9623, 32
        %v10257 = vpop.permute.xlu0 %10256
        %10258 = vrot.lane.b32.xlu0 %v9625, 32
        %v10259 = vpop.permute.xlu0 %10258
        %10260 = vrot.lane.b32.xlu0 %v9627, 32
        %v10261 = vpop.permute.xlu0 %10260
        %10262 = vrot.lane.b32.xlu0 %v9626, 32
        %v10263 = vpop.permute.xlu0 %10262
        %10264 = vrot.lane.b32.xlu0 %v9628, 32
        %v10265 = vpop.permute.xlu0 %10264
        %10266 = vrot.lane.b32.xlu0 %v9630, 32
        %v10267 = vpop.permute.xlu0 %10266
        %10268 = vrot.lane.b32.xlu0 %v9629, 32
        %v10269 = vpop.permute.xlu0 %10268
        %10270 = vrot.lane.b32.xlu0 %v10177, 32
        %v10271 = vpop.permute.xlu0 %10270
        %10272 = vrot.lane.b32.xlu0 %v10179, 32
        %v10273 = vpop.permute.xlu0 %10272
        %10274 = vrot.lane.b32.xlu0 %v10178, 32
        %v10275 = vpop.permute.xlu0 %10274
        %v10325 = vrot.slane %v9544, 2
        %v10326 = vrot.slane %v9545, 2
        %v10327 = vsel %vm648, %v10325, %v10326
        %v10328 = vrot.slane %v9546, 2
        %v10329 = vsel %vm648, %v10326, %v10328
        %10330 = vrot.lane.b32.xlu0 %v9796, 40
        %v10331 = vpop.permute.xlu0 %10330
        %10332 = vrot.lane.b32.xlu0 %v9798, 40
        %v10333 = vpop.permute.xlu0 %10332
        %10334 = vrot.lane.b32.xlu0 %v9800, 40
        %v10335 = vpop.permute.xlu0 %10334
        %10336 = vrot.lane.b32.xlu0 %v9801, 40
        %v10337 = vpop.permute.xlu0 %10336
        %10338 = vrot.lane.b32.xlu0 %v9803, 40
        %v10339 = vpop.permute.xlu0 %10338
        %10340 = vrot.lane.b32.xlu0 %v9805, 40
        %v10341 = vpop.permute.xlu0 %10340
        %10342 = vrot.lane.b32.xlu0 %v9806, 40
        %v10343 = vpop.permute.xlu0 %10342
        %10344 = vrot.lane.b32.xlu0 %v9808, 40
        %v10345 = vpop.permute.xlu0 %10344
        %10346 = vrot.lane.b32.xlu0 %v9810, 40
        %v10347 = vpop.permute.xlu0 %10346
        %10348 = vrot.lane.b32.xlu0 %v9811, 40
        %v10349 = vpop.permute.xlu0 %10348
        %10350 = vrot.lane.b32.xlu0 %v9813, 40
        %v10351 = vpop.permute.xlu0 %10350
        %10352 = vrot.lane.b32.xlu0 %v9815, 40
        %v10353 = vpop.permute.xlu0 %10352
        %10354 = vrot.lane.b32.xlu0 %v9816, 40
        %v10355 = vpop.permute.xlu0 %10354
        %10356 = vrot.lane.b32.xlu0 %v9818, 40
        %v10357 = vpop.permute.xlu0 %10356
        %10358 = vrot.lane.b32.xlu0 %v9820, 40
        %v10359 = vpop.permute.xlu0 %10358
        %10360 = vrot.lane.b32.xlu0 %v9821, 40
        %v10361 = vpop.permute.xlu0 %10360
        %10362 = vrot.lane.b32.xlu0 %v9823, 40
        %v10363 = vpop.permute.xlu0 %10362
        %10364 = vrot.lane.b32.xlu0 %v9825, 40
        %v10365 = vpop.permute.xlu0 %10364
        %10366 = vrot.lane.b32.xlu0 %v9826, 40
        %v10367 = vpop.permute.xlu0 %10366
        %10368 = vrot.lane.b32.xlu0 %v9828, 40
        %v10369 = vpop.permute.xlu0 %10368
        %10370 = vrot.lane.b32.xlu0 %v9830, 40
        %v10371 = vpop.permute.xlu0 %10370
        %10372 = vrot.lane.b32.xlu0 %v9831, 40
        %v10373 = vpop.permute.xlu0 %10372
        %10374 = vrot.lane.b32.xlu0 %v9833, 40
        %v10375 = vpop.permute.xlu0 %10374
        %10376 = vrot.lane.b32.xlu0 %v9835, 40
        %v10377 = vpop.permute.xlu0 %10376
        %10378 = vrot.lane.b32.xlu0 %v9836, 40
        %v10379 = vpop.permute.xlu0 %10378
        %10380 = vrot.lane.b32.xlu0 %v9838, 40
        %v10381 = vpop.permute.xlu0 %10380
        %10382 = vrot.lane.b32.xlu0 %v9840, 40
        %v10383 = vpop.permute.xlu0 %10382
        %10384 = vrot.lane.b32.xlu0 %v9841, 40
        %v10385 = vpop.permute.xlu0 %10384
        %10386 = vrot.lane.b32.xlu0 %v9843, 40
        %v10387 = vpop.permute.xlu0 %10386
        %10388 = vrot.lane.b32.xlu0 %v9845, 40
        %v10389 = vpop.permute.xlu0 %10388
        %10390 = vrot.lane.b32.xlu0 %v9846, 40
        %v10391 = vpop.permute.xlu0 %10390
        %10392 = vrot.lane.b32.xlu0 %v9848, 40
        %v10393 = vpop.permute.xlu0 %10392
        %10394 = vrot.lane.b32.xlu0 %v9850, 40
        %v10395 = vpop.permute.xlu0 %10394
        %10396 = vrot.lane.b32.xlu0 %v9851, 40
        %v10397 = vpop.permute.xlu0 %10396
        %10398 = vrot.lane.b32.xlu0 %v9853, 40
        %v10399 = vpop.permute.xlu0 %10398
        %10400 = vrot.lane.b32.xlu0 %v9855, 40
        %v10401 = vpop.permute.xlu0 %10400
        %10402 = vrot.lane.b32.xlu0 %v9856, 40
        %v10403 = vpop.permute.xlu0 %10402
        %10404 = vrot.lane.b32.xlu0 %v9858, 40
        %v10405 = vpop.permute.xlu0 %10404
        %10406 = vrot.lane.b32.xlu0 %v9860, 40
        %v10407 = vpop.permute.xlu0 %10406
        %10408 = vrot.lane.b32.xlu0 %v9861, 40
        %v10409 = vpop.permute.xlu0 %10408
        %10410 = vrot.lane.b32.xlu0 %v9863, 40
        %v10411 = vpop.permute.xlu0 %10410
        %10412 = vrot.lane.b32.xlu0 %v9865, 40
        %v10413 = vpop.permute.xlu0 %10412
        %10414 = vrot.lane.b32.xlu0 %v9866, 40
        %v10415 = vpop.permute.xlu0 %10414
        %10416 = vrot.lane.b32.xlu0 %v9868, 40
        %v10417 = vpop.permute.xlu0 %10416
        %10418 = vrot.lane.b32.xlu0 %v9870, 40
        %v10419 = vpop.permute.xlu0 %10418
        %10420 = vrot.lane.b32.xlu0 %v10325, 40
        %v10421 = vpop.permute.xlu0 %10420
        %10422 = vrot.lane.b32.xlu0 %v10327, 40
        %v10423 = vpop.permute.xlu0 %10422
        %10424 = vrot.lane.b32.xlu0 %v10329, 40
        %v10425 = vpop.permute.xlu0 %10424
        %10477 = vrot.lane.b32.xlu0 %v9487, 48
        %v10478 = vpop.permute.xlu0 %10477
        %10479 = vrot.lane.b32.xlu0 %v9488, 48
        %v10480 = vpop.permute.xlu0 %10479
        %10481 = vrot.lane.b32.xlu0 %v9489, 48
        %v10482 = vpop.permute.xlu0 %10481
        %10483 = vrot.lane.b32.xlu0 %v9491, 48
        %v10484 = vpop.permute.xlu0 %10483
        %10485 = vrot.lane.b32.xlu0 %v9492, 48
        %v10486 = vpop.permute.xlu0 %10485
        %10487 = vrot.lane.b32.xlu0 %v9493, 48
        %v10488 = vpop.permute.xlu0 %10487
        %10489 = vrot.lane.b32.xlu0 %v9495, 48
        %v10490 = vpop.permute.xlu0 %10489
        %10491 = vrot.lane.b32.xlu0 %v9496, 48
        %v10492 = vpop.permute.xlu0 %10491
        %10493 = vrot.lane.b32.xlu0 %v9497, 48
        %v10494 = vpop.permute.xlu0 %10493
        %10495 = vrot.lane.b32.xlu0 %v9499, 48
        %v10496 = vpop.permute.xlu0 %10495
        %10497 = vrot.lane.b32.xlu0 %v9500, 48
        %v10498 = vpop.permute.xlu0 %10497
        %10499 = vrot.lane.b32.xlu0 %v9501, 48
        %v10500 = vpop.permute.xlu0 %10499
        %10501 = vrot.lane.b32.xlu0 %v9503, 48
        %v10502 = vpop.permute.xlu0 %10501
        %10503 = vrot.lane.b32.xlu0 %v9504, 48
        %v10504 = vpop.permute.xlu0 %10503
        %10505 = vrot.lane.b32.xlu0 %v9505, 48
        %v10506 = vpop.permute.xlu0 %10505
        %10507 = vrot.lane.b32.xlu0 %v9507, 48
        %v10508 = vpop.permute.xlu0 %10507
        %10509 = vrot.lane.b32.xlu0 %v9508, 48
        %v10510 = vpop.permute.xlu0 %10509
        %10511 = vrot.lane.b32.xlu0 %v9509, 48
        %v10512 = vpop.permute.xlu0 %10511
        %10513 = vrot.lane.b32.xlu0 %v9511, 48
        %v10514 = vpop.permute.xlu0 %10513
        %10515 = vrot.lane.b32.xlu0 %v9512, 48
        %v10516 = vpop.permute.xlu0 %10515
        %10517 = vrot.lane.b32.xlu0 %v9513, 48
        %v10518 = vpop.permute.xlu0 %10517
        %10519 = vrot.lane.b32.xlu0 %v9515, 48
        %v10520 = vpop.permute.xlu0 %10519
        %10521 = vrot.lane.b32.xlu0 %v9516, 48
        %v10522 = vpop.permute.xlu0 %10521
        %10523 = vrot.lane.b32.xlu0 %v9517, 48
        %v10524 = vpop.permute.xlu0 %10523
        %10525 = vrot.lane.b32.xlu0 %v9519, 48
        %v10526 = vpop.permute.xlu0 %10525
        %10527 = vrot.lane.b32.xlu0 %v9520, 48
        %v10528 = vpop.permute.xlu0 %10527
        %10529 = vrot.lane.b32.xlu0 %v9521, 48
        %v10530 = vpop.permute.xlu0 %10529
        %10531 = vrot.lane.b32.xlu0 %v9523, 48
        %v10532 = vpop.permute.xlu0 %10531
        %10533 = vrot.lane.b32.xlu0 %v9524, 48
        %v10534 = vpop.permute.xlu0 %10533
        %10535 = vrot.lane.b32.xlu0 %v9525, 48
        %v10536 = vpop.permute.xlu0 %10535
        %10537 = vrot.lane.b32.xlu0 %v9527, 48
        %v10538 = vpop.permute.xlu0 %10537
        %10539 = vrot.lane.b32.xlu0 %v9528, 48
        %v10540 = vpop.permute.xlu0 %10539
        %10541 = vrot.lane.b32.xlu0 %v9529, 48
        %v10542 = vpop.permute.xlu0 %10541
        %10543 = vrot.lane.b32.xlu0 %v9531, 48
        %v10544 = vpop.permute.xlu0 %10543
        %10545 = vrot.lane.b32.xlu0 %v9532, 48
        %v10546 = vpop.permute.xlu0 %10545
        %10547 = vrot.lane.b32.xlu0 %v9533, 48
        %v10548 = vpop.permute.xlu0 %10547
        %10549 = vrot.lane.b32.xlu0 %v9535, 48
        %v10550 = vpop.permute.xlu0 %10549
        %10551 = vrot.lane.b32.xlu0 %v9536, 48
        %v10552 = vpop.permute.xlu0 %10551
        %10553 = vrot.lane.b32.xlu0 %v9537, 48
        %v10554 = vpop.permute.xlu0 %10553
        %10555 = vrot.lane.b32.xlu0 %v9539, 48
        %v10556 = vpop.permute.xlu0 %10555
        %10557 = vrot.lane.b32.xlu0 %v9540, 48
        %v10558 = vpop.permute.xlu0 %10557
        %10559 = vrot.lane.b32.xlu0 %v9541, 48
        %v10560 = vpop.permute.xlu0 %10559
        %10561 = vrot.lane.b32.xlu0 %v9543, 48
        %v10562 = vpop.permute.xlu0 %10561
        %10563 = vrot.lane.b32.xlu0 %v9544, 48
        %v10564 = vpop.permute.xlu0 %10563
        %10565 = vrot.lane.b32.xlu0 %v9545, 48
        %v10566 = vpop.permute.xlu0 %10565
        %10567 = vrot.lane.b32.xlu0 %v9547, 48
        %v10568 = vpop.permute.xlu0 %10567
        %10569 = vrot.lane.b32.xlu0 %v9548, 48
        %v10570 = vpop.permute.xlu0 %10569
        %10571 = vrot.lane.b32.xlu0 %v9549, 48
        %v10572 = vpop.permute.xlu0 %10571
        %v10621 = vrot.slane %v9548, 1
        %v10622 = vrot.slane %v9549, 1
        %v10623 = vsel %vm439, %v10621, %v10622
        %10624 = vrot.lane.b32.xlu0 %v9589, 56
        %v10625 = vpop.permute.xlu0 %10624
        %10626 = vrot.lane.b32.xlu0 %v9591, 56
        %v10627 = vpop.permute.xlu0 %10626
        %10628 = vrot.lane.b32.xlu0 %v9590, 56
        %v10629 = vpop.permute.xlu0 %10628
        %10630 = vrot.lane.b32.xlu0 %v9592, 56
        %v10631 = vpop.permute.xlu0 %10630
        %10632 = vrot.lane.b32.xlu0 %v9594, 56
        %v10633 = vpop.permute.xlu0 %10632
        %10634 = vrot.lane.b32.xlu0 %v9593, 56
        %v10635 = vpop.permute.xlu0 %10634
        %10636 = vrot.lane.b32.xlu0 %v9595, 56
        %v10637 = vpop.permute.xlu0 %10636
        %10638 = vrot.lane.b32.xlu0 %v9597, 56
        %v10639 = vpop.permute.xlu0 %10638
        %10640 = vrot.lane.b32.xlu0 %v9596, 56
        %v10641 = vpop.permute.xlu0 %10640
        %10642 = vrot.lane.b32.xlu0 %v9598, 56
        %v10643 = vpop.permute.xlu0 %10642
        %10644 = vrot.lane.b32.xlu0 %v9600, 56
        %v10645 = vpop.permute.xlu0 %10644
        %10646 = vrot.lane.b32.xlu0 %v9599, 56
        %v10647 = vpop.permute.xlu0 %10646
        %10648 = vrot.lane.b32.xlu0 %v9601, 56
        %v10649 = vpop.permute.xlu0 %10648
        %10650 = vrot.lane.b32.xlu0 %v9603, 56
        %v10651 = vpop.permute.xlu0 %10650
        %10652 = vrot.lane.b32.xlu0 %v9602, 56
        %v10653 = vpop.permute.xlu0 %10652
        %10654 = vrot.lane.b32.xlu0 %v9604, 56
        %v10655 = vpop.permute.xlu0 %10654
        %10656 = vrot.lane.b32.xlu0 %v9606, 56
        %v10657 = vpop.permute.xlu0 %10656
        %10658 = vrot.lane.b32.xlu0 %v9605, 56
        %v10659 = vpop.permute.xlu0 %10658
        %10660 = vrot.lane.b32.xlu0 %v9607, 56
        %v10661 = vpop.permute.xlu0 %10660
        %10662 = vrot.lane.b32.xlu0 %v9609, 56
        %v10663 = vpop.permute.xlu0 %10662
        %10664 = vrot.lane.b32.xlu0 %v9608, 56
        %v10665 = vpop.permute.xlu0 %10664
        %10666 = vrot.lane.b32.xlu0 %v9610, 56
        %v10667 = vpop.permute.xlu0 %10666
        %10668 = vrot.lane.b32.xlu0 %v9612, 56
        %v10669 = vpop.permute.xlu0 %10668
        %10670 = vrot.lane.b32.xlu0 %v9611, 56
        %v10671 = vpop.permute.xlu0 %10670
        %10672 = vrot.lane.b32.xlu0 %v9613, 56
        %v10673 = vpop.permute.xlu0 %10672
        %10674 = vrot.lane.b32.xlu0 %v9615, 56
        %v10675 = vpop.permute.xlu0 %10674
        %10676 = vrot.lane.b32.xlu0 %v9614, 56
        %v10677 = vpop.permute.xlu0 %10676
        %10678 = vrot.lane.b32.xlu0 %v9616, 56
        %v10679 = vpop.permute.xlu0 %10678
        %10680 = vrot.lane.b32.xlu0 %v9618, 56
        %v10681 = vpop.permute.xlu0 %10680
        %10682 = vrot.lane.b32.xlu0 %v9617, 56
        %v10683 = vpop.permute.xlu0 %10682
        %10684 = vrot.lane.b32.xlu0 %v9619, 56
        %v10685 = vpop.permute.xlu0 %10684
        %10686 = vrot.lane.b32.xlu0 %v9621, 56
        %v10687 = vpop.permute.xlu0 %10686
        %10688 = vrot.lane.b32.xlu0 %v9620, 56
        %v10689 = vpop.permute.xlu0 %10688
        %10690 = vrot.lane.b32.xlu0 %v9622, 56
        %v10691 = vpop.permute.xlu0 %10690
        %10692 = vrot.lane.b32.xlu0 %v9624, 56
        %v10693 = vpop.permute.xlu0 %10692
        %10694 = vrot.lane.b32.xlu0 %v9623, 56
        %v10695 = vpop.permute.xlu0 %10694
        %10696 = vrot.lane.b32.xlu0 %v9625, 56
        %v10697 = vpop.permute.xlu0 %10696
        %10698 = vrot.lane.b32.xlu0 %v9627, 56
        %v10699 = vpop.permute.xlu0 %10698
        %10700 = vrot.lane.b32.xlu0 %v9626, 56
        %v10701 = vpop.permute.xlu0 %10700
        %10702 = vrot.lane.b32.xlu0 %v9628, 56
        %v10703 = vpop.permute.xlu0 %10702
        %10704 = vrot.lane.b32.xlu0 %v9630, 56
        %v10705 = vpop.permute.xlu0 %10704
        %10706 = vrot.lane.b32.xlu0 %v9629, 56
        %v10707 = vpop.permute.xlu0 %10706
        %10708 = vrot.lane.b32.xlu0 %v10177, 56
        %v10709 = vpop.permute.xlu0 %10708
        %10710 = vrot.lane.b32.xlu0 %v10179, 56
        %v10711 = vpop.permute.xlu0 %10710
        %10712 = vrot.lane.b32.xlu0 %v10178, 56
        %v10713 = vpop.permute.xlu0 %10712
        %10714 = vrot.lane.b32.xlu0 %v10621, 56
        %v10715 = vpop.permute.xlu0 %10714
        %10716 = vrot.lane.b32.xlu0 %v10623, 56
        %v10717 = vpop.permute.xlu0 %10716
        %10718 = vrot.lane.b32.xlu0 %v10622, 56
        %v10719 = vpop.permute.xlu0 %10718
        %v10769 = vrot.slane %v9548, 2
        %v10770 = vrot.slane %v9549, 2
        %v10771 = vsel %vm648, %v10769, %v10770
        %v10772 = vrot.slane %v9550, 2
        %v10773 = vsel %vm648, %v10770, %v10772
        %10774 = vrot.lane.b32.xlu0 %v9801, 64
        %v10775 = vpop.permute.xlu0 %10774
        %10776 = vrot.lane.b32.xlu0 %v9803, 64
        %v10777 = vpop.permute.xlu0 %10776
        %10778 = vrot.lane.b32.xlu0 %v9805, 64
        %v10779 = vpop.permute.xlu0 %10778
        %10780 = vrot.lane.b32.xlu0 %v9806, 64
        %v10781 = vpop.permute.xlu0 %10780
        %10782 = vrot.lane.b32.xlu0 %v9808, 64
        %v10783 = vpop.permute.xlu0 %10782
        %10784 = vrot.lane.b32.xlu0 %v9810, 64
        %v10785 = vpop.permute.xlu0 %10784
        %10786 = vrot.lane.b32.xlu0 %v9811, 64
        %v10787 = vpop.permute.xlu0 %10786
        %10788 = vrot.lane.b32.xlu0 %v9813, 64
        %v10789 = vpop.permute.xlu0 %10788
        %10790 = vrot.lane.b32.xlu0 %v9815, 64
        %v10791 = vpop.permute.xlu0 %10790
        %10792 = vrot.lane.b32.xlu0 %v9816, 64
        %v10793 = vpop.permute.xlu0 %10792
        %10794 = vrot.lane.b32.xlu0 %v9818, 64
        %v10795 = vpop.permute.xlu0 %10794
        %10796 = vrot.lane.b32.xlu0 %v9820, 64
        %v10797 = vpop.permute.xlu0 %10796
        %10798 = vrot.lane.b32.xlu0 %v9821, 64
        %v10799 = vpop.permute.xlu0 %10798
        %10800 = vrot.lane.b32.xlu0 %v9823, 64
        %v10801 = vpop.permute.xlu0 %10800
        %10802 = vrot.lane.b32.xlu0 %v9825, 64
        %v10803 = vpop.permute.xlu0 %10802
        %10804 = vrot.lane.b32.xlu0 %v9826, 64
        %v10805 = vpop.permute.xlu0 %10804
        %10806 = vrot.lane.b32.xlu0 %v9828, 64
        %v10807 = vpop.permute.xlu0 %10806
        %10808 = vrot.lane.b32.xlu0 %v9830, 64
        %v10809 = vpop.permute.xlu0 %10808
        %10810 = vrot.lane.b32.xlu0 %v9831, 64
        %v10811 = vpop.permute.xlu0 %10810
        %10812 = vrot.lane.b32.xlu0 %v9833, 64
        %v10813 = vpop.permute.xlu0 %10812
        %10814 = vrot.lane.b32.xlu0 %v9835, 64
        %v10815 = vpop.permute.xlu0 %10814
        %10816 = vrot.lane.b32.xlu0 %v9836, 64
        %v10817 = vpop.permute.xlu0 %10816
        %10818 = vrot.lane.b32.xlu0 %v9838, 64
        %v10819 = vpop.permute.xlu0 %10818
        %10820 = vrot.lane.b32.xlu0 %v9840, 64
        %v10821 = vpop.permute.xlu0 %10820
        %10822 = vrot.lane.b32.xlu0 %v9841, 64
        %v10823 = vpop.permute.xlu0 %10822
        %10824 = vrot.lane.b32.xlu0 %v9843, 64
        %v10825 = vpop.permute.xlu0 %10824
        %10826 = vrot.lane.b32.xlu0 %v9845, 64
        %v10827 = vpop.permute.xlu0 %10826
        %10828 = vrot.lane.b32.xlu0 %v9846, 64
        %v10829 = vpop.permute.xlu0 %10828
        %10830 = vrot.lane.b32.xlu0 %v9848, 64
        %v10831 = vpop.permute.xlu0 %10830
        %10832 = vrot.lane.b32.xlu0 %v9850, 64
        %v10833 = vpop.permute.xlu0 %10832
        %10834 = vrot.lane.b32.xlu0 %v9851, 64
        %v10835 = vpop.permute.xlu0 %10834
        %10836 = vrot.lane.b32.xlu0 %v9853, 64
        %v10837 = vpop.permute.xlu0 %10836
        %10838 = vrot.lane.b32.xlu0 %v9855, 64
        %v10839 = vpop.permute.xlu0 %10838
        %10840 = vrot.lane.b32.xlu0 %v9856, 64
        %v10841 = vpop.permute.xlu0 %10840
        %10842 = vrot.lane.b32.xlu0 %v9858, 64
        %v10843 = vpop.permute.xlu0 %10842
        %10844 = vrot.lane.b32.xlu0 %v9860, 64
        %v10845 = vpop.permute.xlu0 %10844
        %10846 = vrot.lane.b32.xlu0 %v9861, 64
        %v10847 = vpop.permute.xlu0 %10846
        %10848 = vrot.lane.b32.xlu0 %v9863, 64
        %v10849 = vpop.permute.xlu0 %10848
        %10850 = vrot.lane.b32.xlu0 %v9865, 64
        %v10851 = vpop.permute.xlu0 %10850
        %10852 = vrot.lane.b32.xlu0 %v9866, 64
        %v10853 = vpop.permute.xlu0 %10852
        %10854 = vrot.lane.b32.xlu0 %v9868, 64
        %v10855 = vpop.permute.xlu0 %10854
        %10856 = vrot.lane.b32.xlu0 %v9870, 64
        %v10857 = vpop.permute.xlu0 %10856
        %10858 = vrot.lane.b32.xlu0 %v10325, 64
        %v10859 = vpop.permute.xlu0 %10858
        %10860 = vrot.lane.b32.xlu0 %v10327, 64
        %v10861 = vpop.permute.xlu0 %10860
        %10862 = vrot.lane.b32.xlu0 %v10329, 64
        %v10863 = vpop.permute.xlu0 %10862
        %10864 = vrot.lane.b32.xlu0 %v10769, 64
        %v10865 = vpop.permute.xlu0 %10864
        %10866 = vrot.lane.b32.xlu0 %v10771, 64
        %v10867 = vpop.permute.xlu0 %10866
        %10868 = vrot.lane.b32.xlu0 %v10773, 64
        %v10869 = vpop.permute.xlu0 %10868
        %v10918 = vsel %vm196, %v9479, %v9632
        %v10919 = vsel %vm196, %v9480, %v9634
        %v10920 = vsel %vm196, %v9481, %v9636
        %v10921 = vsel %vm196, %v9483, %v9638
        %v10922 = vsel %vm196, %v9484, %v9640
        %v10923 = vsel %vm196, %v9485, %v9642
        %v10924 = vsel %vm196, %v9487, %v9644
        %v10925 = vsel %vm196, %v9488, %v9646
        %v10926 = vsel %vm196, %v9489, %v9648
        %v10927 = vsel %vm196, %v9491, %v9650
        %v10928 = vsel %vm196, %v9492, %v9652
        %v10929 = vsel %vm196, %v9493, %v9654
        %v10930 = vsel %vm196, %v9495, %v9656
        %v10931 = vsel %vm196, %v9496, %v9658
        %v10932 = vsel %vm196, %v9497, %v9660
        %v10933 = vsel %vm196, %v9499, %v9662
        %v10934 = vsel %vm196, %v9500, %v9664
        %v10935 = vsel %vm196, %v9501, %v9666
        %v10936 = vsel %vm196, %v9503, %v9668
        %v10937 = vsel %vm196, %v9504, %v9670
        %v10938 = vsel %vm196, %v9505, %v9672
        %v10939 = vsel %vm196, %v9507, %v9674
        %v10940 = vsel %vm196, %v9508, %v9676
        %v10941 = vsel %vm196, %v9509, %v9678
        %v10942 = vsel %vm196, %v9511, %v9680
        %v10943 = vsel %vm196, %v9512, %v9682
        %v10944 = vsel %vm196, %v9513, %v9684
        %v10945 = vsel %vm196, %v9515, %v9686
        %v10946 = vsel %vm196, %v9516, %v9688
        %v10947 = vsel %vm196, %v9517, %v9690
        %v10948 = vsel %vm196, %v9519, %v9692
        %v10949 = vsel %vm196, %v9520, %v9694
        %v10950 = vsel %vm196, %v9521, %v9696
        %v10951 = vsel %vm196, %v9523, %v9698
        %v10952 = vsel %vm196, %v9524, %v9700
        %v10953 = vsel %vm196, %v9525, %v9702
        %v10954 = vsel %vm196, %v9527, %v9704
        %v10955 = vsel %vm196, %v9528, %v9706
        %v10956 = vsel %vm196, %v9529, %v9708
        %v10957 = vsel %vm196, %v9531, %v9710
        %v10958 = vsel %vm196, %v9532, %v9712
        %v10959 = vsel %vm196, %v9533, %v9714
        %v10960 = vsel %vm196, %v9535, %v9716
        %v10961 = vsel %vm196, %v9536, %v9718
        %v10962 = vsel %vm196, %v9537, %v9720
        %v10963 = vsel %vm196, %v9539, %v9722
        %v10964 = vsel %vm196, %v9540, %v9724
        %v10965 = vsel %vm196, %v9541, %v9726
        %v10966 = vsel %vm1824, %v10918, %v9872
        %v10967 = vsel %vm1824, %v10919, %v9874
        %v10968 = vsel %vm1824, %v10920, %v9876
        %v10969 = vsel %vm1824, %v10921, %v9878
        %v10970 = vsel %vm1824, %v10922, %v9880
        %v10971 = vsel %vm1824, %v10923, %v9882
        %v10972 = vsel %vm1824, %v10924, %v9884
        %v10973 = vsel %vm1824, %v10925, %v9886
        %v10974 = vsel %vm1824, %v10926, %v9888
        %v10975 = vsel %vm1824, %v10927, %v9890
        %v10976 = vsel %vm1824, %v10928, %v9892
        %v10977 = vsel %vm1824, %v10929, %v9894
        %v10978 = vsel %vm1824, %v10930, %v9896
        %v10979 = vsel %vm1824, %v10931, %v9898
        %v10980 = vsel %vm1824, %v10932, %v9900
        %v10981 = vsel %vm1824, %v10933, %v9902
        %v10982 = vsel %vm1824, %v10934, %v9904
        %v10983 = vsel %vm1824, %v10935, %v9906
        %v10984 = vsel %vm1824, %v10936, %v9908
        %v10985 = vsel %vm1824, %v10937, %v9910
        %v10986 = vsel %vm1824, %v10938, %v9912
        %v10987 = vsel %vm1824, %v10939, %v9914
        %v10988 = vsel %vm1824, %v10940, %v9916
        %v10989 = vsel %vm1824, %v10941, %v9918
        %v10990 = vsel %vm1824, %v10942, %v9920
        %v10991 = vsel %vm1824, %v10943, %v9922
        %v10992 = vsel %vm1824, %v10944, %v9924
        %v10993 = vsel %vm1824, %v10945, %v9926
        %v10994 = vsel %vm1824, %v10946, %v9928
        %v10995 = vsel %vm1824, %v10947, %v9930
        %v10996 = vsel %vm1824, %v10948, %v9932
        %v10997 = vsel %vm1824, %v10949, %v9934
        %v10998 = vsel %vm1824, %v10950, %v9936
        %v10999 = vsel %vm1824, %v10951, %v9938
        %v11000 = vsel %vm1824, %v10952, %v9940
        %v11001 = vsel %vm1824, %v10953, %v9942
        %v11002 = vsel %vm1824, %v10954, %v9944
        %v11003 = vsel %vm1824, %v10955, %v9946
        %v11004 = vsel %vm1824, %v10956, %v9948
        %v11005 = vsel %vm1824, %v10957, %v9950
        %v11006 = vsel %vm1824, %v10958, %v9952
        %v11007 = vsel %vm1824, %v10959, %v9954
        %v11008 = vsel %vm1824, %v10960, %v9956
        %v11009 = vsel %vm1824, %v10961, %v9958
        %v11010 = vsel %vm1824, %v10962, %v9960
        %v11011 = vsel %vm1824, %v10963, %v9962
        %v11012 = vsel %vm1824, %v10964, %v9964
        %v11013 = vsel %vm1824, %v10965, %v9966
        %v11014 = vsel %vm1873, %v10966, %v10034
        %v11015 = vsel %vm1873, %v10967, %v10036
        %v11016 = vsel %vm1873, %v10968, %v10038
        %v11017 = vsel %vm1873, %v10969, %v10040
        %v11018 = vsel %vm1873, %v10970, %v10042
        %v11019 = vsel %vm1873, %v10971, %v10044
        %v11020 = vsel %vm1873, %v10972, %v10046
        %v11021 = vsel %vm1873, %v10973, %v10048
        %v11022 = vsel %vm1873, %v10974, %v10050
        %v11023 = vsel %vm1873, %v10975, %v10052
        %v11024 = vsel %vm1873, %v10976, %v10054
        %v11025 = vsel %vm1873, %v10977, %v10056
        %v11026 = vsel %vm1873, %v10978, %v10058
        %v11027 = vsel %vm1873, %v10979, %v10060
        %v11028 = vsel %vm1873, %v10980, %v10062
        %v11029 = vsel %vm1873, %v10981, %v10064
        %v11030 = vsel %vm1873, %v10982, %v10066
        %v11031 = vsel %vm1873, %v10983, %v10068
        %v11032 = vsel %vm1873, %v10984, %v10070
        %v11033 = vsel %vm1873, %v10985, %v10072
        %v11034 = vsel %vm1873, %v10986, %v10074
        %v11035 = vsel %vm1873, %v10987, %v10076
        %v11036 = vsel %vm1873, %v10988, %v10078
        %v11037 = vsel %vm1873, %v10989, %v10080
        %v11038 = vsel %vm1873, %v10990, %v10082
        %v11039 = vsel %vm1873, %v10991, %v10084
        %v11040 = vsel %vm1873, %v10992, %v10086
        %v11041 = vsel %vm1873, %v10993, %v10088
        %v11042 = vsel %vm1873, %v10994, %v10090
        %v11043 = vsel %vm1873, %v10995, %v10092
        %v11044 = vsel %vm1873, %v10996, %v10094
        %v11045 = vsel %vm1873, %v10997, %v10096
        %v11046 = vsel %vm1873, %v10998, %v10098
        %v11047 = vsel %vm1873, %v10999, %v10100
        %v11048 = vsel %vm1873, %v11000, %v10102
        %v11049 = vsel %vm1873, %v11001, %v10104
        %v11050 = vsel %vm1873, %v11002, %v10106
        %v11051 = vsel %vm1873, %v11003, %v10108
        %v11052 = vsel %vm1873, %v11004, %v10110
        %v11053 = vsel %vm1873, %v11005, %v10112
        %v11054 = vsel %vm1873, %v11006, %v10114
        %v11055 = vsel %vm1873, %v11007, %v10116
        %v11056 = vsel %vm1873, %v11008, %v10118
        %v11057 = vsel %vm1873, %v11009, %v10120
        %v11058 = vsel %vm1873, %v11010, %v10122
        %v11059 = vsel %vm1873, %v11011, %v10124
        %v11060 = vsel %vm1873, %v11012, %v10126
        %v11061 = vsel %vm1873, %v11013, %v10128
        %v11062 = vsel %vm1922, %v11014, %v10181
        %v11063 = vsel %vm1922, %v11015, %v10183
        %v11064 = vsel %vm1922, %v11016, %v10185
        %v11065 = vsel %vm1922, %v11017, %v10187
        %v11066 = vsel %vm1922, %v11018, %v10189
        %v11067 = vsel %vm1922, %v11019, %v10191
        %v11068 = vsel %vm1922, %v11020, %v10193
        %v11069 = vsel %vm1922, %v11021, %v10195
        %v11070 = vsel %vm1922, %v11022, %v10197
        %v11071 = vsel %vm1922, %v11023, %v10199
        %v11072 = vsel %vm1922, %v11024, %v10201
        %v11073 = vsel %vm1922, %v11025, %v10203
        %v11074 = vsel %vm1922, %v11026, %v10205
        %v11075 = vsel %vm1922, %v11027, %v10207
        %v11076 = vsel %vm1922, %v11028, %v10209
        %v11077 = vsel %vm1922, %v11029, %v10211
        %v11078 = vsel %vm1922, %v11030, %v10213
        %v11079 = vsel %vm1922, %v11031, %v10215
        %v11080 = vsel %vm1922, %v11032, %v10217
        %v11081 = vsel %vm1922, %v11033, %v10219
        %v11082 = vsel %vm1922, %v11034, %v10221
        %v11083 = vsel %vm1922, %v11035, %v10223
        %v11084 = vsel %vm1922, %v11036, %v10225
        %v11085 = vsel %vm1922, %v11037, %v10227
        %v11086 = vsel %vm1922, %v11038, %v10229
        %v11087 = vsel %vm1922, %v11039, %v10231
        %v11088 = vsel %vm1922, %v11040, %v10233
        %v11089 = vsel %vm1922, %v11041, %v10235
        %v11090 = vsel %vm1922, %v11042, %v10237
        %v11091 = vsel %vm1922, %v11043, %v10239
        %v11092 = vsel %vm1922, %v11044, %v10241
        %v11093 = vsel %vm1922, %v11045, %v10243
        %v11094 = vsel %vm1922, %v11046, %v10245
        %v11095 = vsel %vm1922, %v11047, %v10247
        %v11096 = vsel %vm1922, %v11048, %v10249
        %v11097 = vsel %vm1922, %v11049, %v10251
        %v11098 = vsel %vm1922, %v11050, %v10253
        %v11099 = vsel %vm1922, %v11051, %v10255
        %v11100 = vsel %vm1922, %v11052, %v10257
        %v11101 = vsel %vm1922, %v11053, %v10259
        %v11102 = vsel %vm1922, %v11054, %v10261
        %v11103 = vsel %vm1922, %v11055, %v10263
        %v11104 = vsel %vm1922, %v11056, %v10265
        %v11105 = vsel %vm1922, %v11057, %v10267
        %v11106 = vsel %vm1922, %v11058, %v10269
        %v11107 = vsel %vm1922, %v11059, %v10271
        %v11108 = vsel %vm1922, %v11060, %v10273
        %v11109 = vsel %vm1922, %v11061, %v10275
        %v11110 = vsel %vm1971, %v11062, %v10331
        %v11111 = vsel %vm1971, %v11063, %v10333
        %v11112 = vsel %vm1971, %v11064, %v10335
        %v11113 = vsel %vm1971, %v11065, %v10337
        %v11114 = vsel %vm1971, %v11066, %v10339
        %v11115 = vsel %vm1971, %v11067, %v10341
        %v11116 = vsel %vm1971, %v11068, %v10343
        %v11117 = vsel %vm1971, %v11069, %v10345
        %v11118 = vsel %vm1971, %v11070, %v10347
        %v11119 = vsel %vm1971, %v11071, %v10349
        %v11120 = vsel %vm1971, %v11072, %v10351
        %v11121 = vsel %vm1971, %v11073, %v10353
        %v11122 = vsel %vm1971, %v11074, %v10355
        %v11123 = vsel %vm1971, %v11075, %v10357
        %v11124 = vsel %vm1971, %v11076, %v10359
        %v11125 = vsel %vm1971, %v11077, %v10361
        %v11126 = vsel %vm1971, %v11078, %v10363
        %v11127 = vsel %vm1971, %v11079, %v10365
        %v11128 = vsel %vm1971, %v11080, %v10367
        %v11129 = vsel %vm1971, %v11081, %v10369
        %v11130 = vsel %vm1971, %v11082, %v10371
        %v11131 = vsel %vm1971, %v11083, %v10373
        %v11132 = vsel %vm1971, %v11084, %v10375
        %v11133 = vsel %vm1971, %v11085, %v10377
        %v11134 = vsel %vm1971, %v11086, %v10379
        %v11135 = vsel %vm1971, %v11087, %v10381
        %v11136 = vsel %vm1971, %v11088, %v10383
        %v11137 = vsel %vm1971, %v11089, %v10385
        %v11138 = vsel %vm1971, %v11090, %v10387
        %v11139 = vsel %vm1971, %v11091, %v10389
        %v11140 = vsel %vm1971, %v11092, %v10391
        %v11141 = vsel %vm1971, %v11093, %v10393
        %v11142 = vsel %vm1971, %v11094, %v10395
        %v11143 = vsel %vm1971, %v11095, %v10397
        %v11144 = vsel %vm1971, %v11096, %v10399
        %v11145 = vsel %vm1971, %v11097, %v10401
        %v11146 = vsel %vm1971, %v11098, %v10403
        %v11147 = vsel %vm1971, %v11099, %v10405
        %v11148 = vsel %vm1971, %v11100, %v10407
        %v11149 = vsel %vm1971, %v11101, %v10409
        %v11150 = vsel %vm1971, %v11102, %v10411
        %v11151 = vsel %vm1971, %v11103, %v10413
        %v11152 = vsel %vm1971, %v11104, %v10415
        %v11153 = vsel %vm1971, %v11105, %v10417
        %v11154 = vsel %vm1971, %v11106, %v10419
        %v11155 = vsel %vm1971, %v11107, %v10421
        %v11156 = vsel %vm1971, %v11108, %v10423
        %v11157 = vsel %vm1971, %v11109, %v10425
        %v11158 = vsel %vm2020, %v11110, %v10478
        %v11159 = vsel %vm2020, %v11111, %v10480
        %v11160 = vsel %vm2020, %v11112, %v10482
        %v11161 = vsel %vm2020, %v11113, %v10484
        %v11162 = vsel %vm2020, %v11114, %v10486
        %v11163 = vsel %vm2020, %v11115, %v10488
        %v11164 = vsel %vm2020, %v11116, %v10490
        %v11165 = vsel %vm2020, %v11117, %v10492
        %v11166 = vsel %vm2020, %v11118, %v10494
        %v11167 = vsel %vm2020, %v11119, %v10496
        %v11168 = vsel %vm2020, %v11120, %v10498
        %v11169 = vsel %vm2020, %v11121, %v10500
        %v11170 = vsel %vm2020, %v11122, %v10502
        %v11171 = vsel %vm2020, %v11123, %v10504
        %v11172 = vsel %vm2020, %v11124, %v10506
        %v11173 = vsel %vm2020, %v11125, %v10508
        %v11174 = vsel %vm2020, %v11126, %v10510
        %v11175 = vsel %vm2020, %v11127, %v10512
        %v11176 = vsel %vm2020, %v11128, %v10514
        %v11177 = vsel %vm2020, %v11129, %v10516
        %v11178 = vsel %vm2020, %v11130, %v10518
        %v11179 = vsel %vm2020, %v11131, %v10520
        %v11180 = vsel %vm2020, %v11132, %v10522
        %v11181 = vsel %vm2020, %v11133, %v10524
        %v11182 = vsel %vm2020, %v11134, %v10526
        %v11183 = vsel %vm2020, %v11135, %v10528
        %v11184 = vsel %vm2020, %v11136, %v10530
        %v11185 = vsel %vm2020, %v11137, %v10532
        %v11186 = vsel %vm2020, %v11138, %v10534
        %v11187 = vsel %vm2020, %v11139, %v10536
        %v11188 = vsel %vm2020, %v11140, %v10538
        %v11189 = vsel %vm2020, %v11141, %v10540
        %v11190 = vsel %vm2020, %v11142, %v10542
        %v11191 = vsel %vm2020, %v11143, %v10544
        %v11192 = vsel %vm2020, %v11144, %v10546
        %v11193 = vsel %vm2020, %v11145, %v10548
        %v11194 = vsel %vm2020, %v11146, %v10550
        %v11195 = vsel %vm2020, %v11147, %v10552
        %v11196 = vsel %vm2020, %v11148, %v10554
        %v11197 = vsel %vm2020, %v11149, %v10556
        %v11198 = vsel %vm2020, %v11150, %v10558
        %v11199 = vsel %vm2020, %v11151, %v10560
        %v11200 = vsel %vm2020, %v11152, %v10562
        %v11201 = vsel %vm2020, %v11153, %v10564
        %v11202 = vsel %vm2020, %v11154, %v10566
        %v11203 = vsel %vm2020, %v11155, %v10568
        %v11204 = vsel %vm2020, %v11156, %v10570
        %v11205 = vsel %vm2020, %v11157, %v10572
        %v11206 = vsel %vm2069, %v11158, %v10625
        %v11207 = vsel %vm2069, %v11159, %v10627
        %v11208 = vsel %vm2069, %v11160, %v10629
        %v11209 = vsel %vm2069, %v11161, %v10631
        %v11210 = vsel %vm2069, %v11162, %v10633
        %v11211 = vsel %vm2069, %v11163, %v10635
        %v11212 = vsel %vm2069, %v11164, %v10637
        %v11213 = vsel %vm2069, %v11165, %v10639
        %v11214 = vsel %vm2069, %v11166, %v10641
        %v11215 = vsel %vm2069, %v11167, %v10643
        %v11216 = vsel %vm2069, %v11168, %v10645
        %v11217 = vsel %vm2069, %v11169, %v10647
        %v11218 = vsel %vm2069, %v11170, %v10649
        %v11219 = vsel %vm2069, %v11171, %v10651
        %v11220 = vsel %vm2069, %v11172, %v10653
        %v11221 = vsel %vm2069, %v11173, %v10655
        %v11222 = vsel %vm2069, %v11174, %v10657
        %v11223 = vsel %vm2069, %v11175, %v10659
        %v11224 = vsel %vm2069, %v11176, %v10661
        %v11225 = vsel %vm2069, %v11177, %v10663
        %v11226 = vsel %vm2069, %v11178, %v10665
        %v11227 = vsel %vm2069, %v11179, %v10667
        %v11228 = vsel %vm2069, %v11180, %v10669
        %v11229 = vsel %vm2069, %v11181, %v10671
        %v11230 = vsel %vm2069, %v11182, %v10673
        %v11231 = vsel %vm2069, %v11183, %v10675
        %v11232 = vsel %vm2069, %v11184, %v10677
        %v11233 = vsel %vm2069, %v11185, %v10679
        %v11234 = vsel %vm2069, %v11186, %v10681
        %v11235 = vsel %vm2069, %v11187, %v10683
        %v11236 = vsel %vm2069, %v11188, %v10685
        %v11237 = vsel %vm2069, %v11189, %v10687
        %v11238 = vsel %vm2069, %v11190, %v10689
        %v11239 = vsel %vm2069, %v11191, %v10691
        %v11240 = vsel %vm2069, %v11192, %v10693
        %v11241 = vsel %vm2069, %v11193, %v10695
        %v11242 = vsel %vm2069, %v11194, %v10697
        %v11243 = vsel %vm2069, %v11195, %v10699
        %v11244 = vsel %vm2069, %v11196, %v10701
        %v11245 = vsel %vm2069, %v11197, %v10703
        %v11246 = vsel %vm2069, %v11198, %v10705
        %v11247 = vsel %vm2069, %v11199, %v10707
        %v11248 = vsel %vm2069, %v11200, %v10709
        %v11249 = vsel %vm2069, %v11201, %v10711
        %v11250 = vsel %vm2069, %v11202, %v10713
        %v11251 = vsel %vm2069, %v11203, %v10715
        %v11252 = vsel %vm2069, %v11204, %v10717
        %v11253 = vsel %vm2069, %v11205, %v10719
        %v11254 = vsel %vm2118, %v11206, %v10775
        %v11255 = vsel %vm2118, %v11207, %v10777
        %v11256 = vsel %vm2118, %v11208, %v10779
        %v11257 = vsel %vm2118, %v11209, %v10781
        %v11258 = vsel %vm2118, %v11210, %v10783
        %v11259 = vsel %vm2118, %v11211, %v10785
        %v11260 = vsel %vm2118, %v11212, %v10787
        %v11261 = vsel %vm2118, %v11213, %v10789
        %v11262 = vsel %vm2118, %v11214, %v10791
        %v11263 = vsel %vm2118, %v11215, %v10793
        %v11264 = vsel %vm2118, %v11216, %v10795
        %v11265 = vsel %vm2118, %v11217, %v10797
        %v11266 = vsel %vm2118, %v11218, %v10799
        %v11267 = vsel %vm2118, %v11219, %v10801
        %v11268 = vsel %vm2118, %v11220, %v10803
        %v11269 = vsel %vm2118, %v11221, %v10805
        %v11270 = vsel %vm2118, %v11222, %v10807
        %v11271 = vsel %vm2118, %v11223, %v10809
        %v11272 = vsel %vm2118, %v11224, %v10811
        %v11273 = vsel %vm2118, %v11225, %v10813
        %v11274 = vsel %vm2118, %v11226, %v10815
        %v11275 = vsel %vm2118, %v11227, %v10817
        %v11276 = vsel %vm2118, %v11228, %v10819
        %v11277 = vsel %vm2118, %v11229, %v10821
        %v11278 = vsel %vm2118, %v11230, %v10823
        %v11279 = vsel %vm2118, %v11231, %v10825
        %v11280 = vsel %vm2118, %v11232, %v10827
        %v11281 = vsel %vm2118, %v11233, %v10829
        %v11282 = vsel %vm2118, %v11234, %v10831
        %v11283 = vsel %vm2118, %v11235, %v10833
        %v11284 = vsel %vm2118, %v11236, %v10835
        %v11285 = vsel %vm2118, %v11237, %v10837
        %v11286 = vsel %vm2118, %v11238, %v10839
        %v11287 = vsel %vm2118, %v11239, %v10841
        %v11288 = vsel %vm2118, %v11240, %v10843
        %v11289 = vsel %vm2118, %v11241, %v10845
        %v11290 = vsel %vm2118, %v11242, %v10847
        %v11291 = vsel %vm2118, %v11243, %v10849
        %v11292 = vsel %vm2118, %v11244, %v10851
        %v11293 = vsel %vm2118, %v11245, %v10853
        %v11294 = vsel %vm2118, %v11246, %v10855
        %v11295 = vsel %vm2118, %v11247, %v10857
        %v11296 = vsel %vm2118, %v11248, %v10859
        %v11297 = vsel %vm2118, %v11249, %v10861
        %v11298 = vsel %vm2118, %v11250, %v10863
        %v11299 = vsel %vm2118, %v11251, %v10865
        %v11300 = vsel %vm2118, %v11252, %v10867
        %v11301 = vsel %vm2118, %v11253, %v10869
        %v11350 = vrot.slane %v11254, 7
        %v11351 = vrot.slane %v11255, 7
        %v11352 = vsel %vm2215, %v11350, %v11351
        %v11353 = vrot.slane %v11256, 7
        %v11354 = vsel %vm2215, %v11351, %v11353
        %v11355 = vrot.slane %v11257, 7
        %v11356 = vrot.slane %v11258, 7
        %v11357 = vsel %vm2215, %v11355, %v11356
        %v11358 = vrot.slane %v11259, 7
        %v11359 = vsel %vm2215, %v11356, %v11358
        %v11360 = vrot.slane %v11260, 7
        %v11361 = vrot.slane %v11261, 7
        %v11362 = vsel %vm2215, %v11360, %v11361
        %v11363 = vrot.slane %v11262, 7
        %v11364 = vsel %vm2215, %v11361, %v11363
        %v11365 = vrot.slane %v11263, 7
        %v11366 = vrot.slane %v11264, 7
        %v11367 = vsel %vm2215, %v11365, %v11366
        %v11368 = vrot.slane %v11265, 7
        %v11369 = vsel %vm2215, %v11366, %v11368
        %v11370 = vrot.slane %v11266, 7
        %v11371 = vrot.slane %v11267, 7
        %v11372 = vsel %vm2215, %v11370, %v11371
        %v11373 = vrot.slane %v11268, 7
        %v11374 = vsel %vm2215, %v11371, %v11373
        %v11375 = vrot.slane %v11269, 7
        %v11376 = vrot.slane %v11270, 7
        %v11377 = vsel %vm2215, %v11375, %v11376
        %v11378 = vrot.slane %v11271, 7
        %v11379 = vsel %vm2215, %v11376, %v11378
        %v11380 = vrot.slane %v11272, 7
        %v11381 = vrot.slane %v11273, 7
        %v11382 = vsel %vm2215, %v11380, %v11381
        %v11383 = vrot.slane %v11274, 7
        %v11384 = vsel %vm2215, %v11381, %v11383
        %v11385 = vrot.slane %v11275, 7
        %v11386 = vrot.slane %v11276, 7
        %v11387 = vsel %vm2215, %v11385, %v11386
        %v11388 = vrot.slane %v11277, 7
        %v11389 = vsel %vm2215, %v11386, %v11388
        %v11390 = vrot.slane %v11278, 7
        %v11391 = vrot.slane %v11279, 7
        %v11392 = vsel %vm2215, %v11390, %v11391
        %v11393 = vrot.slane %v11280, 7
        %v11394 = vsel %vm2215, %v11391, %v11393
        %v11395 = vrot.slane %v11281, 7
        %v11396 = vrot.slane %v11282, 7
        %v11397 = vsel %vm2215, %v11395, %v11396
        %v11398 = vrot.slane %v11283, 7
        %v11399 = vsel %vm2215, %v11396, %v11398
        %v11400 = vrot.slane %v11284, 7
        %v11401 = vrot.slane %v11285, 7
        %v11402 = vsel %vm2215, %v11400, %v11401
        %v11403 = vrot.slane %v11286, 7
        %v11404 = vsel %vm2215, %v11401, %v11403
        %v11405 = vrot.slane %v11287, 7
        %v11406 = vrot.slane %v11288, 7
        %v11407 = vsel %vm2215, %v11405, %v11406
        %v11408 = vrot.slane %v11289, 7
        %v11409 = vsel %vm2215, %v11406, %v11408
        %v11410 = vrot.slane %v11290, 7
        %v11411 = vrot.slane %v11291, 7
        %v11412 = vsel %vm2215, %v11410, %v11411
        %v11413 = vrot.slane %v11292, 7
        %v11414 = vsel %vm2215, %v11411, %v11413
        %v11415 = vrot.slane %v11293, 7
        %v11416 = vrot.slane %v11294, 7
        %v11417 = vsel %vm2215, %v11415, %v11416
        %v11418 = vrot.slane %v11295, 7
        %v11419 = vsel %vm2215, %v11416, %v11418
        %v11420 = vrot.slane %v11296, 7
        %v11421 = vrot.slane %v11297, 7
        %v11422 = vsel %vm2215, %v11420, %v11421
        %v11423 = vrot.slane %v11298, 7
        %v11424 = vsel %vm2215, %v11421, %v11423
        %v11425 = vrot.slane %v11299, 7
        %v11426 = vrot.slane %v11300, 7
        %v11427 = vsel %vm2215, %v11425, %v11426
        %v11428 = vrot.slane %v11301, 7
        %v11429 = vsel %vm2215, %v11426, %v11428
        %s11430 = scalar_lea.vmem %s1, 288
        %v11431 = vld [vmem:[%s11430] sm:$0xff]
        %v11432 = vld [vmem:[%s11430 + $0x8] sm:$0xff]
        %v11433 = vld [vmem:[%s11430 + $0x10] sm:$0xff]
        %v11434 = vld [vmem:[%s11430 + $0x18] sm:$0xff]
        %v11435 = vld [vmem:[%s11430 + $0x20] sm:$0xff]
        %v11436 = vld [vmem:[%s11430 + $0x28] sm:$0xff]
        %v11437 = vld [vmem:[%s11430 + $0x30] sm:$0xff]
        %v11438 = vld [vmem:[%s11430 + $0x38] sm:$0xff]
        %v11439 = vld [vmem:[%s11430 + $0x40] sm:$0xff]
        %v11440 = vsel %vm2305, %v11352, 0
        %v11442 = vsel %vm2305, %v11354, 0
        %v11444 = vsel %vm2305, %v11357, 0
        %v11446 = vsel %vm2305, %v11359, 0
        %v11448 = vsel %vm2305, %v11362, 0
        %v11450 = vsel %vm2305, %v11364, 0
        %v11452 = vsel %vm2305, %v11367, 0
        %v11454 = vsel %vm2305, %v11369, 0
        %v11456 = vsel %vm2305, %v11372, 0
        %v11458 = vsel %vm2305, %v11374, 0
        %v11460 = vsel %vm2305, %v11377, 0
        %v11462 = vsel %vm2305, %v11379, 0
        %v11464 = vsel %vm2305, %v11382, 0
        %v11466 = vsel %vm2305, %v11384, 0
        %v11468 = vsel %vm2305, %v11387, 0
        %v11470 = vsel %vm2305, %v11389, 0
        %v11472 = vsel %vm2305, %v11392, 0
        %v11474 = vsel %vm2305, %v11394, 0
        %v11476 = vsel %vm2305, %v11397, 0
        %v11478 = vsel %vm2305, %v11399, 0
        %v11480 = vsel %vm2305, %v11402, 0
        %v11482 = vsel %vm2305, %v11404, 0
        %v11484 = vsel %vm2305, %v11407, 0
        %v11486 = vsel %vm2305, %v11409, 0
        %v11488 = vsel %vm2305, %v11412, 0
        %v11490 = vsel %vm2305, %v11414, 0
        %v11492 = vsel %vm2305, %v11417, 0
        %v11494 = vsel %vm2305, %v11419, 0
        %v11496 = vsel %vm2305, %v11422, 0
        %v11498 = vsel %vm2305, %v11424, 0
        %v11500 = vsel %vm2305, %v11427, 0
        %v11502 = vsel %vm2305, %v11429, 0
        %11504 = vmatpush.msra.mxu0 0.0
        %11505 = vmatpush.msra.mxu0 0.0
        %11506 = vmatpush.msra.mxu0 0.0
        %11507 = vmatpush.msra.mxu0 0.0
        %11508 = vmatpush.msra.mxu0 0.0
        %11509 = vmatpush.msra.mxu0 0.0
        %11510 = vmatpush.msra.mxu0 0.0
        %11511 = vmatpush.msra.mxu0 %v11439
        %11512 = vmatpush.msra.mxu0 %v11438
        %11513 = vmatpush.msra.mxu0 %v11437
        %11514 = vmatpush.msra.mxu0 %v11436
        %11515 = vmatpush.msra.mxu0 %v11435
        %11516 = vmatpush.msra.mxu0 %v11434
        %11517 = vmatpush.msra.mxu0 %v11433
        %11518 = vmatpush.msra.mxu0 %v11432
        %11519 = vmatpush.msra.mxu0 %v11431
        %11520 = vmatmul.f32.gmra.mxu0 %v11440
        %v11521 = vpop.f32.mrf.mxu0
        %v11522 = vadd.f32 0.0, %v11521
        %11523 = vmatmul.f32.gmra.mxu0 %v11442
        %v11524 = vpop.f32.mrf.mxu0
        %v11525 = vadd.f32 0.0, %v11524
        %11526 = vmatmul.f32.gmra.mxu0 %v11444
        %v11527 = vpop.f32.mrf.mxu0
        %v11528 = vadd.f32 0.0, %v11527
        %11529 = vmatmul.f32.gmra.mxu0 %v11446
        %v11530 = vpop.f32.mrf.mxu0
        %v11531 = vadd.f32 0.0, %v11530
        %11532 = vmatmul.f32.gmra.mxu0 %v11448
        %v11533 = vpop.f32.mrf.mxu0
        %v11534 = vadd.f32 0.0, %v11533
        %11535 = vmatmul.f32.gmra.mxu0 %v11450
        %v11536 = vpop.f32.mrf.mxu0
        %v11537 = vadd.f32 0.0, %v11536
        %11538 = vmatmul.f32.gmra.mxu0 %v11452
        %v11539 = vpop.f32.mrf.mxu0
        %v11540 = vadd.f32 0.0, %v11539
        %11541 = vmatmul.f32.gmra.mxu0 %v11454
        %v11542 = vpop.f32.mrf.mxu0
        %v11543 = vadd.f32 0.0, %v11542
        %11544 = vmatmul.f32.gmra.mxu0 %v11456
        %v11545 = vpop.f32.mrf.mxu0
        %v11546 = vadd.f32 0.0, %v11545
        %11547 = vmatmul.f32.gmra.mxu0 %v11458
        %v11548 = vpop.f32.mrf.mxu0
        %v11549 = vadd.f32 0.0, %v11548
        %11550 = vmatmul.f32.gmra.mxu0 %v11460
        %v11551 = vpop.f32.mrf.mxu0
        %v11552 = vadd.f32 0.0, %v11551
        %11553 = vmatmul.f32.gmra.mxu0 %v11462
        %v11554 = vpop.f32.mrf.mxu0
        %v11555 = vadd.f32 0.0, %v11554
        %11556 = vmatmul.f32.gmra.mxu0 %v11464
        %v11557 = vpop.f32.mrf.mxu0
        %v11558 = vadd.f32 0.0, %v11557
        %11559 = vmatmul.f32.gmra.mxu0 %v11466
        %v11560 = vpop.f32.mrf.mxu0
        %v11561 = vadd.f32 0.0, %v11560
        %11562 = vmatmul.f32.gmra.mxu0 %v11468
        %v11563 = vpop.f32.mrf.mxu0
        %v11564 = vadd.f32 0.0, %v11563
        %11565 = vmatmul.f32.gmra.mxu0 %v11470
        %v11566 = vpop.f32.mrf.mxu0
        %v11567 = vadd.f32 0.0, %v11566
        %11568 = vmatmul.f32.gmra.mxu0 %v11472
        %v11569 = vpop.f32.mrf.mxu0
        %v11570 = vadd.f32 0.0, %v11569
        %11571 = vmatmul.f32.gmra.mxu0 %v11474
        %v11572 = vpop.f32.mrf.mxu0
        %v11573 = vadd.f32 0.0, %v11572
        %11574 = vmatmul.f32.gmra.mxu0 %v11476
        %v11575 = vpop.f32.mrf.mxu0
        %v11576 = vadd.f32 0.0, %v11575
        %11577 = vmatmul.f32.gmra.mxu0 %v11478
        %v11578 = vpop.f32.mrf.mxu0
        %v11579 = vadd.f32 0.0, %v11578
        %11580 = vmatmul.f32.gmra.mxu0 %v11480
        %v11581 = vpop.f32.mrf.mxu0
        %v11582 = vadd.f32 0.0, %v11581
        %11583 = vmatmul.f32.gmra.mxu0 %v11482
        %v11584 = vpop.f32.mrf.mxu0
        %v11585 = vadd.f32 0.0, %v11584
        %11586 = vmatmul.f32.gmra.mxu0 %v11484
        %v11587 = vpop.f32.mrf.mxu0
        %v11588 = vadd.f32 0.0, %v11587
        %11589 = vmatmul.f32.gmra.mxu0 %v11486
        %v11590 = vpop.f32.mrf.mxu0
        %v11591 = vadd.f32 0.0, %v11590
        %11592 = vmatmul.f32.gmra.mxu0 %v11488
        %v11593 = vpop.f32.mrf.mxu0
        %v11594 = vadd.f32 0.0, %v11593
        %11595 = vmatmul.f32.gmra.mxu0 %v11490
        %v11596 = vpop.f32.mrf.mxu0
        %v11597 = vadd.f32 0.0, %v11596
        %11598 = vmatmul.f32.gmra.mxu0 %v11492
        %v11599 = vpop.f32.mrf.mxu0
        %v11600 = vadd.f32 0.0, %v11599
        %11601 = vmatmul.f32.gmra.mxu0 %v11494
        %v11602 = vpop.f32.mrf.mxu0
        %v11603 = vadd.f32 0.0, %v11602
        %11604 = vmatmul.f32.gmra.mxu0 %v11496
        %v11605 = vpop.f32.mrf.mxu0
        %v11606 = vadd.f32 0.0, %v11605
        %11607 = vmatmul.f32.gmra.mxu0 %v11498
        %v11608 = vpop.f32.mrf.mxu0
        %v11609 = vadd.f32 0.0, %v11608
        %11610 = vmatmul.f32.gmra.mxu0 %v11500
        %v11611 = vpop.f32.mrf.mxu0
        %v11612 = vadd.f32 0.0, %v11611
        %11613 = vmatmul.f32.gmra.mxu0 %v11502
        %v11614 = vpop.f32.mrf.mxu0
        %v11615 = vadd.f32 0.0, %v11614
        %11616 = vdwg.mxu0
        %s11617 = scalar_lea.vmem %s2, 4
        %v11618 = vld [vmem:[%s11617] sm:$0x1]
        %v11620 = vperm.slane %v11618, 0
        %v11622 = vmul.f32 %v11522, %v11620
        %v11623 = vmul.f32 %v11525, %v11620
        %v11624 = vmul.f32 %v11528, %v11620
        %v11625 = vmul.f32 %v11531, %v11620
        %v11626 = vmul.f32 %v11534, %v11620
        %v11627 = vmul.f32 %v11537, %v11620
        %v11628 = vmul.f32 %v11540, %v11620
        %v11629 = vmul.f32 %v11543, %v11620
        %v11630 = vmul.f32 %v11546, %v11620
        %v11631 = vmul.f32 %v11549, %v11620
        %v11632 = vmul.f32 %v11552, %v11620
        %v11633 = vmul.f32 %v11555, %v11620
        %v11634 = vmul.f32 %v11558, %v11620
        %v11635 = vmul.f32 %v11561, %v11620
        %v11636 = vmul.f32 %v11564, %v11620
        %v11637 = vmul.f32 %v11567, %v11620
        %v11638 = vmul.f32 %v11570, %v11620
        %v11639 = vmul.f32 %v11573, %v11620
        %v11640 = vmul.f32 %v11576, %v11620
        %v11641 = vmul.f32 %v11579, %v11620
        %v11642 = vmul.f32 %v11582, %v11620
        %v11643 = vmul.f32 %v11585, %v11620
        %v11644 = vmul.f32 %v11588, %v11620
        %v11645 = vmul.f32 %v11591, %v11620
        %v11646 = vmul.f32 %v11594, %v11620
        %v11647 = vmul.f32 %v11597, %v11620
        %v11648 = vmul.f32 %v11600, %v11620
        %v11649 = vmul.f32 %v11603, %v11620
        %v11650 = vmul.f32 %v11606, %v11620
        %v11651 = vmul.f32 %v11609, %v11620
        %v11652 = vmul.f32 %v11612, %v11620
        %v11653 = vmul.f32 %v11615, %v11620
        %s11654 = scalar_lea.vmem %s3, 4
        %v11655 = vld [vmem:[%s11654] sm:$0x1]
        %v11657 = vperm.slane %v11655, 0
        %v11659 = vadd.f32 %v11622, %v11657
        %v11660 = vadd.f32 %v11623, %v11657
        %v11661 = vadd.f32 %v11624, %v11657
        %v11662 = vadd.f32 %v11625, %v11657
        %v11663 = vadd.f32 %v11626, %v11657
        %v11664 = vadd.f32 %v11627, %v11657
        %v11665 = vadd.f32 %v11628, %v11657
        %v11666 = vadd.f32 %v11629, %v11657
        %v11667 = vadd.f32 %v11630, %v11657
        %v11668 = vadd.f32 %v11631, %v11657
        %v11669 = vadd.f32 %v11632, %v11657
        %v11670 = vadd.f32 %v11633, %v11657
        %v11671 = vadd.f32 %v11634, %v11657
        %v11672 = vadd.f32 %v11635, %v11657
        %v11673 = vadd.f32 %v11636, %v11657
        %v11674 = vadd.f32 %v11637, %v11657
        %v11675 = vadd.f32 %v11638, %v11657
        %v11676 = vadd.f32 %v11639, %v11657
        %v11677 = vadd.f32 %v11640, %v11657
        %v11678 = vadd.f32 %v11641, %v11657
        %v11679 = vadd.f32 %v11642, %v11657
        %v11680 = vadd.f32 %v11643, %v11657
        %v11681 = vadd.f32 %v11644, %v11657
        %v11682 = vadd.f32 %v11645, %v11657
        %v11683 = vadd.f32 %v11646, %v11657
        %v11684 = vadd.f32 %v11647, %v11657
        %v11685 = vadd.f32 %v11648, %v11657
        %v11686 = vadd.f32 %v11649, %v11657
        %v11687 = vadd.f32 %v11650, %v11657
        %v11688 = vadd.f32 %v11651, %v11657
        %v11689 = vadd.f32 %v11652, %v11657
        %v11690 = vadd.f32 %v11653, %v11657
        %v11691 = vadd.f32 %v11659, %v7139
        %v11692 = vadd.f32 %v11660, %v7140
        %v11693 = vadd.f32 %v11661, %v7141
        %v11694 = vadd.f32 %v11662, %v7142
        %v11695 = vadd.f32 %v11663, %v7143
        %v11696 = vadd.f32 %v11664, %v7144
        %v11697 = vadd.f32 %v11665, %v7145
        %v11698 = vadd.f32 %v11666, %v7146
        %v11699 = vadd.f32 %v11667, %v7147
        %v11700 = vadd.f32 %v11668, %v7148
        %v11701 = vadd.f32 %v11669, %v7149
        %v11702 = vadd.f32 %v11670, %v7150
        %v11703 = vadd.f32 %v11671, %v7151
        %v11704 = vadd.f32 %v11672, %v7152
        %v11705 = vadd.f32 %v11673, %v7153
        %v11706 = vadd.f32 %v11674, %v7154
        %v11707 = vadd.f32 %v11675, %v7155
        %v11708 = vadd.f32 %v11676, %v7156
        %v11709 = vadd.f32 %v11677, %v7157
        %v11710 = vadd.f32 %v11678, %v7158
        %v11711 = vadd.f32 %v11679, %v7159
        %v11712 = vadd.f32 %v11680, %v7160
        %v11713 = vadd.f32 %v11681, %v7161
        %v11714 = vadd.f32 %v11682, %v7162
        %v11715 = vadd.f32 %v11683, %v7163
        %v11716 = vadd.f32 %v11684, %v7164
        %v11717 = vadd.f32 %v11685, %v7165
        %v11718 = vadd.f32 %v11686, %v7166
        %v11719 = vadd.f32 %v11687, %v7167
        %v11720 = vadd.f32 %v11688, %v7168
        %v11721 = vadd.f32 %v11689, %v7169
        %v11722 = vadd.f32 %v11690, %v7170
        %v11723 = vmax.f32 %v11691, 0.0
        %v11724 = vmax.f32 %v11692, 0.0
        %v11725 = vmax.f32 %v11693, 0.0
        %v11726 = vmax.f32 %v11694, 0.0
        %v11727 = vmax.f32 %v11695, 0.0
        %v11728 = vmax.f32 %v11696, 0.0
        %v11729 = vmax.f32 %v11697, 0.0
        %v11730 = vmax.f32 %v11698, 0.0
        %v11731 = vmax.f32 %v11699, 0.0
        %v11732 = vmax.f32 %v11700, 0.0
        %v11733 = vmax.f32 %v11701, 0.0
        %v11734 = vmax.f32 %v11702, 0.0
        %v11735 = vmax.f32 %v11703, 0.0
        %v11736 = vmax.f32 %v11704, 0.0
        %v11737 = vmax.f32 %v11705, 0.0
        %v11738 = vmax.f32 %v11706, 0.0
        %v11739 = vmax.f32 %v11707, 0.0
        %v11740 = vmax.f32 %v11708, 0.0
        %v11741 = vmax.f32 %v11709, 0.0
        %v11742 = vmax.f32 %v11710, 0.0
        %v11743 = vmax.f32 %v11711, 0.0
        %v11744 = vmax.f32 %v11712, 0.0
        %v11745 = vmax.f32 %v11713, 0.0
        %v11746 = vmax.f32 %v11714, 0.0
        %v11747 = vmax.f32 %v11715, 0.0
        %v11748 = vmax.f32 %v11716, 0.0
        %v11749 = vmax.f32 %v11717, 0.0
        %v11750 = vmax.f32 %v11718, 0.0
        %v11751 = vmax.f32 %v11719, 0.0
        %v11752 = vmax.f32 %v11720, 0.0
        %v11753 = vmax.f32 %v11721, 0.0
        %v11754 = vmax.f32 %v11722, 0.0
        %11787 = vrot.lane.b32.xlu0 %v11723, 8
        %v11788 = vpop.permute.xlu0 %11787
        %11789 = vrot.lane.b32.xlu0 %v11724, 8
        %v11790 = vpop.permute.xlu0 %11789
        %11791 = vrot.lane.b32.xlu0 %v11725, 8
        %v11792 = vpop.permute.xlu0 %11791
        %11793 = vrot.lane.b32.xlu0 %v11726, 8
        %v11794 = vpop.permute.xlu0 %11793
        %11795 = vrot.lane.b32.xlu0 %v11727, 8
        %v11796 = vpop.permute.xlu0 %11795
        %11797 = vrot.lane.b32.xlu0 %v11728, 8
        %v11798 = vpop.permute.xlu0 %11797
        %11799 = vrot.lane.b32.xlu0 %v11729, 8
        %v11800 = vpop.permute.xlu0 %11799
        %11801 = vrot.lane.b32.xlu0 %v11730, 8
        %v11802 = vpop.permute.xlu0 %11801
        %11803 = vrot.lane.b32.xlu0 %v11731, 8
        %v11804 = vpop.permute.xlu0 %11803
        %11805 = vrot.lane.b32.xlu0 %v11732, 8
        %v11806 = vpop.permute.xlu0 %11805
        %11807 = vrot.lane.b32.xlu0 %v11733, 8
        %v11808 = vpop.permute.xlu0 %11807
        %11809 = vrot.lane.b32.xlu0 %v11734, 8
        %v11810 = vpop.permute.xlu0 %11809
        %11811 = vrot.lane.b32.xlu0 %v11735, 8
        %v11812 = vpop.permute.xlu0 %11811
        %11813 = vrot.lane.b32.xlu0 %v11736, 8
        %v11814 = vpop.permute.xlu0 %11813
        %11815 = vrot.lane.b32.xlu0 %v11737, 8
        %v11816 = vpop.permute.xlu0 %11815
        %11817 = vrot.lane.b32.xlu0 %v11738, 8
        %v11818 = vpop.permute.xlu0 %11817
        %11819 = vrot.lane.b32.xlu0 %v11739, 8
        %v11820 = vpop.permute.xlu0 %11819
        %11821 = vrot.lane.b32.xlu0 %v11740, 8
        %v11822 = vpop.permute.xlu0 %11821
        %11823 = vrot.lane.b32.xlu0 %v11741, 8
        %v11824 = vpop.permute.xlu0 %11823
        %11825 = vrot.lane.b32.xlu0 %v11742, 8
        %v11826 = vpop.permute.xlu0 %11825
        %11827 = vrot.lane.b32.xlu0 %v11743, 8
        %v11828 = vpop.permute.xlu0 %11827
        %11829 = vrot.lane.b32.xlu0 %v11744, 8
        %v11830 = vpop.permute.xlu0 %11829
        %11831 = vrot.lane.b32.xlu0 %v11745, 8
        %v11832 = vpop.permute.xlu0 %11831
        %11833 = vrot.lane.b32.xlu0 %v11746, 8
        %v11834 = vpop.permute.xlu0 %11833
        %11835 = vrot.lane.b32.xlu0 %v11747, 8
        %v11836 = vpop.permute.xlu0 %11835
        %11837 = vrot.lane.b32.xlu0 %v11748, 8
        %v11838 = vpop.permute.xlu0 %11837
        %11839 = vrot.lane.b32.xlu0 %v11749, 8
        %v11840 = vpop.permute.xlu0 %11839
        %11841 = vrot.lane.b32.xlu0 %v11750, 8
        %v11842 = vpop.permute.xlu0 %11841
        %11843 = vrot.lane.b32.xlu0 %v11751, 8
        %v11844 = vpop.permute.xlu0 %11843
        %11845 = vrot.lane.b32.xlu0 %v11752, 8
        %v11846 = vpop.permute.xlu0 %11845
        %11847 = vrot.lane.b32.xlu0 %v11753, 8
        %v11848 = vpop.permute.xlu0 %11847
        %11849 = vrot.lane.b32.xlu0 %v11754, 8
        %v11850 = vpop.permute.xlu0 %11849
        %v11883 = vsel %vm196, %v11723, %v11788
        %v11884 = vsel %vm196, %v11724, %v11790
        %v11885 = vsel %vm196, %v11725, %v11792
        %v11886 = vsel %vm196, %v11726, %v11794
        %v11887 = vsel %vm196, %v11727, %v11796
        %v11888 = vsel %vm196, %v11728, %v11798
        %v11889 = vsel %vm196, %v11729, %v11800
        %v11890 = vsel %vm196, %v11730, %v11802
        %v11891 = vsel %vm196, %v11731, %v11804
        %v11892 = vsel %vm196, %v11732, %v11806
        %v11893 = vsel %vm196, %v11733, %v11808
        %v11894 = vsel %vm196, %v11734, %v11810
        %v11895 = vsel %vm196, %v11735, %v11812
        %v11896 = vsel %vm196, %v11736, %v11814
        %v11897 = vsel %vm196, %v11737, %v11816
        %v11898 = vsel %vm196, %v11738, %v11818
        %v11899 = vsel %vm196, %v11739, %v11820
        %v11900 = vsel %vm196, %v11740, %v11822
        %v11901 = vsel %vm196, %v11741, %v11824
        %v11902 = vsel %vm196, %v11742, %v11826
        %v11903 = vsel %vm196, %v11743, %v11828
        %v11904 = vsel %vm196, %v11744, %v11830
        %v11905 = vsel %vm196, %v11745, %v11832
        %v11906 = vsel %vm196, %v11746, %v11834
        %v11907 = vsel %vm196, %v11747, %v11836
        %v11908 = vsel %vm196, %v11748, %v11838
        %v11909 = vsel %vm196, %v11749, %v11840
        %v11910 = vsel %vm196, %v11750, %v11842
        %v11911 = vsel %vm196, %v11751, %v11844
        %v11912 = vsel %vm196, %v11752, %v11846
        %v11913 = vsel %vm196, %v11753, %v11848
        %v11914 = vsel %vm196, %v11754, %v11850
        %11915 = vst.msk [vmem:[%s190] sm:$0xff] %vm1824, %v11883
        %11916 = vst.msk [vmem:[%s190 + $0x8] sm:$0xff] %vm1824, %v11884
        %11917 = vst.msk [vmem:[%s190 + $0x20] sm:$0xff] %vm1824, %v11885
        %11918 = vst.msk [vmem:[%s190 + $0x28] sm:$0xff] %vm1824, %v11886
        %11919 = vst.msk [vmem:[%s190 + $0x40] sm:$0xff] %vm1824, %v11887
        %11920 = vst.msk [vmem:[%s190 + $0x48] sm:$0xff] %vm1824, %v11888
        %11921 = vst.msk [vmem:[%s190 + $0x60] sm:$0xff] %vm1824, %v11889
        %11922 = vst.msk [vmem:[%s190 + $0x68] sm:$0xff] %vm1824, %v11890
        %11923 = vst.msk [vmem:[%s190 + $0x80] sm:$0xff] %vm1824, %v11891
        %11924 = vst.msk [vmem:[%s190 + $0x88] sm:$0xff] %vm1824, %v11892
        %11925 = vst.msk [vmem:[%s190 + $0xa0] sm:$0xff] %vm1824, %v11893
        %11926 = vst.msk [vmem:[%s190 + $0xa8] sm:$0xff] %vm1824, %v11894
        %11927 = vst.msk [vmem:[%s190 + $0xc0] sm:$0xff] %vm1824, %v11895
        %11928 = vst.msk [vmem:[%s190 + $0xc8] sm:$0xff] %vm1824, %v11896
        %11929 = vst.msk [vmem:[%s190 + $0xe0] sm:$0xff] %vm1824, %v11897
        %11930 = vst.msk [vmem:[%s190 + $0xe8] sm:$0xff] %vm1824, %v11898
        %11931 = vst.msk [vmem:[%s190 + $0x100] sm:$0xff] %vm1824, %v11899
        %11932 = vst.msk [vmem:[%s190 + $0x108] sm:$0xff] %vm1824, %v11900
        %11933 = vst.msk [vmem:[%s190 + $0x120] sm:$0xff] %vm1824, %v11901
        %11934 = vst.msk [vmem:[%s190 + $0x128] sm:$0xff] %vm1824, %v11902
        %11935 = vst.msk [vmem:[%s190 + $0x140] sm:$0xff] %vm1824, %v11903
        %11936 = vst.msk [vmem:[%s190 + $0x148] sm:$0xff] %vm1824, %v11904
        %11937 = vst.msk [vmem:[%s190 + $0x160] sm:$0xff] %vm1824, %v11905
        %11938 = vst.msk [vmem:[%s190 + $0x168] sm:$0xff] %vm1824, %v11906
        %11939 = vst.msk [vmem:[%s190 + $0x180] sm:$0xff] %vm1824, %v11907
        %11940 = vst.msk [vmem:[%s190 + $0x188] sm:$0xff] %vm1824, %v11908
        %11941 = vst.msk [vmem:[%s190 + $0x1a0] sm:$0xff] %vm1824, %v11909
        %11942 = vst.msk [vmem:[%s190 + $0x1a8] sm:$0xff] %vm1824, %v11910
        %11943 = vst.msk [vmem:[%s190 + $0x1c0] sm:$0xff] %vm1824, %v11911
        %11944 = vst.msk [vmem:[%s190 + $0x1c8] sm:$0xff] %vm1824, %v11912
        %11945 = vst.msk [vmem:[%s190 + $0x1e0] sm:$0xff] %vm1824, %v11913
        %11946 = vst.msk [vmem:[%s190 + $0x1e8] sm:$0xff] %vm1824, %v11914
        %s11947 = scalar_lea.vmem %s190, 16 [#allocation3]
        %11948 = vst.msk [vmem:[%s11947] sm:$0xff] %vm1824, %v11883
        %11949 = vst.msk [vmem:[%s11947 + $0x8] sm:$0xff] %vm1824, %v11884
        %11950 = vst.msk [vmem:[%s11947 + $0x20] sm:$0xff] %vm1824, %v11885
        %11951 = vst.msk [vmem:[%s11947 + $0x28] sm:$0xff] %vm1824, %v11886
        %11952 = vst.msk [vmem:[%s11947 + $0x40] sm:$0xff] %vm1824, %v11887
        %11953 = vst.msk [vmem:[%s11947 + $0x48] sm:$0xff] %vm1824, %v11888
        %11954 = vst.msk [vmem:[%s11947 + $0x60] sm:$0xff] %vm1824, %v11889
        %11955 = vst.msk [vmem:[%s11947 + $0x68] sm:$0xff] %vm1824, %v11890
        %11956 = vst.msk [vmem:[%s11947 + $0x80] sm:$0xff] %vm1824, %v11891
        %11957 = vst.msk [vmem:[%s11947 + $0x88] sm:$0xff] %vm1824, %v11892
        %11958 = vst.msk [vmem:[%s11947 + $0xa0] sm:$0xff] %vm1824, %v11893
        %11959 = vst.msk [vmem:[%s11947 + $0xa8] sm:$0xff] %vm1824, %v11894
        %11960 = vst.msk [vmem:[%s11947 + $0xc0] sm:$0xff] %vm1824, %v11895
        %11961 = vst.msk [vmem:[%s11947 + $0xc8] sm:$0xff] %vm1824, %v11896
        %11962 = vst.msk [vmem:[%s11947 + $0xe0] sm:$0xff] %vm1824, %v11897
        %11963 = vst.msk [vmem:[%s11947 + $0xe8] sm:$0xff] %vm1824, %v11898
        %11964 = vst.msk [vmem:[%s11947 + $0x100] sm:$0xff] %vm1824, %v11899
        %11965 = vst.msk [vmem:[%s11947 + $0x108] sm:$0xff] %vm1824, %v11900
        %11966 = vst.msk [vmem:[%s11947 + $0x120] sm:$0xff] %vm1824, %v11901
        %11967 = vst.msk [vmem:[%s11947 + $0x128] sm:$0xff] %vm1824, %v11902
        %11968 = vst.msk [vmem:[%s11947 + $0x140] sm:$0xff] %vm1824, %v11903
        %11969 = vst.msk [vmem:[%s11947 + $0x148] sm:$0xff] %vm1824, %v11904
        %11970 = vst.msk [vmem:[%s11947 + $0x160] sm:$0xff] %vm1824, %v11905
        %11971 = vst.msk [vmem:[%s11947 + $0x168] sm:$0xff] %vm1824, %v11906
        %11972 = vst.msk [vmem:[%s11947 + $0x180] sm:$0xff] %vm1824, %v11907
        %11973 = vst.msk [vmem:[%s11947 + $0x188] sm:$0xff] %vm1824, %v11908
        %11974 = vst.msk [vmem:[%s11947 + $0x1a0] sm:$0xff] %vm1824, %v11909
        %11975 = vst.msk [vmem:[%s11947 + $0x1a8] sm:$0xff] %vm1824, %v11910
        %11976 = vst.msk [vmem:[%s11947 + $0x1c0] sm:$0xff] %vm1824, %v11911
        %11977 = vst.msk [vmem:[%s11947 + $0x1c8] sm:$0xff] %vm1824, %v11912
        %11978 = vst.msk [vmem:[%s11947 + $0x1e0] sm:$0xff] %vm1824, %v11913
        %11979 = vst.msk [vmem:[%s11947 + $0x1e8] sm:$0xff] %vm1824, %v11914
        %s11980 = sand.u32 %s115, 1
        %s11981 = scalar_lea.sflag [#allocation4], %s11980
        %s11982 = sand.u32 %s115, 1
        %s11983 = smul.addr %s11982, 512
        %s11984 = scalar_lea.vmem [#allocation3], %s11983
        // Predicated region
        $region37: #{tpu_custom_call.1} parent=35 // pred_check
          %p11985 = pneg %p125
        $region38: #{tpu_custom_call.1} parent=35 // pred_check_branch
          %11987 = sbr.rel (%p11985) target = $region40
        $region39: #{tpu_custom_call.1} parent=35 // pred_region
          %11989 = vsyncadd %s11981, 0
          %s11990 = smul.addr %s18, 64
          %s11991 = smul.addr %s11990, 8
          %s11992 = scalar_lea.hbm %s4, %s11991
          %s11993 = sshll.u32 %s11984, 4
          %s11994 = int_to_ptr.vmem [resolvable:$true] %s11993
          %s11995 = sshll.u32 %s11992, 4
          %s11996 = int_to_ptr.hbm [resolvable:$true] %s11995
          %12001 = dma.vmem_to_hbm [thread:$0]  %s11994, 8192, %s11996, %s11981, 128, 128, 8
        $region40: #{tpu_custom_call.1} parent=35 // pred_fallthru
          _
      $region36: #{tpu_custom_call.1} parent=5 // pred_fallthru
        _
      %p12002 = scmp.le.s32.totalorder 2, %s13
      // Predicated region
      $region41: #{tpu_custom_call.1} parent=5 // pred_check
        %p12003 = pneg %p12002
      $region42: #{tpu_custom_call.1} parent=5 // pred_check_branch
        %12005 = sbr.rel (%p12003) target = $region44
      $region43: #{tpu_custom_call.1} parent=5 // pred_region
        %s12006 = ssub.s32 %s13, 2
        // Predicated region
        $region45: #{tpu_custom_call.1} parent=43 // pred_check
          %p12007 = pneg %p131
        $region46: #{tpu_custom_call.1} parent=43 // pred_check_branch
          %12009 = sbr.rel (%p12007) target = $region48
        $region47: #{tpu_custom_call.1} parent=43 // pred_region
          %s12010 = sand.u32 %s116, 1
          %s12011 = scalar_lea.sflag [#allocation4], %s12010
          %s12012 = sand.u32 %s116, 1
          %s12013 = smul.addr %s12012, 512
          %s12014 = scalar_lea.vmem [#allocation3], %s12013
          %12016 = dma.done %s12011, 8192
        $region48: #{tpu_custom_call.1} parent=43 // pred_fallthru
          _
      $region44: #{tpu_custom_call.1} parent=5 // pred_fallthru
        _
    $region6: #{tpu_custom_call.1} parent=1 // loop_footer
      %s17 = sadd.s32 1, %s13
    $region7: #{tpu_custom_call.1} parent=1 // loop_footer_branch
      %12 = sbr.rel target = $region3
    $region8: #{tpu_custom_call.1} parent=1 // loop_exit
      _
    %12017 = vsyncpa [#allocation4], 1
    %s12018 = scalar_lea.sflag [#allocation4], 1
    %12019 = vsyncpa %s12018, 1

</llo_original>
